<compile_context>
chip_gen: v7x
topology: tpu7x:2x2x1
jax: 0.10.0
libtpu: 0.0.40
codegen_flags: <defaults>
</compile_context>

<pallas_src>
import math

import jax
import jax.numpy as jnp
from jax.experimental import pallas as pl
from jax.experimental.pallas import tpu as pltpu

# ----------------------------------------------------------------------------- config
D = 8
W = 256
EMBED_DIM = 10
X_MULTIRES = 10
T_MULTIRES = 10
SKIP = D // 2  # = 4

XYZ_IN_CH = 3 + 3 * 2 * X_MULTIRES       # 63
TIME_IN_CH = 1 + 1 * 2 * T_MULTIRES      # 21
INPUT_CH = XYZ_IN_CH + TIME_IN_CH + EMBED_DIM  # 94
H0_DIM = 128     # input features zero-padded to a full lane width
HEAD_DIM = 16    # fused heads: [d_xyz(3) | rotation(4) | scaling(3) | zero pad(6)]

TILE_N = 512     # rows per grid step


# ---------------------------------------------------------------- positional embedder
def positional_embed(x, multires):
    """Matches the PyTorch Embedder (include_input=True, log_sampling=True)."""
    outs = [x]
    for i in range(multires):
        freq = 2.0 ** i
        outs.append(jnp.sin(x * freq))
        outs.append(jnp.cos(x * freq))
    return jnp.concatenate(outs, axis=-1)


# --------------------------------------------------------------------- parameter init
def _linear_init(key, fan_in, fan_out):
    """PyTorch nn.Linear default init: U(-1/sqrt(fan_in), 1/sqrt(fan_in))."""
    kw, kb = jax.random.split(key)
    bound = 1.0 / math.sqrt(fan_in)
    w = jax.random.uniform(kw, (fan_in, fan_out), jnp.float32, -bound, bound)
    b = jax.random.uniform(kb, (1, fan_out), jnp.float32, -bound, bound)
    return w, b


def init_params(key):
    keys = jax.random.split(key, D + 3)
    linears = [_linear_init(keys[0], INPUT_CH, W)]          # layer 0: 94 -> 256
    for i in range(1, D):                                   # layers 1..7
        fan_in = W + INPUT_CH if i == SKIP + 1 else W       # layer 5 takes the skip concat
        linears.append(_linear_init(keys[i], fan_in, W))
    warp = _linear_init(keys[D], W, 3)
    rot = _linear_init(keys[D + 1], W, 4)
    scale = _linear_init(keys[D + 2], W, 3)
    return {"linear": linears, "warp": warp, "rot": rot, "scale": scale}


# -------------------------------------------------------------------- kernel parameter packing
def _pad_rows(w, rows):
    return jnp.concatenate(
        [w, jnp.zeros((rows - w.shape[0], w.shape[1]), w.dtype)], axis=0)


def _pack_params(params):
    """Repack PyTorch-layout params into the kernel layout (padded/split/fused, bf16 weights)."""
    packed = []
    # layer 0: (94, 256) -> (128, 256) bf16
    w0, b0 = params["linear"][0]
    packed += [_pad_rows(w0, H0_DIM).astype(jnp.bfloat16), b0]
    # layers 1..4: (256, 256)
    for i in range(1, SKIP + 1):
        w, b = params["linear"][i]
        packed += [w.astype(jnp.bfloat16), b]
    # layer 5 (after skip concat [h0, h]): split at row 94 -> (128,256) + (256,256)
    w5, b5 = params["linear"][SKIP + 1]
    packed += [_pad_rows(w5[:INPUT_CH], H0_DIM).astype(jnp.bfloat16),
               w5[INPUT_CH:].astype(jnp.bfloat16), b5]
    # layers 6..7
    for i in range(SKIP + 2, D):
        w, b = params["linear"][i]
        packed += [w.astype(jnp.bfloat16), b]
    # fused output heads: columns [warp(3) | rot(4) | scale(3) | zeros(6)]
    ww, bw = params["warp"]
    wr, br = params["rot"]
    ws, bs = params["scale"]
    wh = jnp.concatenate([ww, wr, ws, jnp.zeros((W, HEAD_DIM - 10), jnp.float32)], axis=1)
    bh = jnp.concatenate([bw, br, bs, jnp.zeros((1, HEAD_DIM - 10), jnp.float32)], axis=1)
    packed += [wh.astype(jnp.bfloat16), bh]
    return packed


# --------------------------------------------------------------------- Pallas kernel
def _deform_kernel(h0_ref,
                   w0_ref, b0_ref, w1_ref, b1_ref, w2_ref, b2_ref,
                   w3_ref, b3_ref, w4_ref, b4_ref,
                   w5a_ref, w5b_ref, b5_ref,
                   w6_ref, b6_ref, w7_ref, b7_ref,
                   wh_ref, bh_ref,
                   out_ref):
    h0 = h0_ref[...]                                           # (TILE_N, 128) bf16

    def layer(h_bf16, w_ref, b_ref):
        acc = jnp.dot(h_bf16, w_ref[...], preferred_element_type=jnp.float32)
        acc = acc + b_ref[...]                                 # bias + ReLU in f32
        return jnp.maximum(acc, 0.0).astype(jnp.bfloat16)

    h = layer(h0, w0_ref, b0_ref)       # layer 0
    h = layer(h, w1_ref, b1_ref)        # layer 1
    h = layer(h, w2_ref, b2_ref)        # layer 2
    h = layer(h, w3_ref, b3_ref)        # layer 3
    h = layer(h, w4_ref, b4_ref)        # layer 4 (skip concat follows)

    # layer 5: relu([h0, h] @ W5 + b5) == relu(h0 @ W5a + h @ W5b + b5)
    acc = (jnp.dot(h0, w5a_ref[...], preferred_element_type=jnp.float32)
           + jnp.dot(h, w5b_ref[...], preferred_element_type=jnp.float32)
           + b5_ref[...])
    h = jnp.maximum(acc, 0.0).astype(jnp.bfloat16)

    h = layer(h, w6_ref, b6_ref)        # layer 6
    h = layer(h, w7_ref, b7_ref)        # layer 7

    # fused heads -> single (TILE_N, 16) f32 store
    out_ref[...] = (jnp.dot(h, wh_ref[...], preferred_element_type=jnp.float32)
                    + bh_ref[...])


def _const_spec(shape):
    # whole array resident in VMEM; constant index_map -> not re-DMA'd per grid step
    return pl.BlockSpec(shape, lambda i: (0,) * len(shape))


def conditional_deform_forward(params, x, t, condition):
    """x: (N, 3), t: (N, 1), condition: (N, EMBED_DIM). Returns (d_xyz, rotation, scaling)."""
    x = x.astype(jnp.float32)
    t = t.astype(jnp.float32)
    condition = condition.astype(jnp.float32)

    x_emb = positional_embed(x, X_MULTIRES)                    # (N, 63)
    t_emb = positional_embed(t, T_MULTIRES)                    # (N, 21)
    h0 = jnp.concatenate([x_emb, t_emb, condition], axis=-1)   # (N, 94)

    n = h0.shape[0]
    n_pad = ((n + TILE_N - 1) // TILE_N) * TILE_N
    # pad rows to tile multiple, pad features 94 -> 128 lanes, cast to bf16
    h0 = jnp.pad(h0, ((0, n_pad - n), (0, H0_DIM - INPUT_CH))).astype(jnp.bfloat16)

    packed = _pack_params(params)

    in_specs = [pl.BlockSpec((TILE_N, H0_DIM), lambda i: (i, 0))]
    in_specs += [_const_spec(p.shape) for p in packed]

    out = pl.pallas_call(
        _deform_kernel,
        out_shape=jax.ShapeDtypeStruct((n_pad, HEAD_DIM), jnp.float32),
        grid_spec=pltpu.PrefetchScalarGridSpec(
            num_scalar_prefetch=0,
            grid=(n_pad // TILE_N,),
            in_specs=in_specs,
            out_specs=pl.BlockSpec((TILE_N, HEAD_DIM), lambda i: (i, 0)),
        ),
        compiler_params=pltpu.CompilerParams(
            dimension_semantics=("parallel",),
            vmem_limit_bytes=32 * 1024 * 1024,
        ),
    )(h0, *packed)

    d_xyz = out[:n, 0:3]
    rotation = out[:n, 3:7]
    scaling = out[:n, 7:10]
    return d_xyz, rotation, scaling


# ------------------------------------------------------------------- pure-JAX reference
def reference_forward(params, x, t, condition):
    """Literal f32 translation of the PyTorch module."""
    x_emb = positional_embed(x.astype(jnp.float32), X_MULTIRES)
    t_emb = positional_embed(t.astype(jnp.float32), T_MULTIRES)
    h0 = jnp.concatenate([x_emb, t_emb, condition.astype(jnp.float32)], axis=-1)
    h = h0
    for i in range(D):
        w, b = params["linear"][i]
        h = jax.nn.relu(h @ w + b)
        if i == SKIP:
            h = jnp.concatenate([h0, h], axis=-1)
    d_xyz = h @ params["warp"][0] + params["warp"][1]
    rotation = h @ params["rot"][0] + params["rot"][1]
    scaling = h @ params["scale"][0] + params["scale"][1]
    return d_xyz, rotation, scaling


# ----------------------------------------------------------------------------- driver
if __name__ == "__main__":
    key = jax.random.PRNGKey(0)
    k_param, k_x, k_t, k_c = jax.random.split(key, 4)

    params = init_params(k_param)

    N = 1000  # small demo point count (not a tile multiple -> exercises padding, 2 grid steps)
    x = jax.random.normal(k_x, (N, 3), jnp.float32)
    t = jax.random.uniform(k_t, (N, 1), jnp.float32)
    condition = jax.random.normal(k_c, (N, EMBED_DIM), jnp.float32)

    fwd = jax.jit(conditional_deform_forward)
    d_xyz, rotation, scaling = jax.block_until_ready(fwd(params, x, t, condition))

    d_ref, r_ref, s_ref = reference_forward(params, x, t, condition)

    assert d_xyz.shape == (N, 3) and rotation.shape == (N, 4) and scaling.shape == (N, 3)
    # bf16 matmuls with f32 accumulation -> small, bounded deviation from the f32 reference
    tol = dict(atol=1e-2, rtol=1e-2)
    assert jnp.allclose(d_xyz, d_ref, **tol)
    assert jnp.allclose(rotation, r_ref, **tol)
    assert jnp.allclose(scaling, s_ref, **tol)

    print("KERNEL_OK")
</pallas_src>

<mosaic_0001>
module attributes {stable_mosaic.version = 11 : i64} {
  func.func @_deform_kernel(%arg0: i32, %arg1: memref<512x128xbf16, #tpu.memory_space<vmem>>, %arg2: memref<128x256xbf16, #tpu.memory_space<vmem>>, %arg3: memref<1x256xf32, #tpu.memory_space<vmem>>, %arg4: memref<256x256xbf16, #tpu.memory_space<vmem>>, %arg5: memref<1x256xf32, #tpu.memory_space<vmem>>, %arg6: memref<256x256xbf16, #tpu.memory_space<vmem>>, %arg7: memref<1x256xf32, #tpu.memory_space<vmem>>, %arg8: memref<256x256xbf16, #tpu.memory_space<vmem>>, %arg9: memref<1x256xf32, #tpu.memory_space<vmem>>, %arg10: memref<256x256xbf16, #tpu.memory_space<vmem>>, %arg11: memref<1x256xf32, #tpu.memory_space<vmem>>, %arg12: memref<128x256xbf16, #tpu.memory_space<vmem>>, %arg13: memref<256x256xbf16, #tpu.memory_space<vmem>>, %arg14: memref<1x256xf32, #tpu.memory_space<vmem>>, %arg15: memref<256x256xbf16, #tpu.memory_space<vmem>>, %arg16: memref<1x256xf32, #tpu.memory_space<vmem>>, %arg17: memref<256x256xbf16, #tpu.memory_space<vmem>>, %arg18: memref<1x256xf32, #tpu.memory_space<vmem>>, %arg19: memref<256x16xbf16, #tpu.memory_space<vmem>>, %arg20: memref<1x16xf32, #tpu.memory_space<vmem>>, %arg21: memref<512x16xf32, #tpu.memory_space<vmem>>) attributes {dimension_semantics = [#tpu.dimension_semantics<parallel>], iteration_bounds = array<i64: 2>, scalar_prefetch = 0 : i64, scratch_operands = 0 : i64, tpu.core_type = #tpu.core_type<tc>, window_params = [{transform_indices = @transform_0, window_bounds = array<i64: 512, 128>}, {pipeline_mode = #tpu.pipeline_mode<synchronous>, transform_indices = @transform_1, window_bounds = array<i64: 128, 256>}, {pipeline_mode = #tpu.pipeline_mode<synchronous>, transform_indices = @transform_2, window_bounds = array<i64: 1, 256>}, {pipeline_mode = #tpu.pipeline_mode<synchronous>, transform_indices = @transform_3, window_bounds = array<i64: 256, 256>}, {pipeline_mode = #tpu.pipeline_mode<synchronous>, transform_indices = @transform_4, window_bounds = array<i64: 1, 256>}, {pipeline_mode = #tpu.pipeline_mode<synchronous>, transform_indices = @transform_5, window_bounds = array<i64: 256, 256>}, {pipeline_mode = #tpu.pipeline_mode<synchronous>, transform_indices = @transform_6, window_bounds = array<i64: 1, 256>}, {pipeline_mode = #tpu.pipeline_mode<synchronous>, transform_indices = @transform_7, window_bounds = array<i64: 256, 256>}, {pipeline_mode = #tpu.pipeline_mode<synchronous>, transform_indices = @transform_8, window_bounds = array<i64: 1, 256>}, {pipeline_mode = #tpu.pipeline_mode<synchronous>, transform_indices = @transform_9, window_bounds = array<i64: 256, 256>}, {pipeline_mode = #tpu.pipeline_mode<synchronous>, transform_indices = @transform_10, window_bounds = array<i64: 1, 256>}, {pipeline_mode = #tpu.pipeline_mode<synchronous>, transform_indices = @transform_11, window_bounds = array<i64: 128, 256>}, {pipeline_mode = #tpu.pipeline_mode<synchronous>, transform_indices = @transform_12, window_bounds = array<i64: 256, 256>}, {pipeline_mode = #tpu.pipeline_mode<synchronous>, transform_indices = @transform_13, window_bounds = array<i64: 1, 256>}, {pipeline_mode = #tpu.pipeline_mode<synchronous>, transform_indices = @transform_14, window_bounds = array<i64: 256, 256>}, {pipeline_mode = #tpu.pipeline_mode<synchronous>, transform_indices = @transform_15, window_bounds = array<i64: 1, 256>}, {pipeline_mode = #tpu.pipeline_mode<synchronous>, transform_indices = @transform_16, window_bounds = array<i64: 256, 256>}, {pipeline_mode = #tpu.pipeline_mode<synchronous>, transform_indices = @transform_17, window_bounds = array<i64: 1, 256>}, {pipeline_mode = #tpu.pipeline_mode<synchronous>, transform_indices = @transform_18, window_bounds = array<i64: 256, 16>}, {pipeline_mode = #tpu.pipeline_mode<synchronous>, transform_indices = @transform_19, window_bounds = array<i64: 1, 16>}, {transform_indices = @transform_20, window_bounds = array<i64: 512, 16>}]} {
    %c0 = arith.constant 0 : index
    %c0_0 = arith.constant 0 : index
    %0 = vector.load %arg1[%c0, %c0_0] : memref<512x128xbf16, #tpu.memory_space<vmem>>, vector<512x128xbf16>
    %c0_1 = arith.constant 0 : index
    %c0_2 = arith.constant 0 : index
    %1 = vector.load %arg2[%c0_1, %c0_2] : memref<128x256xbf16, #tpu.memory_space<vmem>>, vector<128x256xbf16>
    %cst = arith.constant dense<0.000000e+00> : vector<512x256xf32>
    %2 = tpu.matmul %0, %1, %cst {dimension_numbers = #tpu.dot_dimension_numbers<[1], [0], [0], [1], [0, 0, 1, 1], [], []>} : vector<512x128xbf16>, vector<128x256xbf16>, vector<512x256xf32> -> vector<512x256xf32>
    %c0_3 = arith.constant 0 : index
    %c0_4 = arith.constant 0 : index
    %3 = vector.load %arg3[%c0_3, %c0_4] : memref<1x256xf32, #tpu.memory_space<vmem>>, vector<1x256xf32>
    %4 = vector.broadcast %3 : vector<1x256xf32> to vector<512x256xf32>
    %5 = arith.addf %2, %4 : vector<512x256xf32>
    %cst_5 = arith.constant 0.000000e+00 : f32
    %6 = vector.broadcast %cst_5 : f32 to vector<512x256xf32>
    %7 = arith.maximumf %5, %6 : vector<512x256xf32>
    %8 = arith.truncf %7 : vector<512x256xf32> to vector<512x256xbf16>
    %c0_6 = arith.constant 0 : index
    %c0_7 = arith.constant 0 : index
    %9 = vector.load %arg4[%c0_6, %c0_7] : memref<256x256xbf16, #tpu.memory_space<vmem>>, vector<256x256xbf16>
    %cst_8 = arith.constant dense<0.000000e+00> : vector<512x256xf32>
    %10 = tpu.matmul %8, %9, %cst_8 {dimension_numbers = #tpu.dot_dimension_numbers<[1], [0], [0], [1], [0, 0, 1, 1], [], []>} : vector<512x256xbf16>, vector<256x256xbf16>, vector<512x256xf32> -> vector<512x256xf32>
    %c0_9 = arith.constant 0 : index
    %c0_10 = arith.constant 0 : index
    %11 = vector.load %arg5[%c0_9, %c0_10] : memref<1x256xf32, #tpu.memory_space<vmem>>, vector<1x256xf32>
    %12 = vector.broadcast %11 : vector<1x256xf32> to vector<512x256xf32>
    %13 = arith.addf %10, %12 : vector<512x256xf32>
    %cst_11 = arith.constant 0.000000e+00 : f32
    %14 = vector.broadcast %cst_11 : f32 to vector<512x256xf32>
    %15 = arith.maximumf %13, %14 : vector<512x256xf32>
    %16 = arith.truncf %15 : vector<512x256xf32> to vector<512x256xbf16>
    %c0_12 = arith.constant 0 : index
    %c0_13 = arith.constant 0 : index
    %17 = vector.load %arg6[%c0_12, %c0_13] : memref<256x256xbf16, #tpu.memory_space<vmem>>, vector<256x256xbf16>
    %cst_14 = arith.constant dense<0.000000e+00> : vector<512x256xf32>
    %18 = tpu.matmul %16, %17, %cst_14 {dimension_numbers = #tpu.dot_dimension_numbers<[1], [0], [0], [1], [0, 0, 1, 1], [], []>} : vector<512x256xbf16>, vector<256x256xbf16>, vector<512x256xf32> -> vector<512x256xf32>
    %c0_15 = arith.constant 0 : index
    %c0_16 = arith.constant 0 : index
    %19 = vector.load %arg7[%c0_15, %c0_16] : memref<1x256xf32, #tpu.memory_space<vmem>>, vector<1x256xf32>
    %20 = vector.broadcast %19 : vector<1x256xf32> to vector<512x256xf32>
    %21 = arith.addf %18, %20 : vector<512x256xf32>
    %cst_17 = arith.constant 0.000000e+00 : f32
    %22 = vector.broadcast %cst_17 : f32 to vector<512x256xf32>
    %23 = arith.maximumf %21, %22 : vector<512x256xf32>
    %24 = arith.truncf %23 : vector<512x256xf32> to vector<512x256xbf16>
    %c0_18 = arith.constant 0 : index
    %c0_19 = arith.constant 0 : index
    %25 = vector.load %arg8[%c0_18, %c0_19] : memref<256x256xbf16, #tpu.memory_space<vmem>>, vector<256x256xbf16>
    %cst_20 = arith.constant dense<0.000000e+00> : vector<512x256xf32>
    %26 = tpu.matmul %24, %25, %cst_20 {dimension_numbers = #tpu.dot_dimension_numbers<[1], [0], [0], [1], [0, 0, 1, 1], [], []>} : vector<512x256xbf16>, vector<256x256xbf16>, vector<512x256xf32> -> vector<512x256xf32>
    %c0_21 = arith.constant 0 : index
    %c0_22 = arith.constant 0 : index
    %27 = vector.load %arg9[%c0_21, %c0_22] : memref<1x256xf32, #tpu.memory_space<vmem>>, vector<1x256xf32>
    %28 = vector.broadcast %27 : vector<1x256xf32> to vector<512x256xf32>
    %29 = arith.addf %26, %28 : vector<512x256xf32>
    %cst_23 = arith.constant 0.000000e+00 : f32
    %30 = vector.broadcast %cst_23 : f32 to vector<512x256xf32>
    %31 = arith.maximumf %29, %30 : vector<512x256xf32>
    %32 = arith.truncf %31 : vector<512x256xf32> to vector<512x256xbf16>
    %c0_24 = arith.constant 0 : index
    %c0_25 = arith.constant 0 : index
    %33 = vector.load %arg10[%c0_24, %c0_25] : memref<256x256xbf16, #tpu.memory_space<vmem>>, vector<256x256xbf16>
    %cst_26 = arith.constant dense<0.000000e+00> : vector<512x256xf32>
    %34 = tpu.matmul %32, %33, %cst_26 {dimension_numbers = #tpu.dot_dimension_numbers<[1], [0], [0], [1], [0, 0, 1, 1], [], []>} : vector<512x256xbf16>, vector<256x256xbf16>, vector<512x256xf32> -> vector<512x256xf32>
    %c0_27 = arith.constant 0 : index
    %c0_28 = arith.constant 0 : index
    %35 = vector.load %arg11[%c0_27, %c0_28] : memref<1x256xf32, #tpu.memory_space<vmem>>, vector<1x256xf32>
    %36 = vector.broadcast %35 : vector<1x256xf32> to vector<512x256xf32>
    %37 = arith.addf %34, %36 : vector<512x256xf32>
    %cst_29 = arith.constant 0.000000e+00 : f32
    %38 = vector.broadcast %cst_29 : f32 to vector<512x256xf32>
    %39 = arith.maximumf %37, %38 : vector<512x256xf32>
    %40 = arith.truncf %39 : vector<512x256xf32> to vector<512x256xbf16>
    %c0_30 = arith.constant 0 : index
    %c0_31 = arith.constant 0 : index
    %41 = vector.load %arg12[%c0_30, %c0_31] : memref<128x256xbf16, #tpu.memory_space<vmem>>, vector<128x256xbf16>
    %cst_32 = arith.constant dense<0.000000e+00> : vector<512x256xf32>
    %42 = tpu.matmul %0, %41, %cst_32 {dimension_numbers = #tpu.dot_dimension_numbers<[1], [0], [0], [1], [0, 0, 1, 1], [], []>} : vector<512x128xbf16>, vector<128x256xbf16>, vector<512x256xf32> -> vector<512x256xf32>
    %c0_33 = arith.constant 0 : index
    %c0_34 = arith.constant 0 : index
    %43 = vector.load %arg13[%c0_33, %c0_34] : memref<256x256xbf16, #tpu.memory_space<vmem>>, vector<256x256xbf16>
    %cst_35 = arith.constant dense<0.000000e+00> : vector<512x256xf32>
    %44 = tpu.matmul %40, %43, %cst_35 {dimension_numbers = #tpu.dot_dimension_numbers<[1], [0], [0], [1], [0, 0, 1, 1], [], []>} : vector<512x256xbf16>, vector<256x256xbf16>, vector<512x256xf32> -> vector<512x256xf32>
    %45 = arith.addf %42, %44 : vector<512x256xf32>
    %c0_36 = arith.constant 0 : index
    %c0_37 = arith.constant 0 : index
    %46 = vector.load %arg14[%c0_36, %c0_37] : memref<1x256xf32, #tpu.memory_space<vmem>>, vector<1x256xf32>
    %47 = vector.broadcast %46 : vector<1x256xf32> to vector<512x256xf32>
    %48 = arith.addf %45, %47 : vector<512x256xf32>
    %cst_38 = arith.constant 0.000000e+00 : f32
    %49 = vector.broadcast %cst_38 : f32 to vector<512x256xf32>
    %50 = arith.maximumf %48, %49 : vector<512x256xf32>
    %51 = arith.truncf %50 : vector<512x256xf32> to vector<512x256xbf16>
    %c0_39 = arith.constant 0 : index
    %c0_40 = arith.constant 0 : index
    %52 = vector.load %arg15[%c0_39, %c0_40] : memref<256x256xbf16, #tpu.memory_space<vmem>>, vector<256x256xbf16>
    %cst_41 = arith.constant dense<0.000000e+00> : vector<512x256xf32>
    %53 = tpu.matmul %51, %52, %cst_41 {dimension_numbers = #tpu.dot_dimension_numbers<[1], [0], [0], [1], [0, 0, 1, 1], [], []>} : vector<512x256xbf16>, vector<256x256xbf16>, vector<512x256xf32> -> vector<512x256xf32>
    %c0_42 = arith.constant 0 : index
    %c0_43 = arith.constant 0 : index
    %54 = vector.load %arg16[%c0_42, %c0_43] : memref<1x256xf32, #tpu.memory_space<vmem>>, vector<1x256xf32>
    %55 = vector.broadcast %54 : vector<1x256xf32> to vector<512x256xf32>
    %56 = arith.addf %53, %55 : vector<512x256xf32>
    %cst_44 = arith.constant 0.000000e+00 : f32
    %57 = vector.broadcast %cst_44 : f32 to vector<512x256xf32>
    %58 = arith.maximumf %56, %57 : vector<512x256xf32>
    %59 = arith.truncf %58 : vector<512x256xf32> to vector<512x256xbf16>
    %c0_45 = arith.constant 0 : index
    %c0_46 = arith.constant 0 : index
    %60 = vector.load %arg17[%c0_45, %c0_46] : memref<256x256xbf16, #tpu.memory_space<vmem>>, vector<256x256xbf16>
    %cst_47 = arith.constant dense<0.000000e+00> : vector<512x256xf32>
    %61 = tpu.matmul %59, %60, %cst_47 {dimension_numbers = #tpu.dot_dimension_numbers<[1], [0], [0], [1], [0, 0, 1, 1], [], []>} : vector<512x256xbf16>, vector<256x256xbf16>, vector<512x256xf32> -> vector<512x256xf32>
    %c0_48 = arith.constant 0 : index
    %c0_49 = arith.constant 0 : index
    %62 = vector.load %arg18[%c0_48, %c0_49] : memref<1x256xf32, #tpu.memory_space<vmem>>, vector<1x256xf32>
    %63 = vector.broadcast %62 : vector<1x256xf32> to vector<512x256xf32>
    %64 = arith.addf %61, %63 : vector<512x256xf32>
    %cst_50 = arith.constant 0.000000e+00 : f32
    %65 = vector.broadcast %cst_50 : f32 to vector<512x256xf32>
    %66 = arith.maximumf %64, %65 : vector<512x256xf32>
    %67 = arith.truncf %66 : vector<512x256xf32> to vector<512x256xbf16>
    %c0_51 = arith.constant 0 : index
    %c0_52 = arith.constant 0 : index
    %68 = vector.load %arg19[%c0_51, %c0_52] : memref<256x16xbf16, #tpu.memory_space<vmem>>, vector<256x16xbf16>
    %cst_53 = arith.constant dense<0.000000e+00> : vector<512x16xf32>
    %69 = tpu.matmul %67, %68, %cst_53 {dimension_numbers = #tpu.dot_dimension_numbers<[1], [0], [0], [1], [0, 0, 1, 1], [], []>} : vector<512x256xbf16>, vector<256x16xbf16>, vector<512x16xf32> -> vector<512x16xf32>
    %c0_54 = arith.constant 0 : index
    %c0_55 = arith.constant 0 : index
    %70 = vector.load %arg20[%c0_54, %c0_55] : memref<1x16xf32, #tpu.memory_space<vmem>>, vector<1x16xf32>
    %71 = vector.broadcast %70 : vector<1x16xf32> to vector<512x16xf32>
    %72 = arith.addf %69, %71 : vector<512x16xf32>
    %c0_56 = arith.constant 0 : index
    %c0_57 = arith.constant 0 : index
    %73 = vector.load %arg21[%c0_56, %c0_57] : memref<512x16xf32, #tpu.memory_space<vmem>>, vector<512x16xf32>
    tpu.vector_store %arg21[%c0_56, %c0_57], %72 {strides = array<i32>} : memref<512x16xf32, #tpu.memory_space<vmem>>, vector<512x16xf32>,
    return
  }
  func.func @transform_0(%arg0: i32) -> (i32, i32) {
    %c0_i32 = arith.constant 0 : i32
    %c0_i32_0 = arith.constant 0 : i32
    return %arg0, %c0_i32 : i32, i32
  }
  func.func @transform_1(%arg0: i32) -> (i32, i32) {
    %c0_i32 = arith.constant 0 : i32
    %c0_i32_0 = arith.constant 0 : i32
    %c0_i32_1 = arith.constant 0 : i32
    return %c0_i32, %c0_i32_0 : i32, i32
  }
  func.func @transform_2(%arg0: i32) -> (i32, i32) {
    %c0_i32 = arith.constant 0 : i32
    %c0_i32_0 = arith.constant 0 : i32
    %c0_i32_1 = arith.constant 0 : i32
    return %c0_i32, %c0_i32_0 : i32, i32
  }
  func.func @transform_3(%arg0: i32) -> (i32, i32) {
    %c0_i32 = arith.constant 0 : i32
    %c0_i32_0 = arith.constant 0 : i32
    %c0_i32_1 = arith.constant 0 : i32
    return %c0_i32, %c0_i32_0 : i32, i32
  }
  func.func @transform_4(%arg0: i32) -> (i32, i32) {
    %c0_i32 = arith.constant 0 : i32
    %c0_i32_0 = arith.constant 0 : i32
    %c0_i32_1 = arith.constant 0 : i32
    return %c0_i32, %c0_i32_0 : i32, i32
  }
  func.func @transform_5(%arg0: i32) -> (i32, i32) {
    %c0_i32 = arith.constant 0 : i32
    %c0_i32_0 = arith.constant 0 : i32
    %c0_i32_1 = arith.constant 0 : i32
    return %c0_i32, %c0_i32_0 : i32, i32
  }
  func.func @transform_6(%arg0: i32) -> (i32, i32) {
    %c0_i32 = arith.constant 0 : i32
    %c0_i32_0 = arith.constant 0 : i32
    %c0_i32_1 = arith.constant 0 : i32
    return %c0_i32, %c0_i32_0 : i32, i32
  }
  func.func @transform_7(%arg0: i32) -> (i32, i32) {
    %c0_i32 = arith.constant 0 : i32
    %c0_i32_0 = arith.constant 0 : i32
    %c0_i32_1 = arith.constant 0 : i32
    return %c0_i32, %c0_i32_0 : i32, i32
  }
  func.func @transform_8(%arg0: i32) -> (i32, i32) {
    %c0_i32 = arith.constant 0 : i32
    %c0_i32_0 = arith.constant 0 : i32
    %c0_i32_1 = arith.constant 0 : i32
    return %c0_i32, %c0_i32_0 : i32, i32
  }
  func.func @transform_9(%arg0: i32) -> (i32, i32) {
    %c0_i32 = arith.constant 0 : i32
    %c0_i32_0 = arith.constant 0 : i32
    %c0_i32_1 = arith.constant 0 : i32
    return %c0_i32, %c0_i32_0 : i32, i32
  }
  func.func @transform_10(%arg0: i32) -> (i32, i32) {
    %c0_i32 = arith.constant 0 : i32
    %c0_i32_0 = arith.constant 0 : i32
    %c0_i32_1 = arith.constant 0 : i32
    return %c0_i32, %c0_i32_0 : i32, i32
  }
  func.func @transform_11(%arg0: i32) -> (i32, i32) {
    %c0_i32 = arith.constant 0 : i32
    %c0_i32_0 = arith.constant 0 : i32
    %c0_i32_1 = arith.constant 0 : i32
    return %c0_i32, %c0_i32_0 : i32, i32
  }
  func.func @transform_12(%arg0: i32) -> (i32, i32) {
    %c0_i32 = arith.constant 0 : i32
    %c0_i32_0 = arith.constant 0 : i32
    %c0_i32_1 = arith.constant 0 : i32
    return %c0_i32, %c0_i32_0 : i32, i32
  }
  func.func @transform_13(%arg0: i32) -> (i32, i32) {
    %c0_i32 = arith.constant 0 : i32
    %c0_i32_0 = arith.constant 0 : i32
    %c0_i32_1 = arith.constant 0 : i32
    return %c0_i32, %c0_i32_0 : i32, i32
  }
  func.func @transform_14(%arg0: i32) -> (i32, i32) {
    %c0_i32 = arith.constant 0 : i32
    %c0_i32_0 = arith.constant 0 : i32
    %c0_i32_1 = arith.constant 0 : i32
    return %c0_i32, %c0_i32_0 : i32, i32
  }
  func.func @transform_15(%arg0: i32) -> (i32, i32) {
    %c0_i32 = arith.constant 0 : i32
    %c0_i32_0 = arith.constant 0 : i32
    %c0_i32_1 = arith.constant 0 : i32
    return %c0_i32, %c0_i32_0 : i32, i32
  }
  func.func @transform_16(%arg0: i32) -> (i32, i32) {
    %c0_i32 = arith.constant 0 : i32
    %c0_i32_0 = arith.constant 0 : i32
    %c0_i32_1 = arith.constant 0 : i32
    return %c0_i32, %c0_i32_0 : i32, i32
  }
  func.func @transform_17(%arg0: i32) -> (i32, i32) {
    %c0_i32 = arith.constant 0 : i32
    %c0_i32_0 = arith.constant 0 : i32
    %c0_i32_1 = arith.constant 0 : i32
    return %c0_i32, %c0_i32_0 : i32, i32
  }
  func.func @transform_18(%arg0: i32) -> (i32, i32) {
    %c0_i32 = arith.constant 0 : i32
    %c0_i32_0 = arith.constant 0 : i32
    %c0_i32_1 = arith.constant 0 : i32
    return %c0_i32, %c0_i32_0 : i32, i32
  }
  func.func @transform_19(%arg0: i32) -> (i32, i32) {
    %c0_i32 = arith.constant 0 : i32
    %c0_i32_0 = arith.constant 0 : i32
    %c0_i32_1 = arith.constant 0 : i32
    return %c0_i32, %c0_i32_0 : i32, i32
  }
  func.func @transform_20(%arg0: i32) -> (i32, i32) {
    %c0_i32 = arith.constant 0 : i32
    %c0_i32_0 = arith.constant 0 : i32
    return %arg0, %c0_i32 : i32, i32
  }
}

</mosaic_0001>

<llo_original>
// kernel: conditional_deform_forward.1
$region0: #{conditional_deform_forward.1}
  #allocation0 [shape = 'u32[]', space=smem, size = 0x4, offset = 0x4, fixed_abs, tag = 'smem constant byte address 0x4 - core index']
  #allocation1 [shape = 'u32[144,128]{1,0:T(1,128)}', space=vmem, size = 0x12000, scoped, tag = 'internal scratch']
  %s0 = inlined_call_operand.vmem [shape: bf16[1024,128], index: 0, kind: input, shape index: {}]
  %s1 = inlined_call_operand.vmem [shape: bf16[128,256], index: 1, kind: input, shape index: {}]
  %s2 = inlined_call_operand.vmem [shape: f32[1,256], index: 2, kind: input, shape index: {}]
  %s3 = inlined_call_operand.vmem [shape: bf16[256,256], index: 3, kind: input, shape index: {}]
  %s4 = inlined_call_operand.vmem [shape: f32[1,256], index: 4, kind: input, shape index: {}]
  %s5 = inlined_call_operand.vmem [shape: bf16[256,256], index: 5, kind: input, shape index: {}]
  %s6 = inlined_call_operand.vmem [shape: f32[1,256], index: 6, kind: input, shape index: {}]
  %s7 = inlined_call_operand.vmem [shape: bf16[256,256], index: 7, kind: input, shape index: {}]
  %s8 = inlined_call_operand.vmem [shape: f32[1,256], index: 8, kind: input, shape index: {}]
  %s9 = inlined_call_operand.vmem [shape: bf16[256,256], index: 9, kind: input, shape index: {}]
  %s10 = inlined_call_operand.vmem [shape: f32[1,256], index: 10, kind: input, shape index: {}]
  %s11 = inlined_call_operand.vmem [shape: bf16[128,256], index: 11, kind: input, shape index: {}]
  %s12 = inlined_call_operand.vmem [shape: bf16[256,256], index: 12, kind: input, shape index: {}]
  %s13 = inlined_call_operand.vmem [shape: f32[1,256], index: 13, kind: input, shape index: {}]
  %s14 = inlined_call_operand.vmem [shape: bf16[256,256], index: 14, kind: input, shape index: {}]
  %s15 = inlined_call_operand.vmem [shape: f32[1,256], index: 15, kind: input, shape index: {}]
  %s16 = inlined_call_operand.vmem [shape: bf16[256,256], index: 16, kind: input, shape index: {}]
  %s17 = inlined_call_operand.vmem [shape: f32[1,256], index: 17, kind: input, shape index: {}]
  %s18 = inlined_call_operand.vmem [shape: bf16[256,16], index: 18, kind: input, shape index: {}]
  %s19 = inlined_call_operand.vmem [shape: f32[1,16], index: 19, kind: input, shape index: {}]
  %s20 = inlined_call_operand.vmem [shape: f32[1024,16], index: 20, kind: output, shape index: {}]
  %s21 = sld [smem:[#allocation0]]
  $region113: #{conditional_deform_forward.1} parent=0
    _
  %s23 = ssub.s32 1, %s21
  %s24 = scalar_select 0, %s23, %s21
  loop: start=0, step=1, limit=4
  $region2: #{conditional_deform_forward.1} parent=0 // loop_pre_header
    _
  $region3: #{conditional_deform_forward.1} parent=0 // loop_header
    %s26 = sphi 0, %s30
    %p27 = scmp.ge.s32.totalorder %s26, 4
    %s36 = sphi 0, %s38
    %s39 = sphi 0, %s36
    %s40 = sphi 0, %s39
    %s56 = sphi 0, %s40
    %s60 = sphi 0, %s60
    %s62 = sphi 0, %s60
    %s63 = sphi 0, %s62
    %s77 = sphi 0, %s63
    %s81 = sphi 0, %s81
    %s83 = sphi 0, %s81
    %s84 = sphi 0, %s83
    %s98 = sphi 0, %s84
    %s102 = sphi 0, %s102
    %s104 = sphi 0, %s102
    %s105 = sphi 0, %s104
    %s119 = sphi 0, %s105
    %s123 = sphi 0, %s123
    %s125 = sphi 0, %s123
    %s126 = sphi 0, %s125
    %s140 = sphi 0, %s126
    %s144 = sphi 0, %s144
    %s146 = sphi 0, %s144
    %s147 = sphi 0, %s146
    %s161 = sphi 0, %s147
    %s165 = sphi 0, %s165
    %s167 = sphi 0, %s165
    %s168 = sphi 0, %s167
    %s182 = sphi 0, %s168
    %s186 = sphi 0, %s186
    %s188 = sphi 0, %s186
    %s189 = sphi 0, %s188
    %s203 = sphi 0, %s189
    %s207 = sphi 0, %s207
    %s209 = sphi 0, %s207
    %s210 = sphi 0, %s209
    %s224 = sphi 0, %s210
    %s228 = sphi 0, %s228
    %s230 = sphi 0, %s228
    %s231 = sphi 0, %s230
    %s245 = sphi 0, %s231
    %s249 = sphi 0, %s249
    %s251 = sphi 0, %s249
    %s252 = sphi 0, %s251
    %s266 = sphi 0, %s252
    %s270 = sphi 0, %s270
    %s272 = sphi 0, %s270
    %s273 = sphi 0, %s272
    %s287 = sphi 0, %s273
    %s291 = sphi 0, %s291
    %s293 = sphi 0, %s291
    %s294 = sphi 0, %s293
    %s308 = sphi 0, %s294
    %s312 = sphi 0, %s312
    %s314 = sphi 0, %s312
    %s315 = sphi 0, %s314
    %s329 = sphi 0, %s315
    %s333 = sphi 0, %s333
    %s335 = sphi 0, %s333
    %s336 = sphi 0, %s335
    %s350 = sphi 0, %s336
    %s354 = sphi 0, %s354
    %s356 = sphi 0, %s354
    %s357 = sphi 0, %s356
    %s371 = sphi 0, %s357
    %s375 = sphi 0, %s375
    %s377 = sphi 0, %s375
    %s378 = sphi 0, %s377
    %s392 = sphi 0, %s378
    %s396 = sphi 0, %s396
    %s398 = sphi 0, %s396
    %s399 = sphi 0, %s398
    %s413 = sphi 0, %s399
    %s417 = sphi 0, %s417
    %s419 = sphi 0, %s417
    %s420 = sphi 0, %s419
    %s434 = sphi 0, %s420
    %s438 = sphi 0, %s438
    %s440 = sphi 0, %s438
    %s441 = sphi 0, %s440
    %s455 = sphi 0, %s441
    %s461 = sphi 0, %s463
    %s464 = sphi 0, %s461
    %s465 = sphi 0, %s464
    %s481 = sphi 0, %s465
  $region4: #{conditional_deform_forward.1} parent=0 // loop_header_branch
    %29 = sbr.rel (%p27) target = $region8
  $region5: #{conditional_deform_forward.1} parent=0 // loop_body
    %s31 = ssub.s32 %s26, 1
    %s32 = ssub.s32 %s26, 2
    %s33 = sadd.s32 %s26, 1
    %s34 = ssub.s32 %s26, %s33
    %p35 = scmp.eq.s32.totalorder %s34, 0
    %s37 = sadd.s32 %s36, 1
    %s38 = scalar_select %p35, %s36, %s37
    %p41 = pneg %p35
    %p42 = scmp.eq.s32.totalorder %s26, 1
    %p43 = por %p41, %p42
    %p44 = scmp.ne.s32.totalorder %s36, %s39
    %p45 = scmp.eq.s32.totalorder %s26, 0
    %p46 = por %p44, %p45
    %p47 = scmp.ne.s32.totalorder %s36, %s39
    %p48 = scmp.eq.s32.totalorder %s31, 1
    %p49 = por %p47, %p48
    %p50 = scmp.ne.s32.totalorder %s39, %s40
    %p51 = scmp.eq.s32.totalorder %s31, 0
    %p52 = por %p50, %p51
    %p53 = scmp.ne.s32.totalorder %s39, %s40
    %p54 = scmp.eq.s32.totalorder %s32, 1
    %p55 = por %p53, %p54
    %p57 = scmp.ne.s32.totalorder %s40, %s56
    %p58 = scmp.eq.s32.totalorder %s32, 0
    %p59 = por %p57, %p58
    %s61 = sadd.s32 %s60, 1
    %p64 = scmp.eq.s32.totalorder %s26, 1
    %p65 = scmp.ne.s32.totalorder %s60, %s62
    %p66 = scmp.eq.s32.totalorder %s26, 0
    %p67 = por %p65, %p66
    %p68 = scmp.ne.s32.totalorder %s60, %s62
    %p69 = scmp.eq.s32.totalorder %s31, 1
    %p70 = por %p68, %p69
    %p71 = scmp.ne.s32.totalorder %s62, %s63
    %p72 = scmp.eq.s32.totalorder %s31, 0
    %p73 = por %p71, %p72
    %p74 = scmp.ne.s32.totalorder %s62, %s63
    %p75 = scmp.eq.s32.totalorder %s32, 1
    %p76 = por %p74, %p75
    %p78 = scmp.ne.s32.totalorder %s63, %s77
    %p79 = scmp.eq.s32.totalorder %s32, 0
    %p80 = por %p78, %p79
    %s82 = sadd.s32 %s81, 1
    %p85 = scmp.eq.s32.totalorder %s26, 1
    %p86 = scmp.ne.s32.totalorder %s81, %s83
    %p87 = scmp.eq.s32.totalorder %s26, 0
    %p88 = por %p86, %p87
    %p89 = scmp.ne.s32.totalorder %s81, %s83
    %p90 = scmp.eq.s32.totalorder %s31, 1
    %p91 = por %p89, %p90
    %p92 = scmp.ne.s32.totalorder %s83, %s84
    %p93 = scmp.eq.s32.totalorder %s31, 0
    %p94 = por %p92, %p93
    %p95 = scmp.ne.s32.totalorder %s83, %s84
    %p96 = scmp.eq.s32.totalorder %s32, 1
    %p97 = por %p95, %p96
    %p99 = scmp.ne.s32.totalorder %s84, %s98
    %p100 = scmp.eq.s32.totalorder %s32, 0
    %p101 = por %p99, %p100
    %s103 = sadd.s32 %s102, 1
    %p106 = scmp.eq.s32.totalorder %s26, 1
    %p107 = scmp.ne.s32.totalorder %s102, %s104
    %p108 = scmp.eq.s32.totalorder %s26, 0
    %p109 = por %p107, %p108
    %p110 = scmp.ne.s32.totalorder %s102, %s104
    %p111 = scmp.eq.s32.totalorder %s31, 1
    %p112 = por %p110, %p111
    %p113 = scmp.ne.s32.totalorder %s104, %s105
    %p114 = scmp.eq.s32.totalorder %s31, 0
    %p115 = por %p113, %p114
    %p116 = scmp.ne.s32.totalorder %s104, %s105
    %p117 = scmp.eq.s32.totalorder %s32, 1
    %p118 = por %p116, %p117
    %p120 = scmp.ne.s32.totalorder %s105, %s119
    %p121 = scmp.eq.s32.totalorder %s32, 0
    %p122 = por %p120, %p121
    %s124 = sadd.s32 %s123, 1
    %p127 = scmp.eq.s32.totalorder %s26, 1
    %p128 = scmp.ne.s32.totalorder %s123, %s125
    %p129 = scmp.eq.s32.totalorder %s26, 0
    %p130 = por %p128, %p129
    %p131 = scmp.ne.s32.totalorder %s123, %s125
    %p132 = scmp.eq.s32.totalorder %s31, 1
    %p133 = por %p131, %p132
    %p134 = scmp.ne.s32.totalorder %s125, %s126
    %p135 = scmp.eq.s32.totalorder %s31, 0
    %p136 = por %p134, %p135
    %p137 = scmp.ne.s32.totalorder %s125, %s126
    %p138 = scmp.eq.s32.totalorder %s32, 1
    %p139 = por %p137, %p138
    %p141 = scmp.ne.s32.totalorder %s126, %s140
    %p142 = scmp.eq.s32.totalorder %s32, 0
    %p143 = por %p141, %p142
    %s145 = sadd.s32 %s144, 1
    %p148 = scmp.eq.s32.totalorder %s26, 1
    %p149 = scmp.ne.s32.totalorder %s144, %s146
    %p150 = scmp.eq.s32.totalorder %s26, 0
    %p151 = por %p149, %p150
    %p152 = scmp.ne.s32.totalorder %s144, %s146
    %p153 = scmp.eq.s32.totalorder %s31, 1
    %p154 = por %p152, %p153
    %p155 = scmp.ne.s32.totalorder %s146, %s147
    %p156 = scmp.eq.s32.totalorder %s31, 0
    %p157 = por %p155, %p156
    %p158 = scmp.ne.s32.totalorder %s146, %s147
    %p159 = scmp.eq.s32.totalorder %s32, 1
    %p160 = por %p158, %p159
    %p162 = scmp.ne.s32.totalorder %s147, %s161
    %p163 = scmp.eq.s32.totalorder %s32, 0
    %p164 = por %p162, %p163
    %s166 = sadd.s32 %s165, 1
    %p169 = scmp.eq.s32.totalorder %s26, 1
    %p170 = scmp.ne.s32.totalorder %s165, %s167
    %p171 = scmp.eq.s32.totalorder %s26, 0
    %p172 = por %p170, %p171
    %p173 = scmp.ne.s32.totalorder %s165, %s167
    %p174 = scmp.eq.s32.totalorder %s31, 1
    %p175 = por %p173, %p174
    %p176 = scmp.ne.s32.totalorder %s167, %s168
    %p177 = scmp.eq.s32.totalorder %s31, 0
    %p178 = por %p176, %p177
    %p179 = scmp.ne.s32.totalorder %s167, %s168
    %p180 = scmp.eq.s32.totalorder %s32, 1
    %p181 = por %p179, %p180
    %p183 = scmp.ne.s32.totalorder %s168, %s182
    %p184 = scmp.eq.s32.totalorder %s32, 0
    %p185 = por %p183, %p184
    %s187 = sadd.s32 %s186, 1
    %p190 = scmp.eq.s32.totalorder %s26, 1
    %p191 = scmp.ne.s32.totalorder %s186, %s188
    %p192 = scmp.eq.s32.totalorder %s26, 0
    %p193 = por %p191, %p192
    %p194 = scmp.ne.s32.totalorder %s186, %s188
    %p195 = scmp.eq.s32.totalorder %s31, 1
    %p196 = por %p194, %p195
    %p197 = scmp.ne.s32.totalorder %s188, %s189
    %p198 = scmp.eq.s32.totalorder %s31, 0
    %p199 = por %p197, %p198
    %p200 = scmp.ne.s32.totalorder %s188, %s189
    %p201 = scmp.eq.s32.totalorder %s32, 1
    %p202 = por %p200, %p201
    %p204 = scmp.ne.s32.totalorder %s189, %s203
    %p205 = scmp.eq.s32.totalorder %s32, 0
    %p206 = por %p204, %p205
    %s208 = sadd.s32 %s207, 1
    %p211 = scmp.eq.s32.totalorder %s26, 1
    %p212 = scmp.ne.s32.totalorder %s207, %s209
    %p213 = scmp.eq.s32.totalorder %s26, 0
    %p214 = por %p212, %p213
    %p215 = scmp.ne.s32.totalorder %s207, %s209
    %p216 = scmp.eq.s32.totalorder %s31, 1
    %p217 = por %p215, %p216
    %p218 = scmp.ne.s32.totalorder %s209, %s210
    %p219 = scmp.eq.s32.totalorder %s31, 0
    %p220 = por %p218, %p219
    %p221 = scmp.ne.s32.totalorder %s209, %s210
    %p222 = scmp.eq.s32.totalorder %s32, 1
    %p223 = por %p221, %p222
    %p225 = scmp.ne.s32.totalorder %s210, %s224
    %p226 = scmp.eq.s32.totalorder %s32, 0
    %p227 = por %p225, %p226
    %s229 = sadd.s32 %s228, 1
    %p232 = scmp.eq.s32.totalorder %s26, 1
    %p233 = scmp.ne.s32.totalorder %s228, %s230
    %p234 = scmp.eq.s32.totalorder %s26, 0
    %p235 = por %p233, %p234
    %p236 = scmp.ne.s32.totalorder %s228, %s230
    %p237 = scmp.eq.s32.totalorder %s31, 1
    %p238 = por %p236, %p237
    %p239 = scmp.ne.s32.totalorder %s230, %s231
    %p240 = scmp.eq.s32.totalorder %s31, 0
    %p241 = por %p239, %p240
    %p242 = scmp.ne.s32.totalorder %s230, %s231
    %p243 = scmp.eq.s32.totalorder %s32, 1
    %p244 = por %p242, %p243
    %p246 = scmp.ne.s32.totalorder %s231, %s245
    %p247 = scmp.eq.s32.totalorder %s32, 0
    %p248 = por %p246, %p247
    %s250 = sadd.s32 %s249, 1
    %p253 = scmp.eq.s32.totalorder %s26, 1
    %p254 = scmp.ne.s32.totalorder %s249, %s251
    %p255 = scmp.eq.s32.totalorder %s26, 0
    %p256 = por %p254, %p255
    %p257 = scmp.ne.s32.totalorder %s249, %s251
    %p258 = scmp.eq.s32.totalorder %s31, 1
    %p259 = por %p257, %p258
    %p260 = scmp.ne.s32.totalorder %s251, %s252
    %p261 = scmp.eq.s32.totalorder %s31, 0
    %p262 = por %p260, %p261
    %p263 = scmp.ne.s32.totalorder %s251, %s252
    %p264 = scmp.eq.s32.totalorder %s32, 1
    %p265 = por %p263, %p264
    %p267 = scmp.ne.s32.totalorder %s252, %s266
    %p268 = scmp.eq.s32.totalorder %s32, 0
    %p269 = por %p267, %p268
    %s271 = sadd.s32 %s270, 1
    %p274 = scmp.eq.s32.totalorder %s26, 1
    %p275 = scmp.ne.s32.totalorder %s270, %s272
    %p276 = scmp.eq.s32.totalorder %s26, 0
    %p277 = por %p275, %p276
    %p278 = scmp.ne.s32.totalorder %s270, %s272
    %p279 = scmp.eq.s32.totalorder %s31, 1
    %p280 = por %p278, %p279
    %p281 = scmp.ne.s32.totalorder %s272, %s273
    %p282 = scmp.eq.s32.totalorder %s31, 0
    %p283 = por %p281, %p282
    %p284 = scmp.ne.s32.totalorder %s272, %s273
    %p285 = scmp.eq.s32.totalorder %s32, 1
    %p286 = por %p284, %p285
    %p288 = scmp.ne.s32.totalorder %s273, %s287
    %p289 = scmp.eq.s32.totalorder %s32, 0
    %p290 = por %p288, %p289
    %s292 = sadd.s32 %s291, 1
    %p295 = scmp.eq.s32.totalorder %s26, 1
    %p296 = scmp.ne.s32.totalorder %s291, %s293
    %p297 = scmp.eq.s32.totalorder %s26, 0
    %p298 = por %p296, %p297
    %p299 = scmp.ne.s32.totalorder %s291, %s293
    %p300 = scmp.eq.s32.totalorder %s31, 1
    %p301 = por %p299, %p300
    %p302 = scmp.ne.s32.totalorder %s293, %s294
    %p303 = scmp.eq.s32.totalorder %s31, 0
    %p304 = por %p302, %p303
    %p305 = scmp.ne.s32.totalorder %s293, %s294
    %p306 = scmp.eq.s32.totalorder %s32, 1
    %p307 = por %p305, %p306
    %p309 = scmp.ne.s32.totalorder %s294, %s308
    %p310 = scmp.eq.s32.totalorder %s32, 0
    %p311 = por %p309, %p310
    %s313 = sadd.s32 %s312, 1
    %p316 = scmp.eq.s32.totalorder %s26, 1
    %p317 = scmp.ne.s32.totalorder %s312, %s314
    %p318 = scmp.eq.s32.totalorder %s26, 0
    %p319 = por %p317, %p318
    %p320 = scmp.ne.s32.totalorder %s312, %s314
    %p321 = scmp.eq.s32.totalorder %s31, 1
    %p322 = por %p320, %p321
    %p323 = scmp.ne.s32.totalorder %s314, %s315
    %p324 = scmp.eq.s32.totalorder %s31, 0
    %p325 = por %p323, %p324
    %p326 = scmp.ne.s32.totalorder %s314, %s315
    %p327 = scmp.eq.s32.totalorder %s32, 1
    %p328 = por %p326, %p327
    %p330 = scmp.ne.s32.totalorder %s315, %s329
    %p331 = scmp.eq.s32.totalorder %s32, 0
    %p332 = por %p330, %p331
    %s334 = sadd.s32 %s333, 1
    %p337 = scmp.eq.s32.totalorder %s26, 1
    %p338 = scmp.ne.s32.totalorder %s333, %s335
    %p339 = scmp.eq.s32.totalorder %s26, 0
    %p340 = por %p338, %p339
    %p341 = scmp.ne.s32.totalorder %s333, %s335
    %p342 = scmp.eq.s32.totalorder %s31, 1
    %p343 = por %p341, %p342
    %p344 = scmp.ne.s32.totalorder %s335, %s336
    %p345 = scmp.eq.s32.totalorder %s31, 0
    %p346 = por %p344, %p345
    %p347 = scmp.ne.s32.totalorder %s335, %s336
    %p348 = scmp.eq.s32.totalorder %s32, 1
    %p349 = por %p347, %p348
    %p351 = scmp.ne.s32.totalorder %s336, %s350
    %p352 = scmp.eq.s32.totalorder %s32, 0
    %p353 = por %p351, %p352
    %s355 = sadd.s32 %s354, 1
    %p358 = scmp.eq.s32.totalorder %s26, 1
    %p359 = scmp.ne.s32.totalorder %s354, %s356
    %p360 = scmp.eq.s32.totalorder %s26, 0
    %p361 = por %p359, %p360
    %p362 = scmp.ne.s32.totalorder %s354, %s356
    %p363 = scmp.eq.s32.totalorder %s31, 1
    %p364 = por %p362, %p363
    %p365 = scmp.ne.s32.totalorder %s356, %s357
    %p366 = scmp.eq.s32.totalorder %s31, 0
    %p367 = por %p365, %p366
    %p368 = scmp.ne.s32.totalorder %s356, %s357
    %p369 = scmp.eq.s32.totalorder %s32, 1
    %p370 = por %p368, %p369
    %p372 = scmp.ne.s32.totalorder %s357, %s371
    %p373 = scmp.eq.s32.totalorder %s32, 0
    %p374 = por %p372, %p373
    %s376 = sadd.s32 %s375, 1
    %p379 = scmp.eq.s32.totalorder %s26, 1
    %p380 = scmp.ne.s32.totalorder %s375, %s377
    %p381 = scmp.eq.s32.totalorder %s26, 0
    %p382 = por %p380, %p381
    %p383 = scmp.ne.s32.totalorder %s375, %s377
    %p384 = scmp.eq.s32.totalorder %s31, 1
    %p385 = por %p383, %p384
    %p386 = scmp.ne.s32.totalorder %s377, %s378
    %p387 = scmp.eq.s32.totalorder %s31, 0
    %p388 = por %p386, %p387
    %p389 = scmp.ne.s32.totalorder %s377, %s378
    %p390 = scmp.eq.s32.totalorder %s32, 1
    %p391 = por %p389, %p390
    %p393 = scmp.ne.s32.totalorder %s378, %s392
    %p394 = scmp.eq.s32.totalorder %s32, 0
    %p395 = por %p393, %p394
    %s397 = sadd.s32 %s396, 1
    %p400 = scmp.eq.s32.totalorder %s26, 1
    %p401 = scmp.ne.s32.totalorder %s396, %s398
    %p402 = scmp.eq.s32.totalorder %s26, 0
    %p403 = por %p401, %p402
    %p404 = scmp.ne.s32.totalorder %s396, %s398
    %p405 = scmp.eq.s32.totalorder %s31, 1
    %p406 = por %p404, %p405
    %p407 = scmp.ne.s32.totalorder %s398, %s399
    %p408 = scmp.eq.s32.totalorder %s31, 0
    %p409 = por %p407, %p408
    %p410 = scmp.ne.s32.totalorder %s398, %s399
    %p411 = scmp.eq.s32.totalorder %s32, 1
    %p412 = por %p410, %p411
    %p414 = scmp.ne.s32.totalorder %s399, %s413
    %p415 = scmp.eq.s32.totalorder %s32, 0
    %p416 = por %p414, %p415
    %s418 = sadd.s32 %s417, 1
    %p421 = scmp.eq.s32.totalorder %s26, 1
    %p422 = scmp.ne.s32.totalorder %s417, %s419
    %p423 = scmp.eq.s32.totalorder %s26, 0
    %p424 = por %p422, %p423
    %p425 = scmp.ne.s32.totalorder %s417, %s419
    %p426 = scmp.eq.s32.totalorder %s31, 1
    %p427 = por %p425, %p426
    %p428 = scmp.ne.s32.totalorder %s419, %s420
    %p429 = scmp.eq.s32.totalorder %s31, 0
    %p430 = por %p428, %p429
    %p431 = scmp.ne.s32.totalorder %s419, %s420
    %p432 = scmp.eq.s32.totalorder %s32, 1
    %p433 = por %p431, %p432
    %p435 = scmp.ne.s32.totalorder %s420, %s434
    %p436 = scmp.eq.s32.totalorder %s32, 0
    %p437 = por %p435, %p436
    %s439 = sadd.s32 %s438, 1
    %p442 = scmp.eq.s32.totalorder %s26, 1
    %p443 = scmp.ne.s32.totalorder %s438, %s440
    %p444 = scmp.eq.s32.totalorder %s26, 0
    %p445 = por %p443, %p444
    %p446 = scmp.ne.s32.totalorder %s438, %s440
    %p447 = scmp.eq.s32.totalorder %s31, 1
    %p448 = por %p446, %p447
    %p449 = scmp.ne.s32.totalorder %s440, %s441
    %p450 = scmp.eq.s32.totalorder %s31, 0
    %p451 = por %p449, %p450
    %p452 = scmp.ne.s32.totalorder %s440, %s441
    %p453 = scmp.eq.s32.totalorder %s32, 1
    %p454 = por %p452, %p453
    %p456 = scmp.ne.s32.totalorder %s441, %s455
    %p457 = scmp.eq.s32.totalorder %s32, 0
    %p458 = por %p456, %p457
    %s459 = ssub.s32 %s26, %s33
    %p460 = scmp.eq.s32.totalorder %s459, 0
    %s462 = sadd.s32 %s461, 1
    %s463 = scalar_select %p460, %s461, %s462
    %p466 = pneg %p460
    %p467 = scmp.eq.s32.totalorder %s26, 1
    %p468 = por %p466, %p467
    %p469 = scmp.ne.s32.totalorder %s461, %s464
    %p470 = scmp.eq.s32.totalorder %s26, 0
    %p471 = por %p469, %p470
    %p472 = scmp.ne.s32.totalorder %s461, %s464
    %p473 = scmp.eq.s32.totalorder %s31, 1
    %p474 = por %p472, %p473
    %p475 = scmp.ne.s32.totalorder %s464, %s465
    %p476 = scmp.eq.s32.totalorder %s31, 0
    %p477 = por %p475, %p476
    %p478 = scmp.ne.s32.totalorder %s464, %s465
    %p479 = scmp.eq.s32.totalorder %s32, 1
    %p480 = por %p478, %p479
    %p482 = scmp.ne.s32.totalorder %s465, %s481
    %p483 = scmp.eq.s32.totalorder %s32, 0
    %p484 = por %p482, %p483
    %p485 = scmp.le.s32.totalorder 1, %s26
    %p486 = scmp.lt.s32.totalorder %s26, 3
    %p487 = pnand %p485, %p486
    %p488 = pneg %p487
    // Predicated region
    $region9: #{conditional_deform_forward.1} parent=5 // pred_check
      _
    $region10: #{conditional_deform_forward.1} parent=5 // pred_check_branch
      %490 = sbr.rel (%p487) target = $region12
    $region11: #{conditional_deform_forward.1} parent=5 // pred_region
      %s491 = ssub.s32 %s26, 1
      // Predicated region
      $region13: #{conditional_deform_forward.1} parent=11 // pred_check
        %p492 = pneg %p73
      $region14: #{conditional_deform_forward.1} parent=11 // pred_check_branch
        %494 = sbr.rel (%p492) target = $region16
      $region15: #{conditional_deform_forward.1} parent=11 // pred_region
        _
      $region16: #{conditional_deform_forward.1} parent=11 // pred_fallthru
        _
      // Predicated region
      $region17: #{conditional_deform_forward.1} parent=11 // pred_check
        %p495 = pneg %p94
      $region18: #{conditional_deform_forward.1} parent=11 // pred_check_branch
        %497 = sbr.rel (%p495) target = $region20
      $region19: #{conditional_deform_forward.1} parent=11 // pred_region
        _
      $region20: #{conditional_deform_forward.1} parent=11 // pred_fallthru
        _
      // Predicated region
      $region21: #{conditional_deform_forward.1} parent=11 // pred_check
        %p498 = pneg %p115
      $region22: #{conditional_deform_forward.1} parent=11 // pred_check_branch
        %500 = sbr.rel (%p498) target = $region24
      $region23: #{conditional_deform_forward.1} parent=11 // pred_region
        _
      $region24: #{conditional_deform_forward.1} parent=11 // pred_fallthru
        _
      // Predicated region
      $region25: #{conditional_deform_forward.1} parent=11 // pred_check
        %p501 = pneg %p136
      $region26: #{conditional_deform_forward.1} parent=11 // pred_check_branch
        %503 = sbr.rel (%p501) target = $region28
      $region27: #{conditional_deform_forward.1} parent=11 // pred_region
        _
      $region28: #{conditional_deform_forward.1} parent=11 // pred_fallthru
        _
      // Predicated region
      $region29: #{conditional_deform_forward.1} parent=11 // pred_check
        %p504 = pneg %p157
      $region30: #{conditional_deform_forward.1} parent=11 // pred_check_branch
        %506 = sbr.rel (%p504) target = $region32
      $region31: #{conditional_deform_forward.1} parent=11 // pred_region
        _
      $region32: #{conditional_deform_forward.1} parent=11 // pred_fallthru
        _
      // Predicated region
      $region33: #{conditional_deform_forward.1} parent=11 // pred_check
        %p507 = pneg %p178
      $region34: #{conditional_deform_forward.1} parent=11 // pred_check_branch
        %509 = sbr.rel (%p507) target = $region36
      $region35: #{conditional_deform_forward.1} parent=11 // pred_region
        _
      $region36: #{conditional_deform_forward.1} parent=11 // pred_fallthru
        _
      // Predicated region
      $region37: #{conditional_deform_forward.1} parent=11 // pred_check
        %p510 = pneg %p199
      $region38: #{conditional_deform_forward.1} parent=11 // pred_check_branch
        %512 = sbr.rel (%p510) target = $region40
      $region39: #{conditional_deform_forward.1} parent=11 // pred_region
        _
      $region40: #{conditional_deform_forward.1} parent=11 // pred_fallthru
        _
      // Predicated region
      $region41: #{conditional_deform_forward.1} parent=11 // pred_check
        %p513 = pneg %p220
      $region42: #{conditional_deform_forward.1} parent=11 // pred_check_branch
        %515 = sbr.rel (%p513) target = $region44
      $region43: #{conditional_deform_forward.1} parent=11 // pred_region
        _
      $region44: #{conditional_deform_forward.1} parent=11 // pred_fallthru
        _
      // Predicated region
      $region45: #{conditional_deform_forward.1} parent=11 // pred_check
        %p516 = pneg %p241
      $region46: #{conditional_deform_forward.1} parent=11 // pred_check_branch
        %518 = sbr.rel (%p516) target = $region48
      $region47: #{conditional_deform_forward.1} parent=11 // pred_region
        _
      $region48: #{conditional_deform_forward.1} parent=11 // pred_fallthru
        _
      // Predicated region
      $region49: #{conditional_deform_forward.1} parent=11 // pred_check
        %p519 = pneg %p262
      $region50: #{conditional_deform_forward.1} parent=11 // pred_check_branch
        %521 = sbr.rel (%p519) target = $region52
      $region51: #{conditional_deform_forward.1} parent=11 // pred_region
        _
      $region52: #{conditional_deform_forward.1} parent=11 // pred_fallthru
        _
      // Predicated region
      $region53: #{conditional_deform_forward.1} parent=11 // pred_check
        %p522 = pneg %p283
      $region54: #{conditional_deform_forward.1} parent=11 // pred_check_branch
        %524 = sbr.rel (%p522) target = $region56
      $region55: #{conditional_deform_forward.1} parent=11 // pred_region
        _
      $region56: #{conditional_deform_forward.1} parent=11 // pred_fallthru
        _
      // Predicated region
      $region57: #{conditional_deform_forward.1} parent=11 // pred_check
        %p525 = pneg %p304
      $region58: #{conditional_deform_forward.1} parent=11 // pred_check_branch
        %527 = sbr.rel (%p525) target = $region60
      $region59: #{conditional_deform_forward.1} parent=11 // pred_region
        _
      $region60: #{conditional_deform_forward.1} parent=11 // pred_fallthru
        _
      // Predicated region
      $region61: #{conditional_deform_forward.1} parent=11 // pred_check
        %p528 = pneg %p325
      $region62: #{conditional_deform_forward.1} parent=11 // pred_check_branch
        %530 = sbr.rel (%p528) target = $region64
      $region63: #{conditional_deform_forward.1} parent=11 // pred_region
        _
      $region64: #{conditional_deform_forward.1} parent=11 // pred_fallthru
        _
      // Predicated region
      $region65: #{conditional_deform_forward.1} parent=11 // pred_check
        %p531 = pneg %p346
      $region66: #{conditional_deform_forward.1} parent=11 // pred_check_branch
        %533 = sbr.rel (%p531) target = $region68
      $region67: #{conditional_deform_forward.1} parent=11 // pred_region
        _
      $region68: #{conditional_deform_forward.1} parent=11 // pred_fallthru
        _
      // Predicated region
      $region69: #{conditional_deform_forward.1} parent=11 // pred_check
        %p534 = pneg %p367
      $region70: #{conditional_deform_forward.1} parent=11 // pred_check_branch
        %536 = sbr.rel (%p534) target = $region72
      $region71: #{conditional_deform_forward.1} parent=11 // pred_region
        _
      $region72: #{conditional_deform_forward.1} parent=11 // pred_fallthru
        _
      // Predicated region
      $region73: #{conditional_deform_forward.1} parent=11 // pred_check
        %p537 = pneg %p388
      $region74: #{conditional_deform_forward.1} parent=11 // pred_check_branch
        %539 = sbr.rel (%p537) target = $region76
      $region75: #{conditional_deform_forward.1} parent=11 // pred_region
        _
      $region76: #{conditional_deform_forward.1} parent=11 // pred_fallthru
        _
      // Predicated region
      $region77: #{conditional_deform_forward.1} parent=11 // pred_check
        %p540 = pneg %p409
      $region78: #{conditional_deform_forward.1} parent=11 // pred_check_branch
        %542 = sbr.rel (%p540) target = $region80
      $region79: #{conditional_deform_forward.1} parent=11 // pred_region
        _
      $region80: #{conditional_deform_forward.1} parent=11 // pred_fallthru
        _
      // Predicated region
      $region81: #{conditional_deform_forward.1} parent=11 // pred_check
        %p543 = pneg %p430
      $region82: #{conditional_deform_forward.1} parent=11 // pred_check_branch
        %545 = sbr.rel (%p543) target = $region84
      $region83: #{conditional_deform_forward.1} parent=11 // pred_region
        _
      $region84: #{conditional_deform_forward.1} parent=11 // pred_fallthru
        _
      // Predicated region
      $region85: #{conditional_deform_forward.1} parent=11 // pred_check
        %p546 = pneg %p451
      $region86: #{conditional_deform_forward.1} parent=11 // pred_check_branch
        %548 = sbr.rel (%p546) target = $region88
      $region87: #{conditional_deform_forward.1} parent=11 // pred_region
        _
      $region88: #{conditional_deform_forward.1} parent=11 // pred_fallthru
        _
    $region12: #{conditional_deform_forward.1} parent=5 // pred_fallthru
      _
    %p549 = scmp.lt.s32.totalorder %s26, 2
    // Predicated region
    $region89: #{conditional_deform_forward.1} parent=5 // pred_check
      %p550 = pneg %p549
    $region90: #{conditional_deform_forward.1} parent=5 // pred_check_branch
      %552 = sbr.rel (%p550) target = $region92
    $region91: #{conditional_deform_forward.1} parent=5 // pred_region
      // Predicated region
      $region93: #{conditional_deform_forward.1} parent=91 // pred_check
        %p553 = pneg %p46
      $region94: #{conditional_deform_forward.1} parent=91 // pred_check_branch
        %555 = sbr.rel (%p553) target = $region96
      $region95: #{conditional_deform_forward.1} parent=91 // pred_region
        %s556 = smul.u32 64, %s26
        %p557 = scmp.lt.s32.totalorder %s556, 127
        %s558 = scalar_select %p557, %s556, 127
        %s559 = smul.addr %s558, 4
        %s560 = scalar_lea.vmem %s0, %s559
        %s561 = smul.u32 64, %s26
      $region96: #{conditional_deform_forward.1} parent=91 // pred_fallthru
        _
    $region92: #{conditional_deform_forward.1} parent=5 // pred_fallthru
      _
    %p562 = scmp.le.s32.totalorder 1, %s26
    %p563 = scmp.lt.s32.totalorder %s26, 3
    %p564 = pnand %p562, %p563
    %p565 = pneg %p564
    // Predicated region
    $region97: #{conditional_deform_forward.1} parent=5 // pred_check
      _
    $region98: #{conditional_deform_forward.1} parent=5 // pred_check_branch
      %567 = sbr.rel (%p564) target = $region100
    $region99: #{conditional_deform_forward.1} parent=5 // pred_region
      %s568 = ssub.s32 %s26, 1
      %s569 = smul.u32 64, %s31
      %p570 = scmp.lt.s32.totalorder %s569, 127
      %s571 = scalar_select %p570, %s569, 127
      %s572 = smul.addr %s571, 4
      %s573 = scalar_lea.vmem %s0, %s572
      %p574 = pneg %p52
      %p575 = pneg %p49
      %p576 = pneg %p73
      %p577 = pneg %p70
      %p578 = pneg %p94
      %p579 = pneg %p91
      %p580 = pneg %p115
      %p581 = pneg %p112
      %p582 = pneg %p136
      %p583 = pneg %p133
      %p584 = pneg %p157
      %p585 = pneg %p154
      %p586 = pneg %p178
      %p587 = pneg %p175
      %p588 = pneg %p199
      %p589 = pneg %p196
      %p590 = pneg %p220
      %p591 = pneg %p217
      %p592 = pneg %p241
      %p593 = pneg %p238
      %p594 = pneg %p262
      %p595 = pneg %p259
      %p596 = pneg %p283
      %p597 = pneg %p280
      %p598 = pneg %p304
      %p599 = pneg %p301
      %p600 = pneg %p325
      %p601 = pneg %p322
      %p602 = pneg %p346
      %p603 = pneg %p343
      %p604 = pneg %p367
      %p605 = pneg %p364
      %p606 = pneg %p388
      %p607 = pneg %p385
      %p608 = pneg %p409
      %p609 = pneg %p406
      %p610 = pneg %p430
      %p611 = pneg %p427
      %p612 = pneg %p451
      %p613 = pneg %p448
      %p614 = pneg %p477
      %p615 = pneg %p474
      %s616 = smul.u32 64, %s31
      %p617 = scmp.lt.s32.totalorder %s616, 127
      %s618 = scalar_select %p617, %s616, 127
      %s619 = smul.addr %s618, 8
      %s620 = scalar_lea.vmem %s20, %s619
      %s621 = smul.u32 64, %s31
      %p622 = scmp.lt.s32.totalorder %s621, 127
      %s623 = scalar_select %p622, %s621, 127
      %s624 = smul.addr %s623, 4
      %s625 = scalar_lea.vmem %s0, %s624
      %s626 = smul.u32 64, %s31
      %s627 = smul.u32 64, %s31
      %p628 = scmp.lt.s32.totalorder %s627, 127
      %s629 = scalar_select %p628, %s627, 127
      %s630 = smul.addr %s629, 8
      %s631 = scalar_lea.vmem %s20, %s630
      %s632 = smul.u32 64, %s31
      %v634 = vld [vmem:[%s625] sm:$0xf]
      %v635 = vld [vmem:[%s625 + $0x4] sm:$0xf]
      %v636 = vld [vmem:[%s625 + $0x8] sm:$0xf]
      %v637 = vld [vmem:[%s625 + $0xc] sm:$0xf]
      %v638 = vld [vmem:[%s625 + $0x10] sm:$0xf]
      %v639 = vld [vmem:[%s625 + $0x14] sm:$0xf]
      %v640 = vld [vmem:[%s625 + $0x18] sm:$0xf]
      %v641 = vld [vmem:[%s625 + $0x1c] sm:$0xf]
      %v642 = vld [vmem:[%s625 + $0x20] sm:$0xf]
      %v643 = vld [vmem:[%s625 + $0x24] sm:$0xf]
      %v644 = vld [vmem:[%s625 + $0x28] sm:$0xf]
      %v645 = vld [vmem:[%s625 + $0x2c] sm:$0xf]
      %v646 = vld [vmem:[%s625 + $0x30] sm:$0xf]
      %v647 = vld [vmem:[%s625 + $0x34] sm:$0xf]
      %v648 = vld [vmem:[%s625 + $0x38] sm:$0xf]
      %v649 = vld [vmem:[%s625 + $0x3c] sm:$0xf]
      %v650 = vld [vmem:[%s625 + $0x40] sm:$0xf]
      %v651 = vld [vmem:[%s625 + $0x44] sm:$0xf]
      %v652 = vld [vmem:[%s625 + $0x48] sm:$0xf]
      %v653 = vld [vmem:[%s625 + $0x4c] sm:$0xf]
      %v654 = vld [vmem:[%s625 + $0x50] sm:$0xf]
      %v655 = vld [vmem:[%s625 + $0x54] sm:$0xf]
      %v656 = vld [vmem:[%s625 + $0x58] sm:$0xf]
      %v657 = vld [vmem:[%s625 + $0x5c] sm:$0xf]
      %v658 = vld [vmem:[%s625 + $0x60] sm:$0xf]
      %v659 = vld [vmem:[%s625 + $0x64] sm:$0xf]
      %v660 = vld [vmem:[%s625 + $0x68] sm:$0xf]
      %v661 = vld [vmem:[%s625 + $0x6c] sm:$0xf]
      %v662 = vld [vmem:[%s625 + $0x70] sm:$0xf]
      %v663 = vld [vmem:[%s625 + $0x74] sm:$0xf]
      %v664 = vld [vmem:[%s625 + $0x78] sm:$0xf]
      %v665 = vld [vmem:[%s625 + $0x7c] sm:$0xf]
      %v666 = vld [vmem:[%s625 + $0x80] sm:$0xf]
      %v667 = vld [vmem:[%s625 + $0x84] sm:$0xf]
      %v668 = vld [vmem:[%s625 + $0x88] sm:$0xf]
      %v669 = vld [vmem:[%s625 + $0x8c] sm:$0xf]
      %v670 = vld [vmem:[%s625 + $0x90] sm:$0xf]
      %v671 = vld [vmem:[%s625 + $0x94] sm:$0xf]
      %v672 = vld [vmem:[%s625 + $0x98] sm:$0xf]
      %v673 = vld [vmem:[%s625 + $0x9c] sm:$0xf]
      %v674 = vld [vmem:[%s625 + $0xa0] sm:$0xf]
      %v675 = vld [vmem:[%s625 + $0xa4] sm:$0xf]
      %v676 = vld [vmem:[%s625 + $0xa8] sm:$0xf]
      %v677 = vld [vmem:[%s625 + $0xac] sm:$0xf]
      %v678 = vld [vmem:[%s625 + $0xb0] sm:$0xf]
      %v679 = vld [vmem:[%s625 + $0xb4] sm:$0xf]
      %v680 = vld [vmem:[%s625 + $0xb8] sm:$0xf]
      %v681 = vld [vmem:[%s625 + $0xbc] sm:$0xf]
      %v682 = vld [vmem:[%s625 + $0xc0] sm:$0xf]
      %v683 = vld [vmem:[%s625 + $0xc4] sm:$0xf]
      %v684 = vld [vmem:[%s625 + $0xc8] sm:$0xf]
      %v685 = vld [vmem:[%s625 + $0xcc] sm:$0xf]
      %v686 = vld [vmem:[%s625 + $0xd0] sm:$0xf]
      %v687 = vld [vmem:[%s625 + $0xd4] sm:$0xf]
      %v688 = vld [vmem:[%s625 + $0xd8] sm:$0xf]
      %v689 = vld [vmem:[%s625 + $0xdc] sm:$0xf]
      %v690 = vld [vmem:[%s625 + $0xe0] sm:$0xf]
      %v691 = vld [vmem:[%s625 + $0xe4] sm:$0xf]
      %v692 = vld [vmem:[%s625 + $0xe8] sm:$0xf]
      %v693 = vld [vmem:[%s625 + $0xec] sm:$0xf]
      %v694 = vld [vmem:[%s625 + $0xf0] sm:$0xf]
      %v695 = vld [vmem:[%s625 + $0xf4] sm:$0xf]
      %v696 = vld [vmem:[%s625 + $0xf8] sm:$0xf]
      %v697 = vld [vmem:[%s625 + $0xfc] sm:$0xf]
      %v698 = vld [vmem:[%s1] sm:$0xff]
      %v699 = vld [vmem:[%s1 + $0x8] sm:$0xff]
      %v700 = vld [vmem:[%s1 + $0x10] sm:$0xff]
      %v701 = vld [vmem:[%s1 + $0x18] sm:$0xff]
      %v702 = vld [vmem:[%s1 + $0x20] sm:$0xff]
      %v703 = vld [vmem:[%s1 + $0x28] sm:$0xff]
      %v704 = vld [vmem:[%s1 + $0x30] sm:$0xff]
      %v705 = vld [vmem:[%s1 + $0x38] sm:$0xff]
      %v706 = vld [vmem:[%s1 + $0x40] sm:$0xff]
      %v707 = vld [vmem:[%s1 + $0x48] sm:$0xff]
      %v708 = vld [vmem:[%s1 + $0x50] sm:$0xff]
      %v709 = vld [vmem:[%s1 + $0x58] sm:$0xff]
      %v710 = vld [vmem:[%s1 + $0x60] sm:$0xff]
      %v711 = vld [vmem:[%s1 + $0x68] sm:$0xff]
      %v712 = vld [vmem:[%s1 + $0x70] sm:$0xff]
      %v713 = vld [vmem:[%s1 + $0x78] sm:$0xff]
      %v714 = vld [vmem:[%s2] sm:$0x3]
      %v716 = vlaneseq
      %v717 = vshrl.u32 %v716, 7
      %v718 = vsub.s32 0, %v717
      %v719 = vrot.slane %v714, %v718
      %v720 = vlaneseq
      %v721 = vshrl.u32 %v720, 7
      %v722 = vsub.s32 1, %v721
      %v723 = vrot.slane %v714, %v722
      %v790 = vunpack.c.l.b16 %v634
      %v791 = vunpack.c.l.b16 %v635
      %v792 = vunpack.c.l.b16 %v636
      %v793 = vunpack.c.l.b16 %v637
      %v794 = vunpack.c.l.b16 %v638
      %v795 = vunpack.c.l.b16 %v639
      %v796 = vunpack.c.l.b16 %v640
      %v797 = vunpack.c.l.b16 %v641
      %v798 = vunpack.c.l.b16 %v642
      %v799 = vunpack.c.l.b16 %v643
      %v800 = vunpack.c.l.b16 %v644
      %v801 = vunpack.c.l.b16 %v645
      %v802 = vunpack.c.l.b16 %v646
      %v803 = vunpack.c.l.b16 %v647
      %v804 = vunpack.c.l.b16 %v648
      %v805 = vunpack.c.l.b16 %v649
      %v806 = vunpack.c.l.b16 %v650
      %v807 = vunpack.c.l.b16 %v651
      %v808 = vunpack.c.l.b16 %v652
      %v809 = vunpack.c.l.b16 %v653
      %v810 = vunpack.c.l.b16 %v654
      %v811 = vunpack.c.l.b16 %v655
      %v812 = vunpack.c.l.b16 %v656
      %v813 = vunpack.c.l.b16 %v657
      %v814 = vunpack.c.l.b16 %v658
      %v815 = vunpack.c.l.b16 %v659
      %v816 = vunpack.c.l.b16 %v660
      %v817 = vunpack.c.l.b16 %v661
      %v818 = vunpack.c.l.b16 %v662
      %v819 = vunpack.c.l.b16 %v663
      %v820 = vunpack.c.l.b16 %v664
      %v821 = vunpack.c.l.b16 %v665
      %v822 = vunpack.c.l.b16 %v666
      %v823 = vunpack.c.l.b16 %v667
      %v824 = vunpack.c.l.b16 %v668
      %v825 = vunpack.c.l.b16 %v669
      %v826 = vunpack.c.l.b16 %v670
      %v827 = vunpack.c.l.b16 %v671
      %v828 = vunpack.c.l.b16 %v672
      %v829 = vunpack.c.l.b16 %v673
      %v830 = vunpack.c.l.b16 %v674
      %v831 = vunpack.c.l.b16 %v675
      %v832 = vunpack.c.l.b16 %v676
      %v833 = vunpack.c.l.b16 %v677
      %v834 = vunpack.c.l.b16 %v678
      %v835 = vunpack.c.l.b16 %v679
      %v836 = vunpack.c.l.b16 %v680
      %v837 = vunpack.c.l.b16 %v681
      %v838 = vunpack.c.l.b16 %v682
      %v839 = vunpack.c.l.b16 %v683
      %v840 = vunpack.c.l.b16 %v684
      %v841 = vunpack.c.l.b16 %v685
      %v842 = vunpack.c.l.b16 %v686
      %v843 = vunpack.c.l.b16 %v687
      %v844 = vunpack.c.l.b16 %v688
      %v845 = vunpack.c.l.b16 %v689
      %v846 = vunpack.c.l.b16 %v690
      %v847 = vunpack.c.l.b16 %v691
      %v848 = vunpack.c.l.b16 %v692
      %v849 = vunpack.c.l.b16 %v693
      %v850 = vunpack.c.l.b16 %v694
      %v851 = vunpack.c.l.b16 %v695
      %v852 = vunpack.c.l.b16 %v696
      %v853 = vunpack.c.l.b16 %v697
      %v854 = vpack.c.b16 %v791, %v790
      %v855 = vpack.c.b16 %v793, %v792
      %v856 = vpack.c.b16 %v795, %v794
      %v857 = vpack.c.b16 %v797, %v796
      %v858 = vpack.c.b16 %v799, %v798
      %v859 = vpack.c.b16 %v801, %v800
      %v860 = vpack.c.b16 %v803, %v802
      %v861 = vpack.c.b16 %v805, %v804
      %v862 = vpack.c.b16 %v807, %v806
      %v863 = vpack.c.b16 %v809, %v808
      %v864 = vpack.c.b16 %v811, %v810
      %v865 = vpack.c.b16 %v813, %v812
      %v866 = vpack.c.b16 %v815, %v814
      %v867 = vpack.c.b16 %v817, %v816
      %v868 = vpack.c.b16 %v819, %v818
      %v869 = vpack.c.b16 %v821, %v820
      %v870 = vpack.c.b16 %v823, %v822
      %v871 = vpack.c.b16 %v825, %v824
      %v872 = vpack.c.b16 %v827, %v826
      %v873 = vpack.c.b16 %v829, %v828
      %v874 = vpack.c.b16 %v831, %v830
      %v875 = vpack.c.b16 %v833, %v832
      %v876 = vpack.c.b16 %v835, %v834
      %v877 = vpack.c.b16 %v837, %v836
      %v878 = vpack.c.b16 %v839, %v838
      %v879 = vpack.c.b16 %v841, %v840
      %v880 = vpack.c.b16 %v843, %v842
      %v881 = vpack.c.b16 %v845, %v844
      %v882 = vpack.c.b16 %v847, %v846
      %v883 = vpack.c.b16 %v849, %v848
      %v884 = vpack.c.b16 %v851, %v850
      %v885 = vpack.c.b16 %v853, %v852
      %v934 = vunpack.c.l.b16 %v698
      %v935 = vunpack.c.h.b16 %v698
      %v936 = vunpack.c.l.b16 %v699
      %v937 = vunpack.c.h.b16 %v699
      %v938 = vunpack.c.l.b16 %v700
      %v939 = vunpack.c.h.b16 %v700
      %v940 = vunpack.c.l.b16 %v701
      %v941 = vunpack.c.h.b16 %v701
      %v942 = vunpack.c.l.b16 %v702
      %v943 = vunpack.c.h.b16 %v702
      %v944 = vunpack.c.l.b16 %v703
      %v945 = vunpack.c.h.b16 %v703
      %v946 = vunpack.c.l.b16 %v704
      %v947 = vunpack.c.h.b16 %v704
      %v948 = vunpack.c.l.b16 %v705
      %v949 = vunpack.c.h.b16 %v705
      %v950 = vunpack.c.l.b16 %v706
      %v951 = vunpack.c.h.b16 %v706
      %v952 = vunpack.c.l.b16 %v707
      %v953 = vunpack.c.h.b16 %v707
      %v954 = vunpack.c.l.b16 %v708
      %v955 = vunpack.c.h.b16 %v708
      %v956 = vunpack.c.l.b16 %v709
      %v957 = vunpack.c.h.b16 %v709
      %v958 = vunpack.c.l.b16 %v710
      %v959 = vunpack.c.h.b16 %v710
      %v960 = vunpack.c.l.b16 %v711
      %v961 = vunpack.c.h.b16 %v711
      %v962 = vunpack.c.l.b16 %v712
      %v963 = vunpack.c.h.b16 %v712
      %v964 = vunpack.c.l.b16 %v713
      %v965 = vunpack.c.h.b16 %v713
      %v966 = vpack.c.b16 %v936, %v934
      %v967 = vpack.c.b16 %v937, %v935
      %v968 = vpack.c.b16 %v940, %v938
      %v969 = vpack.c.b16 %v941, %v939
      %v970 = vpack.c.b16 %v944, %v942
      %v971 = vpack.c.b16 %v945, %v943
      %v972 = vpack.c.b16 %v948, %v946
      %v973 = vpack.c.b16 %v949, %v947
      %v974 = vpack.c.b16 %v952, %v950
      %v975 = vpack.c.b16 %v953, %v951
      %v976 = vpack.c.b16 %v956, %v954
      %v977 = vpack.c.b16 %v957, %v955
      %v978 = vpack.c.b16 %v960, %v958
      %v979 = vpack.c.b16 %v961, %v959
      %v980 = vpack.c.b16 %v964, %v962
      %v981 = vpack.c.b16 %v965, %v963
      %998 = vmatprep.subr.bf16.mxu0 %v967
      %999 = vmatpush1.bf16.msra.mxu0 %v966
      %1000 = vmatprep.subr.bf16.mxu0 %v969
      %1001 = vmatpush1.bf16.msra.mxu0 %v968
      %1002 = vmatprep.subr.bf16.mxu0 %v971
      %1003 = vmatpush1.bf16.msra.mxu0 %v970
      %1004 = vmatprep.subr.bf16.mxu0 %v973
      %1005 = vmatpush1.bf16.msra.mxu0 %v972
      %1006 = vmatprep.subr.bf16.mxu0 %v975
      %1007 = vmatpush1.bf16.msra.mxu0 %v974
      %1008 = vmatprep.subr.bf16.mxu0 %v977
      %1009 = vmatpush1.bf16.msra.mxu0 %v976
      %1010 = vmatprep.subr.bf16.mxu0 %v979
      %1011 = vmatpush1.bf16.msra.mxu0 %v978
      %1012 = vmatprep.subr.bf16.mxu0 %v981
      %1013 = vmatpush1.bf16.msra.mxu0 %v980
      %1014 = vmatprep.subr.bf16.mxu0 0
      %1015 = vmatpush1.bf16.msra.mxu0 0
      %1016 = vmatprep.subr.bf16.mxu0 0
      %1017 = vmatpush1.bf16.msra.mxu0 0
      %1018 = vmatprep.subr.bf16.mxu0 0
      %1019 = vmatpush1.bf16.msra.mxu0 0
      %1020 = vmatprep.subr.bf16.mxu0 0
      %1021 = vmatpush1.bf16.msra.mxu0 0
      %1022 = vmatprep.subr.bf16.mxu0 0
      %1023 = vmatpush1.bf16.msra.mxu0 0
      %1024 = vmatprep.subr.bf16.mxu0 0
      %1025 = vmatpush1.bf16.msra.mxu0 0
      %1026 = vmatprep.subr.bf16.mxu0 0
      %1027 = vmatpush1.bf16.msra.mxu0 0
      %1028 = vmatprep.subr.bf16.mxu0 0
      %1029 = vmatpush1.bf16.msra.mxu0 0
      %1030 = vmatprep.mubr.bf16.mxu0 0
      %1031 = vmatmul.mubr.bf16.gmra.mrb[0].mxu0 %v854
      %v1032 = vpop.f32.mrb[0].mxu0
      %v1033 = vadd.f32 %v719, %v1032
      %v1034 = vpop.f32.mrb[0].mxu0
      %v1035 = vadd.f32 %v723, %v1034
      %v1036 = vpop.f32.mrb[0].mxu0
      %v1037 = vadd.f32 %v719, %v1036
      %v1038 = vpop.f32.mrb[0].mxu0
      %v1039 = vadd.f32 %v723, %v1038
      %1040 = vmatprep.mubr.bf16.mxu0 0
      %1041 = vmatmul.mubr.bf16.gmra.mrb[0].mxu0 %v855
      %v1042 = vpop.f32.mrb[0].mxu0
      %v1043 = vadd.f32 %v719, %v1042
      %v1044 = vpop.f32.mrb[0].mxu0
      %v1045 = vadd.f32 %v723, %v1044
      %v1046 = vpop.f32.mrb[0].mxu0
      %v1047 = vadd.f32 %v719, %v1046
      %v1048 = vpop.f32.mrb[0].mxu0
      %v1049 = vadd.f32 %v723, %v1048
      %1050 = vmatprep.mubr.bf16.mxu0 0
      %1051 = vmatmul.mubr.bf16.gmra.mrb[0].mxu0 %v856
      %v1052 = vpop.f32.mrb[0].mxu0
      %v1053 = vadd.f32 %v719, %v1052
      %v1054 = vpop.f32.mrb[0].mxu0
      %v1055 = vadd.f32 %v723, %v1054
      %v1056 = vpop.f32.mrb[0].mxu0
      %v1057 = vadd.f32 %v719, %v1056
      %v1058 = vpop.f32.mrb[0].mxu0
      %v1059 = vadd.f32 %v723, %v1058
      %1060 = vmatprep.mubr.bf16.mxu0 0
      %1061 = vmatmul.mubr.bf16.gmra.mrb[0].mxu0 %v857
      %v1062 = vpop.f32.mrb[0].mxu0
      %v1063 = vadd.f32 %v719, %v1062
      %v1064 = vpop.f32.mrb[0].mxu0
      %v1065 = vadd.f32 %v723, %v1064
      %v1066 = vpop.f32.mrb[0].mxu0
      %v1067 = vadd.f32 %v719, %v1066
      %v1068 = vpop.f32.mrb[0].mxu0
      %v1069 = vadd.f32 %v723, %v1068
      %1070 = vmatprep.mubr.bf16.mxu0 0
      %1071 = vmatmul.mubr.bf16.gmra.mrb[0].mxu0 %v858
      %v1072 = vpop.f32.mrb[0].mxu0
      %v1073 = vadd.f32 %v719, %v1072
      %v1074 = vpop.f32.mrb[0].mxu0
      %v1075 = vadd.f32 %v723, %v1074
      %v1076 = vpop.f32.mrb[0].mxu0
      %v1077 = vadd.f32 %v719, %v1076
      %v1078 = vpop.f32.mrb[0].mxu0
      %v1079 = vadd.f32 %v723, %v1078
      %1080 = vmatprep.mubr.bf16.mxu0 0
      %1081 = vmatmul.mubr.bf16.gmra.mrb[0].mxu0 %v859
      %v1082 = vpop.f32.mrb[0].mxu0
      %v1083 = vadd.f32 %v719, %v1082
      %v1084 = vpop.f32.mrb[0].mxu0
      %v1085 = vadd.f32 %v723, %v1084
      %v1086 = vpop.f32.mrb[0].mxu0
      %v1087 = vadd.f32 %v719, %v1086
      %v1088 = vpop.f32.mrb[0].mxu0
      %v1089 = vadd.f32 %v723, %v1088
      %1090 = vmatprep.mubr.bf16.mxu0 0
      %1091 = vmatmul.mubr.bf16.gmra.mrb[0].mxu0 %v860
      %v1092 = vpop.f32.mrb[0].mxu0
      %v1093 = vadd.f32 %v719, %v1092
      %v1094 = vpop.f32.mrb[0].mxu0
      %v1095 = vadd.f32 %v723, %v1094
      %v1096 = vpop.f32.mrb[0].mxu0
      %v1097 = vadd.f32 %v719, %v1096
      %v1098 = vpop.f32.mrb[0].mxu0
      %v1099 = vadd.f32 %v723, %v1098
      %1100 = vmatprep.mubr.bf16.mxu0 0
      %1101 = vmatmul.mubr.bf16.gmra.mrb[0].mxu0 %v861
      %v1102 = vpop.f32.mrb[0].mxu0
      %v1103 = vadd.f32 %v719, %v1102
      %v1104 = vpop.f32.mrb[0].mxu0
      %v1105 = vadd.f32 %v723, %v1104
      %v1106 = vpop.f32.mrb[0].mxu0
      %v1107 = vadd.f32 %v719, %v1106
      %v1108 = vpop.f32.mrb[0].mxu0
      %v1109 = vadd.f32 %v723, %v1108
      %1110 = vmatprep.mubr.bf16.mxu0 0
      %1111 = vmatmul.mubr.bf16.gmra.mrb[0].mxu0 %v862
      %v1112 = vpop.f32.mrb[0].mxu0
      %v1113 = vadd.f32 %v719, %v1112
      %v1114 = vpop.f32.mrb[0].mxu0
      %v1115 = vadd.f32 %v723, %v1114
      %v1116 = vpop.f32.mrb[0].mxu0
      %v1117 = vadd.f32 %v719, %v1116
      %v1118 = vpop.f32.mrb[0].mxu0
      %v1119 = vadd.f32 %v723, %v1118
      %1120 = vmatprep.mubr.bf16.mxu0 0
      %1121 = vmatmul.mubr.bf16.gmra.mrb[0].mxu0 %v863
      %v1122 = vpop.f32.mrb[0].mxu0
      %v1123 = vadd.f32 %v719, %v1122
      %v1124 = vpop.f32.mrb[0].mxu0
      %v1125 = vadd.f32 %v723, %v1124
      %v1126 = vpop.f32.mrb[0].mxu0
      %v1127 = vadd.f32 %v719, %v1126
      %v1128 = vpop.f32.mrb[0].mxu0
      %v1129 = vadd.f32 %v723, %v1128
      %1130 = vmatprep.mubr.bf16.mxu0 0
      %1131 = vmatmul.mubr.bf16.gmra.mrb[0].mxu0 %v864
      %v1132 = vpop.f32.mrb[0].mxu0
      %v1133 = vadd.f32 %v719, %v1132
      %v1134 = vpop.f32.mrb[0].mxu0
      %v1135 = vadd.f32 %v723, %v1134
      %v1136 = vpop.f32.mrb[0].mxu0
      %v1137 = vadd.f32 %v719, %v1136
      %v1138 = vpop.f32.mrb[0].mxu0
      %v1139 = vadd.f32 %v723, %v1138
      %1140 = vmatprep.mubr.bf16.mxu0 0
      %1141 = vmatmul.mubr.bf16.gmra.mrb[0].mxu0 %v865
      %v1142 = vpop.f32.mrb[0].mxu0
      %v1143 = vadd.f32 %v719, %v1142
      %v1144 = vpop.f32.mrb[0].mxu0
      %v1145 = vadd.f32 %v723, %v1144
      %v1146 = vpop.f32.mrb[0].mxu0
      %v1147 = vadd.f32 %v719, %v1146
      %v1148 = vpop.f32.mrb[0].mxu0
      %v1149 = vadd.f32 %v723, %v1148
      %1150 = vmatprep.mubr.bf16.mxu0 0
      %1151 = vmatmul.mubr.bf16.gmra.mrb[0].mxu0 %v866
      %v1152 = vpop.f32.mrb[0].mxu0
      %v1153 = vadd.f32 %v719, %v1152
      %v1154 = vpop.f32.mrb[0].mxu0
      %v1155 = vadd.f32 %v723, %v1154
      %v1156 = vpop.f32.mrb[0].mxu0
      %v1157 = vadd.f32 %v719, %v1156
      %v1158 = vpop.f32.mrb[0].mxu0
      %v1159 = vadd.f32 %v723, %v1158
      %1160 = vmatprep.mubr.bf16.mxu0 0
      %1161 = vmatmul.mubr.bf16.gmra.mrb[0].mxu0 %v867
      %v1162 = vpop.f32.mrb[0].mxu0
      %v1163 = vadd.f32 %v719, %v1162
      %v1164 = vpop.f32.mrb[0].mxu0
      %v1165 = vadd.f32 %v723, %v1164
      %v1166 = vpop.f32.mrb[0].mxu0
      %v1167 = vadd.f32 %v719, %v1166
      %v1168 = vpop.f32.mrb[0].mxu0
      %v1169 = vadd.f32 %v723, %v1168
      %1170 = vmatprep.mubr.bf16.mxu0 0
      %1171 = vmatmul.mubr.bf16.gmra.mrb[0].mxu0 %v868
      %v1172 = vpop.f32.mrb[0].mxu0
      %v1173 = vadd.f32 %v719, %v1172
      %v1174 = vpop.f32.mrb[0].mxu0
      %v1175 = vadd.f32 %v723, %v1174
      %v1176 = vpop.f32.mrb[0].mxu0
      %v1177 = vadd.f32 %v719, %v1176
      %v1178 = vpop.f32.mrb[0].mxu0
      %v1179 = vadd.f32 %v723, %v1178
      %1180 = vmatprep.mubr.bf16.mxu0 0
      %1181 = vmatmul.mubr.bf16.gmra.mrb[0].mxu0 %v869
      %v1182 = vpop.f32.mrb[0].mxu0
      %v1183 = vadd.f32 %v719, %v1182
      %v1184 = vpop.f32.mrb[0].mxu0
      %v1185 = vadd.f32 %v723, %v1184
      %v1186 = vpop.f32.mrb[0].mxu0
      %v1187 = vadd.f32 %v719, %v1186
      %v1188 = vpop.f32.mrb[0].mxu0
      %v1189 = vadd.f32 %v723, %v1188
      %1190 = vmatprep.mubr.bf16.mxu0 0
      %1191 = vmatmul.mubr.bf16.gmra.mrb[0].mxu0 %v870
      %v1192 = vpop.f32.mrb[0].mxu0
      %v1193 = vadd.f32 %v719, %v1192
      %v1194 = vpop.f32.mrb[0].mxu0
      %v1195 = vadd.f32 %v723, %v1194
      %v1196 = vpop.f32.mrb[0].mxu0
      %v1197 = vadd.f32 %v719, %v1196
      %v1198 = vpop.f32.mrb[0].mxu0
      %v1199 = vadd.f32 %v723, %v1198
      %1200 = vmatprep.mubr.bf16.mxu0 0
      %1201 = vmatmul.mubr.bf16.gmra.mrb[0].mxu0 %v871
      %v1202 = vpop.f32.mrb[0].mxu0
      %v1203 = vadd.f32 %v719, %v1202
      %v1204 = vpop.f32.mrb[0].mxu0
      %v1205 = vadd.f32 %v723, %v1204
      %v1206 = vpop.f32.mrb[0].mxu0
      %v1207 = vadd.f32 %v719, %v1206
      %v1208 = vpop.f32.mrb[0].mxu0
      %v1209 = vadd.f32 %v723, %v1208
      %1210 = vmatprep.mubr.bf16.mxu0 0
      %1211 = vmatmul.mubr.bf16.gmra.mrb[0].mxu0 %v872
      %v1212 = vpop.f32.mrb[0].mxu0
      %v1213 = vadd.f32 %v719, %v1212
      %v1214 = vpop.f32.mrb[0].mxu0
      %v1215 = vadd.f32 %v723, %v1214
      %v1216 = vpop.f32.mrb[0].mxu0
      %v1217 = vadd.f32 %v719, %v1216
      %v1218 = vpop.f32.mrb[0].mxu0
      %v1219 = vadd.f32 %v723, %v1218
      %1220 = vmatprep.mubr.bf16.mxu0 0
      %1221 = vmatmul.mubr.bf16.gmra.mrb[0].mxu0 %v873
      %v1222 = vpop.f32.mrb[0].mxu0
      %v1223 = vadd.f32 %v719, %v1222
      %v1224 = vpop.f32.mrb[0].mxu0
      %v1225 = vadd.f32 %v723, %v1224
      %v1226 = vpop.f32.mrb[0].mxu0
      %v1227 = vadd.f32 %v719, %v1226
      %v1228 = vpop.f32.mrb[0].mxu0
      %v1229 = vadd.f32 %v723, %v1228
      %1230 = vmatprep.mubr.bf16.mxu0 0
      %1231 = vmatmul.mubr.bf16.gmra.mrb[0].mxu0 %v874
      %v1232 = vpop.f32.mrb[0].mxu0
      %v1233 = vadd.f32 %v719, %v1232
      %v1234 = vpop.f32.mrb[0].mxu0
      %v1235 = vadd.f32 %v723, %v1234
      %v1236 = vpop.f32.mrb[0].mxu0
      %v1237 = vadd.f32 %v719, %v1236
      %v1238 = vpop.f32.mrb[0].mxu0
      %v1239 = vadd.f32 %v723, %v1238
      %1240 = vmatprep.mubr.bf16.mxu0 0
      %1241 = vmatmul.mubr.bf16.gmra.mrb[0].mxu0 %v875
      %v1242 = vpop.f32.mrb[0].mxu0
      %v1243 = vadd.f32 %v719, %v1242
      %v1244 = vpop.f32.mrb[0].mxu0
      %v1245 = vadd.f32 %v723, %v1244
      %v1246 = vpop.f32.mrb[0].mxu0
      %v1247 = vadd.f32 %v719, %v1246
      %v1248 = vpop.f32.mrb[0].mxu0
      %v1249 = vadd.f32 %v723, %v1248
      %1250 = vmatprep.mubr.bf16.mxu0 0
      %1251 = vmatmul.mubr.bf16.gmra.mrb[0].mxu0 %v876
      %v1252 = vpop.f32.mrb[0].mxu0
      %v1253 = vadd.f32 %v719, %v1252
      %v1254 = vpop.f32.mrb[0].mxu0
      %v1255 = vadd.f32 %v723, %v1254
      %v1256 = vpop.f32.mrb[0].mxu0
      %v1257 = vadd.f32 %v719, %v1256
      %v1258 = vpop.f32.mrb[0].mxu0
      %v1259 = vadd.f32 %v723, %v1258
      %1260 = vmatprep.mubr.bf16.mxu0 0
      %1261 = vmatmul.mubr.bf16.gmra.mrb[0].mxu0 %v877
      %v1262 = vpop.f32.mrb[0].mxu0
      %v1263 = vadd.f32 %v719, %v1262
      %v1264 = vpop.f32.mrb[0].mxu0
      %v1265 = vadd.f32 %v723, %v1264
      %v1266 = vpop.f32.mrb[0].mxu0
      %v1267 = vadd.f32 %v719, %v1266
      %v1268 = vpop.f32.mrb[0].mxu0
      %v1269 = vadd.f32 %v723, %v1268
      %1270 = vmatprep.mubr.bf16.mxu0 0
      %1271 = vmatmul.mubr.bf16.gmra.mrb[0].mxu0 %v878
      %v1272 = vpop.f32.mrb[0].mxu0
      %v1273 = vadd.f32 %v719, %v1272
      %v1274 = vpop.f32.mrb[0].mxu0
      %v1275 = vadd.f32 %v723, %v1274
      %v1276 = vpop.f32.mrb[0].mxu0
      %v1277 = vadd.f32 %v719, %v1276
      %v1278 = vpop.f32.mrb[0].mxu0
      %v1279 = vadd.f32 %v723, %v1278
      %1280 = vmatprep.mubr.bf16.mxu0 0
      %1281 = vmatmul.mubr.bf16.gmra.mrb[0].mxu0 %v879
      %v1282 = vpop.f32.mrb[0].mxu0
      %v1283 = vadd.f32 %v719, %v1282
      %v1284 = vpop.f32.mrb[0].mxu0
      %v1285 = vadd.f32 %v723, %v1284
      %v1286 = vpop.f32.mrb[0].mxu0
      %v1287 = vadd.f32 %v719, %v1286
      %v1288 = vpop.f32.mrb[0].mxu0
      %v1289 = vadd.f32 %v723, %v1288
      %1290 = vmatprep.mubr.bf16.mxu0 0
      %1291 = vmatmul.mubr.bf16.gmra.mrb[0].mxu0 %v880
      %v1292 = vpop.f32.mrb[0].mxu0
      %v1293 = vadd.f32 %v719, %v1292
      %v1294 = vpop.f32.mrb[0].mxu0
      %v1295 = vadd.f32 %v723, %v1294
      %v1296 = vpop.f32.mrb[0].mxu0
      %v1297 = vadd.f32 %v719, %v1296
      %v1298 = vpop.f32.mrb[0].mxu0
      %v1299 = vadd.f32 %v723, %v1298
      %1300 = vmatprep.mubr.bf16.mxu0 0
      %1301 = vmatmul.mubr.bf16.gmra.mrb[0].mxu0 %v881
      %v1302 = vpop.f32.mrb[0].mxu0
      %v1303 = vadd.f32 %v719, %v1302
      %v1304 = vpop.f32.mrb[0].mxu0
      %v1305 = vadd.f32 %v723, %v1304
      %v1306 = vpop.f32.mrb[0].mxu0
      %v1307 = vadd.f32 %v719, %v1306
      %v1308 = vpop.f32.mrb[0].mxu0
      %v1309 = vadd.f32 %v723, %v1308
      %1310 = vmatprep.mubr.bf16.mxu0 0
      %1311 = vmatmul.mubr.bf16.gmra.mrb[0].mxu0 %v882
      %v1312 = vpop.f32.mrb[0].mxu0
      %v1313 = vadd.f32 %v719, %v1312
      %v1314 = vpop.f32.mrb[0].mxu0
      %v1315 = vadd.f32 %v723, %v1314
      %v1316 = vpop.f32.mrb[0].mxu0
      %v1317 = vadd.f32 %v719, %v1316
      %v1318 = vpop.f32.mrb[0].mxu0
      %v1319 = vadd.f32 %v723, %v1318
      %1320 = vmatprep.mubr.bf16.mxu0 0
      %1321 = vmatmul.mubr.bf16.gmra.mrb[0].mxu0 %v883
      %v1322 = vpop.f32.mrb[0].mxu0
      %v1323 = vadd.f32 %v719, %v1322
      %v1324 = vpop.f32.mrb[0].mxu0
      %v1325 = vadd.f32 %v723, %v1324
      %v1326 = vpop.f32.mrb[0].mxu0
      %v1327 = vadd.f32 %v719, %v1326
      %v1328 = vpop.f32.mrb[0].mxu0
      %v1329 = vadd.f32 %v723, %v1328
      %1330 = vmatprep.mubr.bf16.mxu0 0
      %1331 = vmatmul.mubr.bf16.gmra.mrb[0].mxu0 %v884
      %v1332 = vpop.f32.mrb[0].mxu0
      %v1333 = vadd.f32 %v719, %v1332
      %v1334 = vpop.f32.mrb[0].mxu0
      %v1335 = vadd.f32 %v723, %v1334
      %v1336 = vpop.f32.mrb[0].mxu0
      %v1337 = vadd.f32 %v719, %v1336
      %v1338 = vpop.f32.mrb[0].mxu0
      %v1339 = vadd.f32 %v723, %v1338
      %1340 = vmatprep.mubr.bf16.mxu0 0
      %1341 = vmatmul.mubr.bf16.gmra.mrb[0].mxu0 %v885
      %v1342 = vpop.f32.mrb[0].mxu0
      %v1343 = vadd.f32 %v719, %v1342
      %v1344 = vpop.f32.mrb[0].mxu0
      %v1345 = vadd.f32 %v723, %v1344
      %v1346 = vpop.f32.mrb[0].mxu0
      %v1347 = vadd.f32 %v719, %v1346
      %v1348 = vpop.f32.mrb[0].mxu0
      %v1349 = vadd.f32 %v723, %v1348
      %1350 = vdwg.mxu0
      %v1351 = vmax.f32 %v1033, 0.0
      %v1352 = vmax.f32 %v1035, 0.0
      %v1353 = vmax.f32 %v1037, 0.0
      %v1354 = vmax.f32 %v1039, 0.0
      %v1355 = vmax.f32 %v1043, 0.0
      %v1356 = vmax.f32 %v1045, 0.0
      %v1357 = vmax.f32 %v1047, 0.0
      %v1358 = vmax.f32 %v1049, 0.0
      %v1359 = vmax.f32 %v1053, 0.0
      %v1360 = vmax.f32 %v1055, 0.0
      %v1361 = vmax.f32 %v1057, 0.0
      %v1362 = vmax.f32 %v1059, 0.0
      %v1363 = vmax.f32 %v1063, 0.0
      %v1364 = vmax.f32 %v1065, 0.0
      %v1365 = vmax.f32 %v1067, 0.0
      %v1366 = vmax.f32 %v1069, 0.0
      %v1367 = vmax.f32 %v1073, 0.0
      %v1368 = vmax.f32 %v1075, 0.0
      %v1369 = vmax.f32 %v1077, 0.0
      %v1370 = vmax.f32 %v1079, 0.0
      %v1371 = vmax.f32 %v1083, 0.0
      %v1372 = vmax.f32 %v1085, 0.0
      %v1373 = vmax.f32 %v1087, 0.0
      %v1374 = vmax.f32 %v1089, 0.0
      %v1375 = vmax.f32 %v1093, 0.0
      %v1376 = vmax.f32 %v1095, 0.0
      %v1377 = vmax.f32 %v1097, 0.0
      %v1378 = vmax.f32 %v1099, 0.0
      %v1379 = vmax.f32 %v1103, 0.0
      %v1380 = vmax.f32 %v1105, 0.0
      %v1381 = vmax.f32 %v1107, 0.0
      %v1382 = vmax.f32 %v1109, 0.0
      %v1383 = vmax.f32 %v1113, 0.0
      %v1384 = vmax.f32 %v1115, 0.0
      %v1385 = vmax.f32 %v1117, 0.0
      %v1386 = vmax.f32 %v1119, 0.0
      %v1387 = vmax.f32 %v1123, 0.0
      %v1388 = vmax.f32 %v1125, 0.0
      %v1389 = vmax.f32 %v1127, 0.0
      %v1390 = vmax.f32 %v1129, 0.0
      %v1391 = vmax.f32 %v1133, 0.0
      %v1392 = vmax.f32 %v1135, 0.0
      %v1393 = vmax.f32 %v1137, 0.0
      %v1394 = vmax.f32 %v1139, 0.0
      %v1395 = vmax.f32 %v1143, 0.0
      %v1396 = vmax.f32 %v1145, 0.0
      %v1397 = vmax.f32 %v1147, 0.0
      %v1398 = vmax.f32 %v1149, 0.0
      %v1399 = vmax.f32 %v1153, 0.0
      %v1400 = vmax.f32 %v1155, 0.0
      %v1401 = vmax.f32 %v1157, 0.0
      %v1402 = vmax.f32 %v1159, 0.0
      %v1403 = vmax.f32 %v1163, 0.0
      %v1404 = vmax.f32 %v1165, 0.0
      %v1405 = vmax.f32 %v1167, 0.0
      %v1406 = vmax.f32 %v1169, 0.0
      %v1407 = vmax.f32 %v1173, 0.0
      %v1408 = vmax.f32 %v1175, 0.0
      %v1409 = vmax.f32 %v1177, 0.0
      %v1410 = vmax.f32 %v1179, 0.0
      %v1411 = vmax.f32 %v1183, 0.0
      %v1412 = vmax.f32 %v1185, 0.0
      %v1413 = vmax.f32 %v1187, 0.0
      %v1414 = vmax.f32 %v1189, 0.0
      %v1415 = vmax.f32 %v1193, 0.0
      %v1416 = vmax.f32 %v1195, 0.0
      %v1417 = vmax.f32 %v1197, 0.0
      %v1418 = vmax.f32 %v1199, 0.0
      %v1419 = vmax.f32 %v1203, 0.0
      %v1420 = vmax.f32 %v1205, 0.0
      %v1421 = vmax.f32 %v1207, 0.0
      %v1422 = vmax.f32 %v1209, 0.0
      %v1423 = vmax.f32 %v1213, 0.0
      %v1424 = vmax.f32 %v1215, 0.0
      %v1425 = vmax.f32 %v1217, 0.0
      %v1426 = vmax.f32 %v1219, 0.0
      %v1427 = vmax.f32 %v1223, 0.0
      %v1428 = vmax.f32 %v1225, 0.0
      %v1429 = vmax.f32 %v1227, 0.0
      %v1430 = vmax.f32 %v1229, 0.0
      %v1431 = vmax.f32 %v1233, 0.0
      %v1432 = vmax.f32 %v1235, 0.0
      %v1433 = vmax.f32 %v1237, 0.0
      %v1434 = vmax.f32 %v1239, 0.0
      %v1435 = vmax.f32 %v1243, 0.0
      %v1436 = vmax.f32 %v1245, 0.0
      %v1437 = vmax.f32 %v1247, 0.0
      %v1438 = vmax.f32 %v1249, 0.0
      %v1439 = vmax.f32 %v1253, 0.0
      %v1440 = vmax.f32 %v1255, 0.0
      %v1441 = vmax.f32 %v1257, 0.0
      %v1442 = vmax.f32 %v1259, 0.0
      %v1443 = vmax.f32 %v1263, 0.0
      %v1444 = vmax.f32 %v1265, 0.0
      %v1445 = vmax.f32 %v1267, 0.0
      %v1446 = vmax.f32 %v1269, 0.0
      %v1447 = vmax.f32 %v1273, 0.0
      %v1448 = vmax.f32 %v1275, 0.0
      %v1449 = vmax.f32 %v1277, 0.0
      %v1450 = vmax.f32 %v1279, 0.0
      %v1451 = vmax.f32 %v1283, 0.0
      %v1452 = vmax.f32 %v1285, 0.0
      %v1453 = vmax.f32 %v1287, 0.0
      %v1454 = vmax.f32 %v1289, 0.0
      %v1455 = vmax.f32 %v1293, 0.0
      %v1456 = vmax.f32 %v1295, 0.0
      %v1457 = vmax.f32 %v1297, 0.0
      %v1458 = vmax.f32 %v1299, 0.0
      %v1459 = vmax.f32 %v1303, 0.0
      %v1460 = vmax.f32 %v1305, 0.0
      %v1461 = vmax.f32 %v1307, 0.0
      %v1462 = vmax.f32 %v1309, 0.0
      %v1463 = vmax.f32 %v1313, 0.0
      %v1464 = vmax.f32 %v1315, 0.0
      %v1465 = vmax.f32 %v1317, 0.0
      %v1466 = vmax.f32 %v1319, 0.0
      %v1467 = vmax.f32 %v1323, 0.0
      %v1468 = vmax.f32 %v1325, 0.0
      %v1469 = vmax.f32 %v1327, 0.0
      %v1470 = vmax.f32 %v1329, 0.0
      %v1471 = vmax.f32 %v1333, 0.0
      %v1472 = vmax.f32 %v1335, 0.0
      %v1473 = vmax.f32 %v1337, 0.0
      %v1474 = vmax.f32 %v1339, 0.0
      %v1475 = vmax.f32 %v1343, 0.0
      %v1476 = vmax.f32 %v1345, 0.0
      %v1477 = vmax.f32 %v1347, 0.0
      %v1478 = vmax.f32 %v1349, 0.0
      %v1479 = vpack.c.bf16 %v1353, %v1351
      %v1480 = vpack.c.bf16 %v1354, %v1352
      %v1481 = vpack.c.bf16 %v1357, %v1355
      %v1482 = vpack.c.bf16 %v1358, %v1356
      %v1483 = vpack.c.bf16 %v1361, %v1359
      %v1484 = vpack.c.bf16 %v1362, %v1360
      %v1485 = vpack.c.bf16 %v1365, %v1363
      %v1486 = vpack.c.bf16 %v1366, %v1364
      %v1487 = vpack.c.bf16 %v1369, %v1367
      %v1488 = vpack.c.bf16 %v1370, %v1368
      %v1489 = vpack.c.bf16 %v1373, %v1371
      %v1490 = vpack.c.bf16 %v1374, %v1372
      %v1491 = vpack.c.bf16 %v1377, %v1375
      %v1492 = vpack.c.bf16 %v1378, %v1376
      %v1493 = vpack.c.bf16 %v1381, %v1379
      %v1494 = vpack.c.bf16 %v1382, %v1380
      %v1495 = vpack.c.bf16 %v1385, %v1383
      %v1496 = vpack.c.bf16 %v1386, %v1384
      %v1497 = vpack.c.bf16 %v1389, %v1387
      %v1498 = vpack.c.bf16 %v1390, %v1388
      %v1499 = vpack.c.bf16 %v1393, %v1391
      %v1500 = vpack.c.bf16 %v1394, %v1392
      %v1501 = vpack.c.bf16 %v1397, %v1395
      %v1502 = vpack.c.bf16 %v1398, %v1396
      %v1503 = vpack.c.bf16 %v1401, %v1399
      %v1504 = vpack.c.bf16 %v1402, %v1400
      %v1505 = vpack.c.bf16 %v1405, %v1403
      %v1506 = vpack.c.bf16 %v1406, %v1404
      %v1507 = vpack.c.bf16 %v1409, %v1407
      %v1508 = vpack.c.bf16 %v1410, %v1408
      %v1509 = vpack.c.bf16 %v1413, %v1411
      %v1510 = vpack.c.bf16 %v1414, %v1412
      %v1511 = vpack.c.bf16 %v1417, %v1415
      %v1512 = vpack.c.bf16 %v1418, %v1416
      %v1513 = vpack.c.bf16 %v1421, %v1419
      %v1514 = vpack.c.bf16 %v1422, %v1420
      %v1515 = vpack.c.bf16 %v1425, %v1423
      %v1516 = vpack.c.bf16 %v1426, %v1424
      %v1517 = vpack.c.bf16 %v1429, %v1427
      %v1518 = vpack.c.bf16 %v1430, %v1428
      %v1519 = vpack.c.bf16 %v1433, %v1431
      %v1520 = vpack.c.bf16 %v1434, %v1432
      %v1521 = vpack.c.bf16 %v1437, %v1435
      %v1522 = vpack.c.bf16 %v1438, %v1436
      %v1523 = vpack.c.bf16 %v1441, %v1439
      %v1524 = vpack.c.bf16 %v1442, %v1440
      %v1525 = vpack.c.bf16 %v1445, %v1443
      %v1526 = vpack.c.bf16 %v1446, %v1444
      %v1527 = vpack.c.bf16 %v1449, %v1447
      %v1528 = vpack.c.bf16 %v1450, %v1448
      %v1529 = vpack.c.bf16 %v1453, %v1451
      %v1530 = vpack.c.bf16 %v1454, %v1452
      %v1531 = vpack.c.bf16 %v1457, %v1455
      %v1532 = vpack.c.bf16 %v1458, %v1456
      %v1533 = vpack.c.bf16 %v1461, %v1459
      %v1534 = vpack.c.bf16 %v1462, %v1460
      %v1535 = vpack.c.bf16 %v1465, %v1463
      %v1536 = vpack.c.bf16 %v1466, %v1464
      %v1537 = vpack.c.bf16 %v1469, %v1467
      %v1538 = vpack.c.bf16 %v1470, %v1468
      %v1539 = vpack.c.bf16 %v1473, %v1471
      %v1540 = vpack.c.bf16 %v1474, %v1472
      %v1541 = vpack.c.bf16 %v1477, %v1475
      %v1542 = vpack.c.bf16 %v1478, %v1476
      %v1543 = vld [vmem:[%s3] sm:$0xff]
      %v1544 = vld [vmem:[%s3 + $0x8] sm:$0xff]
      %v1545 = vld [vmem:[%s3 + $0x10] sm:$0xff]
      %v1546 = vld [vmem:[%s3 + $0x18] sm:$0xff]
      %v1547 = vld [vmem:[%s3 + $0x20] sm:$0xff]
      %v1548 = vld [vmem:[%s3 + $0x28] sm:$0xff]
      %v1549 = vld [vmem:[%s3 + $0x30] sm:$0xff]
      %v1550 = vld [vmem:[%s3 + $0x38] sm:$0xff]
      %v1551 = vld [vmem:[%s3 + $0x40] sm:$0xff]
      %v1552 = vld [vmem:[%s3 + $0x48] sm:$0xff]
      %v1553 = vld [vmem:[%s3 + $0x50] sm:$0xff]
      %v1554 = vld [vmem:[%s3 + $0x58] sm:$0xff]
      %v1555 = vld [vmem:[%s3 + $0x60] sm:$0xff]
      %v1556 = vld [vmem:[%s3 + $0x68] sm:$0xff]
      %v1557 = vld [vmem:[%s3 + $0x70] sm:$0xff]
      %v1558 = vld [vmem:[%s3 + $0x78] sm:$0xff]
      %v1559 = vld [vmem:[%s3 + $0x80] sm:$0xff]
      %v1560 = vld [vmem:[%s3 + $0x88] sm:$0xff]
      %v1561 = vld [vmem:[%s3 + $0x90] sm:$0xff]
      %v1562 = vld [vmem:[%s3 + $0x98] sm:$0xff]
      %v1563 = vld [vmem:[%s3 + $0xa0] sm:$0xff]
      %v1564 = vld [vmem:[%s3 + $0xa8] sm:$0xff]
      %v1565 = vld [vmem:[%s3 + $0xb0] sm:$0xff]
      %v1566 = vld [vmem:[%s3 + $0xb8] sm:$0xff]
      %v1567 = vld [vmem:[%s3 + $0xc0] sm:$0xff]
      %v1568 = vld [vmem:[%s3 + $0xc8] sm:$0xff]
      %v1569 = vld [vmem:[%s3 + $0xd0] sm:$0xff]
      %v1570 = vld [vmem:[%s3 + $0xd8] sm:$0xff]
      %v1571 = vld [vmem:[%s3 + $0xe0] sm:$0xff]
      %v1572 = vld [vmem:[%s3 + $0xe8] sm:$0xff]
      %v1573 = vld [vmem:[%s3 + $0xf0] sm:$0xff]
      %v1574 = vld [vmem:[%s3 + $0xf8] sm:$0xff]
      %v1575 = vld [vmem:[%s4] sm:$0x3]
      %v1577 = vlaneseq
      %v1578 = vshrl.u32 %v1577, 7
      %v1579 = vsub.s32 0, %v1578
      %v1580 = vrot.slane %v1575, %v1579
      %v1581 = vlaneseq
      %v1582 = vshrl.u32 %v1581, 7
      %v1583 = vsub.s32 1, %v1582
      %v1584 = vrot.slane %v1575, %v1583
      %v1619 = vunpack.c.l.b16 %v1543
      %v1620 = vunpack.c.h.b16 %v1543
      %v1621 = vunpack.c.l.b16 %v1544
      %v1622 = vunpack.c.h.b16 %v1544
      %v1623 = vunpack.c.l.b16 %v1545
      %v1624 = vunpack.c.h.b16 %v1545
      %v1625 = vunpack.c.l.b16 %v1546
      %v1626 = vunpack.c.h.b16 %v1546
      %v1627 = vunpack.c.l.b16 %v1547
      %v1628 = vunpack.c.h.b16 %v1547
      %v1629 = vunpack.c.l.b16 %v1548
      %v1630 = vunpack.c.h.b16 %v1548
      %v1631 = vunpack.c.l.b16 %v1549
      %v1632 = vunpack.c.h.b16 %v1549
      %v1633 = vunpack.c.l.b16 %v1550
      %v1634 = vunpack.c.h.b16 %v1550
      %v1635 = vunpack.c.l.b16 %v1551
      %v1636 = vunpack.c.h.b16 %v1551
      %v1637 = vunpack.c.l.b16 %v1552
      %v1638 = vunpack.c.h.b16 %v1552
      %v1639 = vunpack.c.l.b16 %v1553
      %v1640 = vunpack.c.h.b16 %v1553
      %v1641 = vunpack.c.l.b16 %v1554
      %v1642 = vunpack.c.h.b16 %v1554
      %v1643 = vunpack.c.l.b16 %v1555
      %v1644 = vunpack.c.h.b16 %v1555
      %v1645 = vunpack.c.l.b16 %v1556
      %v1646 = vunpack.c.h.b16 %v1556
      %v1647 = vunpack.c.l.b16 %v1557
      %v1648 = vunpack.c.h.b16 %v1557
      %v1649 = vunpack.c.l.b16 %v1558
      %v1650 = vunpack.c.h.b16 %v1558
      %v1651 = vunpack.c.l.b16 %v1559
      %v1652 = vunpack.c.h.b16 %v1559
      %v1653 = vunpack.c.l.b16 %v1560
      %v1654 = vunpack.c.h.b16 %v1560
      %v1655 = vunpack.c.l.b16 %v1561
      %v1656 = vunpack.c.h.b16 %v1561
      %v1657 = vunpack.c.l.b16 %v1562
      %v1658 = vunpack.c.h.b16 %v1562
      %v1659 = vunpack.c.l.b16 %v1563
      %v1660 = vunpack.c.h.b16 %v1563
      %v1661 = vunpack.c.l.b16 %v1564
      %v1662 = vunpack.c.h.b16 %v1564
      %v1663 = vunpack.c.l.b16 %v1565
      %v1664 = vunpack.c.h.b16 %v1565
      %v1665 = vunpack.c.l.b16 %v1566
      %v1666 = vunpack.c.h.b16 %v1566
      %v1667 = vunpack.c.l.b16 %v1567
      %v1668 = vunpack.c.h.b16 %v1567
      %v1669 = vunpack.c.l.b16 %v1568
      %v1670 = vunpack.c.h.b16 %v1568
      %v1671 = vunpack.c.l.b16 %v1569
      %v1672 = vunpack.c.h.b16 %v1569
      %v1673 = vunpack.c.l.b16 %v1570
      %v1674 = vunpack.c.h.b16 %v1570
      %v1675 = vunpack.c.l.b16 %v1571
      %v1676 = vunpack.c.h.b16 %v1571
      %v1677 = vunpack.c.l.b16 %v1572
      %v1678 = vunpack.c.h.b16 %v1572
      %v1679 = vunpack.c.l.b16 %v1573
      %v1680 = vunpack.c.h.b16 %v1573
      %v1681 = vunpack.c.l.b16 %v1574
      %v1682 = vunpack.c.h.b16 %v1574
      %v1683 = vpack.c.b16 %v1621, %v1619
      %v1684 = vpack.c.b16 %v1622, %v1620
      %v1685 = vpack.c.b16 %v1625, %v1623
      %v1686 = vpack.c.b16 %v1626, %v1624
      %v1687 = vpack.c.b16 %v1629, %v1627
      %v1688 = vpack.c.b16 %v1630, %v1628
      %v1689 = vpack.c.b16 %v1633, %v1631
      %v1690 = vpack.c.b16 %v1634, %v1632
      %v1691 = vpack.c.b16 %v1637, %v1635
      %v1692 = vpack.c.b16 %v1638, %v1636
      %v1693 = vpack.c.b16 %v1641, %v1639
      %v1694 = vpack.c.b16 %v1642, %v1640
      %v1695 = vpack.c.b16 %v1645, %v1643
      %v1696 = vpack.c.b16 %v1646, %v1644
      %v1697 = vpack.c.b16 %v1649, %v1647
      %v1698 = vpack.c.b16 %v1650, %v1648
      %v1699 = vpack.c.b16 %v1653, %v1651
      %v1700 = vpack.c.b16 %v1654, %v1652
      %v1701 = vpack.c.b16 %v1657, %v1655
      %v1702 = vpack.c.b16 %v1658, %v1656
      %v1703 = vpack.c.b16 %v1661, %v1659
      %v1704 = vpack.c.b16 %v1662, %v1660
      %v1705 = vpack.c.b16 %v1665, %v1663
      %v1706 = vpack.c.b16 %v1666, %v1664
      %v1707 = vpack.c.b16 %v1669, %v1667
      %v1708 = vpack.c.b16 %v1670, %v1668
      %v1709 = vpack.c.b16 %v1673, %v1671
      %v1710 = vpack.c.b16 %v1674, %v1672
      %v1711 = vpack.c.b16 %v1677, %v1675
      %v1712 = vpack.c.b16 %v1678, %v1676
      %v1713 = vpack.c.b16 %v1681, %v1679
      %v1714 = vpack.c.b16 %v1682, %v1680
      %1747 = vmatprep.subr.bf16.mxu0 %v1684
      %1748 = vmatpush1.bf16.msra.mxu0 %v1683
      %1749 = vmatprep.subr.bf16.mxu0 %v1686
      %1750 = vmatpush1.bf16.msra.mxu0 %v1685
      %1751 = vmatprep.subr.bf16.mxu0 %v1688
      %1752 = vmatpush1.bf16.msra.mxu0 %v1687
      %1753 = vmatprep.subr.bf16.mxu0 %v1690
      %1754 = vmatpush1.bf16.msra.mxu0 %v1689
      %1755 = vmatprep.subr.bf16.mxu0 %v1692
      %1756 = vmatpush1.bf16.msra.mxu0 %v1691
      %1757 = vmatprep.subr.bf16.mxu0 %v1694
      %1758 = vmatpush1.bf16.msra.mxu0 %v1693
      %1759 = vmatprep.subr.bf16.mxu0 %v1696
      %1760 = vmatpush1.bf16.msra.mxu0 %v1695
      %1761 = vmatprep.subr.bf16.mxu0 %v1698
      %1762 = vmatpush1.bf16.msra.mxu0 %v1697
      %1763 = vmatprep.subr.bf16.mxu0 %v1700
      %1764 = vmatpush1.bf16.msra.mxu0 %v1699
      %1765 = vmatprep.subr.bf16.mxu0 %v1702
      %1766 = vmatpush1.bf16.msra.mxu0 %v1701
      %1767 = vmatprep.subr.bf16.mxu0 %v1704
      %1768 = vmatpush1.bf16.msra.mxu0 %v1703
      %1769 = vmatprep.subr.bf16.mxu0 %v1706
      %1770 = vmatpush1.bf16.msra.mxu0 %v1705
      %1771 = vmatprep.subr.bf16.mxu0 %v1708
      %1772 = vmatpush1.bf16.msra.mxu0 %v1707
      %1773 = vmatprep.subr.bf16.mxu0 %v1710
      %1774 = vmatpush1.bf16.msra.mxu0 %v1709
      %1775 = vmatprep.subr.bf16.mxu0 %v1712
      %1776 = vmatpush1.bf16.msra.mxu0 %v1711
      %1777 = vmatprep.subr.bf16.mxu0 %v1714
      %1778 = vmatpush1.bf16.msra.mxu0 %v1713
      %1779 = vmatprep.mubr.bf16.mxu0 %v1480
      %1780 = vmatmul.mubr.bf16.gmra.mrb[0].mxu0 %v1479
      %v1781 = vpop.f32.mrb[0].mxu0
      %v1782 = vadd.f32 %v1580, %v1781
      %v1783 = vpop.f32.mrb[0].mxu0
      %v1784 = vadd.f32 %v1584, %v1783
      %v1785 = vpop.f32.mrb[0].mxu0
      %v1786 = vadd.f32 %v1580, %v1785
      %v1787 = vpop.f32.mrb[0].mxu0
      %v1788 = vadd.f32 %v1584, %v1787
      %1789 = vmatprep.mubr.bf16.mxu0 %v1482
      %1790 = vmatmul.mubr.bf16.gmra.mrb[0].mxu0 %v1481
      %v1791 = vpop.f32.mrb[0].mxu0
      %v1792 = vadd.f32 %v1580, %v1791
      %v1793 = vpop.f32.mrb[0].mxu0
      %v1794 = vadd.f32 %v1584, %v1793
      %v1795 = vpop.f32.mrb[0].mxu0
      %v1796 = vadd.f32 %v1580, %v1795
      %v1797 = vpop.f32.mrb[0].mxu0
      %v1798 = vadd.f32 %v1584, %v1797
      %1799 = vmatprep.mubr.bf16.mxu0 %v1484
      %1800 = vmatmul.mubr.bf16.gmra.mrb[0].mxu0 %v1483
      %v1801 = vpop.f32.mrb[0].mxu0
      %v1802 = vadd.f32 %v1580, %v1801
      %v1803 = vpop.f32.mrb[0].mxu0
      %v1804 = vadd.f32 %v1584, %v1803
      %v1805 = vpop.f32.mrb[0].mxu0
      %v1806 = vadd.f32 %v1580, %v1805
      %v1807 = vpop.f32.mrb[0].mxu0
      %v1808 = vadd.f32 %v1584, %v1807
      %1809 = vmatprep.mubr.bf16.mxu0 %v1486
      %1810 = vmatmul.mubr.bf16.gmra.mrb[0].mxu0 %v1485
      %v1811 = vpop.f32.mrb[0].mxu0
      %v1812 = vadd.f32 %v1580, %v1811
      %v1813 = vpop.f32.mrb[0].mxu0
      %v1814 = vadd.f32 %v1584, %v1813
      %v1815 = vpop.f32.mrb[0].mxu0
      %v1816 = vadd.f32 %v1580, %v1815
      %v1817 = vpop.f32.mrb[0].mxu0
      %v1818 = vadd.f32 %v1584, %v1817
      %1819 = vmatprep.mubr.bf16.mxu0 %v1488
      %1820 = vmatmul.mubr.bf16.gmra.mrb[0].mxu0 %v1487
      %v1821 = vpop.f32.mrb[0].mxu0
      %v1822 = vadd.f32 %v1580, %v1821
      %v1823 = vpop.f32.mrb[0].mxu0
      %v1824 = vadd.f32 %v1584, %v1823
      %v1825 = vpop.f32.mrb[0].mxu0
      %v1826 = vadd.f32 %v1580, %v1825
      %v1827 = vpop.f32.mrb[0].mxu0
      %v1828 = vadd.f32 %v1584, %v1827
      %1829 = vmatprep.mubr.bf16.mxu0 %v1490
      %1830 = vmatmul.mubr.bf16.gmra.mrb[0].mxu0 %v1489
      %v1831 = vpop.f32.mrb[0].mxu0
      %v1832 = vadd.f32 %v1580, %v1831
      %v1833 = vpop.f32.mrb[0].mxu0
      %v1834 = vadd.f32 %v1584, %v1833
      %v1835 = vpop.f32.mrb[0].mxu0
      %v1836 = vadd.f32 %v1580, %v1835
      %v1837 = vpop.f32.mrb[0].mxu0
      %v1838 = vadd.f32 %v1584, %v1837
      %1839 = vmatprep.mubr.bf16.mxu0 %v1492
      %1840 = vmatmul.mubr.bf16.gmra.mrb[0].mxu0 %v1491
      %v1841 = vpop.f32.mrb[0].mxu0
      %v1842 = vadd.f32 %v1580, %v1841
      %v1843 = vpop.f32.mrb[0].mxu0
      %v1844 = vadd.f32 %v1584, %v1843
      %v1845 = vpop.f32.mrb[0].mxu0
      %v1846 = vadd.f32 %v1580, %v1845
      %v1847 = vpop.f32.mrb[0].mxu0
      %v1848 = vadd.f32 %v1584, %v1847
      %1849 = vmatprep.mubr.bf16.mxu0 %v1494
      %1850 = vmatmul.mubr.bf16.gmra.mrb[0].mxu0 %v1493
      %v1851 = vpop.f32.mrb[0].mxu0
      %v1852 = vadd.f32 %v1580, %v1851
      %v1853 = vpop.f32.mrb[0].mxu0
      %v1854 = vadd.f32 %v1584, %v1853
      %v1855 = vpop.f32.mrb[0].mxu0
      %v1856 = vadd.f32 %v1580, %v1855
      %v1857 = vpop.f32.mrb[0].mxu0
      %v1858 = vadd.f32 %v1584, %v1857
      %1859 = vmatprep.mubr.bf16.mxu0 %v1496
      %1860 = vmatmul.mubr.bf16.gmra.mrb[0].mxu0 %v1495
      %v1861 = vpop.f32.mrb[0].mxu0
      %v1862 = vadd.f32 %v1580, %v1861
      %v1863 = vpop.f32.mrb[0].mxu0
      %v1864 = vadd.f32 %v1584, %v1863
      %v1865 = vpop.f32.mrb[0].mxu0
      %v1866 = vadd.f32 %v1580, %v1865
      %v1867 = vpop.f32.mrb[0].mxu0
      %v1868 = vadd.f32 %v1584, %v1867
      %1869 = vmatprep.mubr.bf16.mxu0 %v1498
      %1870 = vmatmul.mubr.bf16.gmra.mrb[0].mxu0 %v1497
      %v1871 = vpop.f32.mrb[0].mxu0
      %v1872 = vadd.f32 %v1580, %v1871
      %v1873 = vpop.f32.mrb[0].mxu0
      %v1874 = vadd.f32 %v1584, %v1873
      %v1875 = vpop.f32.mrb[0].mxu0
      %v1876 = vadd.f32 %v1580, %v1875
      %v1877 = vpop.f32.mrb[0].mxu0
      %v1878 = vadd.f32 %v1584, %v1877
      %1879 = vmatprep.mubr.bf16.mxu0 %v1500
      %1880 = vmatmul.mubr.bf16.gmra.mrb[0].mxu0 %v1499
      %v1881 = vpop.f32.mrb[0].mxu0
      %v1882 = vadd.f32 %v1580, %v1881
      %v1883 = vpop.f32.mrb[0].mxu0
      %v1884 = vadd.f32 %v1584, %v1883
      %v1885 = vpop.f32.mrb[0].mxu0
      %v1886 = vadd.f32 %v1580, %v1885
      %v1887 = vpop.f32.mrb[0].mxu0
      %v1888 = vadd.f32 %v1584, %v1887
      %1889 = vmatprep.mubr.bf16.mxu0 %v1502
      %1890 = vmatmul.mubr.bf16.gmra.mrb[0].mxu0 %v1501
      %v1891 = vpop.f32.mrb[0].mxu0
      %v1892 = vadd.f32 %v1580, %v1891
      %v1893 = vpop.f32.mrb[0].mxu0
      %v1894 = vadd.f32 %v1584, %v1893
      %v1895 = vpop.f32.mrb[0].mxu0
      %v1896 = vadd.f32 %v1580, %v1895
      %v1897 = vpop.f32.mrb[0].mxu0
      %v1898 = vadd.f32 %v1584, %v1897
      %1899 = vmatprep.mubr.bf16.mxu0 %v1504
      %1900 = vmatmul.mubr.bf16.gmra.mrb[0].mxu0 %v1503
      %v1901 = vpop.f32.mrb[0].mxu0
      %v1902 = vadd.f32 %v1580, %v1901
      %v1903 = vpop.f32.mrb[0].mxu0
      %v1904 = vadd.f32 %v1584, %v1903
      %v1905 = vpop.f32.mrb[0].mxu0
      %v1906 = vadd.f32 %v1580, %v1905
      %v1907 = vpop.f32.mrb[0].mxu0
      %v1908 = vadd.f32 %v1584, %v1907
      %1909 = vmatprep.mubr.bf16.mxu0 %v1506
      %1910 = vmatmul.mubr.bf16.gmra.mrb[0].mxu0 %v1505
      %v1911 = vpop.f32.mrb[0].mxu0
      %v1912 = vadd.f32 %v1580, %v1911
      %v1913 = vpop.f32.mrb[0].mxu0
      %v1914 = vadd.f32 %v1584, %v1913
      %v1915 = vpop.f32.mrb[0].mxu0
      %v1916 = vadd.f32 %v1580, %v1915
      %v1917 = vpop.f32.mrb[0].mxu0
      %v1918 = vadd.f32 %v1584, %v1917
      %1919 = vmatprep.mubr.bf16.mxu0 %v1508
      %1920 = vmatmul.mubr.bf16.gmra.mrb[0].mxu0 %v1507
      %v1921 = vpop.f32.mrb[0].mxu0
      %v1922 = vadd.f32 %v1580, %v1921
      %v1923 = vpop.f32.mrb[0].mxu0
      %v1924 = vadd.f32 %v1584, %v1923
      %v1925 = vpop.f32.mrb[0].mxu0
      %v1926 = vadd.f32 %v1580, %v1925
      %v1927 = vpop.f32.mrb[0].mxu0
      %v1928 = vadd.f32 %v1584, %v1927
      %1929 = vmatprep.mubr.bf16.mxu0 %v1510
      %1930 = vmatmul.mubr.bf16.gmra.mrb[0].mxu0 %v1509
      %v1931 = vpop.f32.mrb[0].mxu0
      %v1932 = vadd.f32 %v1580, %v1931
      %v1933 = vpop.f32.mrb[0].mxu0
      %v1934 = vadd.f32 %v1584, %v1933
      %v1935 = vpop.f32.mrb[0].mxu0
      %v1936 = vadd.f32 %v1580, %v1935
      %v1937 = vpop.f32.mrb[0].mxu0
      %v1938 = vadd.f32 %v1584, %v1937
      %1939 = vmatprep.mubr.bf16.mxu0 %v1512
      %1940 = vmatmul.mubr.bf16.gmra.mrb[0].mxu0 %v1511
      %v1941 = vpop.f32.mrb[0].mxu0
      %v1942 = vadd.f32 %v1580, %v1941
      %v1943 = vpop.f32.mrb[0].mxu0
      %v1944 = vadd.f32 %v1584, %v1943
      %v1945 = vpop.f32.mrb[0].mxu0
      %v1946 = vadd.f32 %v1580, %v1945
      %v1947 = vpop.f32.mrb[0].mxu0
      %v1948 = vadd.f32 %v1584, %v1947
      %1949 = vmatprep.mubr.bf16.mxu0 %v1514
      %1950 = vmatmul.mubr.bf16.gmra.mrb[0].mxu0 %v1513
      %v1951 = vpop.f32.mrb[0].mxu0
      %v1952 = vadd.f32 %v1580, %v1951
      %v1953 = vpop.f32.mrb[0].mxu0
      %v1954 = vadd.f32 %v1584, %v1953
      %v1955 = vpop.f32.mrb[0].mxu0
      %v1956 = vadd.f32 %v1580, %v1955
      %v1957 = vpop.f32.mrb[0].mxu0
      %v1958 = vadd.f32 %v1584, %v1957
      %1959 = vmatprep.mubr.bf16.mxu0 %v1516
      %1960 = vmatmul.mubr.bf16.gmra.mrb[0].mxu0 %v1515
      %v1961 = vpop.f32.mrb[0].mxu0
      %v1962 = vadd.f32 %v1580, %v1961
      %v1963 = vpop.f32.mrb[0].mxu0
      %v1964 = vadd.f32 %v1584, %v1963
      %v1965 = vpop.f32.mrb[0].mxu0
      %v1966 = vadd.f32 %v1580, %v1965
      %v1967 = vpop.f32.mrb[0].mxu0
      %v1968 = vadd.f32 %v1584, %v1967
      %1969 = vmatprep.mubr.bf16.mxu0 %v1518
      %1970 = vmatmul.mubr.bf16.gmra.mrb[0].mxu0 %v1517
      %v1971 = vpop.f32.mrb[0].mxu0
      %v1972 = vadd.f32 %v1580, %v1971
      %v1973 = vpop.f32.mrb[0].mxu0
      %v1974 = vadd.f32 %v1584, %v1973
      %v1975 = vpop.f32.mrb[0].mxu0
      %v1976 = vadd.f32 %v1580, %v1975
      %v1977 = vpop.f32.mrb[0].mxu0
      %v1978 = vadd.f32 %v1584, %v1977
      %1979 = vmatprep.mubr.bf16.mxu0 %v1520
      %1980 = vmatmul.mubr.bf16.gmra.mrb[0].mxu0 %v1519
      %v1981 = vpop.f32.mrb[0].mxu0
      %v1982 = vadd.f32 %v1580, %v1981
      %v1983 = vpop.f32.mrb[0].mxu0
      %v1984 = vadd.f32 %v1584, %v1983
      %v1985 = vpop.f32.mrb[0].mxu0
      %v1986 = vadd.f32 %v1580, %v1985
      %v1987 = vpop.f32.mrb[0].mxu0
      %v1988 = vadd.f32 %v1584, %v1987
      %1989 = vmatprep.mubr.bf16.mxu0 %v1522
      %1990 = vmatmul.mubr.bf16.gmra.mrb[0].mxu0 %v1521
      %v1991 = vpop.f32.mrb[0].mxu0
      %v1992 = vadd.f32 %v1580, %v1991
      %v1993 = vpop.f32.mrb[0].mxu0
      %v1994 = vadd.f32 %v1584, %v1993
      %v1995 = vpop.f32.mrb[0].mxu0
      %v1996 = vadd.f32 %v1580, %v1995
      %v1997 = vpop.f32.mrb[0].mxu0
      %v1998 = vadd.f32 %v1584, %v1997
      %1999 = vmatprep.mubr.bf16.mxu0 %v1524
      %2000 = vmatmul.mubr.bf16.gmra.mrb[0].mxu0 %v1523
      %v2001 = vpop.f32.mrb[0].mxu0
      %v2002 = vadd.f32 %v1580, %v2001
      %v2003 = vpop.f32.mrb[0].mxu0
      %v2004 = vadd.f32 %v1584, %v2003
      %v2005 = vpop.f32.mrb[0].mxu0
      %v2006 = vadd.f32 %v1580, %v2005
      %v2007 = vpop.f32.mrb[0].mxu0
      %v2008 = vadd.f32 %v1584, %v2007
      %2009 = vmatprep.mubr.bf16.mxu0 %v1526
      %2010 = vmatmul.mubr.bf16.gmra.mrb[0].mxu0 %v1525
      %v2011 = vpop.f32.mrb[0].mxu0
      %v2012 = vadd.f32 %v1580, %v2011
      %v2013 = vpop.f32.mrb[0].mxu0
      %v2014 = vadd.f32 %v1584, %v2013
      %v2015 = vpop.f32.mrb[0].mxu0
      %v2016 = vadd.f32 %v1580, %v2015
      %v2017 = vpop.f32.mrb[0].mxu0
      %v2018 = vadd.f32 %v1584, %v2017
      %2019 = vmatprep.mubr.bf16.mxu0 %v1528
      %2020 = vmatmul.mubr.bf16.gmra.mrb[0].mxu0 %v1527
      %v2021 = vpop.f32.mrb[0].mxu0
      %v2022 = vadd.f32 %v1580, %v2021
      %v2023 = vpop.f32.mrb[0].mxu0
      %v2024 = vadd.f32 %v1584, %v2023
      %v2025 = vpop.f32.mrb[0].mxu0
      %v2026 = vadd.f32 %v1580, %v2025
      %v2027 = vpop.f32.mrb[0].mxu0
      %v2028 = vadd.f32 %v1584, %v2027
      %2029 = vmatprep.mubr.bf16.mxu0 %v1530
      %2030 = vmatmul.mubr.bf16.gmra.mrb[0].mxu0 %v1529
      %v2031 = vpop.f32.mrb[0].mxu0
      %v2032 = vadd.f32 %v1580, %v2031
      %v2033 = vpop.f32.mrb[0].mxu0
      %v2034 = vadd.f32 %v1584, %v2033
      %v2035 = vpop.f32.mrb[0].mxu0
      %v2036 = vadd.f32 %v1580, %v2035
      %v2037 = vpop.f32.mrb[0].mxu0
      %v2038 = vadd.f32 %v1584, %v2037
      %2039 = vmatprep.mubr.bf16.mxu0 %v1532
      %2040 = vmatmul.mubr.bf16.gmra.mrb[0].mxu0 %v1531
      %v2041 = vpop.f32.mrb[0].mxu0
      %v2042 = vadd.f32 %v1580, %v2041
      %v2043 = vpop.f32.mrb[0].mxu0
      %v2044 = vadd.f32 %v1584, %v2043
      %v2045 = vpop.f32.mrb[0].mxu0
      %v2046 = vadd.f32 %v1580, %v2045
      %v2047 = vpop.f32.mrb[0].mxu0
      %v2048 = vadd.f32 %v1584, %v2047
      %2049 = vmatprep.mubr.bf16.mxu0 %v1534
      %2050 = vmatmul.mubr.bf16.gmra.mrb[0].mxu0 %v1533
      %v2051 = vpop.f32.mrb[0].mxu0
      %v2052 = vadd.f32 %v1580, %v2051
      %v2053 = vpop.f32.mrb[0].mxu0
      %v2054 = vadd.f32 %v1584, %v2053
      %v2055 = vpop.f32.mrb[0].mxu0
      %v2056 = vadd.f32 %v1580, %v2055
      %v2057 = vpop.f32.mrb[0].mxu0
      %v2058 = vadd.f32 %v1584, %v2057
      %2059 = vmatprep.mubr.bf16.mxu0 %v1536
      %2060 = vmatmul.mubr.bf16.gmra.mrb[0].mxu0 %v1535
      %v2061 = vpop.f32.mrb[0].mxu0
      %v2062 = vadd.f32 %v1580, %v2061
      %v2063 = vpop.f32.mrb[0].mxu0
      %v2064 = vadd.f32 %v1584, %v2063
      %v2065 = vpop.f32.mrb[0].mxu0
      %v2066 = vadd.f32 %v1580, %v2065
      %v2067 = vpop.f32.mrb[0].mxu0
      %v2068 = vadd.f32 %v1584, %v2067
      %2069 = vmatprep.mubr.bf16.mxu0 %v1538
      %2070 = vmatmul.mubr.bf16.gmra.mrb[0].mxu0 %v1537
      %v2071 = vpop.f32.mrb[0].mxu0
      %v2072 = vadd.f32 %v1580, %v2071
      %v2073 = vpop.f32.mrb[0].mxu0
      %v2074 = vadd.f32 %v1584, %v2073
      %v2075 = vpop.f32.mrb[0].mxu0
      %v2076 = vadd.f32 %v1580, %v2075
      %v2077 = vpop.f32.mrb[0].mxu0
      %v2078 = vadd.f32 %v1584, %v2077
      %2079 = vmatprep.mubr.bf16.mxu0 %v1540
      %2080 = vmatmul.mubr.bf16.gmra.mrb[0].mxu0 %v1539
      %v2081 = vpop.f32.mrb[0].mxu0
      %v2082 = vadd.f32 %v1580, %v2081
      %v2083 = vpop.f32.mrb[0].mxu0
      %v2084 = vadd.f32 %v1584, %v2083
      %v2085 = vpop.f32.mrb[0].mxu0
      %v2086 = vadd.f32 %v1580, %v2085
      %v2087 = vpop.f32.mrb[0].mxu0
      %v2088 = vadd.f32 %v1584, %v2087
      %2089 = vmatprep.mubr.bf16.mxu0 %v1542
      %2090 = vmatmul.mubr.bf16.gmra.mrb[0].mxu0 %v1541
      %v2091 = vpop.f32.mrb[0].mxu0
      %v2092 = vadd.f32 %v1580, %v2091
      %v2093 = vpop.f32.mrb[0].mxu0
      %v2094 = vadd.f32 %v1584, %v2093
      %v2095 = vpop.f32.mrb[0].mxu0
      %v2096 = vadd.f32 %v1580, %v2095
      %v2097 = vpop.f32.mrb[0].mxu0
      %v2098 = vadd.f32 %v1584, %v2097
      %2099 = vdwg.mxu0
      %v2100 = vmax.f32 %v1782, 0.0
      %v2101 = vmax.f32 %v1784, 0.0
      %v2102 = vmax.f32 %v1786, 0.0
      %v2103 = vmax.f32 %v1788, 0.0
      %v2104 = vmax.f32 %v1792, 0.0
      %v2105 = vmax.f32 %v1794, 0.0
      %v2106 = vmax.f32 %v1796, 0.0
      %v2107 = vmax.f32 %v1798, 0.0
      %v2108 = vmax.f32 %v1802, 0.0
      %v2109 = vmax.f32 %v1804, 0.0
      %v2110 = vmax.f32 %v1806, 0.0
      %v2111 = vmax.f32 %v1808, 0.0
      %v2112 = vmax.f32 %v1812, 0.0
      %v2113 = vmax.f32 %v1814, 0.0
      %v2114 = vmax.f32 %v1816, 0.0
      %v2115 = vmax.f32 %v1818, 0.0
      %v2116 = vmax.f32 %v1822, 0.0
      %v2117 = vmax.f32 %v1824, 0.0
      %v2118 = vmax.f32 %v1826, 0.0
      %v2119 = vmax.f32 %v1828, 0.0
      %v2120 = vmax.f32 %v1832, 0.0
      %v2121 = vmax.f32 %v1834, 0.0
      %v2122 = vmax.f32 %v1836, 0.0
      %v2123 = vmax.f32 %v1838, 0.0
      %v2124 = vmax.f32 %v1842, 0.0
      %v2125 = vmax.f32 %v1844, 0.0
      %v2126 = vmax.f32 %v1846, 0.0
      %v2127 = vmax.f32 %v1848, 0.0
      %v2128 = vmax.f32 %v1852, 0.0
      %v2129 = vmax.f32 %v1854, 0.0
      %v2130 = vmax.f32 %v1856, 0.0
      %v2131 = vmax.f32 %v1858, 0.0
      %v2132 = vmax.f32 %v1862, 0.0
      %v2133 = vmax.f32 %v1864, 0.0
      %v2134 = vmax.f32 %v1866, 0.0
      %v2135 = vmax.f32 %v1868, 0.0
      %v2136 = vmax.f32 %v1872, 0.0
      %v2137 = vmax.f32 %v1874, 0.0
      %v2138 = vmax.f32 %v1876, 0.0
      %v2139 = vmax.f32 %v1878, 0.0
      %v2140 = vmax.f32 %v1882, 0.0
      %v2141 = vmax.f32 %v1884, 0.0
      %v2142 = vmax.f32 %v1886, 0.0
      %v2143 = vmax.f32 %v1888, 0.0
      %v2144 = vmax.f32 %v1892, 0.0
      %v2145 = vmax.f32 %v1894, 0.0
      %v2146 = vmax.f32 %v1896, 0.0
      %v2147 = vmax.f32 %v1898, 0.0
      %v2148 = vmax.f32 %v1902, 0.0
      %v2149 = vmax.f32 %v1904, 0.0
      %v2150 = vmax.f32 %v1906, 0.0
      %v2151 = vmax.f32 %v1908, 0.0
      %v2152 = vmax.f32 %v1912, 0.0
      %v2153 = vmax.f32 %v1914, 0.0
      %v2154 = vmax.f32 %v1916, 0.0
      %v2155 = vmax.f32 %v1918, 0.0
      %v2156 = vmax.f32 %v1922, 0.0
      %v2157 = vmax.f32 %v1924, 0.0
      %v2158 = vmax.f32 %v1926, 0.0
      %v2159 = vmax.f32 %v1928, 0.0
      %v2160 = vmax.f32 %v1932, 0.0
      %v2161 = vmax.f32 %v1934, 0.0
      %v2162 = vmax.f32 %v1936, 0.0
      %v2163 = vmax.f32 %v1938, 0.0
      %v2164 = vmax.f32 %v1942, 0.0
      %v2165 = vmax.f32 %v1944, 0.0
      %v2166 = vmax.f32 %v1946, 0.0
      %v2167 = vmax.f32 %v1948, 0.0
      %v2168 = vmax.f32 %v1952, 0.0
      %v2169 = vmax.f32 %v1954, 0.0
      %v2170 = vmax.f32 %v1956, 0.0
      %v2171 = vmax.f32 %v1958, 0.0
      %v2172 = vmax.f32 %v1962, 0.0
      %v2173 = vmax.f32 %v1964, 0.0
      %v2174 = vmax.f32 %v1966, 0.0
      %v2175 = vmax.f32 %v1968, 0.0
      %v2176 = vmax.f32 %v1972, 0.0
      %v2177 = vmax.f32 %v1974, 0.0
      %v2178 = vmax.f32 %v1976, 0.0
      %v2179 = vmax.f32 %v1978, 0.0
      %v2180 = vmax.f32 %v1982, 0.0
      %v2181 = vmax.f32 %v1984, 0.0
      %v2182 = vmax.f32 %v1986, 0.0
      %v2183 = vmax.f32 %v1988, 0.0
      %v2184 = vmax.f32 %v1992, 0.0
      %v2185 = vmax.f32 %v1994, 0.0
      %v2186 = vmax.f32 %v1996, 0.0
      %v2187 = vmax.f32 %v1998, 0.0
      %v2188 = vmax.f32 %v2002, 0.0
      %v2189 = vmax.f32 %v2004, 0.0
      %v2190 = vmax.f32 %v2006, 0.0
      %v2191 = vmax.f32 %v2008, 0.0
      %v2192 = vmax.f32 %v2012, 0.0
      %v2193 = vmax.f32 %v2014, 0.0
      %v2194 = vmax.f32 %v2016, 0.0
      %v2195 = vmax.f32 %v2018, 0.0
      %v2196 = vmax.f32 %v2022, 0.0
      %v2197 = vmax.f32 %v2024, 0.0
      %v2198 = vmax.f32 %v2026, 0.0
      %v2199 = vmax.f32 %v2028, 0.0
      %v2200 = vmax.f32 %v2032, 0.0
      %v2201 = vmax.f32 %v2034, 0.0
      %v2202 = vmax.f32 %v2036, 0.0
      %v2203 = vmax.f32 %v2038, 0.0
      %v2204 = vmax.f32 %v2042, 0.0
      %v2205 = vmax.f32 %v2044, 0.0
      %v2206 = vmax.f32 %v2046, 0.0
      %v2207 = vmax.f32 %v2048, 0.0
      %v2208 = vmax.f32 %v2052, 0.0
      %v2209 = vmax.f32 %v2054, 0.0
      %v2210 = vmax.f32 %v2056, 0.0
      %v2211 = vmax.f32 %v2058, 0.0
      %v2212 = vmax.f32 %v2062, 0.0
      %v2213 = vmax.f32 %v2064, 0.0
      %v2214 = vmax.f32 %v2066, 0.0
      %v2215 = vmax.f32 %v2068, 0.0
      %v2216 = vmax.f32 %v2072, 0.0
      %v2217 = vmax.f32 %v2074, 0.0
      %v2218 = vmax.f32 %v2076, 0.0
      %v2219 = vmax.f32 %v2078, 0.0
      %v2220 = vmax.f32 %v2082, 0.0
      %v2221 = vmax.f32 %v2084, 0.0
      %v2222 = vmax.f32 %v2086, 0.0
      %v2223 = vmax.f32 %v2088, 0.0
      %v2224 = vmax.f32 %v2092, 0.0
      %v2225 = vmax.f32 %v2094, 0.0
      %v2226 = vmax.f32 %v2096, 0.0
      %v2227 = vmax.f32 %v2098, 0.0
      %v2228 = vpack.c.bf16 %v2102, %v2100
      %v2229 = vpack.c.bf16 %v2103, %v2101
      %v2230 = vpack.c.bf16 %v2106, %v2104
      %v2231 = vpack.c.bf16 %v2107, %v2105
      %v2232 = vpack.c.bf16 %v2110, %v2108
      %v2233 = vpack.c.bf16 %v2111, %v2109
      %v2234 = vpack.c.bf16 %v2114, %v2112
      %v2235 = vpack.c.bf16 %v2115, %v2113
      %v2236 = vpack.c.bf16 %v2118, %v2116
      %v2237 = vpack.c.bf16 %v2119, %v2117
      %v2238 = vpack.c.bf16 %v2122, %v2120
      %v2239 = vpack.c.bf16 %v2123, %v2121
      %v2240 = vpack.c.bf16 %v2126, %v2124
      %v2241 = vpack.c.bf16 %v2127, %v2125
      %v2242 = vpack.c.bf16 %v2130, %v2128
      %v2243 = vpack.c.bf16 %v2131, %v2129
      %v2244 = vpack.c.bf16 %v2134, %v2132
      %v2245 = vpack.c.bf16 %v2135, %v2133
      %v2246 = vpack.c.bf16 %v2138, %v2136
      %v2247 = vpack.c.bf16 %v2139, %v2137
      %v2248 = vpack.c.bf16 %v2142, %v2140
      %v2249 = vpack.c.bf16 %v2143, %v2141
      %v2250 = vpack.c.bf16 %v2146, %v2144
      %v2251 = vpack.c.bf16 %v2147, %v2145
      %v2252 = vpack.c.bf16 %v2150, %v2148
      %v2253 = vpack.c.bf16 %v2151, %v2149
      %v2254 = vpack.c.bf16 %v2154, %v2152
      %v2255 = vpack.c.bf16 %v2155, %v2153
      %v2256 = vpack.c.bf16 %v2158, %v2156
      %v2257 = vpack.c.bf16 %v2159, %v2157
      %v2258 = vpack.c.bf16 %v2162, %v2160
      %v2259 = vpack.c.bf16 %v2163, %v2161
      %v2260 = vpack.c.bf16 %v2166, %v2164
      %v2261 = vpack.c.bf16 %v2167, %v2165
      %v2262 = vpack.c.bf16 %v2170, %v2168
      %v2263 = vpack.c.bf16 %v2171, %v2169
      %v2264 = vpack.c.bf16 %v2174, %v2172
      %v2265 = vpack.c.bf16 %v2175, %v2173
      %v2266 = vpack.c.bf16 %v2178, %v2176
      %v2267 = vpack.c.bf16 %v2179, %v2177
      %v2268 = vpack.c.bf16 %v2182, %v2180
      %v2269 = vpack.c.bf16 %v2183, %v2181
      %v2270 = vpack.c.bf16 %v2186, %v2184
      %v2271 = vpack.c.bf16 %v2187, %v2185
      %v2272 = vpack.c.bf16 %v2190, %v2188
      %v2273 = vpack.c.bf16 %v2191, %v2189
      %v2274 = vpack.c.bf16 %v2194, %v2192
      %v2275 = vpack.c.bf16 %v2195, %v2193
      %v2276 = vpack.c.bf16 %v2198, %v2196
      %v2277 = vpack.c.bf16 %v2199, %v2197
      %v2278 = vpack.c.bf16 %v2202, %v2200
      %v2279 = vpack.c.bf16 %v2203, %v2201
      %v2280 = vpack.c.bf16 %v2206, %v2204
      %v2281 = vpack.c.bf16 %v2207, %v2205
      %v2282 = vpack.c.bf16 %v2210, %v2208
      %v2283 = vpack.c.bf16 %v2211, %v2209
      %v2284 = vpack.c.bf16 %v2214, %v2212
      %v2285 = vpack.c.bf16 %v2215, %v2213
      %v2286 = vpack.c.bf16 %v2218, %v2216
      %v2287 = vpack.c.bf16 %v2219, %v2217
      %v2288 = vpack.c.bf16 %v2222, %v2220
      %v2289 = vpack.c.bf16 %v2223, %v2221
      %v2290 = vpack.c.bf16 %v2226, %v2224
      %v2291 = vpack.c.bf16 %v2227, %v2225
      %v2292 = vld [vmem:[%s5] sm:$0xff]
      %v2293 = vld [vmem:[%s5 + $0x8] sm:$0xff]
      %v2294 = vld [vmem:[%s5 + $0x10] sm:$0xff]
      %v2295 = vld [vmem:[%s5 + $0x18] sm:$0xff]
      %v2296 = vld [vmem:[%s5 + $0x20] sm:$0xff]
      %v2297 = vld [vmem:[%s5 + $0x28] sm:$0xff]
      %v2298 = vld [vmem:[%s5 + $0x30] sm:$0xff]
      %v2299 = vld [vmem:[%s5 + $0x38] sm:$0xff]
      %v2300 = vld [vmem:[%s5 + $0x40] sm:$0xff]
      %v2301 = vld [vmem:[%s5 + $0x48] sm:$0xff]
      %v2302 = vld [vmem:[%s5 + $0x50] sm:$0xff]
      %v2303 = vld [vmem:[%s5 + $0x58] sm:$0xff]
      %v2304 = vld [vmem:[%s5 + $0x60] sm:$0xff]
      %v2305 = vld [vmem:[%s5 + $0x68] sm:$0xff]
      %v2306 = vld [vmem:[%s5 + $0x70] sm:$0xff]
      %v2307 = vld [vmem:[%s5 + $0x78] sm:$0xff]
      %v2308 = vld [vmem:[%s5 + $0x80] sm:$0xff]
      %v2309 = vld [vmem:[%s5 + $0x88] sm:$0xff]
      %v2310 = vld [vmem:[%s5 + $0x90] sm:$0xff]
      %v2311 = vld [vmem:[%s5 + $0x98] sm:$0xff]
      %v2312 = vld [vmem:[%s5 + $0xa0] sm:$0xff]
      %v2313 = vld [vmem:[%s5 + $0xa8] sm:$0xff]
      %v2314 = vld [vmem:[%s5 + $0xb0] sm:$0xff]
      %v2315 = vld [vmem:[%s5 + $0xb8] sm:$0xff]
      %v2316 = vld [vmem:[%s5 + $0xc0] sm:$0xff]
      %v2317 = vld [vmem:[%s5 + $0xc8] sm:$0xff]
      %v2318 = vld [vmem:[%s5 + $0xd0] sm:$0xff]
      %v2319 = vld [vmem:[%s5 + $0xd8] sm:$0xff]
      %v2320 = vld [vmem:[%s5 + $0xe0] sm:$0xff]
      %v2321 = vld [vmem:[%s5 + $0xe8] sm:$0xff]
      %v2322 = vld [vmem:[%s5 + $0xf0] sm:$0xff]
      %v2323 = vld [vmem:[%s5 + $0xf8] sm:$0xff]
      %v2324 = vld [vmem:[%s6] sm:$0x3]
      %v2326 = vlaneseq
      %v2327 = vshrl.u32 %v2326, 7
      %v2328 = vsub.s32 0, %v2327
      %v2329 = vrot.slane %v2324, %v2328
      %v2330 = vlaneseq
      %v2331 = vshrl.u32 %v2330, 7
      %v2332 = vsub.s32 1, %v2331
      %v2333 = vrot.slane %v2324, %v2332
      %v2368 = vunpack.c.l.b16 %v2292
      %v2369 = vunpack.c.h.b16 %v2292
      %v2370 = vunpack.c.l.b16 %v2293
      %v2371 = vunpack.c.h.b16 %v2293
      %v2372 = vunpack.c.l.b16 %v2294
      %v2373 = vunpack.c.h.b16 %v2294
      %v2374 = vunpack.c.l.b16 %v2295
      %v2375 = vunpack.c.h.b16 %v2295
      %v2376 = vunpack.c.l.b16 %v2296
      %v2377 = vunpack.c.h.b16 %v2296
      %v2378 = vunpack.c.l.b16 %v2297
      %v2379 = vunpack.c.h.b16 %v2297
      %v2380 = vunpack.c.l.b16 %v2298
      %v2381 = vunpack.c.h.b16 %v2298
      %v2382 = vunpack.c.l.b16 %v2299
      %v2383 = vunpack.c.h.b16 %v2299
      %v2384 = vunpack.c.l.b16 %v2300
      %v2385 = vunpack.c.h.b16 %v2300
      %v2386 = vunpack.c.l.b16 %v2301
      %v2387 = vunpack.c.h.b16 %v2301
      %v2388 = vunpack.c.l.b16 %v2302
      %v2389 = vunpack.c.h.b16 %v2302
      %v2390 = vunpack.c.l.b16 %v2303
      %v2391 = vunpack.c.h.b16 %v2303
      %v2392 = vunpack.c.l.b16 %v2304
      %v2393 = vunpack.c.h.b16 %v2304
      %v2394 = vunpack.c.l.b16 %v2305
      %v2395 = vunpack.c.h.b16 %v2305
      %v2396 = vunpack.c.l.b16 %v2306
      %v2397 = vunpack.c.h.b16 %v2306
      %v2398 = vunpack.c.l.b16 %v2307
      %v2399 = vunpack.c.h.b16 %v2307
      %v2400 = vunpack.c.l.b16 %v2308
      %v2401 = vunpack.c.h.b16 %v2308
      %v2402 = vunpack.c.l.b16 %v2309
      %v2403 = vunpack.c.h.b16 %v2309
      %v2404 = vunpack.c.l.b16 %v2310
      %v2405 = vunpack.c.h.b16 %v2310
      %v2406 = vunpack.c.l.b16 %v2311
      %v2407 = vunpack.c.h.b16 %v2311
      %v2408 = vunpack.c.l.b16 %v2312
      %v2409 = vunpack.c.h.b16 %v2312
      %v2410 = vunpack.c.l.b16 %v2313
      %v2411 = vunpack.c.h.b16 %v2313
      %v2412 = vunpack.c.l.b16 %v2314
      %v2413 = vunpack.c.h.b16 %v2314
      %v2414 = vunpack.c.l.b16 %v2315
      %v2415 = vunpack.c.h.b16 %v2315
      %v2416 = vunpack.c.l.b16 %v2316
      %v2417 = vunpack.c.h.b16 %v2316
      %v2418 = vunpack.c.l.b16 %v2317
      %v2419 = vunpack.c.h.b16 %v2317
      %v2420 = vunpack.c.l.b16 %v2318
      %v2421 = vunpack.c.h.b16 %v2318
      %v2422 = vunpack.c.l.b16 %v2319
      %v2423 = vunpack.c.h.b16 %v2319
      %v2424 = vunpack.c.l.b16 %v2320
      %v2425 = vunpack.c.h.b16 %v2320
      %v2426 = vunpack.c.l.b16 %v2321
      %v2427 = vunpack.c.h.b16 %v2321
      %v2428 = vunpack.c.l.b16 %v2322
      %v2429 = vunpack.c.h.b16 %v2322
      %v2430 = vunpack.c.l.b16 %v2323
      %v2431 = vunpack.c.h.b16 %v2323
      %v2432 = vpack.c.b16 %v2370, %v2368
      %v2433 = vpack.c.b16 %v2371, %v2369
      %v2434 = vpack.c.b16 %v2374, %v2372
      %v2435 = vpack.c.b16 %v2375, %v2373
      %v2436 = vpack.c.b16 %v2378, %v2376
      %v2437 = vpack.c.b16 %v2379, %v2377
      %v2438 = vpack.c.b16 %v2382, %v2380
      %v2439 = vpack.c.b16 %v2383, %v2381
      %v2440 = vpack.c.b16 %v2386, %v2384
      %v2441 = vpack.c.b16 %v2387, %v2385
      %v2442 = vpack.c.b16 %v2390, %v2388
      %v2443 = vpack.c.b16 %v2391, %v2389
      %v2444 = vpack.c.b16 %v2394, %v2392
      %v2445 = vpack.c.b16 %v2395, %v2393
      %v2446 = vpack.c.b16 %v2398, %v2396
      %v2447 = vpack.c.b16 %v2399, %v2397
      %v2448 = vpack.c.b16 %v2402, %v2400
      %v2449 = vpack.c.b16 %v2403, %v2401
      %v2450 = vpack.c.b16 %v2406, %v2404
      %v2451 = vpack.c.b16 %v2407, %v2405
      %v2452 = vpack.c.b16 %v2410, %v2408
      %v2453 = vpack.c.b16 %v2411, %v2409
      %v2454 = vpack.c.b16 %v2414, %v2412
      %v2455 = vpack.c.b16 %v2415, %v2413
      %v2456 = vpack.c.b16 %v2418, %v2416
      %v2457 = vpack.c.b16 %v2419, %v2417
      %v2458 = vpack.c.b16 %v2422, %v2420
      %v2459 = vpack.c.b16 %v2423, %v2421
      %v2460 = vpack.c.b16 %v2426, %v2424
      %v2461 = vpack.c.b16 %v2427, %v2425
      %v2462 = vpack.c.b16 %v2430, %v2428
      %v2463 = vpack.c.b16 %v2431, %v2429
      %2496 = vmatprep.subr.bf16.mxu0 %v2433
      %2497 = vmatpush1.bf16.msra.mxu0 %v2432
      %2498 = vmatprep.subr.bf16.mxu0 %v2435
      %2499 = vmatpush1.bf16.msra.mxu0 %v2434
      %2500 = vmatprep.subr.bf16.mxu0 %v2437
      %2501 = vmatpush1.bf16.msra.mxu0 %v2436
      %2502 = vmatprep.subr.bf16.mxu0 %v2439
      %2503 = vmatpush1.bf16.msra.mxu0 %v2438
      %2504 = vmatprep.subr.bf16.mxu0 %v2441
      %2505 = vmatpush1.bf16.msra.mxu0 %v2440
      %2506 = vmatprep.subr.bf16.mxu0 %v2443
      %2507 = vmatpush1.bf16.msra.mxu0 %v2442
      %2508 = vmatprep.subr.bf16.mxu0 %v2445
      %2509 = vmatpush1.bf16.msra.mxu0 %v2444
      %2510 = vmatprep.subr.bf16.mxu0 %v2447
      %2511 = vmatpush1.bf16.msra.mxu0 %v2446
      %2512 = vmatprep.subr.bf16.mxu0 %v2449
      %2513 = vmatpush1.bf16.msra.mxu0 %v2448
      %2514 = vmatprep.subr.bf16.mxu0 %v2451
      %2515 = vmatpush1.bf16.msra.mxu0 %v2450
      %2516 = vmatprep.subr.bf16.mxu0 %v2453
      %2517 = vmatpush1.bf16.msra.mxu0 %v2452
      %2518 = vmatprep.subr.bf16.mxu0 %v2455
      %2519 = vmatpush1.bf16.msra.mxu0 %v2454
      %2520 = vmatprep.subr.bf16.mxu0 %v2457
      %2521 = vmatpush1.bf16.msra.mxu0 %v2456
      %2522 = vmatprep.subr.bf16.mxu0 %v2459
      %2523 = vmatpush1.bf16.msra.mxu0 %v2458
      %2524 = vmatprep.subr.bf16.mxu0 %v2461
      %2525 = vmatpush1.bf16.msra.mxu0 %v2460
      %2526 = vmatprep.subr.bf16.mxu0 %v2463
      %2527 = vmatpush1.bf16.msra.mxu0 %v2462
      %2528 = vmatprep.mubr.bf16.mxu0 %v2229
      %2529 = vmatmul.mubr.bf16.gmra.mrb[0].mxu0 %v2228
      %v2530 = vpop.f32.mrb[0].mxu0
      %v2531 = vadd.f32 %v2329, %v2530
      %v2532 = vpop.f32.mrb[0].mxu0
      %v2533 = vadd.f32 %v2333, %v2532
      %v2534 = vpop.f32.mrb[0].mxu0
      %v2535 = vadd.f32 %v2329, %v2534
      %v2536 = vpop.f32.mrb[0].mxu0
      %v2537 = vadd.f32 %v2333, %v2536
      %2538 = vmatprep.mubr.bf16.mxu0 %v2231
      %2539 = vmatmul.mubr.bf16.gmra.mrb[0].mxu0 %v2230
      %v2540 = vpop.f32.mrb[0].mxu0
      %v2541 = vadd.f32 %v2329, %v2540
      %v2542 = vpop.f32.mrb[0].mxu0
      %v2543 = vadd.f32 %v2333, %v2542
      %v2544 = vpop.f32.mrb[0].mxu0
      %v2545 = vadd.f32 %v2329, %v2544
      %v2546 = vpop.f32.mrb[0].mxu0
      %v2547 = vadd.f32 %v2333, %v2546
      %2548 = vmatprep.mubr.bf16.mxu0 %v2233
      %2549 = vmatmul.mubr.bf16.gmra.mrb[0].mxu0 %v2232
      %v2550 = vpop.f32.mrb[0].mxu0
      %v2551 = vadd.f32 %v2329, %v2550
      %v2552 = vpop.f32.mrb[0].mxu0
      %v2553 = vadd.f32 %v2333, %v2552
      %v2554 = vpop.f32.mrb[0].mxu0
      %v2555 = vadd.f32 %v2329, %v2554
      %v2556 = vpop.f32.mrb[0].mxu0
      %v2557 = vadd.f32 %v2333, %v2556
      %2558 = vmatprep.mubr.bf16.mxu0 %v2235
      %2559 = vmatmul.mubr.bf16.gmra.mrb[0].mxu0 %v2234
      %v2560 = vpop.f32.mrb[0].mxu0
      %v2561 = vadd.f32 %v2329, %v2560
      %v2562 = vpop.f32.mrb[0].mxu0
      %v2563 = vadd.f32 %v2333, %v2562
      %v2564 = vpop.f32.mrb[0].mxu0
      %v2565 = vadd.f32 %v2329, %v2564
      %v2566 = vpop.f32.mrb[0].mxu0
      %v2567 = vadd.f32 %v2333, %v2566
      %2568 = vmatprep.mubr.bf16.mxu0 %v2237
      %2569 = vmatmul.mubr.bf16.gmra.mrb[0].mxu0 %v2236
      %v2570 = vpop.f32.mrb[0].mxu0
      %v2571 = vadd.f32 %v2329, %v2570
      %v2572 = vpop.f32.mrb[0].mxu0
      %v2573 = vadd.f32 %v2333, %v2572
      %v2574 = vpop.f32.mrb[0].mxu0
      %v2575 = vadd.f32 %v2329, %v2574
      %v2576 = vpop.f32.mrb[0].mxu0
      %v2577 = vadd.f32 %v2333, %v2576
      %2578 = vmatprep.mubr.bf16.mxu0 %v2239
      %2579 = vmatmul.mubr.bf16.gmra.mrb[0].mxu0 %v2238
      %v2580 = vpop.f32.mrb[0].mxu0
      %v2581 = vadd.f32 %v2329, %v2580
      %v2582 = vpop.f32.mrb[0].mxu0
      %v2583 = vadd.f32 %v2333, %v2582
      %v2584 = vpop.f32.mrb[0].mxu0
      %v2585 = vadd.f32 %v2329, %v2584
      %v2586 = vpop.f32.mrb[0].mxu0
      %v2587 = vadd.f32 %v2333, %v2586
      %2588 = vmatprep.mubr.bf16.mxu0 %v2241
      %2589 = vmatmul.mubr.bf16.gmra.mrb[0].mxu0 %v2240
      %v2590 = vpop.f32.mrb[0].mxu0
      %v2591 = vadd.f32 %v2329, %v2590
      %v2592 = vpop.f32.mrb[0].mxu0
      %v2593 = vadd.f32 %v2333, %v2592
      %v2594 = vpop.f32.mrb[0].mxu0
      %v2595 = vadd.f32 %v2329, %v2594
      %v2596 = vpop.f32.mrb[0].mxu0
      %v2597 = vadd.f32 %v2333, %v2596
      %2598 = vmatprep.mubr.bf16.mxu0 %v2243
      %2599 = vmatmul.mubr.bf16.gmra.mrb[0].mxu0 %v2242
      %v2600 = vpop.f32.mrb[0].mxu0
      %v2601 = vadd.f32 %v2329, %v2600
      %v2602 = vpop.f32.mrb[0].mxu0
      %v2603 = vadd.f32 %v2333, %v2602
      %v2604 = vpop.f32.mrb[0].mxu0
      %v2605 = vadd.f32 %v2329, %v2604
      %v2606 = vpop.f32.mrb[0].mxu0
      %v2607 = vadd.f32 %v2333, %v2606
      %2608 = vmatprep.mubr.bf16.mxu0 %v2245
      %2609 = vmatmul.mubr.bf16.gmra.mrb[0].mxu0 %v2244
      %v2610 = vpop.f32.mrb[0].mxu0
      %v2611 = vadd.f32 %v2329, %v2610
      %v2612 = vpop.f32.mrb[0].mxu0
      %v2613 = vadd.f32 %v2333, %v2612
      %v2614 = vpop.f32.mrb[0].mxu0
      %v2615 = vadd.f32 %v2329, %v2614
      %v2616 = vpop.f32.mrb[0].mxu0
      %v2617 = vadd.f32 %v2333, %v2616
      %2618 = vmatprep.mubr.bf16.mxu0 %v2247
      %2619 = vmatmul.mubr.bf16.gmra.mrb[0].mxu0 %v2246
      %v2620 = vpop.f32.mrb[0].mxu0
      %v2621 = vadd.f32 %v2329, %v2620
      %v2622 = vpop.f32.mrb[0].mxu0
      %v2623 = vadd.f32 %v2333, %v2622
      %v2624 = vpop.f32.mrb[0].mxu0
      %v2625 = vadd.f32 %v2329, %v2624
      %v2626 = vpop.f32.mrb[0].mxu0
      %v2627 = vadd.f32 %v2333, %v2626
      %2628 = vmatprep.mubr.bf16.mxu0 %v2249
      %2629 = vmatmul.mubr.bf16.gmra.mrb[0].mxu0 %v2248
      %v2630 = vpop.f32.mrb[0].mxu0
      %v2631 = vadd.f32 %v2329, %v2630
      %v2632 = vpop.f32.mrb[0].mxu0
      %v2633 = vadd.f32 %v2333, %v2632
      %v2634 = vpop.f32.mrb[0].mxu0
      %v2635 = vadd.f32 %v2329, %v2634
      %v2636 = vpop.f32.mrb[0].mxu0
      %v2637 = vadd.f32 %v2333, %v2636
      %2638 = vmatprep.mubr.bf16.mxu0 %v2251
      %2639 = vmatmul.mubr.bf16.gmra.mrb[0].mxu0 %v2250
      %v2640 = vpop.f32.mrb[0].mxu0
      %v2641 = vadd.f32 %v2329, %v2640
      %v2642 = vpop.f32.mrb[0].mxu0
      %v2643 = vadd.f32 %v2333, %v2642
      %v2644 = vpop.f32.mrb[0].mxu0
      %v2645 = vadd.f32 %v2329, %v2644
      %v2646 = vpop.f32.mrb[0].mxu0
      %v2647 = vadd.f32 %v2333, %v2646
      %2648 = vmatprep.mubr.bf16.mxu0 %v2253
      %2649 = vmatmul.mubr.bf16.gmra.mrb[0].mxu0 %v2252
      %v2650 = vpop.f32.mrb[0].mxu0
      %v2651 = vadd.f32 %v2329, %v2650
      %v2652 = vpop.f32.mrb[0].mxu0
      %v2653 = vadd.f32 %v2333, %v2652
      %v2654 = vpop.f32.mrb[0].mxu0
      %v2655 = vadd.f32 %v2329, %v2654
      %v2656 = vpop.f32.mrb[0].mxu0
      %v2657 = vadd.f32 %v2333, %v2656
      %2658 = vmatprep.mubr.bf16.mxu0 %v2255
      %2659 = vmatmul.mubr.bf16.gmra.mrb[0].mxu0 %v2254
      %v2660 = vpop.f32.mrb[0].mxu0
      %v2661 = vadd.f32 %v2329, %v2660
      %v2662 = vpop.f32.mrb[0].mxu0
      %v2663 = vadd.f32 %v2333, %v2662
      %v2664 = vpop.f32.mrb[0].mxu0
      %v2665 = vadd.f32 %v2329, %v2664
      %v2666 = vpop.f32.mrb[0].mxu0
      %v2667 = vadd.f32 %v2333, %v2666
      %2668 = vmatprep.mubr.bf16.mxu0 %v2257
      %2669 = vmatmul.mubr.bf16.gmra.mrb[0].mxu0 %v2256
      %v2670 = vpop.f32.mrb[0].mxu0
      %v2671 = vadd.f32 %v2329, %v2670
      %v2672 = vpop.f32.mrb[0].mxu0
      %v2673 = vadd.f32 %v2333, %v2672
      %v2674 = vpop.f32.mrb[0].mxu0
      %v2675 = vadd.f32 %v2329, %v2674
      %v2676 = vpop.f32.mrb[0].mxu0
      %v2677 = vadd.f32 %v2333, %v2676
      %2678 = vmatprep.mubr.bf16.mxu0 %v2259
      %2679 = vmatmul.mubr.bf16.gmra.mrb[0].mxu0 %v2258
      %v2680 = vpop.f32.mrb[0].mxu0
      %v2681 = vadd.f32 %v2329, %v2680
      %v2682 = vpop.f32.mrb[0].mxu0
      %v2683 = vadd.f32 %v2333, %v2682
      %v2684 = vpop.f32.mrb[0].mxu0
      %v2685 = vadd.f32 %v2329, %v2684
      %v2686 = vpop.f32.mrb[0].mxu0
      %v2687 = vadd.f32 %v2333, %v2686
      %2688 = vmatprep.mubr.bf16.mxu0 %v2261
      %2689 = vmatmul.mubr.bf16.gmra.mrb[0].mxu0 %v2260
      %v2690 = vpop.f32.mrb[0].mxu0
      %v2691 = vadd.f32 %v2329, %v2690
      %v2692 = vpop.f32.mrb[0].mxu0
      %v2693 = vadd.f32 %v2333, %v2692
      %v2694 = vpop.f32.mrb[0].mxu0
      %v2695 = vadd.f32 %v2329, %v2694
      %v2696 = vpop.f32.mrb[0].mxu0
      %v2697 = vadd.f32 %v2333, %v2696
      %2698 = vmatprep.mubr.bf16.mxu0 %v2263
      %2699 = vmatmul.mubr.bf16.gmra.mrb[0].mxu0 %v2262
      %v2700 = vpop.f32.mrb[0].mxu0
      %v2701 = vadd.f32 %v2329, %v2700
      %v2702 = vpop.f32.mrb[0].mxu0
      %v2703 = vadd.f32 %v2333, %v2702
      %v2704 = vpop.f32.mrb[0].mxu0
      %v2705 = vadd.f32 %v2329, %v2704
      %v2706 = vpop.f32.mrb[0].mxu0
      %v2707 = vadd.f32 %v2333, %v2706
      %2708 = vmatprep.mubr.bf16.mxu0 %v2265
      %2709 = vmatmul.mubr.bf16.gmra.mrb[0].mxu0 %v2264
      %v2710 = vpop.f32.mrb[0].mxu0
      %v2711 = vadd.f32 %v2329, %v2710
      %v2712 = vpop.f32.mrb[0].mxu0
      %v2713 = vadd.f32 %v2333, %v2712
      %v2714 = vpop.f32.mrb[0].mxu0
      %v2715 = vadd.f32 %v2329, %v2714
      %v2716 = vpop.f32.mrb[0].mxu0
      %v2717 = vadd.f32 %v2333, %v2716
      %2718 = vmatprep.mubr.bf16.mxu0 %v2267
      %2719 = vmatmul.mubr.bf16.gmra.mrb[0].mxu0 %v2266
      %v2720 = vpop.f32.mrb[0].mxu0
      %v2721 = vadd.f32 %v2329, %v2720
      %v2722 = vpop.f32.mrb[0].mxu0
      %v2723 = vadd.f32 %v2333, %v2722
      %v2724 = vpop.f32.mrb[0].mxu0
      %v2725 = vadd.f32 %v2329, %v2724
      %v2726 = vpop.f32.mrb[0].mxu0
      %v2727 = vadd.f32 %v2333, %v2726
      %2728 = vmatprep.mubr.bf16.mxu0 %v2269
      %2729 = vmatmul.mubr.bf16.gmra.mrb[0].mxu0 %v2268
      %v2730 = vpop.f32.mrb[0].mxu0
      %v2731 = vadd.f32 %v2329, %v2730
      %v2732 = vpop.f32.mrb[0].mxu0
      %v2733 = vadd.f32 %v2333, %v2732
      %v2734 = vpop.f32.mrb[0].mxu0
      %v2735 = vadd.f32 %v2329, %v2734
      %v2736 = vpop.f32.mrb[0].mxu0
      %v2737 = vadd.f32 %v2333, %v2736
      %2738 = vmatprep.mubr.bf16.mxu0 %v2271
      %2739 = vmatmul.mubr.bf16.gmra.mrb[0].mxu0 %v2270
      %v2740 = vpop.f32.mrb[0].mxu0
      %v2741 = vadd.f32 %v2329, %v2740
      %v2742 = vpop.f32.mrb[0].mxu0
      %v2743 = vadd.f32 %v2333, %v2742
      %v2744 = vpop.f32.mrb[0].mxu0
      %v2745 = vadd.f32 %v2329, %v2744
      %v2746 = vpop.f32.mrb[0].mxu0
      %v2747 = vadd.f32 %v2333, %v2746
      %2748 = vmatprep.mubr.bf16.mxu0 %v2273
      %2749 = vmatmul.mubr.bf16.gmra.mrb[0].mxu0 %v2272
      %v2750 = vpop.f32.mrb[0].mxu0
      %v2751 = vadd.f32 %v2329, %v2750
      %v2752 = vpop.f32.mrb[0].mxu0
      %v2753 = vadd.f32 %v2333, %v2752
      %v2754 = vpop.f32.mrb[0].mxu0
      %v2755 = vadd.f32 %v2329, %v2754
      %v2756 = vpop.f32.mrb[0].mxu0
      %v2757 = vadd.f32 %v2333, %v2756
      %2758 = vmatprep.mubr.bf16.mxu0 %v2275
      %2759 = vmatmul.mubr.bf16.gmra.mrb[0].mxu0 %v2274
      %v2760 = vpop.f32.mrb[0].mxu0
      %v2761 = vadd.f32 %v2329, %v2760
      %v2762 = vpop.f32.mrb[0].mxu0
      %v2763 = vadd.f32 %v2333, %v2762
      %v2764 = vpop.f32.mrb[0].mxu0
      %v2765 = vadd.f32 %v2329, %v2764
      %v2766 = vpop.f32.mrb[0].mxu0
      %v2767 = vadd.f32 %v2333, %v2766
      %2768 = vmatprep.mubr.bf16.mxu0 %v2277
      %2769 = vmatmul.mubr.bf16.gmra.mrb[0].mxu0 %v2276
      %v2770 = vpop.f32.mrb[0].mxu0
      %v2771 = vadd.f32 %v2329, %v2770
      %v2772 = vpop.f32.mrb[0].mxu0
      %v2773 = vadd.f32 %v2333, %v2772
      %v2774 = vpop.f32.mrb[0].mxu0
      %v2775 = vadd.f32 %v2329, %v2774
      %v2776 = vpop.f32.mrb[0].mxu0
      %v2777 = vadd.f32 %v2333, %v2776
      %2778 = vmatprep.mubr.bf16.mxu0 %v2279
      %2779 = vmatmul.mubr.bf16.gmra.mrb[0].mxu0 %v2278
      %v2780 = vpop.f32.mrb[0].mxu0
      %v2781 = vadd.f32 %v2329, %v2780
      %v2782 = vpop.f32.mrb[0].mxu0
      %v2783 = vadd.f32 %v2333, %v2782
      %v2784 = vpop.f32.mrb[0].mxu0
      %v2785 = vadd.f32 %v2329, %v2784
      %v2786 = vpop.f32.mrb[0].mxu0
      %v2787 = vadd.f32 %v2333, %v2786
      %2788 = vmatprep.mubr.bf16.mxu0 %v2281
      %2789 = vmatmul.mubr.bf16.gmra.mrb[0].mxu0 %v2280
      %v2790 = vpop.f32.mrb[0].mxu0
      %v2791 = vadd.f32 %v2329, %v2790
      %v2792 = vpop.f32.mrb[0].mxu0
      %v2793 = vadd.f32 %v2333, %v2792
      %v2794 = vpop.f32.mrb[0].mxu0
      %v2795 = vadd.f32 %v2329, %v2794
      %v2796 = vpop.f32.mrb[0].mxu0
      %v2797 = vadd.f32 %v2333, %v2796
      %2798 = vmatprep.mubr.bf16.mxu0 %v2283
      %2799 = vmatmul.mubr.bf16.gmra.mrb[0].mxu0 %v2282
      %v2800 = vpop.f32.mrb[0].mxu0
      %v2801 = vadd.f32 %v2329, %v2800
      %v2802 = vpop.f32.mrb[0].mxu0
      %v2803 = vadd.f32 %v2333, %v2802
      %v2804 = vpop.f32.mrb[0].mxu0
      %v2805 = vadd.f32 %v2329, %v2804
      %v2806 = vpop.f32.mrb[0].mxu0
      %v2807 = vadd.f32 %v2333, %v2806
      %2808 = vmatprep.mubr.bf16.mxu0 %v2285
      %2809 = vmatmul.mubr.bf16.gmra.mrb[0].mxu0 %v2284
      %v2810 = vpop.f32.mrb[0].mxu0
      %v2811 = vadd.f32 %v2329, %v2810
      %v2812 = vpop.f32.mrb[0].mxu0
      %v2813 = vadd.f32 %v2333, %v2812
      %v2814 = vpop.f32.mrb[0].mxu0
      %v2815 = vadd.f32 %v2329, %v2814
      %v2816 = vpop.f32.mrb[0].mxu0
      %v2817 = vadd.f32 %v2333, %v2816
      %2818 = vmatprep.mubr.bf16.mxu0 %v2287
      %2819 = vmatmul.mubr.bf16.gmra.mrb[0].mxu0 %v2286
      %v2820 = vpop.f32.mrb[0].mxu0
      %v2821 = vadd.f32 %v2329, %v2820
      %v2822 = vpop.f32.mrb[0].mxu0
      %v2823 = vadd.f32 %v2333, %v2822
      %v2824 = vpop.f32.mrb[0].mxu0
      %v2825 = vadd.f32 %v2329, %v2824
      %v2826 = vpop.f32.mrb[0].mxu0
      %v2827 = vadd.f32 %v2333, %v2826
      %2828 = vmatprep.mubr.bf16.mxu0 %v2289
      %2829 = vmatmul.mubr.bf16.gmra.mrb[0].mxu0 %v2288
      %v2830 = vpop.f32.mrb[0].mxu0
      %v2831 = vadd.f32 %v2329, %v2830
      %v2832 = vpop.f32.mrb[0].mxu0
      %v2833 = vadd.f32 %v2333, %v2832
      %v2834 = vpop.f32.mrb[0].mxu0
      %v2835 = vadd.f32 %v2329, %v2834
      %v2836 = vpop.f32.mrb[0].mxu0
      %v2837 = vadd.f32 %v2333, %v2836
      %2838 = vmatprep.mubr.bf16.mxu0 %v2291
      %2839 = vmatmul.mubr.bf16.gmra.mrb[0].mxu0 %v2290
      %v2840 = vpop.f32.mrb[0].mxu0
      %v2841 = vadd.f32 %v2329, %v2840
      %v2842 = vpop.f32.mrb[0].mxu0
      %v2843 = vadd.f32 %v2333, %v2842
      %v2844 = vpop.f32.mrb[0].mxu0
      %v2845 = vadd.f32 %v2329, %v2844
      %v2846 = vpop.f32.mrb[0].mxu0
      %v2847 = vadd.f32 %v2333, %v2846
      %2848 = vdwg.mxu0
      %v2849 = vmax.f32 %v2531, 0.0
      %v2850 = vmax.f32 %v2533, 0.0
      %v2851 = vmax.f32 %v2535, 0.0
      %v2852 = vmax.f32 %v2537, 0.0
      %v2853 = vmax.f32 %v2541, 0.0
      %v2854 = vmax.f32 %v2543, 0.0
      %v2855 = vmax.f32 %v2545, 0.0
      %v2856 = vmax.f32 %v2547, 0.0
      %v2857 = vmax.f32 %v2551, 0.0
      %v2858 = vmax.f32 %v2553, 0.0
      %v2859 = vmax.f32 %v2555, 0.0
      %v2860 = vmax.f32 %v2557, 0.0
      %v2861 = vmax.f32 %v2561, 0.0
      %v2862 = vmax.f32 %v2563, 0.0
      %v2863 = vmax.f32 %v2565, 0.0
      %v2864 = vmax.f32 %v2567, 0.0
      %v2865 = vmax.f32 %v2571, 0.0
      %v2866 = vmax.f32 %v2573, 0.0
      %v2867 = vmax.f32 %v2575, 0.0
      %v2868 = vmax.f32 %v2577, 0.0
      %v2869 = vmax.f32 %v2581, 0.0
      %v2870 = vmax.f32 %v2583, 0.0
      %v2871 = vmax.f32 %v2585, 0.0
      %v2872 = vmax.f32 %v2587, 0.0
      %v2873 = vmax.f32 %v2591, 0.0
      %v2874 = vmax.f32 %v2593, 0.0
      %v2875 = vmax.f32 %v2595, 0.0
      %v2876 = vmax.f32 %v2597, 0.0
      %v2877 = vmax.f32 %v2601, 0.0
      %v2878 = vmax.f32 %v2603, 0.0
      %v2879 = vmax.f32 %v2605, 0.0
      %v2880 = vmax.f32 %v2607, 0.0
      %v2881 = vmax.f32 %v2611, 0.0
      %v2882 = vmax.f32 %v2613, 0.0
      %v2883 = vmax.f32 %v2615, 0.0
      %v2884 = vmax.f32 %v2617, 0.0
      %v2885 = vmax.f32 %v2621, 0.0
      %v2886 = vmax.f32 %v2623, 0.0
      %v2887 = vmax.f32 %v2625, 0.0
      %v2888 = vmax.f32 %v2627, 0.0
      %v2889 = vmax.f32 %v2631, 0.0
      %v2890 = vmax.f32 %v2633, 0.0
      %v2891 = vmax.f32 %v2635, 0.0
      %v2892 = vmax.f32 %v2637, 0.0
      %v2893 = vmax.f32 %v2641, 0.0
      %v2894 = vmax.f32 %v2643, 0.0
      %v2895 = vmax.f32 %v2645, 0.0
      %v2896 = vmax.f32 %v2647, 0.0
      %v2897 = vmax.f32 %v2651, 0.0
      %v2898 = vmax.f32 %v2653, 0.0
      %v2899 = vmax.f32 %v2655, 0.0
      %v2900 = vmax.f32 %v2657, 0.0
      %v2901 = vmax.f32 %v2661, 0.0
      %v2902 = vmax.f32 %v2663, 0.0
      %v2903 = vmax.f32 %v2665, 0.0
      %v2904 = vmax.f32 %v2667, 0.0
      %v2905 = vmax.f32 %v2671, 0.0
      %v2906 = vmax.f32 %v2673, 0.0
      %v2907 = vmax.f32 %v2675, 0.0
      %v2908 = vmax.f32 %v2677, 0.0
      %v2909 = vmax.f32 %v2681, 0.0
      %v2910 = vmax.f32 %v2683, 0.0
      %v2911 = vmax.f32 %v2685, 0.0
      %v2912 = vmax.f32 %v2687, 0.0
      %v2913 = vmax.f32 %v2691, 0.0
      %v2914 = vmax.f32 %v2693, 0.0
      %v2915 = vmax.f32 %v2695, 0.0
      %v2916 = vmax.f32 %v2697, 0.0
      %v2917 = vmax.f32 %v2701, 0.0
      %v2918 = vmax.f32 %v2703, 0.0
      %v2919 = vmax.f32 %v2705, 0.0
      %v2920 = vmax.f32 %v2707, 0.0
      %v2921 = vmax.f32 %v2711, 0.0
      %v2922 = vmax.f32 %v2713, 0.0
      %v2923 = vmax.f32 %v2715, 0.0
      %v2924 = vmax.f32 %v2717, 0.0
      %v2925 = vmax.f32 %v2721, 0.0
      %v2926 = vmax.f32 %v2723, 0.0
      %v2927 = vmax.f32 %v2725, 0.0
      %v2928 = vmax.f32 %v2727, 0.0
      %v2929 = vmax.f32 %v2731, 0.0
      %v2930 = vmax.f32 %v2733, 0.0
      %v2931 = vmax.f32 %v2735, 0.0
      %v2932 = vmax.f32 %v2737, 0.0
      %v2933 = vmax.f32 %v2741, 0.0
      %v2934 = vmax.f32 %v2743, 0.0
      %v2935 = vmax.f32 %v2745, 0.0
      %v2936 = vmax.f32 %v2747, 0.0
      %v2937 = vmax.f32 %v2751, 0.0
      %v2938 = vmax.f32 %v2753, 0.0
      %v2939 = vmax.f32 %v2755, 0.0
      %v2940 = vmax.f32 %v2757, 0.0
      %v2941 = vmax.f32 %v2761, 0.0
      %v2942 = vmax.f32 %v2763, 0.0
      %v2943 = vmax.f32 %v2765, 0.0
      %v2944 = vmax.f32 %v2767, 0.0
      %v2945 = vmax.f32 %v2771, 0.0
      %v2946 = vmax.f32 %v2773, 0.0
      %v2947 = vmax.f32 %v2775, 0.0
      %v2948 = vmax.f32 %v2777, 0.0
      %v2949 = vmax.f32 %v2781, 0.0
      %v2950 = vmax.f32 %v2783, 0.0
      %v2951 = vmax.f32 %v2785, 0.0
      %v2952 = vmax.f32 %v2787, 0.0
      %v2953 = vmax.f32 %v2791, 0.0
      %v2954 = vmax.f32 %v2793, 0.0
      %v2955 = vmax.f32 %v2795, 0.0
      %v2956 = vmax.f32 %v2797, 0.0
      %v2957 = vmax.f32 %v2801, 0.0
      %v2958 = vmax.f32 %v2803, 0.0
      %v2959 = vmax.f32 %v2805, 0.0
      %v2960 = vmax.f32 %v2807, 0.0
      %v2961 = vmax.f32 %v2811, 0.0
      %v2962 = vmax.f32 %v2813, 0.0
      %v2963 = vmax.f32 %v2815, 0.0
      %v2964 = vmax.f32 %v2817, 0.0
      %v2965 = vmax.f32 %v2821, 0.0
      %v2966 = vmax.f32 %v2823, 0.0
      %v2967 = vmax.f32 %v2825, 0.0
      %v2968 = vmax.f32 %v2827, 0.0
      %v2969 = vmax.f32 %v2831, 0.0
      %v2970 = vmax.f32 %v2833, 0.0
      %v2971 = vmax.f32 %v2835, 0.0
      %v2972 = vmax.f32 %v2837, 0.0
      %v2973 = vmax.f32 %v2841, 0.0
      %v2974 = vmax.f32 %v2843, 0.0
      %v2975 = vmax.f32 %v2845, 0.0
      %v2976 = vmax.f32 %v2847, 0.0
      %v2977 = vpack.c.bf16 %v2851, %v2849
      %v2978 = vpack.c.bf16 %v2852, %v2850
      %v2979 = vpack.c.bf16 %v2855, %v2853
      %v2980 = vpack.c.bf16 %v2856, %v2854
      %v2981 = vpack.c.bf16 %v2859, %v2857
      %v2982 = vpack.c.bf16 %v2860, %v2858
      %v2983 = vpack.c.bf16 %v2863, %v2861
      %v2984 = vpack.c.bf16 %v2864, %v2862
      %v2985 = vpack.c.bf16 %v2867, %v2865
      %v2986 = vpack.c.bf16 %v2868, %v2866
      %v2987 = vpack.c.bf16 %v2871, %v2869
      %v2988 = vpack.c.bf16 %v2872, %v2870
      %v2989 = vpack.c.bf16 %v2875, %v2873
      %v2990 = vpack.c.bf16 %v2876, %v2874
      %v2991 = vpack.c.bf16 %v2879, %v2877
      %v2992 = vpack.c.bf16 %v2880, %v2878
      %v2993 = vpack.c.bf16 %v2883, %v2881
      %v2994 = vpack.c.bf16 %v2884, %v2882
      %v2995 = vpack.c.bf16 %v2887, %v2885
      %v2996 = vpack.c.bf16 %v2888, %v2886
      %v2997 = vpack.c.bf16 %v2891, %v2889
      %v2998 = vpack.c.bf16 %v2892, %v2890
      %v2999 = vpack.c.bf16 %v2895, %v2893
      %v3000 = vpack.c.bf16 %v2896, %v2894
      %v3001 = vpack.c.bf16 %v2899, %v2897
      %v3002 = vpack.c.bf16 %v2900, %v2898
      %v3003 = vpack.c.bf16 %v2903, %v2901
      %v3004 = vpack.c.bf16 %v2904, %v2902
      %v3005 = vpack.c.bf16 %v2907, %v2905
      %v3006 = vpack.c.bf16 %v2908, %v2906
      %v3007 = vpack.c.bf16 %v2911, %v2909
      %v3008 = vpack.c.bf16 %v2912, %v2910
      %v3009 = vpack.c.bf16 %v2915, %v2913
      %v3010 = vpack.c.bf16 %v2916, %v2914
      %v3011 = vpack.c.bf16 %v2919, %v2917
      %v3012 = vpack.c.bf16 %v2920, %v2918
      %v3013 = vpack.c.bf16 %v2923, %v2921
      %v3014 = vpack.c.bf16 %v2924, %v2922
      %v3015 = vpack.c.bf16 %v2927, %v2925
      %v3016 = vpack.c.bf16 %v2928, %v2926
      %v3017 = vpack.c.bf16 %v2931, %v2929
      %v3018 = vpack.c.bf16 %v2932, %v2930
      %v3019 = vpack.c.bf16 %v2935, %v2933
      %v3020 = vpack.c.bf16 %v2936, %v2934
      %v3021 = vpack.c.bf16 %v2939, %v2937
      %v3022 = vpack.c.bf16 %v2940, %v2938
      %v3023 = vpack.c.bf16 %v2943, %v2941
      %v3024 = vpack.c.bf16 %v2944, %v2942
      %v3025 = vpack.c.bf16 %v2947, %v2945
      %v3026 = vpack.c.bf16 %v2948, %v2946
      %v3027 = vpack.c.bf16 %v2951, %v2949
      %v3028 = vpack.c.bf16 %v2952, %v2950
      %v3029 = vpack.c.bf16 %v2955, %v2953
      %v3030 = vpack.c.bf16 %v2956, %v2954
      %v3031 = vpack.c.bf16 %v2959, %v2957
      %v3032 = vpack.c.bf16 %v2960, %v2958
      %v3033 = vpack.c.bf16 %v2963, %v2961
      %v3034 = vpack.c.bf16 %v2964, %v2962
      %v3035 = vpack.c.bf16 %v2967, %v2965
      %v3036 = vpack.c.bf16 %v2968, %v2966
      %v3037 = vpack.c.bf16 %v2971, %v2969
      %v3038 = vpack.c.bf16 %v2972, %v2970
      %v3039 = vpack.c.bf16 %v2975, %v2973
      %v3040 = vpack.c.bf16 %v2976, %v2974
      %v3041 = vld [vmem:[%s7] sm:$0xff]
      %v3042 = vld [vmem:[%s7 + $0x8] sm:$0xff]
      %v3043 = vld [vmem:[%s7 + $0x10] sm:$0xff]
      %v3044 = vld [vmem:[%s7 + $0x18] sm:$0xff]
      %v3045 = vld [vmem:[%s7 + $0x20] sm:$0xff]
      %v3046 = vld [vmem:[%s7 + $0x28] sm:$0xff]
      %v3047 = vld [vmem:[%s7 + $0x30] sm:$0xff]
      %v3048 = vld [vmem:[%s7 + $0x38] sm:$0xff]
      %v3049 = vld [vmem:[%s7 + $0x40] sm:$0xff]
      %v3050 = vld [vmem:[%s7 + $0x48] sm:$0xff]
      %v3051 = vld [vmem:[%s7 + $0x50] sm:$0xff]
      %v3052 = vld [vmem:[%s7 + $0x58] sm:$0xff]
      %v3053 = vld [vmem:[%s7 + $0x60] sm:$0xff]
      %v3054 = vld [vmem:[%s7 + $0x68] sm:$0xff]
      %v3055 = vld [vmem:[%s7 + $0x70] sm:$0xff]
      %v3056 = vld [vmem:[%s7 + $0x78] sm:$0xff]
      %v3057 = vld [vmem:[%s7 + $0x80] sm:$0xff]
      %v3058 = vld [vmem:[%s7 + $0x88] sm:$0xff]
      %v3059 = vld [vmem:[%s7 + $0x90] sm:$0xff]
      %v3060 = vld [vmem:[%s7 + $0x98] sm:$0xff]
      %v3061 = vld [vmem:[%s7 + $0xa0] sm:$0xff]
      %v3062 = vld [vmem:[%s7 + $0xa8] sm:$0xff]
      %v3063 = vld [vmem:[%s7 + $0xb0] sm:$0xff]
      %v3064 = vld [vmem:[%s7 + $0xb8] sm:$0xff]
      %v3065 = vld [vmem:[%s7 + $0xc0] sm:$0xff]
      %v3066 = vld [vmem:[%s7 + $0xc8] sm:$0xff]
      %v3067 = vld [vmem:[%s7 + $0xd0] sm:$0xff]
      %v3068 = vld [vmem:[%s7 + $0xd8] sm:$0xff]
      %v3069 = vld [vmem:[%s7 + $0xe0] sm:$0xff]
      %v3070 = vld [vmem:[%s7 + $0xe8] sm:$0xff]
      %v3071 = vld [vmem:[%s7 + $0xf0] sm:$0xff]
      %v3072 = vld [vmem:[%s7 + $0xf8] sm:$0xff]
      %v3073 = vld [vmem:[%s8] sm:$0x3]
      %v3075 = vlaneseq
      %v3076 = vshrl.u32 %v3075, 7
      %v3077 = vsub.s32 0, %v3076
      %v3078 = vrot.slane %v3073, %v3077
      %v3079 = vlaneseq
      %v3080 = vshrl.u32 %v3079, 7
      %v3081 = vsub.s32 1, %v3080
      %v3082 = vrot.slane %v3073, %v3081
      %v3117 = vunpack.c.l.b16 %v3041
      %v3118 = vunpack.c.h.b16 %v3041
      %v3119 = vunpack.c.l.b16 %v3042
      %v3120 = vunpack.c.h.b16 %v3042
      %v3121 = vunpack.c.l.b16 %v3043
      %v3122 = vunpack.c.h.b16 %v3043
      %v3123 = vunpack.c.l.b16 %v3044
      %v3124 = vunpack.c.h.b16 %v3044
      %v3125 = vunpack.c.l.b16 %v3045
      %v3126 = vunpack.c.h.b16 %v3045
      %v3127 = vunpack.c.l.b16 %v3046
      %v3128 = vunpack.c.h.b16 %v3046
      %v3129 = vunpack.c.l.b16 %v3047
      %v3130 = vunpack.c.h.b16 %v3047
      %v3131 = vunpack.c.l.b16 %v3048
      %v3132 = vunpack.c.h.b16 %v3048
      %v3133 = vunpack.c.l.b16 %v3049
      %v3134 = vunpack.c.h.b16 %v3049
      %v3135 = vunpack.c.l.b16 %v3050
      %v3136 = vunpack.c.h.b16 %v3050
      %v3137 = vunpack.c.l.b16 %v3051
      %v3138 = vunpack.c.h.b16 %v3051
      %v3139 = vunpack.c.l.b16 %v3052
      %v3140 = vunpack.c.h.b16 %v3052
      %v3141 = vunpack.c.l.b16 %v3053
      %v3142 = vunpack.c.h.b16 %v3053
      %v3143 = vunpack.c.l.b16 %v3054
      %v3144 = vunpack.c.h.b16 %v3054
      %v3145 = vunpack.c.l.b16 %v3055
      %v3146 = vunpack.c.h.b16 %v3055
      %v3147 = vunpack.c.l.b16 %v3056
      %v3148 = vunpack.c.h.b16 %v3056
      %v3149 = vunpack.c.l.b16 %v3057
      %v3150 = vunpack.c.h.b16 %v3057
      %v3151 = vunpack.c.l.b16 %v3058
      %v3152 = vunpack.c.h.b16 %v3058
      %v3153 = vunpack.c.l.b16 %v3059
      %v3154 = vunpack.c.h.b16 %v3059
      %v3155 = vunpack.c.l.b16 %v3060
      %v3156 = vunpack.c.h.b16 %v3060
      %v3157 = vunpack.c.l.b16 %v3061
      %v3158 = vunpack.c.h.b16 %v3061
      %v3159 = vunpack.c.l.b16 %v3062
      %v3160 = vunpack.c.h.b16 %v3062
      %v3161 = vunpack.c.l.b16 %v3063
      %v3162 = vunpack.c.h.b16 %v3063
      %v3163 = vunpack.c.l.b16 %v3064
      %v3164 = vunpack.c.h.b16 %v3064
      %v3165 = vunpack.c.l.b16 %v3065
      %v3166 = vunpack.c.h.b16 %v3065
      %v3167 = vunpack.c.l.b16 %v3066
      %v3168 = vunpack.c.h.b16 %v3066
      %v3169 = vunpack.c.l.b16 %v3067
      %v3170 = vunpack.c.h.b16 %v3067
      %v3171 = vunpack.c.l.b16 %v3068
      %v3172 = vunpack.c.h.b16 %v3068
      %v3173 = vunpack.c.l.b16 %v3069
      %v3174 = vunpack.c.h.b16 %v3069
      %v3175 = vunpack.c.l.b16 %v3070
      %v3176 = vunpack.c.h.b16 %v3070
      %v3177 = vunpack.c.l.b16 %v3071
      %v3178 = vunpack.c.h.b16 %v3071
      %v3179 = vunpack.c.l.b16 %v3072
      %v3180 = vunpack.c.h.b16 %v3072
      %v3181 = vpack.c.b16 %v3119, %v3117
      %v3182 = vpack.c.b16 %v3120, %v3118
      %v3183 = vpack.c.b16 %v3123, %v3121
      %v3184 = vpack.c.b16 %v3124, %v3122
      %v3185 = vpack.c.b16 %v3127, %v3125
      %v3186 = vpack.c.b16 %v3128, %v3126
      %v3187 = vpack.c.b16 %v3131, %v3129
      %v3188 = vpack.c.b16 %v3132, %v3130
      %v3189 = vpack.c.b16 %v3135, %v3133
      %v3190 = vpack.c.b16 %v3136, %v3134
      %v3191 = vpack.c.b16 %v3139, %v3137
      %v3192 = vpack.c.b16 %v3140, %v3138
      %v3193 = vpack.c.b16 %v3143, %v3141
      %v3194 = vpack.c.b16 %v3144, %v3142
      %v3195 = vpack.c.b16 %v3147, %v3145
      %v3196 = vpack.c.b16 %v3148, %v3146
      %v3197 = vpack.c.b16 %v3151, %v3149
      %v3198 = vpack.c.b16 %v3152, %v3150
      %v3199 = vpack.c.b16 %v3155, %v3153
      %v3200 = vpack.c.b16 %v3156, %v3154
      %v3201 = vpack.c.b16 %v3159, %v3157
      %v3202 = vpack.c.b16 %v3160, %v3158
      %v3203 = vpack.c.b16 %v3163, %v3161
      %v3204 = vpack.c.b16 %v3164, %v3162
      %v3205 = vpack.c.b16 %v3167, %v3165
      %v3206 = vpack.c.b16 %v3168, %v3166
      %v3207 = vpack.c.b16 %v3171, %v3169
      %v3208 = vpack.c.b16 %v3172, %v3170
      %v3209 = vpack.c.b16 %v3175, %v3173
      %v3210 = vpack.c.b16 %v3176, %v3174
      %v3211 = vpack.c.b16 %v3179, %v3177
      %v3212 = vpack.c.b16 %v3180, %v3178
      %3245 = vmatprep.subr.bf16.mxu0 %v3182
      %3246 = vmatpush1.bf16.msra.mxu0 %v3181
      %3247 = vmatprep.subr.bf16.mxu0 %v3184
      %3248 = vmatpush1.bf16.msra.mxu0 %v3183
      %3249 = vmatprep.subr.bf16.mxu0 %v3186
      %3250 = vmatpush1.bf16.msra.mxu0 %v3185
      %3251 = vmatprep.subr.bf16.mxu0 %v3188
      %3252 = vmatpush1.bf16.msra.mxu0 %v3187
      %3253 = vmatprep.subr.bf16.mxu0 %v3190
      %3254 = vmatpush1.bf16.msra.mxu0 %v3189
      %3255 = vmatprep.subr.bf16.mxu0 %v3192
      %3256 = vmatpush1.bf16.msra.mxu0 %v3191
      %3257 = vmatprep.subr.bf16.mxu0 %v3194
      %3258 = vmatpush1.bf16.msra.mxu0 %v3193
      %3259 = vmatprep.subr.bf16.mxu0 %v3196
      %3260 = vmatpush1.bf16.msra.mxu0 %v3195
      %3261 = vmatprep.subr.bf16.mxu0 %v3198
      %3262 = vmatpush1.bf16.msra.mxu0 %v3197
      %3263 = vmatprep.subr.bf16.mxu0 %v3200
      %3264 = vmatpush1.bf16.msra.mxu0 %v3199
      %3265 = vmatprep.subr.bf16.mxu0 %v3202
      %3266 = vmatpush1.bf16.msra.mxu0 %v3201
      %3267 = vmatprep.subr.bf16.mxu0 %v3204
      %3268 = vmatpush1.bf16.msra.mxu0 %v3203
      %3269 = vmatprep.subr.bf16.mxu0 %v3206
      %3270 = vmatpush1.bf16.msra.mxu0 %v3205
      %3271 = vmatprep.subr.bf16.mxu0 %v3208
      %3272 = vmatpush1.bf16.msra.mxu0 %v3207
      %3273 = vmatprep.subr.bf16.mxu0 %v3210
      %3274 = vmatpush1.bf16.msra.mxu0 %v3209
      %3275 = vmatprep.subr.bf16.mxu0 %v3212
      %3276 = vmatpush1.bf16.msra.mxu0 %v3211
      %3277 = vmatprep.mubr.bf16.mxu0 %v2978
      %3278 = vmatmul.mubr.bf16.gmra.mrb[0].mxu0 %v2977
      %v3279 = vpop.f32.mrb[0].mxu0
      %v3280 = vadd.f32 %v3078, %v3279
      %v3281 = vpop.f32.mrb[0].mxu0
      %v3282 = vadd.f32 %v3082, %v3281
      %v3283 = vpop.f32.mrb[0].mxu0
      %v3284 = vadd.f32 %v3078, %v3283
      %v3285 = vpop.f32.mrb[0].mxu0
      %v3286 = vadd.f32 %v3082, %v3285
      %3287 = vmatprep.mubr.bf16.mxu0 %v2980
      %3288 = vmatmul.mubr.bf16.gmra.mrb[0].mxu0 %v2979
      %v3289 = vpop.f32.mrb[0].mxu0
      %v3290 = vadd.f32 %v3078, %v3289
      %v3291 = vpop.f32.mrb[0].mxu0
      %v3292 = vadd.f32 %v3082, %v3291
      %v3293 = vpop.f32.mrb[0].mxu0
      %v3294 = vadd.f32 %v3078, %v3293
      %v3295 = vpop.f32.mrb[0].mxu0
      %v3296 = vadd.f32 %v3082, %v3295
      %3297 = vmatprep.mubr.bf16.mxu0 %v2982
      %3298 = vmatmul.mubr.bf16.gmra.mrb[0].mxu0 %v2981
      %v3299 = vpop.f32.mrb[0].mxu0
      %v3300 = vadd.f32 %v3078, %v3299
      %v3301 = vpop.f32.mrb[0].mxu0
      %v3302 = vadd.f32 %v3082, %v3301
      %v3303 = vpop.f32.mrb[0].mxu0
      %v3304 = vadd.f32 %v3078, %v3303
      %v3305 = vpop.f32.mrb[0].mxu0
      %v3306 = vadd.f32 %v3082, %v3305
      %3307 = vmatprep.mubr.bf16.mxu0 %v2984
      %3308 = vmatmul.mubr.bf16.gmra.mrb[0].mxu0 %v2983
      %v3309 = vpop.f32.mrb[0].mxu0
      %v3310 = vadd.f32 %v3078, %v3309
      %v3311 = vpop.f32.mrb[0].mxu0
      %v3312 = vadd.f32 %v3082, %v3311
      %v3313 = vpop.f32.mrb[0].mxu0
      %v3314 = vadd.f32 %v3078, %v3313
      %v3315 = vpop.f32.mrb[0].mxu0
      %v3316 = vadd.f32 %v3082, %v3315
      %3317 = vmatprep.mubr.bf16.mxu0 %v2986
      %3318 = vmatmul.mubr.bf16.gmra.mrb[0].mxu0 %v2985
      %v3319 = vpop.f32.mrb[0].mxu0
      %v3320 = vadd.f32 %v3078, %v3319
      %v3321 = vpop.f32.mrb[0].mxu0
      %v3322 = vadd.f32 %v3082, %v3321
      %v3323 = vpop.f32.mrb[0].mxu0
      %v3324 = vadd.f32 %v3078, %v3323
      %v3325 = vpop.f32.mrb[0].mxu0
      %v3326 = vadd.f32 %v3082, %v3325
      %3327 = vmatprep.mubr.bf16.mxu0 %v2988
      %3328 = vmatmul.mubr.bf16.gmra.mrb[0].mxu0 %v2987
      %v3329 = vpop.f32.mrb[0].mxu0
      %v3330 = vadd.f32 %v3078, %v3329
      %v3331 = vpop.f32.mrb[0].mxu0
      %v3332 = vadd.f32 %v3082, %v3331
      %v3333 = vpop.f32.mrb[0].mxu0
      %v3334 = vadd.f32 %v3078, %v3333
      %v3335 = vpop.f32.mrb[0].mxu0
      %v3336 = vadd.f32 %v3082, %v3335
      %3337 = vmatprep.mubr.bf16.mxu0 %v2990
      %3338 = vmatmul.mubr.bf16.gmra.mrb[0].mxu0 %v2989
      %v3339 = vpop.f32.mrb[0].mxu0
      %v3340 = vadd.f32 %v3078, %v3339
      %v3341 = vpop.f32.mrb[0].mxu0
      %v3342 = vadd.f32 %v3082, %v3341
      %v3343 = vpop.f32.mrb[0].mxu0
      %v3344 = vadd.f32 %v3078, %v3343
      %v3345 = vpop.f32.mrb[0].mxu0
      %v3346 = vadd.f32 %v3082, %v3345
      %3347 = vmatprep.mubr.bf16.mxu0 %v2992
      %3348 = vmatmul.mubr.bf16.gmra.mrb[0].mxu0 %v2991
      %v3349 = vpop.f32.mrb[0].mxu0
      %v3350 = vadd.f32 %v3078, %v3349
      %v3351 = vpop.f32.mrb[0].mxu0
      %v3352 = vadd.f32 %v3082, %v3351
      %v3353 = vpop.f32.mrb[0].mxu0
      %v3354 = vadd.f32 %v3078, %v3353
      %v3355 = vpop.f32.mrb[0].mxu0
      %v3356 = vadd.f32 %v3082, %v3355
      %3357 = vmatprep.mubr.bf16.mxu0 %v2994
      %3358 = vmatmul.mubr.bf16.gmra.mrb[0].mxu0 %v2993
      %v3359 = vpop.f32.mrb[0].mxu0
      %v3360 = vadd.f32 %v3078, %v3359
      %v3361 = vpop.f32.mrb[0].mxu0
      %v3362 = vadd.f32 %v3082, %v3361
      %v3363 = vpop.f32.mrb[0].mxu0
      %v3364 = vadd.f32 %v3078, %v3363
      %v3365 = vpop.f32.mrb[0].mxu0
      %v3366 = vadd.f32 %v3082, %v3365
      %3367 = vmatprep.mubr.bf16.mxu0 %v2996
      %3368 = vmatmul.mubr.bf16.gmra.mrb[0].mxu0 %v2995
      %v3369 = vpop.f32.mrb[0].mxu0
      %v3370 = vadd.f32 %v3078, %v3369
      %v3371 = vpop.f32.mrb[0].mxu0
      %v3372 = vadd.f32 %v3082, %v3371
      %v3373 = vpop.f32.mrb[0].mxu0
      %v3374 = vadd.f32 %v3078, %v3373
      %v3375 = vpop.f32.mrb[0].mxu0
      %v3376 = vadd.f32 %v3082, %v3375
      %3377 = vmatprep.mubr.bf16.mxu0 %v2998
      %3378 = vmatmul.mubr.bf16.gmra.mrb[0].mxu0 %v2997
      %v3379 = vpop.f32.mrb[0].mxu0
      %v3380 = vadd.f32 %v3078, %v3379
      %v3381 = vpop.f32.mrb[0].mxu0
      %v3382 = vadd.f32 %v3082, %v3381
      %v3383 = vpop.f32.mrb[0].mxu0
      %v3384 = vadd.f32 %v3078, %v3383
      %v3385 = vpop.f32.mrb[0].mxu0
      %v3386 = vadd.f32 %v3082, %v3385
      %3387 = vmatprep.mubr.bf16.mxu0 %v3000
      %3388 = vmatmul.mubr.bf16.gmra.mrb[0].mxu0 %v2999
      %v3389 = vpop.f32.mrb[0].mxu0
      %v3390 = vadd.f32 %v3078, %v3389
      %v3391 = vpop.f32.mrb[0].mxu0
      %v3392 = vadd.f32 %v3082, %v3391
      %v3393 = vpop.f32.mrb[0].mxu0
      %v3394 = vadd.f32 %v3078, %v3393
      %v3395 = vpop.f32.mrb[0].mxu0
      %v3396 = vadd.f32 %v3082, %v3395
      %3397 = vmatprep.mubr.bf16.mxu0 %v3002
      %3398 = vmatmul.mubr.bf16.gmra.mrb[0].mxu0 %v3001
      %v3399 = vpop.f32.mrb[0].mxu0
      %v3400 = vadd.f32 %v3078, %v3399
      %v3401 = vpop.f32.mrb[0].mxu0
      %v3402 = vadd.f32 %v3082, %v3401
      %v3403 = vpop.f32.mrb[0].mxu0
      %v3404 = vadd.f32 %v3078, %v3403
      %v3405 = vpop.f32.mrb[0].mxu0
      %v3406 = vadd.f32 %v3082, %v3405
      %3407 = vmatprep.mubr.bf16.mxu0 %v3004
      %3408 = vmatmul.mubr.bf16.gmra.mrb[0].mxu0 %v3003
      %v3409 = vpop.f32.mrb[0].mxu0
      %v3410 = vadd.f32 %v3078, %v3409
      %v3411 = vpop.f32.mrb[0].mxu0
      %v3412 = vadd.f32 %v3082, %v3411
      %v3413 = vpop.f32.mrb[0].mxu0
      %v3414 = vadd.f32 %v3078, %v3413
      %v3415 = vpop.f32.mrb[0].mxu0
      %v3416 = vadd.f32 %v3082, %v3415
      %3417 = vmatprep.mubr.bf16.mxu0 %v3006
      %3418 = vmatmul.mubr.bf16.gmra.mrb[0].mxu0 %v3005
      %v3419 = vpop.f32.mrb[0].mxu0
      %v3420 = vadd.f32 %v3078, %v3419
      %v3421 = vpop.f32.mrb[0].mxu0
      %v3422 = vadd.f32 %v3082, %v3421
      %v3423 = vpop.f32.mrb[0].mxu0
      %v3424 = vadd.f32 %v3078, %v3423
      %v3425 = vpop.f32.mrb[0].mxu0
      %v3426 = vadd.f32 %v3082, %v3425
      %3427 = vmatprep.mubr.bf16.mxu0 %v3008
      %3428 = vmatmul.mubr.bf16.gmra.mrb[0].mxu0 %v3007
      %v3429 = vpop.f32.mrb[0].mxu0
      %v3430 = vadd.f32 %v3078, %v3429
      %v3431 = vpop.f32.mrb[0].mxu0
      %v3432 = vadd.f32 %v3082, %v3431
      %v3433 = vpop.f32.mrb[0].mxu0
      %v3434 = vadd.f32 %v3078, %v3433
      %v3435 = vpop.f32.mrb[0].mxu0
      %v3436 = vadd.f32 %v3082, %v3435
      %3437 = vmatprep.mubr.bf16.mxu0 %v3010
      %3438 = vmatmul.mubr.bf16.gmra.mrb[0].mxu0 %v3009
      %v3439 = vpop.f32.mrb[0].mxu0
      %v3440 = vadd.f32 %v3078, %v3439
      %v3441 = vpop.f32.mrb[0].mxu0
      %v3442 = vadd.f32 %v3082, %v3441
      %v3443 = vpop.f32.mrb[0].mxu0
      %v3444 = vadd.f32 %v3078, %v3443
      %v3445 = vpop.f32.mrb[0].mxu0
      %v3446 = vadd.f32 %v3082, %v3445
      %3447 = vmatprep.mubr.bf16.mxu0 %v3012
      %3448 = vmatmul.mubr.bf16.gmra.mrb[0].mxu0 %v3011
      %v3449 = vpop.f32.mrb[0].mxu0
      %v3450 = vadd.f32 %v3078, %v3449
      %v3451 = vpop.f32.mrb[0].mxu0
      %v3452 = vadd.f32 %v3082, %v3451
      %v3453 = vpop.f32.mrb[0].mxu0
      %v3454 = vadd.f32 %v3078, %v3453
      %v3455 = vpop.f32.mrb[0].mxu0
      %v3456 = vadd.f32 %v3082, %v3455
      %3457 = vmatprep.mubr.bf16.mxu0 %v3014
      %3458 = vmatmul.mubr.bf16.gmra.mrb[0].mxu0 %v3013
      %v3459 = vpop.f32.mrb[0].mxu0
      %v3460 = vadd.f32 %v3078, %v3459
      %v3461 = vpop.f32.mrb[0].mxu0
      %v3462 = vadd.f32 %v3082, %v3461
      %v3463 = vpop.f32.mrb[0].mxu0
      %v3464 = vadd.f32 %v3078, %v3463
      %v3465 = vpop.f32.mrb[0].mxu0
      %v3466 = vadd.f32 %v3082, %v3465
      %3467 = vmatprep.mubr.bf16.mxu0 %v3016
      %3468 = vmatmul.mubr.bf16.gmra.mrb[0].mxu0 %v3015
      %v3469 = vpop.f32.mrb[0].mxu0
      %v3470 = vadd.f32 %v3078, %v3469
      %v3471 = vpop.f32.mrb[0].mxu0
      %v3472 = vadd.f32 %v3082, %v3471
      %v3473 = vpop.f32.mrb[0].mxu0
      %v3474 = vadd.f32 %v3078, %v3473
      %v3475 = vpop.f32.mrb[0].mxu0
      %v3476 = vadd.f32 %v3082, %v3475
      %3477 = vmatprep.mubr.bf16.mxu0 %v3018
      %3478 = vmatmul.mubr.bf16.gmra.mrb[0].mxu0 %v3017
      %v3479 = vpop.f32.mrb[0].mxu0
      %v3480 = vadd.f32 %v3078, %v3479
      %v3481 = vpop.f32.mrb[0].mxu0
      %v3482 = vadd.f32 %v3082, %v3481
      %v3483 = vpop.f32.mrb[0].mxu0
      %v3484 = vadd.f32 %v3078, %v3483
      %v3485 = vpop.f32.mrb[0].mxu0
      %v3486 = vadd.f32 %v3082, %v3485
      %3487 = vmatprep.mubr.bf16.mxu0 %v3020
      %3488 = vmatmul.mubr.bf16.gmra.mrb[0].mxu0 %v3019
      %v3489 = vpop.f32.mrb[0].mxu0
      %v3490 = vadd.f32 %v3078, %v3489
      %v3491 = vpop.f32.mrb[0].mxu0
      %v3492 = vadd.f32 %v3082, %v3491
      %v3493 = vpop.f32.mrb[0].mxu0
      %v3494 = vadd.f32 %v3078, %v3493
      %v3495 = vpop.f32.mrb[0].mxu0
      %v3496 = vadd.f32 %v3082, %v3495
      %3497 = vmatprep.mubr.bf16.mxu0 %v3022
      %3498 = vmatmul.mubr.bf16.gmra.mrb[0].mxu0 %v3021
      %v3499 = vpop.f32.mrb[0].mxu0
      %v3500 = vadd.f32 %v3078, %v3499
      %v3501 = vpop.f32.mrb[0].mxu0
      %v3502 = vadd.f32 %v3082, %v3501
      %v3503 = vpop.f32.mrb[0].mxu0
      %v3504 = vadd.f32 %v3078, %v3503
      %v3505 = vpop.f32.mrb[0].mxu0
      %v3506 = vadd.f32 %v3082, %v3505
      %3507 = vmatprep.mubr.bf16.mxu0 %v3024
      %3508 = vmatmul.mubr.bf16.gmra.mrb[0].mxu0 %v3023
      %v3509 = vpop.f32.mrb[0].mxu0
      %v3510 = vadd.f32 %v3078, %v3509
      %v3511 = vpop.f32.mrb[0].mxu0
      %v3512 = vadd.f32 %v3082, %v3511
      %v3513 = vpop.f32.mrb[0].mxu0
      %v3514 = vadd.f32 %v3078, %v3513
      %v3515 = vpop.f32.mrb[0].mxu0
      %v3516 = vadd.f32 %v3082, %v3515
      %3517 = vmatprep.mubr.bf16.mxu0 %v3026
      %3518 = vmatmul.mubr.bf16.gmra.mrb[0].mxu0 %v3025
      %v3519 = vpop.f32.mrb[0].mxu0
      %v3520 = vadd.f32 %v3078, %v3519
      %v3521 = vpop.f32.mrb[0].mxu0
      %v3522 = vadd.f32 %v3082, %v3521
      %v3523 = vpop.f32.mrb[0].mxu0
      %v3524 = vadd.f32 %v3078, %v3523
      %v3525 = vpop.f32.mrb[0].mxu0
      %v3526 = vadd.f32 %v3082, %v3525
      %3527 = vmatprep.mubr.bf16.mxu0 %v3028
      %3528 = vmatmul.mubr.bf16.gmra.mrb[0].mxu0 %v3027
      %v3529 = vpop.f32.mrb[0].mxu0
      %v3530 = vadd.f32 %v3078, %v3529
      %v3531 = vpop.f32.mrb[0].mxu0
      %v3532 = vadd.f32 %v3082, %v3531
      %v3533 = vpop.f32.mrb[0].mxu0
      %v3534 = vadd.f32 %v3078, %v3533
      %v3535 = vpop.f32.mrb[0].mxu0
      %v3536 = vadd.f32 %v3082, %v3535
      %3537 = vmatprep.mubr.bf16.mxu0 %v3030
      %3538 = vmatmul.mubr.bf16.gmra.mrb[0].mxu0 %v3029
      %v3539 = vpop.f32.mrb[0].mxu0
      %v3540 = vadd.f32 %v3078, %v3539
      %v3541 = vpop.f32.mrb[0].mxu0
      %v3542 = vadd.f32 %v3082, %v3541
      %v3543 = vpop.f32.mrb[0].mxu0
      %v3544 = vadd.f32 %v3078, %v3543
      %v3545 = vpop.f32.mrb[0].mxu0
      %v3546 = vadd.f32 %v3082, %v3545
      %3547 = vmatprep.mubr.bf16.mxu0 %v3032
      %3548 = vmatmul.mubr.bf16.gmra.mrb[0].mxu0 %v3031
      %v3549 = vpop.f32.mrb[0].mxu0
      %v3550 = vadd.f32 %v3078, %v3549
      %v3551 = vpop.f32.mrb[0].mxu0
      %v3552 = vadd.f32 %v3082, %v3551
      %v3553 = vpop.f32.mrb[0].mxu0
      %v3554 = vadd.f32 %v3078, %v3553
      %v3555 = vpop.f32.mrb[0].mxu0
      %v3556 = vadd.f32 %v3082, %v3555
      %3557 = vmatprep.mubr.bf16.mxu0 %v3034
      %3558 = vmatmul.mubr.bf16.gmra.mrb[0].mxu0 %v3033
      %v3559 = vpop.f32.mrb[0].mxu0
      %v3560 = vadd.f32 %v3078, %v3559
      %v3561 = vpop.f32.mrb[0].mxu0
      %v3562 = vadd.f32 %v3082, %v3561
      %v3563 = vpop.f32.mrb[0].mxu0
      %v3564 = vadd.f32 %v3078, %v3563
      %v3565 = vpop.f32.mrb[0].mxu0
      %v3566 = vadd.f32 %v3082, %v3565
      %3567 = vmatprep.mubr.bf16.mxu0 %v3036
      %3568 = vmatmul.mubr.bf16.gmra.mrb[0].mxu0 %v3035
      %v3569 = vpop.f32.mrb[0].mxu0
      %v3570 = vadd.f32 %v3078, %v3569
      %v3571 = vpop.f32.mrb[0].mxu0
      %v3572 = vadd.f32 %v3082, %v3571
      %v3573 = vpop.f32.mrb[0].mxu0
      %v3574 = vadd.f32 %v3078, %v3573
      %v3575 = vpop.f32.mrb[0].mxu0
      %v3576 = vadd.f32 %v3082, %v3575
      %3577 = vmatprep.mubr.bf16.mxu0 %v3038
      %3578 = vmatmul.mubr.bf16.gmra.mrb[0].mxu0 %v3037
      %v3579 = vpop.f32.mrb[0].mxu0
      %v3580 = vadd.f32 %v3078, %v3579
      %v3581 = vpop.f32.mrb[0].mxu0
      %v3582 = vadd.f32 %v3082, %v3581
      %v3583 = vpop.f32.mrb[0].mxu0
      %v3584 = vadd.f32 %v3078, %v3583
      %v3585 = vpop.f32.mrb[0].mxu0
      %v3586 = vadd.f32 %v3082, %v3585
      %3587 = vmatprep.mubr.bf16.mxu0 %v3040
      %3588 = vmatmul.mubr.bf16.gmra.mrb[0].mxu0 %v3039
      %v3589 = vpop.f32.mrb[0].mxu0
      %v3590 = vadd.f32 %v3078, %v3589
      %v3591 = vpop.f32.mrb[0].mxu0
      %v3592 = vadd.f32 %v3082, %v3591
      %v3593 = vpop.f32.mrb[0].mxu0
      %v3594 = vadd.f32 %v3078, %v3593
      %v3595 = vpop.f32.mrb[0].mxu0
      %v3596 = vadd.f32 %v3082, %v3595
      %3597 = vdwg.mxu0
      %v3598 = vmax.f32 %v3280, 0.0
      %v3599 = vmax.f32 %v3282, 0.0
      %v3600 = vmax.f32 %v3284, 0.0
      %v3601 = vmax.f32 %v3286, 0.0
      %v3602 = vmax.f32 %v3290, 0.0
      %v3603 = vmax.f32 %v3292, 0.0
      %v3604 = vmax.f32 %v3294, 0.0
      %v3605 = vmax.f32 %v3296, 0.0
      %v3606 = vmax.f32 %v3300, 0.0
      %v3607 = vmax.f32 %v3302, 0.0
      %v3608 = vmax.f32 %v3304, 0.0
      %v3609 = vmax.f32 %v3306, 0.0
      %v3610 = vmax.f32 %v3310, 0.0
      %v3611 = vmax.f32 %v3312, 0.0
      %v3612 = vmax.f32 %v3314, 0.0
      %v3613 = vmax.f32 %v3316, 0.0
      %v3614 = vmax.f32 %v3320, 0.0
      %v3615 = vmax.f32 %v3322, 0.0
      %v3616 = vmax.f32 %v3324, 0.0
      %v3617 = vmax.f32 %v3326, 0.0
      %v3618 = vmax.f32 %v3330, 0.0
      %v3619 = vmax.f32 %v3332, 0.0
      %v3620 = vmax.f32 %v3334, 0.0
      %v3621 = vmax.f32 %v3336, 0.0
      %v3622 = vmax.f32 %v3340, 0.0
      %v3623 = vmax.f32 %v3342, 0.0
      %v3624 = vmax.f32 %v3344, 0.0
      %v3625 = vmax.f32 %v3346, 0.0
      %v3626 = vmax.f32 %v3350, 0.0
      %v3627 = vmax.f32 %v3352, 0.0
      %v3628 = vmax.f32 %v3354, 0.0
      %v3629 = vmax.f32 %v3356, 0.0
      %v3630 = vmax.f32 %v3360, 0.0
      %v3631 = vmax.f32 %v3362, 0.0
      %v3632 = vmax.f32 %v3364, 0.0
      %v3633 = vmax.f32 %v3366, 0.0
      %v3634 = vmax.f32 %v3370, 0.0
      %v3635 = vmax.f32 %v3372, 0.0
      %v3636 = vmax.f32 %v3374, 0.0
      %v3637 = vmax.f32 %v3376, 0.0
      %v3638 = vmax.f32 %v3380, 0.0
      %v3639 = vmax.f32 %v3382, 0.0
      %v3640 = vmax.f32 %v3384, 0.0
      %v3641 = vmax.f32 %v3386, 0.0
      %v3642 = vmax.f32 %v3390, 0.0
      %v3643 = vmax.f32 %v3392, 0.0
      %v3644 = vmax.f32 %v3394, 0.0
      %v3645 = vmax.f32 %v3396, 0.0
      %v3646 = vmax.f32 %v3400, 0.0
      %v3647 = vmax.f32 %v3402, 0.0
      %v3648 = vmax.f32 %v3404, 0.0
      %v3649 = vmax.f32 %v3406, 0.0
      %v3650 = vmax.f32 %v3410, 0.0
      %v3651 = vmax.f32 %v3412, 0.0
      %v3652 = vmax.f32 %v3414, 0.0
      %v3653 = vmax.f32 %v3416, 0.0
      %v3654 = vmax.f32 %v3420, 0.0
      %v3655 = vmax.f32 %v3422, 0.0
      %v3656 = vmax.f32 %v3424, 0.0
      %v3657 = vmax.f32 %v3426, 0.0
      %v3658 = vmax.f32 %v3430, 0.0
      %v3659 = vmax.f32 %v3432, 0.0
      %v3660 = vmax.f32 %v3434, 0.0
      %v3661 = vmax.f32 %v3436, 0.0
      %v3662 = vmax.f32 %v3440, 0.0
      %v3663 = vmax.f32 %v3442, 0.0
      %v3664 = vmax.f32 %v3444, 0.0
      %v3665 = vmax.f32 %v3446, 0.0
      %v3666 = vmax.f32 %v3450, 0.0
      %v3667 = vmax.f32 %v3452, 0.0
      %v3668 = vmax.f32 %v3454, 0.0
      %v3669 = vmax.f32 %v3456, 0.0
      %v3670 = vmax.f32 %v3460, 0.0
      %v3671 = vmax.f32 %v3462, 0.0
      %v3672 = vmax.f32 %v3464, 0.0
      %v3673 = vmax.f32 %v3466, 0.0
      %v3674 = vmax.f32 %v3470, 0.0
      %v3675 = vmax.f32 %v3472, 0.0
      %v3676 = vmax.f32 %v3474, 0.0
      %v3677 = vmax.f32 %v3476, 0.0
      %v3678 = vmax.f32 %v3480, 0.0
      %v3679 = vmax.f32 %v3482, 0.0
      %v3680 = vmax.f32 %v3484, 0.0
      %v3681 = vmax.f32 %v3486, 0.0
      %v3682 = vmax.f32 %v3490, 0.0
      %v3683 = vmax.f32 %v3492, 0.0
      %v3684 = vmax.f32 %v3494, 0.0
      %v3685 = vmax.f32 %v3496, 0.0
      %v3686 = vmax.f32 %v3500, 0.0
      %v3687 = vmax.f32 %v3502, 0.0
      %v3688 = vmax.f32 %v3504, 0.0
      %v3689 = vmax.f32 %v3506, 0.0
      %v3690 = vmax.f32 %v3510, 0.0
      %v3691 = vmax.f32 %v3512, 0.0
      %v3692 = vmax.f32 %v3514, 0.0
      %v3693 = vmax.f32 %v3516, 0.0
      %v3694 = vmax.f32 %v3520, 0.0
      %v3695 = vmax.f32 %v3522, 0.0
      %v3696 = vmax.f32 %v3524, 0.0
      %v3697 = vmax.f32 %v3526, 0.0
      %v3698 = vmax.f32 %v3530, 0.0
      %v3699 = vmax.f32 %v3532, 0.0
      %v3700 = vmax.f32 %v3534, 0.0
      %v3701 = vmax.f32 %v3536, 0.0
      %v3702 = vmax.f32 %v3540, 0.0
      %v3703 = vmax.f32 %v3542, 0.0
      %v3704 = vmax.f32 %v3544, 0.0
      %v3705 = vmax.f32 %v3546, 0.0
      %v3706 = vmax.f32 %v3550, 0.0
      %v3707 = vmax.f32 %v3552, 0.0
      %v3708 = vmax.f32 %v3554, 0.0
      %v3709 = vmax.f32 %v3556, 0.0
      %v3710 = vmax.f32 %v3560, 0.0
      %v3711 = vmax.f32 %v3562, 0.0
      %v3712 = vmax.f32 %v3564, 0.0
      %v3713 = vmax.f32 %v3566, 0.0
      %v3714 = vmax.f32 %v3570, 0.0
      %v3715 = vmax.f32 %v3572, 0.0
      %v3716 = vmax.f32 %v3574, 0.0
      %v3717 = vmax.f32 %v3576, 0.0
      %v3718 = vmax.f32 %v3580, 0.0
      %v3719 = vmax.f32 %v3582, 0.0
      %v3720 = vmax.f32 %v3584, 0.0
      %v3721 = vmax.f32 %v3586, 0.0
      %v3722 = vmax.f32 %v3590, 0.0
      %v3723 = vmax.f32 %v3592, 0.0
      %v3724 = vmax.f32 %v3594, 0.0
      %v3725 = vmax.f32 %v3596, 0.0
      %v3726 = vpack.c.bf16 %v3600, %v3598
      %v3727 = vpack.c.bf16 %v3601, %v3599
      %v3728 = vpack.c.bf16 %v3604, %v3602
      %v3729 = vpack.c.bf16 %v3605, %v3603
      %v3730 = vpack.c.bf16 %v3608, %v3606
      %v3731 = vpack.c.bf16 %v3609, %v3607
      %v3732 = vpack.c.bf16 %v3612, %v3610
      %v3733 = vpack.c.bf16 %v3613, %v3611
      %v3734 = vpack.c.bf16 %v3616, %v3614
      %v3735 = vpack.c.bf16 %v3617, %v3615
      %v3736 = vpack.c.bf16 %v3620, %v3618
      %v3737 = vpack.c.bf16 %v3621, %v3619
      %v3738 = vpack.c.bf16 %v3624, %v3622
      %v3739 = vpack.c.bf16 %v3625, %v3623
      %v3740 = vpack.c.bf16 %v3628, %v3626
      %v3741 = vpack.c.bf16 %v3629, %v3627
      %v3742 = vpack.c.bf16 %v3632, %v3630
      %v3743 = vpack.c.bf16 %v3633, %v3631
      %v3744 = vpack.c.bf16 %v3636, %v3634
      %v3745 = vpack.c.bf16 %v3637, %v3635
      %v3746 = vpack.c.bf16 %v3640, %v3638
      %v3747 = vpack.c.bf16 %v3641, %v3639
      %v3748 = vpack.c.bf16 %v3644, %v3642
      %v3749 = vpack.c.bf16 %v3645, %v3643
      %v3750 = vpack.c.bf16 %v3648, %v3646
      %v3751 = vpack.c.bf16 %v3649, %v3647
      %v3752 = vpack.c.bf16 %v3652, %v3650
      %v3753 = vpack.c.bf16 %v3653, %v3651
      %v3754 = vpack.c.bf16 %v3656, %v3654
      %v3755 = vpack.c.bf16 %v3657, %v3655
      %v3756 = vpack.c.bf16 %v3660, %v3658
      %v3757 = vpack.c.bf16 %v3661, %v3659
      %v3758 = vpack.c.bf16 %v3664, %v3662
      %v3759 = vpack.c.bf16 %v3665, %v3663
      %v3760 = vpack.c.bf16 %v3668, %v3666
      %v3761 = vpack.c.bf16 %v3669, %v3667
      %v3762 = vpack.c.bf16 %v3672, %v3670
      %v3763 = vpack.c.bf16 %v3673, %v3671
      %v3764 = vpack.c.bf16 %v3676, %v3674
      %v3765 = vpack.c.bf16 %v3677, %v3675
      %v3766 = vpack.c.bf16 %v3680, %v3678
      %v3767 = vpack.c.bf16 %v3681, %v3679
      %v3768 = vpack.c.bf16 %v3684, %v3682
      %v3769 = vpack.c.bf16 %v3685, %v3683
      %v3770 = vpack.c.bf16 %v3688, %v3686
      %v3771 = vpack.c.bf16 %v3689, %v3687
      %v3772 = vpack.c.bf16 %v3692, %v3690
      %v3773 = vpack.c.bf16 %v3693, %v3691
      %v3774 = vpack.c.bf16 %v3696, %v3694
      %v3775 = vpack.c.bf16 %v3697, %v3695
      %v3776 = vpack.c.bf16 %v3700, %v3698
      %v3777 = vpack.c.bf16 %v3701, %v3699
      %v3778 = vpack.c.bf16 %v3704, %v3702
      %v3779 = vpack.c.bf16 %v3705, %v3703
      %v3780 = vpack.c.bf16 %v3708, %v3706
      %v3781 = vpack.c.bf16 %v3709, %v3707
      %v3782 = vpack.c.bf16 %v3712, %v3710
      %v3783 = vpack.c.bf16 %v3713, %v3711
      %v3784 = vpack.c.bf16 %v3716, %v3714
      %v3785 = vpack.c.bf16 %v3717, %v3715
      %v3786 = vpack.c.bf16 %v3720, %v3718
      %v3787 = vpack.c.bf16 %v3721, %v3719
      %v3788 = vpack.c.bf16 %v3724, %v3722
      %v3789 = vpack.c.bf16 %v3725, %v3723
      %v3790 = vld [vmem:[%s9] sm:$0xff]
      %v3791 = vld [vmem:[%s9 + $0x8] sm:$0xff]
      %v3792 = vld [vmem:[%s9 + $0x10] sm:$0xff]
      %v3793 = vld [vmem:[%s9 + $0x18] sm:$0xff]
      %v3794 = vld [vmem:[%s9 + $0x20] sm:$0xff]
      %v3795 = vld [vmem:[%s9 + $0x28] sm:$0xff]
      %v3796 = vld [vmem:[%s9 + $0x30] sm:$0xff]
      %v3797 = vld [vmem:[%s9 + $0x38] sm:$0xff]
      %v3798 = vld [vmem:[%s9 + $0x40] sm:$0xff]
      %v3799 = vld [vmem:[%s9 + $0x48] sm:$0xff]
      %v3800 = vld [vmem:[%s9 + $0x50] sm:$0xff]
      %v3801 = vld [vmem:[%s9 + $0x58] sm:$0xff]
      %v3802 = vld [vmem:[%s9 + $0x60] sm:$0xff]
      %v3803 = vld [vmem:[%s9 + $0x68] sm:$0xff]
      %v3804 = vld [vmem:[%s9 + $0x70] sm:$0xff]
      %v3805 = vld [vmem:[%s9 + $0x78] sm:$0xff]
      %v3806 = vld [vmem:[%s9 + $0x80] sm:$0xff]
      %v3807 = vld [vmem:[%s9 + $0x88] sm:$0xff]
      %v3808 = vld [vmem:[%s9 + $0x90] sm:$0xff]
      %v3809 = vld [vmem:[%s9 + $0x98] sm:$0xff]
      %v3810 = vld [vmem:[%s9 + $0xa0] sm:$0xff]
      %v3811 = vld [vmem:[%s9 + $0xa8] sm:$0xff]
      %v3812 = vld [vmem:[%s9 + $0xb0] sm:$0xff]
      %v3813 = vld [vmem:[%s9 + $0xb8] sm:$0xff]
      %v3814 = vld [vmem:[%s9 + $0xc0] sm:$0xff]
      %v3815 = vld [vmem:[%s9 + $0xc8] sm:$0xff]
      %v3816 = vld [vmem:[%s9 + $0xd0] sm:$0xff]
      %v3817 = vld [vmem:[%s9 + $0xd8] sm:$0xff]
      %v3818 = vld [vmem:[%s9 + $0xe0] sm:$0xff]
      %v3819 = vld [vmem:[%s9 + $0xe8] sm:$0xff]
      %v3820 = vld [vmem:[%s9 + $0xf0] sm:$0xff]
      %v3821 = vld [vmem:[%s9 + $0xf8] sm:$0xff]
      %v3822 = vld [vmem:[%s10] sm:$0x3]
      %v3824 = vlaneseq
      %v3825 = vshrl.u32 %v3824, 7
      %v3826 = vsub.s32 0, %v3825
      %v3827 = vrot.slane %v3822, %v3826
      %v3828 = vlaneseq
      %v3829 = vshrl.u32 %v3828, 7
      %v3830 = vsub.s32 1, %v3829
      %v3831 = vrot.slane %v3822, %v3830
      %v3866 = vunpack.c.l.b16 %v3790
      %v3867 = vunpack.c.h.b16 %v3790
      %v3868 = vunpack.c.l.b16 %v3791
      %v3869 = vunpack.c.h.b16 %v3791
      %v3870 = vunpack.c.l.b16 %v3792
      %v3871 = vunpack.c.h.b16 %v3792
      %v3872 = vunpack.c.l.b16 %v3793
      %v3873 = vunpack.c.h.b16 %v3793
      %v3874 = vunpack.c.l.b16 %v3794
      %v3875 = vunpack.c.h.b16 %v3794
      %v3876 = vunpack.c.l.b16 %v3795
      %v3877 = vunpack.c.h.b16 %v3795
      %v3878 = vunpack.c.l.b16 %v3796
      %v3879 = vunpack.c.h.b16 %v3796
      %v3880 = vunpack.c.l.b16 %v3797
      %v3881 = vunpack.c.h.b16 %v3797
      %v3882 = vunpack.c.l.b16 %v3798
      %v3883 = vunpack.c.h.b16 %v3798
      %v3884 = vunpack.c.l.b16 %v3799
      %v3885 = vunpack.c.h.b16 %v3799
      %v3886 = vunpack.c.l.b16 %v3800
      %v3887 = vunpack.c.h.b16 %v3800
      %v3888 = vunpack.c.l.b16 %v3801
      %v3889 = vunpack.c.h.b16 %v3801
      %v3890 = vunpack.c.l.b16 %v3802
      %v3891 = vunpack.c.h.b16 %v3802
      %v3892 = vunpack.c.l.b16 %v3803
      %v3893 = vunpack.c.h.b16 %v3803
      %v3894 = vunpack.c.l.b16 %v3804
      %v3895 = vunpack.c.h.b16 %v3804
      %v3896 = vunpack.c.l.b16 %v3805
      %v3897 = vunpack.c.h.b16 %v3805
      %v3898 = vunpack.c.l.b16 %v3806
      %v3899 = vunpack.c.h.b16 %v3806
      %v3900 = vunpack.c.l.b16 %v3807
      %v3901 = vunpack.c.h.b16 %v3807
      %v3902 = vunpack.c.l.b16 %v3808
      %v3903 = vunpack.c.h.b16 %v3808
      %v3904 = vunpack.c.l.b16 %v3809
      %v3905 = vunpack.c.h.b16 %v3809
      %v3906 = vunpack.c.l.b16 %v3810
      %v3907 = vunpack.c.h.b16 %v3810
      %v3908 = vunpack.c.l.b16 %v3811
      %v3909 = vunpack.c.h.b16 %v3811
      %v3910 = vunpack.c.l.b16 %v3812
      %v3911 = vunpack.c.h.b16 %v3812
      %v3912 = vunpack.c.l.b16 %v3813
      %v3913 = vunpack.c.h.b16 %v3813
      %v3914 = vunpack.c.l.b16 %v3814
      %v3915 = vunpack.c.h.b16 %v3814
      %v3916 = vunpack.c.l.b16 %v3815
      %v3917 = vunpack.c.h.b16 %v3815
      %v3918 = vunpack.c.l.b16 %v3816
      %v3919 = vunpack.c.h.b16 %v3816
      %v3920 = vunpack.c.l.b16 %v3817
      %v3921 = vunpack.c.h.b16 %v3817
      %v3922 = vunpack.c.l.b16 %v3818
      %v3923 = vunpack.c.h.b16 %v3818
      %v3924 = vunpack.c.l.b16 %v3819
      %v3925 = vunpack.c.h.b16 %v3819
      %v3926 = vunpack.c.l.b16 %v3820
      %v3927 = vunpack.c.h.b16 %v3820
      %v3928 = vunpack.c.l.b16 %v3821
      %v3929 = vunpack.c.h.b16 %v3821
      %v3930 = vpack.c.b16 %v3868, %v3866
      %v3931 = vpack.c.b16 %v3869, %v3867
      %v3932 = vpack.c.b16 %v3872, %v3870
      %v3933 = vpack.c.b16 %v3873, %v3871
      %v3934 = vpack.c.b16 %v3876, %v3874
      %v3935 = vpack.c.b16 %v3877, %v3875
      %v3936 = vpack.c.b16 %v3880, %v3878
      %v3937 = vpack.c.b16 %v3881, %v3879
      %v3938 = vpack.c.b16 %v3884, %v3882
      %v3939 = vpack.c.b16 %v3885, %v3883
      %v3940 = vpack.c.b16 %v3888, %v3886
      %v3941 = vpack.c.b16 %v3889, %v3887
      %v3942 = vpack.c.b16 %v3892, %v3890
      %v3943 = vpack.c.b16 %v3893, %v3891
      %v3944 = vpack.c.b16 %v3896, %v3894
      %v3945 = vpack.c.b16 %v3897, %v3895
      %v3946 = vpack.c.b16 %v3900, %v3898
      %v3947 = vpack.c.b16 %v3901, %v3899
      %v3948 = vpack.c.b16 %v3904, %v3902
      %v3949 = vpack.c.b16 %v3905, %v3903
      %v3950 = vpack.c.b16 %v3908, %v3906
      %v3951 = vpack.c.b16 %v3909, %v3907
      %v3952 = vpack.c.b16 %v3912, %v3910
      %v3953 = vpack.c.b16 %v3913, %v3911
      %v3954 = vpack.c.b16 %v3916, %v3914
      %v3955 = vpack.c.b16 %v3917, %v3915
      %v3956 = vpack.c.b16 %v3920, %v3918
      %v3957 = vpack.c.b16 %v3921, %v3919
      %v3958 = vpack.c.b16 %v3924, %v3922
      %v3959 = vpack.c.b16 %v3925, %v3923
      %v3960 = vpack.c.b16 %v3928, %v3926
      %v3961 = vpack.c.b16 %v3929, %v3927
      %3994 = vmatprep.subr.bf16.mxu0 %v3931
      %3995 = vmatpush1.bf16.msra.mxu0 %v3930
      %3996 = vmatprep.subr.bf16.mxu0 %v3933
      %3997 = vmatpush1.bf16.msra.mxu0 %v3932
      %3998 = vmatprep.subr.bf16.mxu0 %v3935
      %3999 = vmatpush1.bf16.msra.mxu0 %v3934
      %4000 = vmatprep.subr.bf16.mxu0 %v3937
      %4001 = vmatpush1.bf16.msra.mxu0 %v3936
      %4002 = vmatprep.subr.bf16.mxu0 %v3939
      %4003 = vmatpush1.bf16.msra.mxu0 %v3938
      %4004 = vmatprep.subr.bf16.mxu0 %v3941
      %4005 = vmatpush1.bf16.msra.mxu0 %v3940
      %4006 = vmatprep.subr.bf16.mxu0 %v3943
      %4007 = vmatpush1.bf16.msra.mxu0 %v3942
      %4008 = vmatprep.subr.bf16.mxu0 %v3945
      %4009 = vmatpush1.bf16.msra.mxu0 %v3944
      %4010 = vmatprep.subr.bf16.mxu0 %v3947
      %4011 = vmatpush1.bf16.msra.mxu0 %v3946
      %4012 = vmatprep.subr.bf16.mxu0 %v3949
      %4013 = vmatpush1.bf16.msra.mxu0 %v3948
      %4014 = vmatprep.subr.bf16.mxu0 %v3951
      %4015 = vmatpush1.bf16.msra.mxu0 %v3950
      %4016 = vmatprep.subr.bf16.mxu0 %v3953
      %4017 = vmatpush1.bf16.msra.mxu0 %v3952
      %4018 = vmatprep.subr.bf16.mxu0 %v3955
      %4019 = vmatpush1.bf16.msra.mxu0 %v3954
      %4020 = vmatprep.subr.bf16.mxu0 %v3957
      %4021 = vmatpush1.bf16.msra.mxu0 %v3956
      %4022 = vmatprep.subr.bf16.mxu0 %v3959
      %4023 = vmatpush1.bf16.msra.mxu0 %v3958
      %4024 = vmatprep.subr.bf16.mxu0 %v3961
      %4025 = vmatpush1.bf16.msra.mxu0 %v3960
      %4026 = vmatprep.mubr.bf16.mxu0 %v3727
      %4027 = vmatmul.mubr.bf16.gmra.mrb[0].mxu0 %v3726
      %v4028 = vpop.f32.mrb[0].mxu0
      %v4029 = vadd.f32 %v3827, %v4028
      %v4030 = vpop.f32.mrb[0].mxu0
      %v4031 = vadd.f32 %v3831, %v4030
      %v4032 = vpop.f32.mrb[0].mxu0
      %v4033 = vadd.f32 %v3827, %v4032
      %v4034 = vpop.f32.mrb[0].mxu0
      %v4035 = vadd.f32 %v3831, %v4034
      %4036 = vmatprep.mubr.bf16.mxu0 %v3729
      %4037 = vmatmul.mubr.bf16.gmra.mrb[0].mxu0 %v3728
      %v4038 = vpop.f32.mrb[0].mxu0
      %v4039 = vadd.f32 %v3827, %v4038
      %v4040 = vpop.f32.mrb[0].mxu0
      %v4041 = vadd.f32 %v3831, %v4040
      %v4042 = vpop.f32.mrb[0].mxu0
      %v4043 = vadd.f32 %v3827, %v4042
      %v4044 = vpop.f32.mrb[0].mxu0
      %v4045 = vadd.f32 %v3831, %v4044
      %4046 = vmatprep.mubr.bf16.mxu0 %v3731
      %4047 = vmatmul.mubr.bf16.gmra.mrb[0].mxu0 %v3730
      %v4048 = vpop.f32.mrb[0].mxu0
      %v4049 = vadd.f32 %v3827, %v4048
      %v4050 = vpop.f32.mrb[0].mxu0
      %v4051 = vadd.f32 %v3831, %v4050
      %v4052 = vpop.f32.mrb[0].mxu0
      %v4053 = vadd.f32 %v3827, %v4052
      %v4054 = vpop.f32.mrb[0].mxu0
      %v4055 = vadd.f32 %v3831, %v4054
      %4056 = vmatprep.mubr.bf16.mxu0 %v3733
      %4057 = vmatmul.mubr.bf16.gmra.mrb[0].mxu0 %v3732
      %v4058 = vpop.f32.mrb[0].mxu0
      %v4059 = vadd.f32 %v3827, %v4058
      %v4060 = vpop.f32.mrb[0].mxu0
      %v4061 = vadd.f32 %v3831, %v4060
      %v4062 = vpop.f32.mrb[0].mxu0
      %v4063 = vadd.f32 %v3827, %v4062
      %v4064 = vpop.f32.mrb[0].mxu0
      %v4065 = vadd.f32 %v3831, %v4064
      %4066 = vmatprep.mubr.bf16.mxu0 %v3735
      %4067 = vmatmul.mubr.bf16.gmra.mrb[0].mxu0 %v3734
      %v4068 = vpop.f32.mrb[0].mxu0
      %v4069 = vadd.f32 %v3827, %v4068
      %v4070 = vpop.f32.mrb[0].mxu0
      %v4071 = vadd.f32 %v3831, %v4070
      %v4072 = vpop.f32.mrb[0].mxu0
      %v4073 = vadd.f32 %v3827, %v4072
      %v4074 = vpop.f32.mrb[0].mxu0
      %v4075 = vadd.f32 %v3831, %v4074
      %4076 = vmatprep.mubr.bf16.mxu0 %v3737
      %4077 = vmatmul.mubr.bf16.gmra.mrb[0].mxu0 %v3736
      %v4078 = vpop.f32.mrb[0].mxu0
      %v4079 = vadd.f32 %v3827, %v4078
      %v4080 = vpop.f32.mrb[0].mxu0
      %v4081 = vadd.f32 %v3831, %v4080
      %v4082 = vpop.f32.mrb[0].mxu0
      %v4083 = vadd.f32 %v3827, %v4082
      %v4084 = vpop.f32.mrb[0].mxu0
      %v4085 = vadd.f32 %v3831, %v4084
      %4086 = vmatprep.mubr.bf16.mxu0 %v3739
      %4087 = vmatmul.mubr.bf16.gmra.mrb[0].mxu0 %v3738
      %v4088 = vpop.f32.mrb[0].mxu0
      %v4089 = vadd.f32 %v3827, %v4088
      %v4090 = vpop.f32.mrb[0].mxu0
      %v4091 = vadd.f32 %v3831, %v4090
      %v4092 = vpop.f32.mrb[0].mxu0
      %v4093 = vadd.f32 %v3827, %v4092
      %v4094 = vpop.f32.mrb[0].mxu0
      %v4095 = vadd.f32 %v3831, %v4094
      %4096 = vmatprep.mubr.bf16.mxu0 %v3741
      %4097 = vmatmul.mubr.bf16.gmra.mrb[0].mxu0 %v3740
      %v4098 = vpop.f32.mrb[0].mxu0
      %v4099 = vadd.f32 %v3827, %v4098
      %v4100 = vpop.f32.mrb[0].mxu0
      %v4101 = vadd.f32 %v3831, %v4100
      %v4102 = vpop.f32.mrb[0].mxu0
      %v4103 = vadd.f32 %v3827, %v4102
      %v4104 = vpop.f32.mrb[0].mxu0
      %v4105 = vadd.f32 %v3831, %v4104
      %4106 = vmatprep.mubr.bf16.mxu0 %v3743
      %4107 = vmatmul.mubr.bf16.gmra.mrb[0].mxu0 %v3742
      %v4108 = vpop.f32.mrb[0].mxu0
      %v4109 = vadd.f32 %v3827, %v4108
      %v4110 = vpop.f32.mrb[0].mxu0
      %v4111 = vadd.f32 %v3831, %v4110
      %v4112 = vpop.f32.mrb[0].mxu0
      %v4113 = vadd.f32 %v3827, %v4112
      %v4114 = vpop.f32.mrb[0].mxu0
      %v4115 = vadd.f32 %v3831, %v4114
      %4116 = vmatprep.mubr.bf16.mxu0 %v3745
      %4117 = vmatmul.mubr.bf16.gmra.mrb[0].mxu0 %v3744
      %v4118 = vpop.f32.mrb[0].mxu0
      %v4119 = vadd.f32 %v3827, %v4118
      %v4120 = vpop.f32.mrb[0].mxu0
      %v4121 = vadd.f32 %v3831, %v4120
      %v4122 = vpop.f32.mrb[0].mxu0
      %v4123 = vadd.f32 %v3827, %v4122
      %v4124 = vpop.f32.mrb[0].mxu0
      %v4125 = vadd.f32 %v3831, %v4124
      %4126 = vmatprep.mubr.bf16.mxu0 %v3747
      %4127 = vmatmul.mubr.bf16.gmra.mrb[0].mxu0 %v3746
      %v4128 = vpop.f32.mrb[0].mxu0
      %v4129 = vadd.f32 %v3827, %v4128
      %v4130 = vpop.f32.mrb[0].mxu0
      %v4131 = vadd.f32 %v3831, %v4130
      %v4132 = vpop.f32.mrb[0].mxu0
      %v4133 = vadd.f32 %v3827, %v4132
      %v4134 = vpop.f32.mrb[0].mxu0
      %v4135 = vadd.f32 %v3831, %v4134
      %4136 = vmatprep.mubr.bf16.mxu0 %v3749
      %4137 = vmatmul.mubr.bf16.gmra.mrb[0].mxu0 %v3748
      %v4138 = vpop.f32.mrb[0].mxu0
      %v4139 = vadd.f32 %v3827, %v4138
      %v4140 = vpop.f32.mrb[0].mxu0
      %v4141 = vadd.f32 %v3831, %v4140
      %v4142 = vpop.f32.mrb[0].mxu0
      %v4143 = vadd.f32 %v3827, %v4142
      %v4144 = vpop.f32.mrb[0].mxu0
      %v4145 = vadd.f32 %v3831, %v4144
      %4146 = vmatprep.mubr.bf16.mxu0 %v3751
      %4147 = vmatmul.mubr.bf16.gmra.mrb[0].mxu0 %v3750
      %v4148 = vpop.f32.mrb[0].mxu0
      %v4149 = vadd.f32 %v3827, %v4148
      %v4150 = vpop.f32.mrb[0].mxu0
      %v4151 = vadd.f32 %v3831, %v4150
      %v4152 = vpop.f32.mrb[0].mxu0
      %v4153 = vadd.f32 %v3827, %v4152
      %v4154 = vpop.f32.mrb[0].mxu0
      %v4155 = vadd.f32 %v3831, %v4154
      %4156 = vmatprep.mubr.bf16.mxu0 %v3753
      %4157 = vmatmul.mubr.bf16.gmra.mrb[0].mxu0 %v3752
      %v4158 = vpop.f32.mrb[0].mxu0
      %v4159 = vadd.f32 %v3827, %v4158
      %v4160 = vpop.f32.mrb[0].mxu0
      %v4161 = vadd.f32 %v3831, %v4160
      %v4162 = vpop.f32.mrb[0].mxu0
      %v4163 = vadd.f32 %v3827, %v4162
      %v4164 = vpop.f32.mrb[0].mxu0
      %v4165 = vadd.f32 %v3831, %v4164
      %4166 = vmatprep.mubr.bf16.mxu0 %v3755
      %4167 = vmatmul.mubr.bf16.gmra.mrb[0].mxu0 %v3754
      %v4168 = vpop.f32.mrb[0].mxu0
      %v4169 = vadd.f32 %v3827, %v4168
      %v4170 = vpop.f32.mrb[0].mxu0
      %v4171 = vadd.f32 %v3831, %v4170
      %v4172 = vpop.f32.mrb[0].mxu0
      %v4173 = vadd.f32 %v3827, %v4172
      %v4174 = vpop.f32.mrb[0].mxu0
      %v4175 = vadd.f32 %v3831, %v4174
      %4176 = vmatprep.mubr.bf16.mxu0 %v3757
      %4177 = vmatmul.mubr.bf16.gmra.mrb[0].mxu0 %v3756
      %v4178 = vpop.f32.mrb[0].mxu0
      %v4179 = vadd.f32 %v3827, %v4178
      %v4180 = vpop.f32.mrb[0].mxu0
      %v4181 = vadd.f32 %v3831, %v4180
      %v4182 = vpop.f32.mrb[0].mxu0
      %v4183 = vadd.f32 %v3827, %v4182
      %v4184 = vpop.f32.mrb[0].mxu0
      %v4185 = vadd.f32 %v3831, %v4184
      %4186 = vmatprep.mubr.bf16.mxu0 %v3759
      %4187 = vmatmul.mubr.bf16.gmra.mrb[0].mxu0 %v3758
      %v4188 = vpop.f32.mrb[0].mxu0
      %v4189 = vadd.f32 %v3827, %v4188
      %v4190 = vpop.f32.mrb[0].mxu0
      %v4191 = vadd.f32 %v3831, %v4190
      %v4192 = vpop.f32.mrb[0].mxu0
      %v4193 = vadd.f32 %v3827, %v4192
      %v4194 = vpop.f32.mrb[0].mxu0
      %v4195 = vadd.f32 %v3831, %v4194
      %4196 = vmatprep.mubr.bf16.mxu0 %v3761
      %4197 = vmatmul.mubr.bf16.gmra.mrb[0].mxu0 %v3760
      %v4198 = vpop.f32.mrb[0].mxu0
      %v4199 = vadd.f32 %v3827, %v4198
      %v4200 = vpop.f32.mrb[0].mxu0
      %v4201 = vadd.f32 %v3831, %v4200
      %v4202 = vpop.f32.mrb[0].mxu0
      %v4203 = vadd.f32 %v3827, %v4202
      %v4204 = vpop.f32.mrb[0].mxu0
      %v4205 = vadd.f32 %v3831, %v4204
      %4206 = vmatprep.mubr.bf16.mxu0 %v3763
      %4207 = vmatmul.mubr.bf16.gmra.mrb[0].mxu0 %v3762
      %v4208 = vpop.f32.mrb[0].mxu0
      %v4209 = vadd.f32 %v3827, %v4208
      %v4210 = vpop.f32.mrb[0].mxu0
      %v4211 = vadd.f32 %v3831, %v4210
      %v4212 = vpop.f32.mrb[0].mxu0
      %v4213 = vadd.f32 %v3827, %v4212
      %v4214 = vpop.f32.mrb[0].mxu0
      %v4215 = vadd.f32 %v3831, %v4214
      %4216 = vmatprep.mubr.bf16.mxu0 %v3765
      %4217 = vmatmul.mubr.bf16.gmra.mrb[0].mxu0 %v3764
      %v4218 = vpop.f32.mrb[0].mxu0
      %v4219 = vadd.f32 %v3827, %v4218
      %v4220 = vpop.f32.mrb[0].mxu0
      %v4221 = vadd.f32 %v3831, %v4220
      %v4222 = vpop.f32.mrb[0].mxu0
      %v4223 = vadd.f32 %v3827, %v4222
      %v4224 = vpop.f32.mrb[0].mxu0
      %v4225 = vadd.f32 %v3831, %v4224
      %4226 = vmatprep.mubr.bf16.mxu0 %v3767
      %4227 = vmatmul.mubr.bf16.gmra.mrb[0].mxu0 %v3766
      %v4228 = vpop.f32.mrb[0].mxu0
      %v4229 = vadd.f32 %v3827, %v4228
      %v4230 = vpop.f32.mrb[0].mxu0
      %v4231 = vadd.f32 %v3831, %v4230
      %v4232 = vpop.f32.mrb[0].mxu0
      %v4233 = vadd.f32 %v3827, %v4232
      %v4234 = vpop.f32.mrb[0].mxu0
      %v4235 = vadd.f32 %v3831, %v4234
      %4236 = vmatprep.mubr.bf16.mxu0 %v3769
      %4237 = vmatmul.mubr.bf16.gmra.mrb[0].mxu0 %v3768
      %v4238 = vpop.f32.mrb[0].mxu0
      %v4239 = vadd.f32 %v3827, %v4238
      %v4240 = vpop.f32.mrb[0].mxu0
      %v4241 = vadd.f32 %v3831, %v4240
      %v4242 = vpop.f32.mrb[0].mxu0
      %v4243 = vadd.f32 %v3827, %v4242
      %v4244 = vpop.f32.mrb[0].mxu0
      %v4245 = vadd.f32 %v3831, %v4244
      %4246 = vmatprep.mubr.bf16.mxu0 %v3771
      %4247 = vmatmul.mubr.bf16.gmra.mrb[0].mxu0 %v3770
      %v4248 = vpop.f32.mrb[0].mxu0
      %v4249 = vadd.f32 %v3827, %v4248
      %v4250 = vpop.f32.mrb[0].mxu0
      %v4251 = vadd.f32 %v3831, %v4250
      %v4252 = vpop.f32.mrb[0].mxu0
      %v4253 = vadd.f32 %v3827, %v4252
      %v4254 = vpop.f32.mrb[0].mxu0
      %v4255 = vadd.f32 %v3831, %v4254
      %4256 = vmatprep.mubr.bf16.mxu0 %v3773
      %4257 = vmatmul.mubr.bf16.gmra.mrb[0].mxu0 %v3772
      %v4258 = vpop.f32.mrb[0].mxu0
      %v4259 = vadd.f32 %v3827, %v4258
      %v4260 = vpop.f32.mrb[0].mxu0
      %v4261 = vadd.f32 %v3831, %v4260
      %v4262 = vpop.f32.mrb[0].mxu0
      %v4263 = vadd.f32 %v3827, %v4262
      %v4264 = vpop.f32.mrb[0].mxu0
      %v4265 = vadd.f32 %v3831, %v4264
      %4266 = vmatprep.mubr.bf16.mxu0 %v3775
      %4267 = vmatmul.mubr.bf16.gmra.mrb[0].mxu0 %v3774
      %v4268 = vpop.f32.mrb[0].mxu0
      %v4269 = vadd.f32 %v3827, %v4268
      %v4270 = vpop.f32.mrb[0].mxu0
      %v4271 = vadd.f32 %v3831, %v4270
      %v4272 = vpop.f32.mrb[0].mxu0
      %v4273 = vadd.f32 %v3827, %v4272
      %v4274 = vpop.f32.mrb[0].mxu0
      %v4275 = vadd.f32 %v3831, %v4274
      %4276 = vmatprep.mubr.bf16.mxu0 %v3777
      %4277 = vmatmul.mubr.bf16.gmra.mrb[0].mxu0 %v3776
      %v4278 = vpop.f32.mrb[0].mxu0
      %v4279 = vadd.f32 %v3827, %v4278
      %v4280 = vpop.f32.mrb[0].mxu0
      %v4281 = vadd.f32 %v3831, %v4280
      %v4282 = vpop.f32.mrb[0].mxu0
      %v4283 = vadd.f32 %v3827, %v4282
      %v4284 = vpop.f32.mrb[0].mxu0
      %v4285 = vadd.f32 %v3831, %v4284
      %4286 = vmatprep.mubr.bf16.mxu0 %v3779
      %4287 = vmatmul.mubr.bf16.gmra.mrb[0].mxu0 %v3778
      %v4288 = vpop.f32.mrb[0].mxu0
      %v4289 = vadd.f32 %v3827, %v4288
      %v4290 = vpop.f32.mrb[0].mxu0
      %v4291 = vadd.f32 %v3831, %v4290
      %v4292 = vpop.f32.mrb[0].mxu0
      %v4293 = vadd.f32 %v3827, %v4292
      %v4294 = vpop.f32.mrb[0].mxu0
      %v4295 = vadd.f32 %v3831, %v4294
      %4296 = vmatprep.mubr.bf16.mxu0 %v3781
      %4297 = vmatmul.mubr.bf16.gmra.mrb[0].mxu0 %v3780
      %v4298 = vpop.f32.mrb[0].mxu0
      %v4299 = vadd.f32 %v3827, %v4298
      %v4300 = vpop.f32.mrb[0].mxu0
      %v4301 = vadd.f32 %v3831, %v4300
      %v4302 = vpop.f32.mrb[0].mxu0
      %v4303 = vadd.f32 %v3827, %v4302
      %v4304 = vpop.f32.mrb[0].mxu0
      %v4305 = vadd.f32 %v3831, %v4304
      %4306 = vmatprep.mubr.bf16.mxu0 %v3783
      %4307 = vmatmul.mubr.bf16.gmra.mrb[0].mxu0 %v3782
      %v4308 = vpop.f32.mrb[0].mxu0
      %v4309 = vadd.f32 %v3827, %v4308
      %v4310 = vpop.f32.mrb[0].mxu0
      %v4311 = vadd.f32 %v3831, %v4310
      %v4312 = vpop.f32.mrb[0].mxu0
      %v4313 = vadd.f32 %v3827, %v4312
      %v4314 = vpop.f32.mrb[0].mxu0
      %v4315 = vadd.f32 %v3831, %v4314
      %4316 = vmatprep.mubr.bf16.mxu0 %v3785
      %4317 = vmatmul.mubr.bf16.gmra.mrb[0].mxu0 %v3784
      %v4318 = vpop.f32.mrb[0].mxu0
      %v4319 = vadd.f32 %v3827, %v4318
      %v4320 = vpop.f32.mrb[0].mxu0
      %v4321 = vadd.f32 %v3831, %v4320
      %v4322 = vpop.f32.mrb[0].mxu0
      %v4323 = vadd.f32 %v3827, %v4322
      %v4324 = vpop.f32.mrb[0].mxu0
      %v4325 = vadd.f32 %v3831, %v4324
      %4326 = vmatprep.mubr.bf16.mxu0 %v3787
      %4327 = vmatmul.mubr.bf16.gmra.mrb[0].mxu0 %v3786
      %v4328 = vpop.f32.mrb[0].mxu0
      %v4329 = vadd.f32 %v3827, %v4328
      %v4330 = vpop.f32.mrb[0].mxu0
      %v4331 = vadd.f32 %v3831, %v4330
      %v4332 = vpop.f32.mrb[0].mxu0
      %v4333 = vadd.f32 %v3827, %v4332
      %v4334 = vpop.f32.mrb[0].mxu0
      %v4335 = vadd.f32 %v3831, %v4334
      %4336 = vmatprep.mubr.bf16.mxu0 %v3789
      %4337 = vmatmul.mubr.bf16.gmra.mrb[0].mxu0 %v3788
      %v4338 = vpop.f32.mrb[0].mxu0
      %v4339 = vadd.f32 %v3827, %v4338
      %v4340 = vpop.f32.mrb[0].mxu0
      %v4341 = vadd.f32 %v3831, %v4340
      %v4342 = vpop.f32.mrb[0].mxu0
      %v4343 = vadd.f32 %v3827, %v4342
      %v4344 = vpop.f32.mrb[0].mxu0
      %v4345 = vadd.f32 %v3831, %v4344
      %4346 = vdwg.mxu0
      %v4347 = vmax.f32 %v4029, 0.0
      %v4348 = vmax.f32 %v4031, 0.0
      %v4349 = vmax.f32 %v4033, 0.0
      %v4350 = vmax.f32 %v4035, 0.0
      %v4351 = vmax.f32 %v4039, 0.0
      %v4352 = vmax.f32 %v4041, 0.0
      %v4353 = vmax.f32 %v4043, 0.0
      %v4354 = vmax.f32 %v4045, 0.0
      %v4355 = vmax.f32 %v4049, 0.0
      %v4356 = vmax.f32 %v4051, 0.0
      %v4357 = vmax.f32 %v4053, 0.0
      %v4358 = vmax.f32 %v4055, 0.0
      %v4359 = vmax.f32 %v4059, 0.0
      %v4360 = vmax.f32 %v4061, 0.0
      %v4361 = vmax.f32 %v4063, 0.0
      %v4362 = vmax.f32 %v4065, 0.0
      %v4363 = vmax.f32 %v4069, 0.0
      %v4364 = vmax.f32 %v4071, 0.0
      %v4365 = vmax.f32 %v4073, 0.0
      %v4366 = vmax.f32 %v4075, 0.0
      %v4367 = vmax.f32 %v4079, 0.0
      %v4368 = vmax.f32 %v4081, 0.0
      %v4369 = vmax.f32 %v4083, 0.0
      %v4370 = vmax.f32 %v4085, 0.0
      %v4371 = vmax.f32 %v4089, 0.0
      %v4372 = vmax.f32 %v4091, 0.0
      %v4373 = vmax.f32 %v4093, 0.0
      %v4374 = vmax.f32 %v4095, 0.0
      %v4375 = vmax.f32 %v4099, 0.0
      %v4376 = vmax.f32 %v4101, 0.0
      %v4377 = vmax.f32 %v4103, 0.0
      %v4378 = vmax.f32 %v4105, 0.0
      %v4379 = vmax.f32 %v4109, 0.0
      %v4380 = vmax.f32 %v4111, 0.0
      %v4381 = vmax.f32 %v4113, 0.0
      %v4382 = vmax.f32 %v4115, 0.0
      %v4383 = vmax.f32 %v4119, 0.0
      %v4384 = vmax.f32 %v4121, 0.0
      %v4385 = vmax.f32 %v4123, 0.0
      %v4386 = vmax.f32 %v4125, 0.0
      %v4387 = vmax.f32 %v4129, 0.0
      %v4388 = vmax.f32 %v4131, 0.0
      %v4389 = vmax.f32 %v4133, 0.0
      %v4390 = vmax.f32 %v4135, 0.0
      %v4391 = vmax.f32 %v4139, 0.0
      %v4392 = vmax.f32 %v4141, 0.0
      %v4393 = vmax.f32 %v4143, 0.0
      %v4394 = vmax.f32 %v4145, 0.0
      %v4395 = vmax.f32 %v4149, 0.0
      %v4396 = vmax.f32 %v4151, 0.0
      %v4397 = vmax.f32 %v4153, 0.0
      %v4398 = vmax.f32 %v4155, 0.0
      %v4399 = vmax.f32 %v4159, 0.0
      %v4400 = vmax.f32 %v4161, 0.0
      %v4401 = vmax.f32 %v4163, 0.0
      %v4402 = vmax.f32 %v4165, 0.0
      %v4403 = vmax.f32 %v4169, 0.0
      %v4404 = vmax.f32 %v4171, 0.0
      %v4405 = vmax.f32 %v4173, 0.0
      %v4406 = vmax.f32 %v4175, 0.0
      %v4407 = vmax.f32 %v4179, 0.0
      %v4408 = vmax.f32 %v4181, 0.0
      %v4409 = vmax.f32 %v4183, 0.0
      %v4410 = vmax.f32 %v4185, 0.0
      %v4411 = vmax.f32 %v4189, 0.0
      %v4412 = vmax.f32 %v4191, 0.0
      %v4413 = vmax.f32 %v4193, 0.0
      %v4414 = vmax.f32 %v4195, 0.0
      %v4415 = vmax.f32 %v4199, 0.0
      %v4416 = vmax.f32 %v4201, 0.0
      %v4417 = vmax.f32 %v4203, 0.0
      %v4418 = vmax.f32 %v4205, 0.0
      %v4419 = vmax.f32 %v4209, 0.0
      %v4420 = vmax.f32 %v4211, 0.0
      %v4421 = vmax.f32 %v4213, 0.0
      %v4422 = vmax.f32 %v4215, 0.0
      %v4423 = vmax.f32 %v4219, 0.0
      %v4424 = vmax.f32 %v4221, 0.0
      %v4425 = vmax.f32 %v4223, 0.0
      %v4426 = vmax.f32 %v4225, 0.0
      %v4427 = vmax.f32 %v4229, 0.0
      %v4428 = vmax.f32 %v4231, 0.0
      %v4429 = vmax.f32 %v4233, 0.0
      %v4430 = vmax.f32 %v4235, 0.0
      %v4431 = vmax.f32 %v4239, 0.0
      %v4432 = vmax.f32 %v4241, 0.0
      %v4433 = vmax.f32 %v4243, 0.0
      %v4434 = vmax.f32 %v4245, 0.0
      %v4435 = vmax.f32 %v4249, 0.0
      %v4436 = vmax.f32 %v4251, 0.0
      %v4437 = vmax.f32 %v4253, 0.0
      %v4438 = vmax.f32 %v4255, 0.0
      %v4439 = vmax.f32 %v4259, 0.0
      %v4440 = vmax.f32 %v4261, 0.0
      %v4441 = vmax.f32 %v4263, 0.0
      %v4442 = vmax.f32 %v4265, 0.0
      %v4443 = vmax.f32 %v4269, 0.0
      %v4444 = vmax.f32 %v4271, 0.0
      %v4445 = vmax.f32 %v4273, 0.0
      %v4446 = vmax.f32 %v4275, 0.0
      %v4447 = vmax.f32 %v4279, 0.0
      %v4448 = vmax.f32 %v4281, 0.0
      %v4449 = vmax.f32 %v4283, 0.0
      %v4450 = vmax.f32 %v4285, 0.0
      %v4451 = vmax.f32 %v4289, 0.0
      %v4452 = vmax.f32 %v4291, 0.0
      %v4453 = vmax.f32 %v4293, 0.0
      %v4454 = vmax.f32 %v4295, 0.0
      %v4455 = vmax.f32 %v4299, 0.0
      %v4456 = vmax.f32 %v4301, 0.0
      %v4457 = vmax.f32 %v4303, 0.0
      %v4458 = vmax.f32 %v4305, 0.0
      %v4459 = vmax.f32 %v4309, 0.0
      %v4460 = vmax.f32 %v4311, 0.0
      %v4461 = vmax.f32 %v4313, 0.0
      %v4462 = vmax.f32 %v4315, 0.0
      %v4463 = vmax.f32 %v4319, 0.0
      %v4464 = vmax.f32 %v4321, 0.0
      %v4465 = vmax.f32 %v4323, 0.0
      %v4466 = vmax.f32 %v4325, 0.0
      %v4467 = vmax.f32 %v4329, 0.0
      %v4468 = vmax.f32 %v4331, 0.0
      %v4469 = vmax.f32 %v4333, 0.0
      %v4470 = vmax.f32 %v4335, 0.0
      %v4471 = vmax.f32 %v4339, 0.0
      %v4472 = vmax.f32 %v4341, 0.0
      %v4473 = vmax.f32 %v4343, 0.0
      %v4474 = vmax.f32 %v4345, 0.0
      %v4475 = vpack.c.bf16 %v4349, %v4347
      %v4476 = vpack.c.bf16 %v4350, %v4348
      %v4477 = vpack.c.bf16 %v4353, %v4351
      %v4478 = vpack.c.bf16 %v4354, %v4352
      %v4479 = vpack.c.bf16 %v4357, %v4355
      %v4480 = vpack.c.bf16 %v4358, %v4356
      %v4481 = vpack.c.bf16 %v4361, %v4359
      %v4482 = vpack.c.bf16 %v4362, %v4360
      %v4483 = vpack.c.bf16 %v4365, %v4363
      %v4484 = vpack.c.bf16 %v4366, %v4364
      %v4485 = vpack.c.bf16 %v4369, %v4367
      %v4486 = vpack.c.bf16 %v4370, %v4368
      %v4487 = vpack.c.bf16 %v4373, %v4371
      %v4488 = vpack.c.bf16 %v4374, %v4372
      %v4489 = vpack.c.bf16 %v4377, %v4375
      %v4490 = vpack.c.bf16 %v4378, %v4376
      %v4491 = vpack.c.bf16 %v4381, %v4379
      %v4492 = vpack.c.bf16 %v4382, %v4380
      %v4493 = vpack.c.bf16 %v4385, %v4383
      %v4494 = vpack.c.bf16 %v4386, %v4384
      %v4495 = vpack.c.bf16 %v4389, %v4387
      %v4496 = vpack.c.bf16 %v4390, %v4388
      %v4497 = vpack.c.bf16 %v4393, %v4391
      %v4498 = vpack.c.bf16 %v4394, %v4392
      %v4499 = vpack.c.bf16 %v4397, %v4395
      %v4500 = vpack.c.bf16 %v4398, %v4396
      %v4501 = vpack.c.bf16 %v4401, %v4399
      %v4502 = vpack.c.bf16 %v4402, %v4400
      %v4503 = vpack.c.bf16 %v4405, %v4403
      %v4504 = vpack.c.bf16 %v4406, %v4404
      %v4505 = vpack.c.bf16 %v4409, %v4407
      %v4506 = vpack.c.bf16 %v4410, %v4408
      %v4507 = vpack.c.bf16 %v4413, %v4411
      %v4508 = vpack.c.bf16 %v4414, %v4412
      %v4509 = vpack.c.bf16 %v4417, %v4415
      %v4510 = vpack.c.bf16 %v4418, %v4416
      %v4511 = vpack.c.bf16 %v4421, %v4419
      %v4512 = vpack.c.bf16 %v4422, %v4420
      %v4513 = vpack.c.bf16 %v4425, %v4423
      %v4514 = vpack.c.bf16 %v4426, %v4424
      %v4515 = vpack.c.bf16 %v4429, %v4427
      %v4516 = vpack.c.bf16 %v4430, %v4428
      %v4517 = vpack.c.bf16 %v4433, %v4431
      %v4518 = vpack.c.bf16 %v4434, %v4432
      %v4519 = vpack.c.bf16 %v4437, %v4435
      %v4520 = vpack.c.bf16 %v4438, %v4436
      %v4521 = vpack.c.bf16 %v4441, %v4439
      %v4522 = vpack.c.bf16 %v4442, %v4440
      %v4523 = vpack.c.bf16 %v4445, %v4443
      %v4524 = vpack.c.bf16 %v4446, %v4444
      %v4525 = vpack.c.bf16 %v4449, %v4447
      %v4526 = vpack.c.bf16 %v4450, %v4448
      %v4527 = vpack.c.bf16 %v4453, %v4451
      %v4528 = vpack.c.bf16 %v4454, %v4452
      %v4529 = vpack.c.bf16 %v4457, %v4455
      %v4530 = vpack.c.bf16 %v4458, %v4456
      %v4531 = vpack.c.bf16 %v4461, %v4459
      %v4532 = vpack.c.bf16 %v4462, %v4460
      %v4533 = vpack.c.bf16 %v4465, %v4463
      %v4534 = vpack.c.bf16 %v4466, %v4464
      %v4535 = vpack.c.bf16 %v4469, %v4467
      %v4536 = vpack.c.bf16 %v4470, %v4468
      %v4537 = vpack.c.bf16 %v4473, %v4471
      %v4538 = vpack.c.bf16 %v4474, %v4472
      %v4539 = vld [vmem:[%s11] sm:$0xff]
      %v4540 = vld [vmem:[%s11 + $0x8] sm:$0xff]
      %v4541 = vld [vmem:[%s11 + $0x10] sm:$0xff]
      %v4542 = vld [vmem:[%s11 + $0x18] sm:$0xff]
      %v4543 = vld [vmem:[%s11 + $0x20] sm:$0xff]
      %v4544 = vld [vmem:[%s11 + $0x28] sm:$0xff]
      %v4545 = vld [vmem:[%s11 + $0x30] sm:$0xff]
      %v4546 = vld [vmem:[%s11 + $0x38] sm:$0xff]
      %v4547 = vld [vmem:[%s11 + $0x40] sm:$0xff]
      %v4548 = vld [vmem:[%s11 + $0x48] sm:$0xff]
      %v4549 = vld [vmem:[%s11 + $0x50] sm:$0xff]
      %v4550 = vld [vmem:[%s11 + $0x58] sm:$0xff]
      %v4551 = vld [vmem:[%s11 + $0x60] sm:$0xff]
      %v4552 = vld [vmem:[%s11 + $0x68] sm:$0xff]
      %v4553 = vld [vmem:[%s11 + $0x70] sm:$0xff]
      %v4554 = vld [vmem:[%s11 + $0x78] sm:$0xff]
      %v4555 = vld [vmem:[%s12] sm:$0xff]
      %v4556 = vld [vmem:[%s12 + $0x8] sm:$0xff]
      %v4557 = vld [vmem:[%s12 + $0x10] sm:$0xff]
      %v4558 = vld [vmem:[%s12 + $0x18] sm:$0xff]
      %v4559 = vld [vmem:[%s12 + $0x20] sm:$0xff]
      %v4560 = vld [vmem:[%s12 + $0x28] sm:$0xff]
      %v4561 = vld [vmem:[%s12 + $0x30] sm:$0xff]
      %v4562 = vld [vmem:[%s12 + $0x38] sm:$0xff]
      %v4563 = vld [vmem:[%s12 + $0x40] sm:$0xff]
      %v4564 = vld [vmem:[%s12 + $0x48] sm:$0xff]
      %v4565 = vld [vmem:[%s12 + $0x50] sm:$0xff]
      %v4566 = vld [vmem:[%s12 + $0x58] sm:$0xff]
      %v4567 = vld [vmem:[%s12 + $0x60] sm:$0xff]
      %v4568 = vld [vmem:[%s12 + $0x68] sm:$0xff]
      %v4569 = vld [vmem:[%s12 + $0x70] sm:$0xff]
      %v4570 = vld [vmem:[%s12 + $0x78] sm:$0xff]
      %v4571 = vld [vmem:[%s12 + $0x80] sm:$0xff]
      %v4572 = vld [vmem:[%s12 + $0x88] sm:$0xff]
      %v4573 = vld [vmem:[%s12 + $0x90] sm:$0xff]
      %v4574 = vld [vmem:[%s12 + $0x98] sm:$0xff]
      %v4575 = vld [vmem:[%s12 + $0xa0] sm:$0xff]
      %v4576 = vld [vmem:[%s12 + $0xa8] sm:$0xff]
      %v4577 = vld [vmem:[%s12 + $0xb0] sm:$0xff]
      %v4578 = vld [vmem:[%s12 + $0xb8] sm:$0xff]
      %v4579 = vld [vmem:[%s12 + $0xc0] sm:$0xff]
      %v4580 = vld [vmem:[%s12 + $0xc8] sm:$0xff]
      %v4581 = vld [vmem:[%s12 + $0xd0] sm:$0xff]
      %v4582 = vld [vmem:[%s12 + $0xd8] sm:$0xff]
      %v4583 = vld [vmem:[%s12 + $0xe0] sm:$0xff]
      %v4584 = vld [vmem:[%s12 + $0xe8] sm:$0xff]
      %v4585 = vld [vmem:[%s12 + $0xf0] sm:$0xff]
      %v4586 = vld [vmem:[%s12 + $0xf8] sm:$0xff]
      %v4619 = vunpack.c.l.b16 %v4555
      %v4620 = vunpack.c.h.b16 %v4555
      %v4621 = vunpack.c.l.b16 %v4556
      %v4622 = vunpack.c.h.b16 %v4556
      %v4623 = vunpack.c.l.b16 %v4557
      %v4624 = vunpack.c.h.b16 %v4557
      %v4625 = vunpack.c.l.b16 %v4558
      %v4626 = vunpack.c.h.b16 %v4558
      %v4627 = vunpack.c.l.b16 %v4559
      %v4628 = vunpack.c.h.b16 %v4559
      %v4629 = vunpack.c.l.b16 %v4560
      %v4630 = vunpack.c.h.b16 %v4560
      %v4631 = vunpack.c.l.b16 %v4561
      %v4632 = vunpack.c.h.b16 %v4561
      %v4633 = vunpack.c.l.b16 %v4562
      %v4634 = vunpack.c.h.b16 %v4562
      %v4635 = vunpack.c.l.b16 %v4563
      %v4636 = vunpack.c.h.b16 %v4563
      %v4637 = vunpack.c.l.b16 %v4564
      %v4638 = vunpack.c.h.b16 %v4564
      %v4639 = vunpack.c.l.b16 %v4565
      %v4640 = vunpack.c.h.b16 %v4565
      %v4641 = vunpack.c.l.b16 %v4566
      %v4642 = vunpack.c.h.b16 %v4566
      %v4643 = vunpack.c.l.b16 %v4567
      %v4644 = vunpack.c.h.b16 %v4567
      %v4645 = vunpack.c.l.b16 %v4568
      %v4646 = vunpack.c.h.b16 %v4568
      %v4647 = vunpack.c.l.b16 %v4569
      %v4648 = vunpack.c.h.b16 %v4569
      %v4649 = vunpack.c.l.b16 %v4570
      %v4650 = vunpack.c.h.b16 %v4570
      %v4651 = vunpack.c.l.b16 %v4571
      %v4652 = vunpack.c.h.b16 %v4571
      %v4653 = vunpack.c.l.b16 %v4572
      %v4654 = vunpack.c.h.b16 %v4572
      %v4655 = vunpack.c.l.b16 %v4573
      %v4656 = vunpack.c.h.b16 %v4573
      %v4657 = vunpack.c.l.b16 %v4574
      %v4658 = vunpack.c.h.b16 %v4574
      %v4659 = vunpack.c.l.b16 %v4575
      %v4660 = vunpack.c.h.b16 %v4575
      %v4661 = vunpack.c.l.b16 %v4576
      %v4662 = vunpack.c.h.b16 %v4576
      %v4663 = vunpack.c.l.b16 %v4577
      %v4664 = vunpack.c.h.b16 %v4577
      %v4665 = vunpack.c.l.b16 %v4578
      %v4666 = vunpack.c.h.b16 %v4578
      %v4667 = vunpack.c.l.b16 %v4579
      %v4668 = vunpack.c.h.b16 %v4579
      %v4669 = vunpack.c.l.b16 %v4580
      %v4670 = vunpack.c.h.b16 %v4580
      %v4671 = vunpack.c.l.b16 %v4581
      %v4672 = vunpack.c.h.b16 %v4581
      %v4673 = vunpack.c.l.b16 %v4582
      %v4674 = vunpack.c.h.b16 %v4582
      %v4675 = vunpack.c.l.b16 %v4583
      %v4676 = vunpack.c.h.b16 %v4583
      %v4677 = vunpack.c.l.b16 %v4584
      %v4678 = vunpack.c.h.b16 %v4584
      %v4679 = vunpack.c.l.b16 %v4585
      %v4680 = vunpack.c.h.b16 %v4585
      %v4681 = vunpack.c.l.b16 %v4586
      %v4682 = vunpack.c.h.b16 %v4586
      %v4683 = vpack.c.b16 %v4621, %v4619
      %v4684 = vpack.c.b16 %v4622, %v4620
      %v4685 = vpack.c.b16 %v4625, %v4623
      %v4686 = vpack.c.b16 %v4626, %v4624
      %v4687 = vpack.c.b16 %v4629, %v4627
      %v4688 = vpack.c.b16 %v4630, %v4628
      %v4689 = vpack.c.b16 %v4633, %v4631
      %v4690 = vpack.c.b16 %v4634, %v4632
      %v4691 = vpack.c.b16 %v4637, %v4635
      %v4692 = vpack.c.b16 %v4638, %v4636
      %v4693 = vpack.c.b16 %v4641, %v4639
      %v4694 = vpack.c.b16 %v4642, %v4640
      %v4695 = vpack.c.b16 %v4645, %v4643
      %v4696 = vpack.c.b16 %v4646, %v4644
      %v4697 = vpack.c.b16 %v4649, %v4647
      %v4698 = vpack.c.b16 %v4650, %v4648
      %v4699 = vpack.c.b16 %v4653, %v4651
      %v4700 = vpack.c.b16 %v4654, %v4652
      %v4701 = vpack.c.b16 %v4657, %v4655
      %v4702 = vpack.c.b16 %v4658, %v4656
      %v4703 = vpack.c.b16 %v4661, %v4659
      %v4704 = vpack.c.b16 %v4662, %v4660
      %v4705 = vpack.c.b16 %v4665, %v4663
      %v4706 = vpack.c.b16 %v4666, %v4664
      %v4707 = vpack.c.b16 %v4669, %v4667
      %v4708 = vpack.c.b16 %v4670, %v4668
      %v4709 = vpack.c.b16 %v4673, %v4671
      %v4710 = vpack.c.b16 %v4674, %v4672
      %v4711 = vpack.c.b16 %v4677, %v4675
      %v4712 = vpack.c.b16 %v4678, %v4676
      %v4713 = vpack.c.b16 %v4681, %v4679
      %v4714 = vpack.c.b16 %v4682, %v4680
      %4747 = vmatprep.subr.bf16.mxu0 %v4684
      %4748 = vmatpush1.bf16.msra.mxu0 %v4683
      %4749 = vmatprep.subr.bf16.mxu0 %v4686
      %4750 = vmatpush1.bf16.msra.mxu0 %v4685
      %4751 = vmatprep.subr.bf16.mxu0 %v4688
      %4752 = vmatpush1.bf16.msra.mxu0 %v4687
      %4753 = vmatprep.subr.bf16.mxu0 %v4690
      %4754 = vmatpush1.bf16.msra.mxu0 %v4689
      %4755 = vmatprep.subr.bf16.mxu0 %v4692
      %4756 = vmatpush1.bf16.msra.mxu0 %v4691
      %4757 = vmatprep.subr.bf16.mxu0 %v4694
      %4758 = vmatpush1.bf16.msra.mxu0 %v4693
      %4759 = vmatprep.subr.bf16.mxu0 %v4696
      %4760 = vmatpush1.bf16.msra.mxu0 %v4695
      %4761 = vmatprep.subr.bf16.mxu0 %v4698
      %4762 = vmatpush1.bf16.msra.mxu0 %v4697
      %4763 = vmatprep.subr.bf16.mxu0 %v4700
      %4764 = vmatpush1.bf16.msra.mxu0 %v4699
      %4765 = vmatprep.subr.bf16.mxu0 %v4702
      %4766 = vmatpush1.bf16.msra.mxu0 %v4701
      %4767 = vmatprep.subr.bf16.mxu0 %v4704
      %4768 = vmatpush1.bf16.msra.mxu0 %v4703
      %4769 = vmatprep.subr.bf16.mxu0 %v4706
      %4770 = vmatpush1.bf16.msra.mxu0 %v4705
      %4771 = vmatprep.subr.bf16.mxu0 %v4708
      %4772 = vmatpush1.bf16.msra.mxu0 %v4707
      %4773 = vmatprep.subr.bf16.mxu0 %v4710
      %4774 = vmatpush1.bf16.msra.mxu0 %v4709
      %4775 = vmatprep.subr.bf16.mxu0 %v4712
      %4776 = vmatpush1.bf16.msra.mxu0 %v4711
      %4777 = vmatprep.subr.bf16.mxu0 %v4714
      %4778 = vmatpush1.bf16.msra.mxu0 %v4713
      %4779 = vmatprep.mubr.bf16.mxu0 %v4476
      %4780 = vmatmul.mubr.bf16.gmra.mrb[0].mxu0 %v4475
      %v4781 = vpop.f32.mrb[0].mxu0
      %v4782 = vadd.f32 0.0, %v4781
      %v4783 = vpop.f32.mrb[0].mxu0
      %v4784 = vadd.f32 0.0, %v4783
      %v4785 = vpop.f32.mrb[0].mxu0
      %v4786 = vadd.f32 0.0, %v4785
      %v4787 = vpop.f32.mrb[0].mxu0
      %v4788 = vadd.f32 0.0, %v4787
      %4789 = vmatprep.mubr.bf16.mxu0 %v4478
      %4790 = vmatmul.mubr.bf16.gmra.mrb[0].mxu0 %v4477
      %v4791 = vpop.f32.mrb[0].mxu0
      %v4792 = vadd.f32 0.0, %v4791
      %v4793 = vpop.f32.mrb[0].mxu0
      %v4794 = vadd.f32 0.0, %v4793
      %v4795 = vpop.f32.mrb[0].mxu0
      %v4796 = vadd.f32 0.0, %v4795
      %v4797 = vpop.f32.mrb[0].mxu0
      %v4798 = vadd.f32 0.0, %v4797
      %4799 = vmatprep.mubr.bf16.mxu0 %v4480
      %4800 = vmatmul.mubr.bf16.gmra.mrb[0].mxu0 %v4479
      %v4801 = vpop.f32.mrb[0].mxu0
      %v4802 = vadd.f32 0.0, %v4801
      %v4803 = vpop.f32.mrb[0].mxu0
      %v4804 = vadd.f32 0.0, %v4803
      %v4805 = vpop.f32.mrb[0].mxu0
      %v4806 = vadd.f32 0.0, %v4805
      %v4807 = vpop.f32.mrb[0].mxu0
      %v4808 = vadd.f32 0.0, %v4807
      %4809 = vmatprep.mubr.bf16.mxu0 %v4482
      %4810 = vmatmul.mubr.bf16.gmra.mrb[0].mxu0 %v4481
      %v4811 = vpop.f32.mrb[0].mxu0
      %v4812 = vadd.f32 0.0, %v4811
      %v4813 = vpop.f32.mrb[0].mxu0
      %v4814 = vadd.f32 0.0, %v4813
      %v4815 = vpop.f32.mrb[0].mxu0
      %v4816 = vadd.f32 0.0, %v4815
      %v4817 = vpop.f32.mrb[0].mxu0
      %v4818 = vadd.f32 0.0, %v4817
      %4819 = vmatprep.mubr.bf16.mxu0 %v4484
      %4820 = vmatmul.mubr.bf16.gmra.mrb[0].mxu0 %v4483
      %v4821 = vpop.f32.mrb[0].mxu0
      %v4822 = vadd.f32 0.0, %v4821
      %v4823 = vpop.f32.mrb[0].mxu0
      %v4824 = vadd.f32 0.0, %v4823
      %v4825 = vpop.f32.mrb[0].mxu0
      %v4826 = vadd.f32 0.0, %v4825
      %v4827 = vpop.f32.mrb[0].mxu0
      %v4828 = vadd.f32 0.0, %v4827
      %4829 = vmatprep.mubr.bf16.mxu0 %v4486
      %4830 = vmatmul.mubr.bf16.gmra.mrb[0].mxu0 %v4485
      %v4831 = vpop.f32.mrb[0].mxu0
      %v4832 = vadd.f32 0.0, %v4831
      %v4833 = vpop.f32.mrb[0].mxu0
      %v4834 = vadd.f32 0.0, %v4833
      %v4835 = vpop.f32.mrb[0].mxu0
      %v4836 = vadd.f32 0.0, %v4835
      %v4837 = vpop.f32.mrb[0].mxu0
      %v4838 = vadd.f32 0.0, %v4837
      %4839 = vmatprep.mubr.bf16.mxu0 %v4488
      %4840 = vmatmul.mubr.bf16.gmra.mrb[0].mxu0 %v4487
      %v4841 = vpop.f32.mrb[0].mxu0
      %v4842 = vadd.f32 0.0, %v4841
      %v4843 = vpop.f32.mrb[0].mxu0
      %v4844 = vadd.f32 0.0, %v4843
      %v4845 = vpop.f32.mrb[0].mxu0
      %v4846 = vadd.f32 0.0, %v4845
      %v4847 = vpop.f32.mrb[0].mxu0
      %v4848 = vadd.f32 0.0, %v4847
      %4849 = vmatprep.mubr.bf16.mxu0 %v4490
      %4850 = vmatmul.mubr.bf16.gmra.mrb[0].mxu0 %v4489
      %v4851 = vpop.f32.mrb[0].mxu0
      %v4852 = vadd.f32 0.0, %v4851
      %v4853 = vpop.f32.mrb[0].mxu0
      %v4854 = vadd.f32 0.0, %v4853
      %v4855 = vpop.f32.mrb[0].mxu0
      %v4856 = vadd.f32 0.0, %v4855
      %v4857 = vpop.f32.mrb[0].mxu0
      %v4858 = vadd.f32 0.0, %v4857
      %4859 = vmatprep.mubr.bf16.mxu0 %v4492
      %4860 = vmatmul.mubr.bf16.gmra.mrb[0].mxu0 %v4491
      %v4861 = vpop.f32.mrb[0].mxu0
      %v4862 = vadd.f32 0.0, %v4861
      %v4863 = vpop.f32.mrb[0].mxu0
      %v4864 = vadd.f32 0.0, %v4863
      %v4865 = vpop.f32.mrb[0].mxu0
      %v4866 = vadd.f32 0.0, %v4865
      %v4867 = vpop.f32.mrb[0].mxu0
      %v4868 = vadd.f32 0.0, %v4867
      %4869 = vmatprep.mubr.bf16.mxu0 %v4494
      %4870 = vmatmul.mubr.bf16.gmra.mrb[0].mxu0 %v4493
      %v4871 = vpop.f32.mrb[0].mxu0
      %v4872 = vadd.f32 0.0, %v4871
      %v4873 = vpop.f32.mrb[0].mxu0
      %v4874 = vadd.f32 0.0, %v4873
      %v4875 = vpop.f32.mrb[0].mxu0
      %v4876 = vadd.f32 0.0, %v4875
      %v4877 = vpop.f32.mrb[0].mxu0
      %v4878 = vadd.f32 0.0, %v4877
      %4879 = vmatprep.mubr.bf16.mxu0 %v4496
      %4880 = vmatmul.mubr.bf16.gmra.mrb[0].mxu0 %v4495
      %v4881 = vpop.f32.mrb[0].mxu0
      %v4882 = vadd.f32 0.0, %v4881
      %v4883 = vpop.f32.mrb[0].mxu0
      %v4884 = vadd.f32 0.0, %v4883
      %v4885 = vpop.f32.mrb[0].mxu0
      %v4886 = vadd.f32 0.0, %v4885
      %v4887 = vpop.f32.mrb[0].mxu0
      %v4888 = vadd.f32 0.0, %v4887
      %4889 = vmatprep.mubr.bf16.mxu0 %v4498
      %4890 = vmatmul.mubr.bf16.gmra.mrb[0].mxu0 %v4497
      %v4891 = vpop.f32.mrb[0].mxu0
      %v4892 = vadd.f32 0.0, %v4891
      %v4893 = vpop.f32.mrb[0].mxu0
      %v4894 = vadd.f32 0.0, %v4893
      %v4895 = vpop.f32.mrb[0].mxu0
      %v4896 = vadd.f32 0.0, %v4895
      %v4897 = vpop.f32.mrb[0].mxu0
      %v4898 = vadd.f32 0.0, %v4897
      %4899 = vmatprep.mubr.bf16.mxu0 %v4500
      %4900 = vmatmul.mubr.bf16.gmra.mrb[0].mxu0 %v4499
      %v4901 = vpop.f32.mrb[0].mxu0
      %v4902 = vadd.f32 0.0, %v4901
      %v4903 = vpop.f32.mrb[0].mxu0
      %v4904 = vadd.f32 0.0, %v4903
      %v4905 = vpop.f32.mrb[0].mxu0
      %v4906 = vadd.f32 0.0, %v4905
      %v4907 = vpop.f32.mrb[0].mxu0
      %v4908 = vadd.f32 0.0, %v4907
      %4909 = vmatprep.mubr.bf16.mxu0 %v4502
      %4910 = vmatmul.mubr.bf16.gmra.mrb[0].mxu0 %v4501
      %v4911 = vpop.f32.mrb[0].mxu0
      %v4912 = vadd.f32 0.0, %v4911
      %v4913 = vpop.f32.mrb[0].mxu0
      %v4914 = vadd.f32 0.0, %v4913
      %v4915 = vpop.f32.mrb[0].mxu0
      %v4916 = vadd.f32 0.0, %v4915
      %v4917 = vpop.f32.mrb[0].mxu0
      %v4918 = vadd.f32 0.0, %v4917
      %4919 = vmatprep.mubr.bf16.mxu0 %v4504
      %4920 = vmatmul.mubr.bf16.gmra.mrb[0].mxu0 %v4503
      %v4921 = vpop.f32.mrb[0].mxu0
      %v4922 = vadd.f32 0.0, %v4921
      %v4923 = vpop.f32.mrb[0].mxu0
      %v4924 = vadd.f32 0.0, %v4923
      %v4925 = vpop.f32.mrb[0].mxu0
      %v4926 = vadd.f32 0.0, %v4925
      %v4927 = vpop.f32.mrb[0].mxu0
      %v4928 = vadd.f32 0.0, %v4927
      %4929 = vmatprep.mubr.bf16.mxu0 %v4506
      %4930 = vmatmul.mubr.bf16.gmra.mrb[0].mxu0 %v4505
      %v4931 = vpop.f32.mrb[0].mxu0
      %v4932 = vadd.f32 0.0, %v4931
      %v4933 = vpop.f32.mrb[0].mxu0
      %v4934 = vadd.f32 0.0, %v4933
      %v4935 = vpop.f32.mrb[0].mxu0
      %v4936 = vadd.f32 0.0, %v4935
      %v4937 = vpop.f32.mrb[0].mxu0
      %v4938 = vadd.f32 0.0, %v4937
      %4939 = vmatprep.mubr.bf16.mxu0 %v4508
      %4940 = vmatmul.mubr.bf16.gmra.mrb[0].mxu0 %v4507
      %v4941 = vpop.f32.mrb[0].mxu0
      %v4942 = vadd.f32 0.0, %v4941
      %v4943 = vpop.f32.mrb[0].mxu0
      %v4944 = vadd.f32 0.0, %v4943
      %v4945 = vpop.f32.mrb[0].mxu0
      %v4946 = vadd.f32 0.0, %v4945
      %v4947 = vpop.f32.mrb[0].mxu0
      %v4948 = vadd.f32 0.0, %v4947
      %4949 = vmatprep.mubr.bf16.mxu0 %v4510
      %4950 = vmatmul.mubr.bf16.gmra.mrb[0].mxu0 %v4509
      %v4951 = vpop.f32.mrb[0].mxu0
      %v4952 = vadd.f32 0.0, %v4951
      %v4953 = vpop.f32.mrb[0].mxu0
      %v4954 = vadd.f32 0.0, %v4953
      %v4955 = vpop.f32.mrb[0].mxu0
      %v4956 = vadd.f32 0.0, %v4955
      %v4957 = vpop.f32.mrb[0].mxu0
      %v4958 = vadd.f32 0.0, %v4957
      %4959 = vmatprep.mubr.bf16.mxu0 %v4512
      %4960 = vmatmul.mubr.bf16.gmra.mrb[0].mxu0 %v4511
      %v4961 = vpop.f32.mrb[0].mxu0
      %v4962 = vadd.f32 0.0, %v4961
      %v4963 = vpop.f32.mrb[0].mxu0
      %v4964 = vadd.f32 0.0, %v4963
      %v4965 = vpop.f32.mrb[0].mxu0
      %v4966 = vadd.f32 0.0, %v4965
      %v4967 = vpop.f32.mrb[0].mxu0
      %v4968 = vadd.f32 0.0, %v4967
      %4969 = vmatprep.mubr.bf16.mxu0 %v4514
      %4970 = vmatmul.mubr.bf16.gmra.mrb[0].mxu0 %v4513
      %v4971 = vpop.f32.mrb[0].mxu0
      %v4972 = vadd.f32 0.0, %v4971
      %v4973 = vpop.f32.mrb[0].mxu0
      %v4974 = vadd.f32 0.0, %v4973
      %v4975 = vpop.f32.mrb[0].mxu0
      %v4976 = vadd.f32 0.0, %v4975
      %v4977 = vpop.f32.mrb[0].mxu0
      %v4978 = vadd.f32 0.0, %v4977
      %4979 = vmatprep.mubr.bf16.mxu0 %v4516
      %4980 = vmatmul.mubr.bf16.gmra.mrb[0].mxu0 %v4515
      %v4981 = vpop.f32.mrb[0].mxu0
      %v4982 = vadd.f32 0.0, %v4981
      %v4983 = vpop.f32.mrb[0].mxu0
      %v4984 = vadd.f32 0.0, %v4983
      %v4985 = vpop.f32.mrb[0].mxu0
      %v4986 = vadd.f32 0.0, %v4985
      %v4987 = vpop.f32.mrb[0].mxu0
      %v4988 = vadd.f32 0.0, %v4987
      %4989 = vmatprep.mubr.bf16.mxu0 %v4518
      %4990 = vmatmul.mubr.bf16.gmra.mrb[0].mxu0 %v4517
      %v4991 = vpop.f32.mrb[0].mxu0
      %v4992 = vadd.f32 0.0, %v4991
      %v4993 = vpop.f32.mrb[0].mxu0
      %v4994 = vadd.f32 0.0, %v4993
      %v4995 = vpop.f32.mrb[0].mxu0
      %v4996 = vadd.f32 0.0, %v4995
      %v4997 = vpop.f32.mrb[0].mxu0
      %v4998 = vadd.f32 0.0, %v4997
      %4999 = vmatprep.mubr.bf16.mxu0 %v4520
      %5000 = vmatmul.mubr.bf16.gmra.mrb[0].mxu0 %v4519
      %v5001 = vpop.f32.mrb[0].mxu0
      %v5002 = vadd.f32 0.0, %v5001
      %v5003 = vpop.f32.mrb[0].mxu0
      %v5004 = vadd.f32 0.0, %v5003
      %v5005 = vpop.f32.mrb[0].mxu0
      %v5006 = vadd.f32 0.0, %v5005
      %v5007 = vpop.f32.mrb[0].mxu0
      %v5008 = vadd.f32 0.0, %v5007
      %5009 = vmatprep.mubr.bf16.mxu0 %v4522
      %5010 = vmatmul.mubr.bf16.gmra.mrb[0].mxu0 %v4521
      %v5011 = vpop.f32.mrb[0].mxu0
      %v5012 = vadd.f32 0.0, %v5011
      %v5013 = vpop.f32.mrb[0].mxu0
      %v5014 = vadd.f32 0.0, %v5013
      %v5015 = vpop.f32.mrb[0].mxu0
      %v5016 = vadd.f32 0.0, %v5015
      %v5017 = vpop.f32.mrb[0].mxu0
      %v5018 = vadd.f32 0.0, %v5017
      %5019 = vmatprep.mubr.bf16.mxu0 %v4524
      %5020 = vmatmul.mubr.bf16.gmra.mrb[0].mxu0 %v4523
      %v5021 = vpop.f32.mrb[0].mxu0
      %v5022 = vadd.f32 0.0, %v5021
      %v5023 = vpop.f32.mrb[0].mxu0
      %v5024 = vadd.f32 0.0, %v5023
      %v5025 = vpop.f32.mrb[0].mxu0
      %v5026 = vadd.f32 0.0, %v5025
      %v5027 = vpop.f32.mrb[0].mxu0
      %v5028 = vadd.f32 0.0, %v5027
      %5029 = vmatprep.mubr.bf16.mxu0 %v4526
      %5030 = vmatmul.mubr.bf16.gmra.mrb[0].mxu0 %v4525
      %v5031 = vpop.f32.mrb[0].mxu0
      %v5032 = vadd.f32 0.0, %v5031
      %v5033 = vpop.f32.mrb[0].mxu0
      %v5034 = vadd.f32 0.0, %v5033
      %v5035 = vpop.f32.mrb[0].mxu0
      %v5036 = vadd.f32 0.0, %v5035
      %v5037 = vpop.f32.mrb[0].mxu0
      %v5038 = vadd.f32 0.0, %v5037
      %5039 = vmatprep.mubr.bf16.mxu0 %v4528
      %5040 = vmatmul.mubr.bf16.gmra.mrb[0].mxu0 %v4527
      %v5041 = vpop.f32.mrb[0].mxu0
      %v5042 = vadd.f32 0.0, %v5041
      %v5043 = vpop.f32.mrb[0].mxu0
      %v5044 = vadd.f32 0.0, %v5043
      %v5045 = vpop.f32.mrb[0].mxu0
      %v5046 = vadd.f32 0.0, %v5045
      %v5047 = vpop.f32.mrb[0].mxu0
      %v5048 = vadd.f32 0.0, %v5047
      %5049 = vmatprep.mubr.bf16.mxu0 %v4530
      %5050 = vmatmul.mubr.bf16.gmra.mrb[0].mxu0 %v4529
      %v5051 = vpop.f32.mrb[0].mxu0
      %v5052 = vadd.f32 0.0, %v5051
      %v5053 = vpop.f32.mrb[0].mxu0
      %v5054 = vadd.f32 0.0, %v5053
      %v5055 = vpop.f32.mrb[0].mxu0
      %v5056 = vadd.f32 0.0, %v5055
      %v5057 = vpop.f32.mrb[0].mxu0
      %v5058 = vadd.f32 0.0, %v5057
      %5059 = vmatprep.mubr.bf16.mxu0 %v4532
      %5060 = vmatmul.mubr.bf16.gmra.mrb[0].mxu0 %v4531
      %v5061 = vpop.f32.mrb[0].mxu0
      %v5062 = vadd.f32 0.0, %v5061
      %v5063 = vpop.f32.mrb[0].mxu0
      %v5064 = vadd.f32 0.0, %v5063
      %v5065 = vpop.f32.mrb[0].mxu0
      %v5066 = vadd.f32 0.0, %v5065
      %v5067 = vpop.f32.mrb[0].mxu0
      %v5068 = vadd.f32 0.0, %v5067
      %5069 = vmatprep.mubr.bf16.mxu0 %v4534
      %5070 = vmatmul.mubr.bf16.gmra.mrb[0].mxu0 %v4533
      %v5071 = vpop.f32.mrb[0].mxu0
      %v5072 = vadd.f32 0.0, %v5071
      %v5073 = vpop.f32.mrb[0].mxu0
      %v5074 = vadd.f32 0.0, %v5073
      %v5075 = vpop.f32.mrb[0].mxu0
      %v5076 = vadd.f32 0.0, %v5075
      %v5077 = vpop.f32.mrb[0].mxu0
      %v5078 = vadd.f32 0.0, %v5077
      %5079 = vmatprep.mubr.bf16.mxu0 %v4536
      %5080 = vmatmul.mubr.bf16.gmra.mrb[0].mxu0 %v4535
      %v5081 = vpop.f32.mrb[0].mxu0
      %v5082 = vadd.f32 0.0, %v5081
      %v5083 = vpop.f32.mrb[0].mxu0
      %v5084 = vadd.f32 0.0, %v5083
      %v5085 = vpop.f32.mrb[0].mxu0
      %v5086 = vadd.f32 0.0, %v5085
      %v5087 = vpop.f32.mrb[0].mxu0
      %v5088 = vadd.f32 0.0, %v5087
      %5089 = vmatprep.mubr.bf16.mxu0 %v4538
      %5090 = vmatmul.mubr.bf16.gmra.mrb[0].mxu0 %v4537
      %v5091 = vpop.f32.mrb[0].mxu0
      %v5092 = vadd.f32 0.0, %v5091
      %v5093 = vpop.f32.mrb[0].mxu0
      %v5094 = vadd.f32 0.0, %v5093
      %v5095 = vpop.f32.mrb[0].mxu0
      %v5096 = vadd.f32 0.0, %v5095
      %v5097 = vpop.f32.mrb[0].mxu0
      %v5098 = vadd.f32 0.0, %v5097
      %5099 = vdwg.mxu0
      %v5116 = vunpack.c.l.b16 %v4539
      %v5117 = vunpack.c.h.b16 %v4539
      %v5118 = vunpack.c.l.b16 %v4540
      %v5119 = vunpack.c.h.b16 %v4540
      %v5120 = vunpack.c.l.b16 %v4541
      %v5121 = vunpack.c.h.b16 %v4541
      %v5122 = vunpack.c.l.b16 %v4542
      %v5123 = vunpack.c.h.b16 %v4542
      %v5124 = vunpack.c.l.b16 %v4543
      %v5125 = vunpack.c.h.b16 %v4543
      %v5126 = vunpack.c.l.b16 %v4544
      %v5127 = vunpack.c.h.b16 %v4544
      %v5128 = vunpack.c.l.b16 %v4545
      %v5129 = vunpack.c.h.b16 %v4545
      %v5130 = vunpack.c.l.b16 %v4546
      %v5131 = vunpack.c.h.b16 %v4546
      %v5132 = vunpack.c.l.b16 %v4547
      %v5133 = vunpack.c.h.b16 %v4547
      %v5134 = vunpack.c.l.b16 %v4548
      %v5135 = vunpack.c.h.b16 %v4548
      %v5136 = vunpack.c.l.b16 %v4549
      %v5137 = vunpack.c.h.b16 %v4549
      %v5138 = vunpack.c.l.b16 %v4550
      %v5139 = vunpack.c.h.b16 %v4550
      %v5140 = vunpack.c.l.b16 %v4551
      %v5141 = vunpack.c.h.b16 %v4551
      %v5142 = vunpack.c.l.b16 %v4552
      %v5143 = vunpack.c.h.b16 %v4552
      %v5144 = vunpack.c.l.b16 %v4553
      %v5145 = vunpack.c.h.b16 %v4553
      %v5146 = vunpack.c.l.b16 %v4554
      %v5147 = vunpack.c.h.b16 %v4554
      %v5148 = vpack.c.b16 %v5118, %v5116
      %v5149 = vpack.c.b16 %v5119, %v5117
      %v5150 = vpack.c.b16 %v5122, %v5120
      %v5151 = vpack.c.b16 %v5123, %v5121
      %v5152 = vpack.c.b16 %v5126, %v5124
      %v5153 = vpack.c.b16 %v5127, %v5125
      %v5154 = vpack.c.b16 %v5130, %v5128
      %v5155 = vpack.c.b16 %v5131, %v5129
      %v5156 = vpack.c.b16 %v5134, %v5132
      %v5157 = vpack.c.b16 %v5135, %v5133
      %v5158 = vpack.c.b16 %v5138, %v5136
      %v5159 = vpack.c.b16 %v5139, %v5137
      %v5160 = vpack.c.b16 %v5142, %v5140
      %v5161 = vpack.c.b16 %v5143, %v5141
      %v5162 = vpack.c.b16 %v5146, %v5144
      %v5163 = vpack.c.b16 %v5147, %v5145
      %5180 = vmatprep.subr.bf16.mxu0 %v5149
      %5181 = vmatpush1.bf16.msra.mxu0 %v5148
      %5182 = vmatprep.subr.bf16.mxu0 %v5151
      %5183 = vmatpush1.bf16.msra.mxu0 %v5150
      %5184 = vmatprep.subr.bf16.mxu0 %v5153
      %5185 = vmatpush1.bf16.msra.mxu0 %v5152
      %5186 = vmatprep.subr.bf16.mxu0 %v5155
      %5187 = vmatpush1.bf16.msra.mxu0 %v5154
      %5188 = vmatprep.subr.bf16.mxu0 %v5157
      %5189 = vmatpush1.bf16.msra.mxu0 %v5156
      %5190 = vmatprep.subr.bf16.mxu0 %v5159
      %5191 = vmatpush1.bf16.msra.mxu0 %v5158
      %5192 = vmatprep.subr.bf16.mxu0 %v5161
      %5193 = vmatpush1.bf16.msra.mxu0 %v5160
      %5194 = vmatprep.subr.bf16.mxu0 %v5163
      %5195 = vmatpush1.bf16.msra.mxu0 %v5162
      %5196 = vmatprep.subr.bf16.mxu0 0
      %5197 = vmatpush1.bf16.msra.mxu0 0
      %5198 = vmatprep.subr.bf16.mxu0 0
      %5199 = vmatpush1.bf16.msra.mxu0 0
      %5200 = vmatprep.subr.bf16.mxu0 0
      %5201 = vmatpush1.bf16.msra.mxu0 0
      %5202 = vmatprep.subr.bf16.mxu0 0
      %5203 = vmatpush1.bf16.msra.mxu0 0
      %5204 = vmatprep.subr.bf16.mxu0 0
      %5205 = vmatpush1.bf16.msra.mxu0 0
      %5206 = vmatprep.subr.bf16.mxu0 0
      %5207 = vmatpush1.bf16.msra.mxu0 0
      %5208 = vmatprep.subr.bf16.mxu0 0
      %5209 = vmatpush1.bf16.msra.mxu0 0
      %5210 = vmatprep.subr.bf16.mxu0 0
      %5211 = vmatpush1.bf16.msra.mxu0 0
      %5212 = vmatprep.mubr.bf16.mxu0 0
      %5213 = vmatmul.mubr.bf16.gmra.mrb[0].mxu0 %v854
      %v5214 = vpop.f32.mrb[0].mxu0
      %v5215 = vadd.f32 %v4782, %v5214
      %v5216 = vpop.f32.mrb[0].mxu0
      %v5217 = vadd.f32 %v4784, %v5216
      %v5218 = vpop.f32.mrb[0].mxu0
      %v5219 = vadd.f32 %v4786, %v5218
      %v5220 = vpop.f32.mrb[0].mxu0
      %v5221 = vadd.f32 %v4788, %v5220
      %5222 = vmatprep.mubr.bf16.mxu0 0
      %5223 = vmatmul.mubr.bf16.gmra.mrb[0].mxu0 %v855
      %v5224 = vpop.f32.mrb[0].mxu0
      %v5225 = vadd.f32 %v4792, %v5224
      %v5226 = vpop.f32.mrb[0].mxu0
      %v5227 = vadd.f32 %v4794, %v5226
      %v5228 = vpop.f32.mrb[0].mxu0
      %v5229 = vadd.f32 %v4796, %v5228
      %v5230 = vpop.f32.mrb[0].mxu0
      %v5231 = vadd.f32 %v4798, %v5230
      %5232 = vmatprep.mubr.bf16.mxu0 0
      %5233 = vmatmul.mubr.bf16.gmra.mrb[0].mxu0 %v856
      %v5234 = vpop.f32.mrb[0].mxu0
      %v5235 = vadd.f32 %v4802, %v5234
      %v5236 = vpop.f32.mrb[0].mxu0
      %v5237 = vadd.f32 %v4804, %v5236
      %v5238 = vpop.f32.mrb[0].mxu0
      %v5239 = vadd.f32 %v4806, %v5238
      %v5240 = vpop.f32.mrb[0].mxu0
      %v5241 = vadd.f32 %v4808, %v5240
      %5242 = vmatprep.mubr.bf16.mxu0 0
      %5243 = vmatmul.mubr.bf16.gmra.mrb[0].mxu0 %v857
      %v5244 = vpop.f32.mrb[0].mxu0
      %v5245 = vadd.f32 %v4812, %v5244
      %v5246 = vpop.f32.mrb[0].mxu0
      %v5247 = vadd.f32 %v4814, %v5246
      %v5248 = vpop.f32.mrb[0].mxu0
      %v5249 = vadd.f32 %v4816, %v5248
      %v5250 = vpop.f32.mrb[0].mxu0
      %v5251 = vadd.f32 %v4818, %v5250
      %5252 = vmatprep.mubr.bf16.mxu0 0
      %5253 = vmatmul.mubr.bf16.gmra.mrb[0].mxu0 %v858
      %v5254 = vpop.f32.mrb[0].mxu0
      %v5255 = vadd.f32 %v4822, %v5254
      %v5256 = vpop.f32.mrb[0].mxu0
      %v5257 = vadd.f32 %v4824, %v5256
      %v5258 = vpop.f32.mrb[0].mxu0
      %v5259 = vadd.f32 %v4826, %v5258
      %v5260 = vpop.f32.mrb[0].mxu0
      %v5261 = vadd.f32 %v4828, %v5260
      %5262 = vmatprep.mubr.bf16.mxu0 0
      %5263 = vmatmul.mubr.bf16.gmra.mrb[0].mxu0 %v859
      %v5264 = vpop.f32.mrb[0].mxu0
      %v5265 = vadd.f32 %v4832, %v5264
      %v5266 = vpop.f32.mrb[0].mxu0
      %v5267 = vadd.f32 %v4834, %v5266
      %v5268 = vpop.f32.mrb[0].mxu0
      %v5269 = vadd.f32 %v4836, %v5268
      %v5270 = vpop.f32.mrb[0].mxu0
      %v5271 = vadd.f32 %v4838, %v5270
      %5272 = vmatprep.mubr.bf16.mxu0 0
      %5273 = vmatmul.mubr.bf16.gmra.mrb[0].mxu0 %v860
      %v5274 = vpop.f32.mrb[0].mxu0
      %v5275 = vadd.f32 %v4842, %v5274
      %v5276 = vpop.f32.mrb[0].mxu0
      %v5277 = vadd.f32 %v4844, %v5276
      %v5278 = vpop.f32.mrb[0].mxu0
      %v5279 = vadd.f32 %v4846, %v5278
      %v5280 = vpop.f32.mrb[0].mxu0
      %v5281 = vadd.f32 %v4848, %v5280
      %5282 = vmatprep.mubr.bf16.mxu0 0
      %5283 = vmatmul.mubr.bf16.gmra.mrb[0].mxu0 %v861
      %v5284 = vpop.f32.mrb[0].mxu0
      %v5285 = vadd.f32 %v4852, %v5284
      %v5286 = vpop.f32.mrb[0].mxu0
      %v5287 = vadd.f32 %v4854, %v5286
      %v5288 = vpop.f32.mrb[0].mxu0
      %v5289 = vadd.f32 %v4856, %v5288
      %v5290 = vpop.f32.mrb[0].mxu0
      %v5291 = vadd.f32 %v4858, %v5290
      %5292 = vmatprep.mubr.bf16.mxu0 0
      %5293 = vmatmul.mubr.bf16.gmra.mrb[0].mxu0 %v862
      %v5294 = vpop.f32.mrb[0].mxu0
      %v5295 = vadd.f32 %v4862, %v5294
      %v5296 = vpop.f32.mrb[0].mxu0
      %v5297 = vadd.f32 %v4864, %v5296
      %v5298 = vpop.f32.mrb[0].mxu0
      %v5299 = vadd.f32 %v4866, %v5298
      %v5300 = vpop.f32.mrb[0].mxu0
      %v5301 = vadd.f32 %v4868, %v5300
      %5302 = vmatprep.mubr.bf16.mxu0 0
      %5303 = vmatmul.mubr.bf16.gmra.mrb[0].mxu0 %v863
      %v5304 = vpop.f32.mrb[0].mxu0
      %v5305 = vadd.f32 %v4872, %v5304
      %v5306 = vpop.f32.mrb[0].mxu0
      %v5307 = vadd.f32 %v4874, %v5306
      %v5308 = vpop.f32.mrb[0].mxu0
      %v5309 = vadd.f32 %v4876, %v5308
      %v5310 = vpop.f32.mrb[0].mxu0
      %v5311 = vadd.f32 %v4878, %v5310
      %5312 = vmatprep.mubr.bf16.mxu0 0
      %5313 = vmatmul.mubr.bf16.gmra.mrb[0].mxu0 %v864
      %v5314 = vpop.f32.mrb[0].mxu0
      %v5315 = vadd.f32 %v4882, %v5314
      %v5316 = vpop.f32.mrb[0].mxu0
      %v5317 = vadd.f32 %v4884, %v5316
      %v5318 = vpop.f32.mrb[0].mxu0
      %v5319 = vadd.f32 %v4886, %v5318
      %v5320 = vpop.f32.mrb[0].mxu0
      %v5321 = vadd.f32 %v4888, %v5320
      %5322 = vmatprep.mubr.bf16.mxu0 0
      %5323 = vmatmul.mubr.bf16.gmra.mrb[0].mxu0 %v865
      %v5324 = vpop.f32.mrb[0].mxu0
      %v5325 = vadd.f32 %v4892, %v5324
      %v5326 = vpop.f32.mrb[0].mxu0
      %v5327 = vadd.f32 %v4894, %v5326
      %v5328 = vpop.f32.mrb[0].mxu0
      %v5329 = vadd.f32 %v4896, %v5328
      %v5330 = vpop.f32.mrb[0].mxu0
      %v5331 = vadd.f32 %v4898, %v5330
      %5332 = vmatprep.mubr.bf16.mxu0 0
      %5333 = vmatmul.mubr.bf16.gmra.mrb[0].mxu0 %v866
      %v5334 = vpop.f32.mrb[0].mxu0
      %v5335 = vadd.f32 %v4902, %v5334
      %v5336 = vpop.f32.mrb[0].mxu0
      %v5337 = vadd.f32 %v4904, %v5336
      %v5338 = vpop.f32.mrb[0].mxu0
      %v5339 = vadd.f32 %v4906, %v5338
      %v5340 = vpop.f32.mrb[0].mxu0
      %v5341 = vadd.f32 %v4908, %v5340
      %5342 = vmatprep.mubr.bf16.mxu0 0
      %5343 = vmatmul.mubr.bf16.gmra.mrb[0].mxu0 %v867
      %v5344 = vpop.f32.mrb[0].mxu0
      %v5345 = vadd.f32 %v4912, %v5344
      %v5346 = vpop.f32.mrb[0].mxu0
      %v5347 = vadd.f32 %v4914, %v5346
      %v5348 = vpop.f32.mrb[0].mxu0
      %v5349 = vadd.f32 %v4916, %v5348
      %v5350 = vpop.f32.mrb[0].mxu0
      %v5351 = vadd.f32 %v4918, %v5350
      %5352 = vmatprep.mubr.bf16.mxu0 0
      %5353 = vmatmul.mubr.bf16.gmra.mrb[0].mxu0 %v868
      %v5354 = vpop.f32.mrb[0].mxu0
      %v5355 = vadd.f32 %v4922, %v5354
      %v5356 = vpop.f32.mrb[0].mxu0
      %v5357 = vadd.f32 %v4924, %v5356
      %v5358 = vpop.f32.mrb[0].mxu0
      %v5359 = vadd.f32 %v4926, %v5358
      %v5360 = vpop.f32.mrb[0].mxu0
      %v5361 = vadd.f32 %v4928, %v5360
      %5362 = vmatprep.mubr.bf16.mxu0 0
      %5363 = vmatmul.mubr.bf16.gmra.mrb[0].mxu0 %v869
      %v5364 = vpop.f32.mrb[0].mxu0
      %v5365 = vadd.f32 %v4932, %v5364
      %v5366 = vpop.f32.mrb[0].mxu0
      %v5367 = vadd.f32 %v4934, %v5366
      %v5368 = vpop.f32.mrb[0].mxu0
      %v5369 = vadd.f32 %v4936, %v5368
      %v5370 = vpop.f32.mrb[0].mxu0
      %v5371 = vadd.f32 %v4938, %v5370
      %5372 = vmatprep.mubr.bf16.mxu0 0
      %5373 = vmatmul.mubr.bf16.gmra.mrb[0].mxu0 %v870
      %v5374 = vpop.f32.mrb[0].mxu0
      %v5375 = vadd.f32 %v4942, %v5374
      %v5376 = vpop.f32.mrb[0].mxu0
      %v5377 = vadd.f32 %v4944, %v5376
      %v5378 = vpop.f32.mrb[0].mxu0
      %v5379 = vadd.f32 %v4946, %v5378
      %v5380 = vpop.f32.mrb[0].mxu0
      %v5381 = vadd.f32 %v4948, %v5380
      %5382 = vmatprep.mubr.bf16.mxu0 0
      %5383 = vmatmul.mubr.bf16.gmra.mrb[0].mxu0 %v871
      %v5384 = vpop.f32.mrb[0].mxu0
      %v5385 = vadd.f32 %v4952, %v5384
      %v5386 = vpop.f32.mrb[0].mxu0
      %v5387 = vadd.f32 %v4954, %v5386
      %v5388 = vpop.f32.mrb[0].mxu0
      %v5389 = vadd.f32 %v4956, %v5388
      %v5390 = vpop.f32.mrb[0].mxu0
      %v5391 = vadd.f32 %v4958, %v5390
      %5392 = vmatprep.mubr.bf16.mxu0 0
      %5393 = vmatmul.mubr.bf16.gmra.mrb[0].mxu0 %v872
      %v5394 = vpop.f32.mrb[0].mxu0
      %v5395 = vadd.f32 %v4962, %v5394
      %v5396 = vpop.f32.mrb[0].mxu0
      %v5397 = vadd.f32 %v4964, %v5396
      %v5398 = vpop.f32.mrb[0].mxu0
      %v5399 = vadd.f32 %v4966, %v5398
      %v5400 = vpop.f32.mrb[0].mxu0
      %v5401 = vadd.f32 %v4968, %v5400
      %5402 = vmatprep.mubr.bf16.mxu0 0
      %5403 = vmatmul.mubr.bf16.gmra.mrb[0].mxu0 %v873
      %v5404 = vpop.f32.mrb[0].mxu0
      %v5405 = vadd.f32 %v4972, %v5404
      %v5406 = vpop.f32.mrb[0].mxu0
      %v5407 = vadd.f32 %v4974, %v5406
      %v5408 = vpop.f32.mrb[0].mxu0
      %v5409 = vadd.f32 %v4976, %v5408
      %v5410 = vpop.f32.mrb[0].mxu0
      %v5411 = vadd.f32 %v4978, %v5410
      %5412 = vmatprep.mubr.bf16.mxu0 0
      %5413 = vmatmul.mubr.bf16.gmra.mrb[0].mxu0 %v874
      %v5414 = vpop.f32.mrb[0].mxu0
      %v5415 = vadd.f32 %v4982, %v5414
      %v5416 = vpop.f32.mrb[0].mxu0
      %v5417 = vadd.f32 %v4984, %v5416
      %v5418 = vpop.f32.mrb[0].mxu0
      %v5419 = vadd.f32 %v4986, %v5418
      %v5420 = vpop.f32.mrb[0].mxu0
      %v5421 = vadd.f32 %v4988, %v5420
      %5422 = vmatprep.mubr.bf16.mxu0 0
      %5423 = vmatmul.mubr.bf16.gmra.mrb[0].mxu0 %v875
      %v5424 = vpop.f32.mrb[0].mxu0
      %v5425 = vadd.f32 %v4992, %v5424
      %v5426 = vpop.f32.mrb[0].mxu0
      %v5427 = vadd.f32 %v4994, %v5426
      %v5428 = vpop.f32.mrb[0].mxu0
      %v5429 = vadd.f32 %v4996, %v5428
      %v5430 = vpop.f32.mrb[0].mxu0
      %v5431 = vadd.f32 %v4998, %v5430
      %5432 = vmatprep.mubr.bf16.mxu0 0
      %5433 = vmatmul.mubr.bf16.gmra.mrb[0].mxu0 %v876
      %v5434 = vpop.f32.mrb[0].mxu0
      %v5435 = vadd.f32 %v5002, %v5434
      %v5436 = vpop.f32.mrb[0].mxu0
      %v5437 = vadd.f32 %v5004, %v5436
      %v5438 = vpop.f32.mrb[0].mxu0
      %v5439 = vadd.f32 %v5006, %v5438
      %v5440 = vpop.f32.mrb[0].mxu0
      %v5441 = vadd.f32 %v5008, %v5440
      %5442 = vmatprep.mubr.bf16.mxu0 0
      %5443 = vmatmul.mubr.bf16.gmra.mrb[0].mxu0 %v877
      %v5444 = vpop.f32.mrb[0].mxu0
      %v5445 = vadd.f32 %v5012, %v5444
      %v5446 = vpop.f32.mrb[0].mxu0
      %v5447 = vadd.f32 %v5014, %v5446
      %v5448 = vpop.f32.mrb[0].mxu0
      %v5449 = vadd.f32 %v5016, %v5448
      %v5450 = vpop.f32.mrb[0].mxu0
      %v5451 = vadd.f32 %v5018, %v5450
      %5452 = vmatprep.mubr.bf16.mxu0 0
      %5453 = vmatmul.mubr.bf16.gmra.mrb[0].mxu0 %v878
      %v5454 = vpop.f32.mrb[0].mxu0
      %v5455 = vadd.f32 %v5022, %v5454
      %v5456 = vpop.f32.mrb[0].mxu0
      %v5457 = vadd.f32 %v5024, %v5456
      %v5458 = vpop.f32.mrb[0].mxu0
      %v5459 = vadd.f32 %v5026, %v5458
      %v5460 = vpop.f32.mrb[0].mxu0
      %v5461 = vadd.f32 %v5028, %v5460
      %5462 = vmatprep.mubr.bf16.mxu0 0
      %5463 = vmatmul.mubr.bf16.gmra.mrb[0].mxu0 %v879
      %v5464 = vpop.f32.mrb[0].mxu0
      %v5465 = vadd.f32 %v5032, %v5464
      %v5466 = vpop.f32.mrb[0].mxu0
      %v5467 = vadd.f32 %v5034, %v5466
      %v5468 = vpop.f32.mrb[0].mxu0
      %v5469 = vadd.f32 %v5036, %v5468
      %v5470 = vpop.f32.mrb[0].mxu0
      %v5471 = vadd.f32 %v5038, %v5470
      %5472 = vmatprep.mubr.bf16.mxu0 0
      %5473 = vmatmul.mubr.bf16.gmra.mrb[0].mxu0 %v880
      %v5474 = vpop.f32.mrb[0].mxu0
      %v5475 = vadd.f32 %v5042, %v5474
      %v5476 = vpop.f32.mrb[0].mxu0
      %v5477 = vadd.f32 %v5044, %v5476
      %v5478 = vpop.f32.mrb[0].mxu0
      %v5479 = vadd.f32 %v5046, %v5478
      %v5480 = vpop.f32.mrb[0].mxu0
      %v5481 = vadd.f32 %v5048, %v5480
      %5482 = vmatprep.mubr.bf16.mxu0 0
      %5483 = vmatmul.mubr.bf16.gmra.mrb[0].mxu0 %v881
      %v5484 = vpop.f32.mrb[0].mxu0
      %v5485 = vadd.f32 %v5052, %v5484
      %v5486 = vpop.f32.mrb[0].mxu0
      %v5487 = vadd.f32 %v5054, %v5486
      %v5488 = vpop.f32.mrb[0].mxu0
      %v5489 = vadd.f32 %v5056, %v5488
      %v5490 = vpop.f32.mrb[0].mxu0
      %v5491 = vadd.f32 %v5058, %v5490
      %5492 = vmatprep.mubr.bf16.mxu0 0
      %5493 = vmatmul.mubr.bf16.gmra.mrb[0].mxu0 %v882
      %v5494 = vpop.f32.mrb[0].mxu0
      %v5495 = vadd.f32 %v5062, %v5494
      %v5496 = vpop.f32.mrb[0].mxu0
      %v5497 = vadd.f32 %v5064, %v5496
      %v5498 = vpop.f32.mrb[0].mxu0
      %v5499 = vadd.f32 %v5066, %v5498
      %v5500 = vpop.f32.mrb[0].mxu0
      %v5501 = vadd.f32 %v5068, %v5500
      %5502 = vmatprep.mubr.bf16.mxu0 0
      %5503 = vmatmul.mubr.bf16.gmra.mrb[0].mxu0 %v883
      %v5504 = vpop.f32.mrb[0].mxu0
      %v5505 = vadd.f32 %v5072, %v5504
      %v5506 = vpop.f32.mrb[0].mxu0
      %v5507 = vadd.f32 %v5074, %v5506
      %v5508 = vpop.f32.mrb[0].mxu0
      %v5509 = vadd.f32 %v5076, %v5508
      %v5510 = vpop.f32.mrb[0].mxu0
      %v5511 = vadd.f32 %v5078, %v5510
      %5512 = vmatprep.mubr.bf16.mxu0 0
      %5513 = vmatmul.mubr.bf16.gmra.mrb[0].mxu0 %v884
      %v5514 = vpop.f32.mrb[0].mxu0
      %v5515 = vadd.f32 %v5082, %v5514
      %v5516 = vpop.f32.mrb[0].mxu0
      %v5517 = vadd.f32 %v5084, %v5516
      %v5518 = vpop.f32.mrb[0].mxu0
      %v5519 = vadd.f32 %v5086, %v5518
      %v5520 = vpop.f32.mrb[0].mxu0
      %v5521 = vadd.f32 %v5088, %v5520
      %5522 = vmatprep.mubr.bf16.mxu0 0
      %5523 = vmatmul.mubr.bf16.gmra.mrb[0].mxu0 %v885
      %v5524 = vpop.f32.mrb[0].mxu0
      %v5525 = vadd.f32 %v5092, %v5524
      %v5526 = vpop.f32.mrb[0].mxu0
      %v5527 = vadd.f32 %v5094, %v5526
      %v5528 = vpop.f32.mrb[0].mxu0
      %v5529 = vadd.f32 %v5096, %v5528
      %v5530 = vpop.f32.mrb[0].mxu0
      %v5531 = vadd.f32 %v5098, %v5530
      %5532 = vdwg.mxu0
      %v5533 = vld [vmem:[%s13] sm:$0x3]
      %v5535 = vlaneseq
      %v5536 = vshrl.u32 %v5535, 7
      %v5537 = vsub.s32 0, %v5536
      %v5538 = vrot.slane %v5533, %v5537
      %v5539 = vlaneseq
      %v5540 = vshrl.u32 %v5539, 7
      %v5541 = vsub.s32 1, %v5540
      %v5542 = vrot.slane %v5533, %v5541
      %v5545 = vadd.f32 %v5215, %v5538
      %v5546 = vadd.f32 %v5217, %v5542
      %v5547 = vadd.f32 %v5219, %v5538
      %v5548 = vadd.f32 %v5221, %v5542
      %v5549 = vadd.f32 %v5225, %v5538
      %v5550 = vadd.f32 %v5227, %v5542
      %v5551 = vadd.f32 %v5229, %v5538
      %v5552 = vadd.f32 %v5231, %v5542
      %v5553 = vadd.f32 %v5235, %v5538
      %v5554 = vadd.f32 %v5237, %v5542
      %v5555 = vadd.f32 %v5239, %v5538
      %v5556 = vadd.f32 %v5241, %v5542
      %v5557 = vadd.f32 %v5245, %v5538
      %v5558 = vadd.f32 %v5247, %v5542
      %v5559 = vadd.f32 %v5249, %v5538
      %v5560 = vadd.f32 %v5251, %v5542
      %v5561 = vadd.f32 %v5255, %v5538
      %v5562 = vadd.f32 %v5257, %v5542
      %v5563 = vadd.f32 %v5259, %v5538
      %v5564 = vadd.f32 %v5261, %v5542
      %v5565 = vadd.f32 %v5265, %v5538
      %v5566 = vadd.f32 %v5267, %v5542
      %v5567 = vadd.f32 %v5269, %v5538
      %v5568 = vadd.f32 %v5271, %v5542
      %v5569 = vadd.f32 %v5275, %v5538
      %v5570 = vadd.f32 %v5277, %v5542
      %v5571 = vadd.f32 %v5279, %v5538
      %v5572 = vadd.f32 %v5281, %v5542
      %v5573 = vadd.f32 %v5285, %v5538
      %v5574 = vadd.f32 %v5287, %v5542
      %v5575 = vadd.f32 %v5289, %v5538
      %v5576 = vadd.f32 %v5291, %v5542
      %v5577 = vadd.f32 %v5295, %v5538
      %v5578 = vadd.f32 %v5297, %v5542
      %v5579 = vadd.f32 %v5299, %v5538
      %v5580 = vadd.f32 %v5301, %v5542
      %v5581 = vadd.f32 %v5305, %v5538
      %v5582 = vadd.f32 %v5307, %v5542
      %v5583 = vadd.f32 %v5309, %v5538
      %v5584 = vadd.f32 %v5311, %v5542
      %v5585 = vadd.f32 %v5315, %v5538
      %v5586 = vadd.f32 %v5317, %v5542
      %v5587 = vadd.f32 %v5319, %v5538
      %v5588 = vadd.f32 %v5321, %v5542
      %v5589 = vadd.f32 %v5325, %v5538
      %v5590 = vadd.f32 %v5327, %v5542
      %v5591 = vadd.f32 %v5329, %v5538
      %v5592 = vadd.f32 %v5331, %v5542
      %v5593 = vadd.f32 %v5335, %v5538
      %v5594 = vadd.f32 %v5337, %v5542
      %v5595 = vadd.f32 %v5339, %v5538
      %v5596 = vadd.f32 %v5341, %v5542
      %v5597 = vadd.f32 %v5345, %v5538
      %v5598 = vadd.f32 %v5347, %v5542
      %v5599 = vadd.f32 %v5349, %v5538
      %v5600 = vadd.f32 %v5351, %v5542
      %v5601 = vadd.f32 %v5355, %v5538
      %v5602 = vadd.f32 %v5357, %v5542
      %v5603 = vadd.f32 %v5359, %v5538
      %v5604 = vadd.f32 %v5361, %v5542
      %v5605 = vadd.f32 %v5365, %v5538
      %v5606 = vadd.f32 %v5367, %v5542
      %v5607 = vadd.f32 %v5369, %v5538
      %v5608 = vadd.f32 %v5371, %v5542
      %v5609 = vadd.f32 %v5375, %v5538
      %v5610 = vadd.f32 %v5377, %v5542
      %v5611 = vadd.f32 %v5379, %v5538
      %v5612 = vadd.f32 %v5381, %v5542
      %v5613 = vadd.f32 %v5385, %v5538
      %v5614 = vadd.f32 %v5387, %v5542
      %v5615 = vadd.f32 %v5389, %v5538
      %v5616 = vadd.f32 %v5391, %v5542
      %v5617 = vadd.f32 %v5395, %v5538
      %v5618 = vadd.f32 %v5397, %v5542
      %v5619 = vadd.f32 %v5399, %v5538
      %v5620 = vadd.f32 %v5401, %v5542
      %v5621 = vadd.f32 %v5405, %v5538
      %v5622 = vadd.f32 %v5407, %v5542
      %v5623 = vadd.f32 %v5409, %v5538
      %v5624 = vadd.f32 %v5411, %v5542
      %v5625 = vadd.f32 %v5415, %v5538
      %v5626 = vadd.f32 %v5417, %v5542
      %v5627 = vadd.f32 %v5419, %v5538
      %v5628 = vadd.f32 %v5421, %v5542
      %v5629 = vadd.f32 %v5425, %v5538
      %v5630 = vadd.f32 %v5427, %v5542
      %v5631 = vadd.f32 %v5429, %v5538
      %v5632 = vadd.f32 %v5431, %v5542
      %v5633 = vadd.f32 %v5435, %v5538
      %v5634 = vadd.f32 %v5437, %v5542
      %v5635 = vadd.f32 %v5439, %v5538
      %v5636 = vadd.f32 %v5441, %v5542
      %v5637 = vadd.f32 %v5445, %v5538
      %v5638 = vadd.f32 %v5447, %v5542
      %v5639 = vadd.f32 %v5449, %v5538
      %v5640 = vadd.f32 %v5451, %v5542
      %v5641 = vadd.f32 %v5455, %v5538
      %v5642 = vadd.f32 %v5457, %v5542
      %v5643 = vadd.f32 %v5459, %v5538
      %v5644 = vadd.f32 %v5461, %v5542
      %v5645 = vadd.f32 %v5465, %v5538
      %v5646 = vadd.f32 %v5467, %v5542
      %v5647 = vadd.f32 %v5469, %v5538
      %v5648 = vadd.f32 %v5471, %v5542
      %v5649 = vadd.f32 %v5475, %v5538
      %v5650 = vadd.f32 %v5477, %v5542
      %v5651 = vadd.f32 %v5479, %v5538
      %v5652 = vadd.f32 %v5481, %v5542
      %v5653 = vadd.f32 %v5485, %v5538
      %v5654 = vadd.f32 %v5487, %v5542
      %v5655 = vadd.f32 %v5489, %v5538
      %v5656 = vadd.f32 %v5491, %v5542
      %v5657 = vadd.f32 %v5495, %v5538
      %v5658 = vadd.f32 %v5497, %v5542
      %v5659 = vadd.f32 %v5499, %v5538
      %v5660 = vadd.f32 %v5501, %v5542
      %v5661 = vadd.f32 %v5505, %v5538
      %v5662 = vadd.f32 %v5507, %v5542
      %v5663 = vadd.f32 %v5509, %v5538
      %v5664 = vadd.f32 %v5511, %v5542
      %v5665 = vadd.f32 %v5515, %v5538
      %v5666 = vadd.f32 %v5517, %v5542
      %v5667 = vadd.f32 %v5519, %v5538
      %v5668 = vadd.f32 %v5521, %v5542
      %v5669 = vadd.f32 %v5525, %v5538
      %v5670 = vadd.f32 %v5527, %v5542
      %v5671 = vadd.f32 %v5529, %v5538
      %v5672 = vadd.f32 %v5531, %v5542
      %v5673 = vmax.f32 %v5545, 0.0
      %v5674 = vmax.f32 %v5546, 0.0
      %v5675 = vmax.f32 %v5547, 0.0
      %v5676 = vmax.f32 %v5548, 0.0
      %v5677 = vmax.f32 %v5549, 0.0
      %v5678 = vmax.f32 %v5550, 0.0
      %v5679 = vmax.f32 %v5551, 0.0
      %v5680 = vmax.f32 %v5552, 0.0
      %v5681 = vmax.f32 %v5553, 0.0
      %v5682 = vmax.f32 %v5554, 0.0
      %v5683 = vmax.f32 %v5555, 0.0
      %v5684 = vmax.f32 %v5556, 0.0
      %v5685 = vmax.f32 %v5557, 0.0
      %v5686 = vmax.f32 %v5558, 0.0
      %v5687 = vmax.f32 %v5559, 0.0
      %v5688 = vmax.f32 %v5560, 0.0
      %v5689 = vmax.f32 %v5561, 0.0
      %v5690 = vmax.f32 %v5562, 0.0
      %v5691 = vmax.f32 %v5563, 0.0
      %v5692 = vmax.f32 %v5564, 0.0
      %v5693 = vmax.f32 %v5565, 0.0
      %v5694 = vmax.f32 %v5566, 0.0
      %v5695 = vmax.f32 %v5567, 0.0
      %v5696 = vmax.f32 %v5568, 0.0
      %v5697 = vmax.f32 %v5569, 0.0
      %v5698 = vmax.f32 %v5570, 0.0
      %v5699 = vmax.f32 %v5571, 0.0
      %v5700 = vmax.f32 %v5572, 0.0
      %v5701 = vmax.f32 %v5573, 0.0
      %v5702 = vmax.f32 %v5574, 0.0
      %v5703 = vmax.f32 %v5575, 0.0
      %v5704 = vmax.f32 %v5576, 0.0
      %v5705 = vmax.f32 %v5577, 0.0
      %v5706 = vmax.f32 %v5578, 0.0
      %v5707 = vmax.f32 %v5579, 0.0
      %v5708 = vmax.f32 %v5580, 0.0
      %v5709 = vmax.f32 %v5581, 0.0
      %v5710 = vmax.f32 %v5582, 0.0
      %v5711 = vmax.f32 %v5583, 0.0
      %v5712 = vmax.f32 %v5584, 0.0
      %v5713 = vmax.f32 %v5585, 0.0
      %v5714 = vmax.f32 %v5586, 0.0
      %v5715 = vmax.f32 %v5587, 0.0
      %v5716 = vmax.f32 %v5588, 0.0
      %v5717 = vmax.f32 %v5589, 0.0
      %v5718 = vmax.f32 %v5590, 0.0
      %v5719 = vmax.f32 %v5591, 0.0
      %v5720 = vmax.f32 %v5592, 0.0
      %v5721 = vmax.f32 %v5593, 0.0
      %v5722 = vmax.f32 %v5594, 0.0
      %v5723 = vmax.f32 %v5595, 0.0
      %v5724 = vmax.f32 %v5596, 0.0
      %v5725 = vmax.f32 %v5597, 0.0
      %v5726 = vmax.f32 %v5598, 0.0
      %v5727 = vmax.f32 %v5599, 0.0
      %v5728 = vmax.f32 %v5600, 0.0
      %v5729 = vmax.f32 %v5601, 0.0
      %v5730 = vmax.f32 %v5602, 0.0
      %v5731 = vmax.f32 %v5603, 0.0
      %v5732 = vmax.f32 %v5604, 0.0
      %v5733 = vmax.f32 %v5605, 0.0
      %v5734 = vmax.f32 %v5606, 0.0
      %v5735 = vmax.f32 %v5607, 0.0
      %v5736 = vmax.f32 %v5608, 0.0
      %v5737 = vmax.f32 %v5609, 0.0
      %v5738 = vmax.f32 %v5610, 0.0
      %v5739 = vmax.f32 %v5611, 0.0
      %v5740 = vmax.f32 %v5612, 0.0
      %v5741 = vmax.f32 %v5613, 0.0
      %v5742 = vmax.f32 %v5614, 0.0
      %v5743 = vmax.f32 %v5615, 0.0
      %v5744 = vmax.f32 %v5616, 0.0
      %v5745 = vmax.f32 %v5617, 0.0
      %v5746 = vmax.f32 %v5618, 0.0
      %v5747 = vmax.f32 %v5619, 0.0
      %v5748 = vmax.f32 %v5620, 0.0
      %v5749 = vmax.f32 %v5621, 0.0
      %v5750 = vmax.f32 %v5622, 0.0
      %v5751 = vmax.f32 %v5623, 0.0
      %v5752 = vmax.f32 %v5624, 0.0
      %v5753 = vmax.f32 %v5625, 0.0
      %v5754 = vmax.f32 %v5626, 0.0
      %v5755 = vmax.f32 %v5627, 0.0
      %v5756 = vmax.f32 %v5628, 0.0
      %v5757 = vmax.f32 %v5629, 0.0
      %v5758 = vmax.f32 %v5630, 0.0
      %v5759 = vmax.f32 %v5631, 0.0
      %v5760 = vmax.f32 %v5632, 0.0
      %v5761 = vmax.f32 %v5633, 0.0
      %v5762 = vmax.f32 %v5634, 0.0
      %v5763 = vmax.f32 %v5635, 0.0
      %v5764 = vmax.f32 %v5636, 0.0
      %v5765 = vmax.f32 %v5637, 0.0
      %v5766 = vmax.f32 %v5638, 0.0
      %v5767 = vmax.f32 %v5639, 0.0
      %v5768 = vmax.f32 %v5640, 0.0
      %v5769 = vmax.f32 %v5641, 0.0
      %v5770 = vmax.f32 %v5642, 0.0
      %v5771 = vmax.f32 %v5643, 0.0
      %v5772 = vmax.f32 %v5644, 0.0
      %v5773 = vmax.f32 %v5645, 0.0
      %v5774 = vmax.f32 %v5646, 0.0
      %v5775 = vmax.f32 %v5647, 0.0
      %v5776 = vmax.f32 %v5648, 0.0
      %v5777 = vmax.f32 %v5649, 0.0
      %v5778 = vmax.f32 %v5650, 0.0
      %v5779 = vmax.f32 %v5651, 0.0
      %v5780 = vmax.f32 %v5652, 0.0
      %v5781 = vmax.f32 %v5653, 0.0
      %v5782 = vmax.f32 %v5654, 0.0
      %v5783 = vmax.f32 %v5655, 0.0
      %v5784 = vmax.f32 %v5656, 0.0
      %v5785 = vmax.f32 %v5657, 0.0
      %v5786 = vmax.f32 %v5658, 0.0
      %v5787 = vmax.f32 %v5659, 0.0
      %v5788 = vmax.f32 %v5660, 0.0
      %v5789 = vmax.f32 %v5661, 0.0
      %v5790 = vmax.f32 %v5662, 0.0
      %v5791 = vmax.f32 %v5663, 0.0
      %v5792 = vmax.f32 %v5664, 0.0
      %v5793 = vmax.f32 %v5665, 0.0
      %v5794 = vmax.f32 %v5666, 0.0
      %v5795 = vmax.f32 %v5667, 0.0
      %v5796 = vmax.f32 %v5668, 0.0
      %v5797 = vmax.f32 %v5669, 0.0
      %v5798 = vmax.f32 %v5670, 0.0
      %v5799 = vmax.f32 %v5671, 0.0
      %v5800 = vmax.f32 %v5672, 0.0
      %v5801 = vpack.c.bf16 %v5675, %v5673
      %v5802 = vpack.c.bf16 %v5676, %v5674
      %v5803 = vpack.c.bf16 %v5679, %v5677
      %v5804 = vpack.c.bf16 %v5680, %v5678
      %v5805 = vpack.c.bf16 %v5683, %v5681
      %v5806 = vpack.c.bf16 %v5684, %v5682
      %v5807 = vpack.c.bf16 %v5687, %v5685
      %v5808 = vpack.c.bf16 %v5688, %v5686
      %v5809 = vpack.c.bf16 %v5691, %v5689
      %v5810 = vpack.c.bf16 %v5692, %v5690
      %v5811 = vpack.c.bf16 %v5695, %v5693
      %v5812 = vpack.c.bf16 %v5696, %v5694
      %v5813 = vpack.c.bf16 %v5699, %v5697
      %v5814 = vpack.c.bf16 %v5700, %v5698
      %v5815 = vpack.c.bf16 %v5703, %v5701
      %v5816 = vpack.c.bf16 %v5704, %v5702
      %v5817 = vpack.c.bf16 %v5707, %v5705
      %v5818 = vpack.c.bf16 %v5708, %v5706
      %v5819 = vpack.c.bf16 %v5711, %v5709
      %v5820 = vpack.c.bf16 %v5712, %v5710
      %v5821 = vpack.c.bf16 %v5715, %v5713
      %v5822 = vpack.c.bf16 %v5716, %v5714
      %v5823 = vpack.c.bf16 %v5719, %v5717
      %v5824 = vpack.c.bf16 %v5720, %v5718
      %v5825 = vpack.c.bf16 %v5723, %v5721
      %v5826 = vpack.c.bf16 %v5724, %v5722
      %v5827 = vpack.c.bf16 %v5727, %v5725
      %v5828 = vpack.c.bf16 %v5728, %v5726
      %v5829 = vpack.c.bf16 %v5731, %v5729
      %v5830 = vpack.c.bf16 %v5732, %v5730
      %v5831 = vpack.c.bf16 %v5735, %v5733
      %v5832 = vpack.c.bf16 %v5736, %v5734
      %v5833 = vpack.c.bf16 %v5739, %v5737
      %v5834 = vpack.c.bf16 %v5740, %v5738
      %v5835 = vpack.c.bf16 %v5743, %v5741
      %v5836 = vpack.c.bf16 %v5744, %v5742
      %v5837 = vpack.c.bf16 %v5747, %v5745
      %v5838 = vpack.c.bf16 %v5748, %v5746
      %v5839 = vpack.c.bf16 %v5751, %v5749
      %v5840 = vpack.c.bf16 %v5752, %v5750
      %v5841 = vpack.c.bf16 %v5755, %v5753
      %v5842 = vpack.c.bf16 %v5756, %v5754
      %v5843 = vpack.c.bf16 %v5759, %v5757
      %v5844 = vpack.c.bf16 %v5760, %v5758
      %v5845 = vpack.c.bf16 %v5763, %v5761
      %v5846 = vpack.c.bf16 %v5764, %v5762
      %v5847 = vpack.c.bf16 %v5767, %v5765
      %v5848 = vpack.c.bf16 %v5768, %v5766
      %v5849 = vpack.c.bf16 %v5771, %v5769
      %v5850 = vpack.c.bf16 %v5772, %v5770
      %v5851 = vpack.c.bf16 %v5775, %v5773
      %v5852 = vpack.c.bf16 %v5776, %v5774
      %v5853 = vpack.c.bf16 %v5779, %v5777
      %v5854 = vpack.c.bf16 %v5780, %v5778
      %v5855 = vpack.c.bf16 %v5783, %v5781
      %v5856 = vpack.c.bf16 %v5784, %v5782
      %v5857 = vpack.c.bf16 %v5787, %v5785
      %v5858 = vpack.c.bf16 %v5788, %v5786
      %v5859 = vpack.c.bf16 %v5791, %v5789
      %v5860 = vpack.c.bf16 %v5792, %v5790
      %v5861 = vpack.c.bf16 %v5795, %v5793
      %v5862 = vpack.c.bf16 %v5796, %v5794
      %v5863 = vpack.c.bf16 %v5799, %v5797
      %v5864 = vpack.c.bf16 %v5800, %v5798
      %v5865 = vld [vmem:[%s14] sm:$0xff]
      %v5866 = vld [vmem:[%s14 + $0x8] sm:$0xff]
      %v5867 = vld [vmem:[%s14 + $0x10] sm:$0xff]
      %v5868 = vld [vmem:[%s14 + $0x18] sm:$0xff]
      %v5869 = vld [vmem:[%s14 + $0x20] sm:$0xff]
      %v5870 = vld [vmem:[%s14 + $0x28] sm:$0xff]
      %v5871 = vld [vmem:[%s14 + $0x30] sm:$0xff]
      %v5872 = vld [vmem:[%s14 + $0x38] sm:$0xff]
      %v5873 = vld [vmem:[%s14 + $0x40] sm:$0xff]
      %v5874 = vld [vmem:[%s14 + $0x48] sm:$0xff]
      %v5875 = vld [vmem:[%s14 + $0x50] sm:$0xff]
      %v5876 = vld [vmem:[%s14 + $0x58] sm:$0xff]
      %v5877 = vld [vmem:[%s14 + $0x60] sm:$0xff]
      %v5878 = vld [vmem:[%s14 + $0x68] sm:$0xff]
      %v5879 = vld [vmem:[%s14 + $0x70] sm:$0xff]
      %v5880 = vld [vmem:[%s14 + $0x78] sm:$0xff]
      %v5881 = vld [vmem:[%s14 + $0x80] sm:$0xff]
      %v5882 = vld [vmem:[%s14 + $0x88] sm:$0xff]
      %v5883 = vld [vmem:[%s14 + $0x90] sm:$0xff]
      %v5884 = vld [vmem:[%s14 + $0x98] sm:$0xff]
      %v5885 = vld [vmem:[%s14 + $0xa0] sm:$0xff]
      %v5886 = vld [vmem:[%s14 + $0xa8] sm:$0xff]
      %v5887 = vld [vmem:[%s14 + $0xb0] sm:$0xff]
      %v5888 = vld [vmem:[%s14 + $0xb8] sm:$0xff]
      %v5889 = vld [vmem:[%s14 + $0xc0] sm:$0xff]
      %v5890 = vld [vmem:[%s14 + $0xc8] sm:$0xff]
      %v5891 = vld [vmem:[%s14 + $0xd0] sm:$0xff]
      %v5892 = vld [vmem:[%s14 + $0xd8] sm:$0xff]
      %v5893 = vld [vmem:[%s14 + $0xe0] sm:$0xff]
      %v5894 = vld [vmem:[%s14 + $0xe8] sm:$0xff]
      %v5895 = vld [vmem:[%s14 + $0xf0] sm:$0xff]
      %v5896 = vld [vmem:[%s14 + $0xf8] sm:$0xff]
      %v5897 = vld [vmem:[%s15] sm:$0x3]
      %v5899 = vlaneseq
      %v5900 = vshrl.u32 %v5899, 7
      %v5901 = vsub.s32 0, %v5900
      %v5902 = vrot.slane %v5897, %v5901
      %v5903 = vlaneseq
      %v5904 = vshrl.u32 %v5903, 7
      %v5905 = vsub.s32 1, %v5904
      %v5906 = vrot.slane %v5897, %v5905
      %v5941 = vunpack.c.l.b16 %v5865
      %v5942 = vunpack.c.h.b16 %v5865
      %v5943 = vunpack.c.l.b16 %v5866
      %v5944 = vunpack.c.h.b16 %v5866
      %v5945 = vunpack.c.l.b16 %v5867
      %v5946 = vunpack.c.h.b16 %v5867
      %v5947 = vunpack.c.l.b16 %v5868
      %v5948 = vunpack.c.h.b16 %v5868
      %v5949 = vunpack.c.l.b16 %v5869
      %v5950 = vunpack.c.h.b16 %v5869
      %v5951 = vunpack.c.l.b16 %v5870
      %v5952 = vunpack.c.h.b16 %v5870
      %v5953 = vunpack.c.l.b16 %v5871
      %v5954 = vunpack.c.h.b16 %v5871
      %v5955 = vunpack.c.l.b16 %v5872
      %v5956 = vunpack.c.h.b16 %v5872
      %v5957 = vunpack.c.l.b16 %v5873
      %v5958 = vunpack.c.h.b16 %v5873
      %v5959 = vunpack.c.l.b16 %v5874
      %v5960 = vunpack.c.h.b16 %v5874
      %v5961 = vunpack.c.l.b16 %v5875
      %v5962 = vunpack.c.h.b16 %v5875
      %v5963 = vunpack.c.l.b16 %v5876
      %v5964 = vunpack.c.h.b16 %v5876
      %v5965 = vunpack.c.l.b16 %v5877
      %v5966 = vunpack.c.h.b16 %v5877
      %v5967 = vunpack.c.l.b16 %v5878
      %v5968 = vunpack.c.h.b16 %v5878
      %v5969 = vunpack.c.l.b16 %v5879
      %v5970 = vunpack.c.h.b16 %v5879
      %v5971 = vunpack.c.l.b16 %v5880
      %v5972 = vunpack.c.h.b16 %v5880
      %v5973 = vunpack.c.l.b16 %v5881
      %v5974 = vunpack.c.h.b16 %v5881
      %v5975 = vunpack.c.l.b16 %v5882
      %v5976 = vunpack.c.h.b16 %v5882
      %v5977 = vunpack.c.l.b16 %v5883
      %v5978 = vunpack.c.h.b16 %v5883
      %v5979 = vunpack.c.l.b16 %v5884
      %v5980 = vunpack.c.h.b16 %v5884
      %v5981 = vunpack.c.l.b16 %v5885
      %v5982 = vunpack.c.h.b16 %v5885
      %v5983 = vunpack.c.l.b16 %v5886
      %v5984 = vunpack.c.h.b16 %v5886
      %v5985 = vunpack.c.l.b16 %v5887
      %v5986 = vunpack.c.h.b16 %v5887
      %v5987 = vunpack.c.l.b16 %v5888
      %v5988 = vunpack.c.h.b16 %v5888
      %v5989 = vunpack.c.l.b16 %v5889
      %v5990 = vunpack.c.h.b16 %v5889
      %v5991 = vunpack.c.l.b16 %v5890
      %v5992 = vunpack.c.h.b16 %v5890
      %v5993 = vunpack.c.l.b16 %v5891
      %v5994 = vunpack.c.h.b16 %v5891
      %v5995 = vunpack.c.l.b16 %v5892
      %v5996 = vunpack.c.h.b16 %v5892
      %v5997 = vunpack.c.l.b16 %v5893
      %v5998 = vunpack.c.h.b16 %v5893
      %v5999 = vunpack.c.l.b16 %v5894
      %v6000 = vunpack.c.h.b16 %v5894
      %v6001 = vunpack.c.l.b16 %v5895
      %v6002 = vunpack.c.h.b16 %v5895
      %v6003 = vunpack.c.l.b16 %v5896
      %v6004 = vunpack.c.h.b16 %v5896
      %v6005 = vpack.c.b16 %v5943, %v5941
      %v6006 = vpack.c.b16 %v5944, %v5942
      %v6007 = vpack.c.b16 %v5947, %v5945
      %v6008 = vpack.c.b16 %v5948, %v5946
      %v6009 = vpack.c.b16 %v5951, %v5949
      %v6010 = vpack.c.b16 %v5952, %v5950
      %v6011 = vpack.c.b16 %v5955, %v5953
      %v6012 = vpack.c.b16 %v5956, %v5954
      %v6013 = vpack.c.b16 %v5959, %v5957
      %v6014 = vpack.c.b16 %v5960, %v5958
      %v6015 = vpack.c.b16 %v5963, %v5961
      %v6016 = vpack.c.b16 %v5964, %v5962
      %v6017 = vpack.c.b16 %v5967, %v5965
      %v6018 = vpack.c.b16 %v5968, %v5966
      %v6019 = vpack.c.b16 %v5971, %v5969
      %v6020 = vpack.c.b16 %v5972, %v5970
      %v6021 = vpack.c.b16 %v5975, %v5973
      %v6022 = vpack.c.b16 %v5976, %v5974
      %v6023 = vpack.c.b16 %v5979, %v5977
      %v6024 = vpack.c.b16 %v5980, %v5978
      %v6025 = vpack.c.b16 %v5983, %v5981
      %v6026 = vpack.c.b16 %v5984, %v5982
      %v6027 = vpack.c.b16 %v5987, %v5985
      %v6028 = vpack.c.b16 %v5988, %v5986
      %v6029 = vpack.c.b16 %v5991, %v5989
      %v6030 = vpack.c.b16 %v5992, %v5990
      %v6031 = vpack.c.b16 %v5995, %v5993
      %v6032 = vpack.c.b16 %v5996, %v5994
      %v6033 = vpack.c.b16 %v5999, %v5997
      %v6034 = vpack.c.b16 %v6000, %v5998
      %v6035 = vpack.c.b16 %v6003, %v6001
      %v6036 = vpack.c.b16 %v6004, %v6002
      %6069 = vmatprep.subr.bf16.mxu0 %v6006
      %6070 = vmatpush1.bf16.msra.mxu0 %v6005
      %6071 = vmatprep.subr.bf16.mxu0 %v6008
      %6072 = vmatpush1.bf16.msra.mxu0 %v6007
      %6073 = vmatprep.subr.bf16.mxu0 %v6010
      %6074 = vmatpush1.bf16.msra.mxu0 %v6009
      %6075 = vmatprep.subr.bf16.mxu0 %v6012
      %6076 = vmatpush1.bf16.msra.mxu0 %v6011
      %6077 = vmatprep.subr.bf16.mxu0 %v6014
      %6078 = vmatpush1.bf16.msra.mxu0 %v6013
      %6079 = vmatprep.subr.bf16.mxu0 %v6016
      %6080 = vmatpush1.bf16.msra.mxu0 %v6015
      %6081 = vmatprep.subr.bf16.mxu0 %v6018
      %6082 = vmatpush1.bf16.msra.mxu0 %v6017
      %6083 = vmatprep.subr.bf16.mxu0 %v6020
      %6084 = vmatpush1.bf16.msra.mxu0 %v6019
      %6085 = vmatprep.subr.bf16.mxu0 %v6022
      %6086 = vmatpush1.bf16.msra.mxu0 %v6021
      %6087 = vmatprep.subr.bf16.mxu0 %v6024
      %6088 = vmatpush1.bf16.msra.mxu0 %v6023
      %6089 = vmatprep.subr.bf16.mxu0 %v6026
      %6090 = vmatpush1.bf16.msra.mxu0 %v6025
      %6091 = vmatprep.subr.bf16.mxu0 %v6028
      %6092 = vmatpush1.bf16.msra.mxu0 %v6027
      %6093 = vmatprep.subr.bf16.mxu0 %v6030
      %6094 = vmatpush1.bf16.msra.mxu0 %v6029
      %6095 = vmatprep.subr.bf16.mxu0 %v6032
      %6096 = vmatpush1.bf16.msra.mxu0 %v6031
      %6097 = vmatprep.subr.bf16.mxu0 %v6034
      %6098 = vmatpush1.bf16.msra.mxu0 %v6033
      %6099 = vmatprep.subr.bf16.mxu0 %v6036
      %6100 = vmatpush1.bf16.msra.mxu0 %v6035
      %6101 = vmatprep.mubr.bf16.mxu0 %v5802
      %6102 = vmatmul.mubr.bf16.gmra.mrb[0].mxu0 %v5801
      %v6103 = vpop.f32.mrb[0].mxu0
      %v6104 = vadd.f32 %v5902, %v6103
      %v6105 = vpop.f32.mrb[0].mxu0
      %v6106 = vadd.f32 %v5906, %v6105
      %v6107 = vpop.f32.mrb[0].mxu0
      %v6108 = vadd.f32 %v5902, %v6107
      %v6109 = vpop.f32.mrb[0].mxu0
      %v6110 = vadd.f32 %v5906, %v6109
      %6111 = vmatprep.mubr.bf16.mxu0 %v5804
      %6112 = vmatmul.mubr.bf16.gmra.mrb[0].mxu0 %v5803
      %v6113 = vpop.f32.mrb[0].mxu0
      %v6114 = vadd.f32 %v5902, %v6113
      %v6115 = vpop.f32.mrb[0].mxu0
      %v6116 = vadd.f32 %v5906, %v6115
      %v6117 = vpop.f32.mrb[0].mxu0
      %v6118 = vadd.f32 %v5902, %v6117
      %v6119 = vpop.f32.mrb[0].mxu0
      %v6120 = vadd.f32 %v5906, %v6119
      %6121 = vmatprep.mubr.bf16.mxu0 %v5806
      %6122 = vmatmul.mubr.bf16.gmra.mrb[0].mxu0 %v5805
      %v6123 = vpop.f32.mrb[0].mxu0
      %v6124 = vadd.f32 %v5902, %v6123
      %v6125 = vpop.f32.mrb[0].mxu0
      %v6126 = vadd.f32 %v5906, %v6125
      %v6127 = vpop.f32.mrb[0].mxu0
      %v6128 = vadd.f32 %v5902, %v6127
      %v6129 = vpop.f32.mrb[0].mxu0
      %v6130 = vadd.f32 %v5906, %v6129
      %6131 = vmatprep.mubr.bf16.mxu0 %v5808
      %6132 = vmatmul.mubr.bf16.gmra.mrb[0].mxu0 %v5807
      %v6133 = vpop.f32.mrb[0].mxu0
      %v6134 = vadd.f32 %v5902, %v6133
      %v6135 = vpop.f32.mrb[0].mxu0
      %v6136 = vadd.f32 %v5906, %v6135
      %v6137 = vpop.f32.mrb[0].mxu0
      %v6138 = vadd.f32 %v5902, %v6137
      %v6139 = vpop.f32.mrb[0].mxu0
      %v6140 = vadd.f32 %v5906, %v6139
      %6141 = vmatprep.mubr.bf16.mxu0 %v5810
      %6142 = vmatmul.mubr.bf16.gmra.mrb[0].mxu0 %v5809
      %v6143 = vpop.f32.mrb[0].mxu0
      %v6144 = vadd.f32 %v5902, %v6143
      %v6145 = vpop.f32.mrb[0].mxu0
      %v6146 = vadd.f32 %v5906, %v6145
      %v6147 = vpop.f32.mrb[0].mxu0
      %v6148 = vadd.f32 %v5902, %v6147
      %v6149 = vpop.f32.mrb[0].mxu0
      %v6150 = vadd.f32 %v5906, %v6149
      %6151 = vmatprep.mubr.bf16.mxu0 %v5812
      %6152 = vmatmul.mubr.bf16.gmra.mrb[0].mxu0 %v5811
      %v6153 = vpop.f32.mrb[0].mxu0
      %v6154 = vadd.f32 %v5902, %v6153
      %v6155 = vpop.f32.mrb[0].mxu0
      %v6156 = vadd.f32 %v5906, %v6155
      %v6157 = vpop.f32.mrb[0].mxu0
      %v6158 = vadd.f32 %v5902, %v6157
      %v6159 = vpop.f32.mrb[0].mxu0
      %v6160 = vadd.f32 %v5906, %v6159
      %6161 = vmatprep.mubr.bf16.mxu0 %v5814
      %6162 = vmatmul.mubr.bf16.gmra.mrb[0].mxu0 %v5813
      %v6163 = vpop.f32.mrb[0].mxu0
      %v6164 = vadd.f32 %v5902, %v6163
      %v6165 = vpop.f32.mrb[0].mxu0
      %v6166 = vadd.f32 %v5906, %v6165
      %v6167 = vpop.f32.mrb[0].mxu0
      %v6168 = vadd.f32 %v5902, %v6167
      %v6169 = vpop.f32.mrb[0].mxu0
      %v6170 = vadd.f32 %v5906, %v6169
      %6171 = vmatprep.mubr.bf16.mxu0 %v5816
      %6172 = vmatmul.mubr.bf16.gmra.mrb[0].mxu0 %v5815
      %v6173 = vpop.f32.mrb[0].mxu0
      %v6174 = vadd.f32 %v5902, %v6173
      %v6175 = vpop.f32.mrb[0].mxu0
      %v6176 = vadd.f32 %v5906, %v6175
      %v6177 = vpop.f32.mrb[0].mxu0
      %v6178 = vadd.f32 %v5902, %v6177
      %v6179 = vpop.f32.mrb[0].mxu0
      %v6180 = vadd.f32 %v5906, %v6179
      %6181 = vmatprep.mubr.bf16.mxu0 %v5818
      %6182 = vmatmul.mubr.bf16.gmra.mrb[0].mxu0 %v5817
      %v6183 = vpop.f32.mrb[0].mxu0
      %v6184 = vadd.f32 %v5902, %v6183
      %v6185 = vpop.f32.mrb[0].mxu0
      %v6186 = vadd.f32 %v5906, %v6185
      %v6187 = vpop.f32.mrb[0].mxu0
      %v6188 = vadd.f32 %v5902, %v6187
      %v6189 = vpop.f32.mrb[0].mxu0
      %v6190 = vadd.f32 %v5906, %v6189
      %6191 = vmatprep.mubr.bf16.mxu0 %v5820
      %6192 = vmatmul.mubr.bf16.gmra.mrb[0].mxu0 %v5819
      %v6193 = vpop.f32.mrb[0].mxu0
      %v6194 = vadd.f32 %v5902, %v6193
      %v6195 = vpop.f32.mrb[0].mxu0
      %v6196 = vadd.f32 %v5906, %v6195
      %v6197 = vpop.f32.mrb[0].mxu0
      %v6198 = vadd.f32 %v5902, %v6197
      %v6199 = vpop.f32.mrb[0].mxu0
      %v6200 = vadd.f32 %v5906, %v6199
      %6201 = vmatprep.mubr.bf16.mxu0 %v5822
      %6202 = vmatmul.mubr.bf16.gmra.mrb[0].mxu0 %v5821
      %v6203 = vpop.f32.mrb[0].mxu0
      %v6204 = vadd.f32 %v5902, %v6203
      %v6205 = vpop.f32.mrb[0].mxu0
      %v6206 = vadd.f32 %v5906, %v6205
      %v6207 = vpop.f32.mrb[0].mxu0
      %v6208 = vadd.f32 %v5902, %v6207
      %v6209 = vpop.f32.mrb[0].mxu0
      %v6210 = vadd.f32 %v5906, %v6209
      %6211 = vmatprep.mubr.bf16.mxu0 %v5824
      %6212 = vmatmul.mubr.bf16.gmra.mrb[0].mxu0 %v5823
      %v6213 = vpop.f32.mrb[0].mxu0
      %v6214 = vadd.f32 %v5902, %v6213
      %v6215 = vpop.f32.mrb[0].mxu0
      %v6216 = vadd.f32 %v5906, %v6215
      %v6217 = vpop.f32.mrb[0].mxu0
      %v6218 = vadd.f32 %v5902, %v6217
      %v6219 = vpop.f32.mrb[0].mxu0
      %v6220 = vadd.f32 %v5906, %v6219
      %6221 = vmatprep.mubr.bf16.mxu0 %v5826
      %6222 = vmatmul.mubr.bf16.gmra.mrb[0].mxu0 %v5825
      %v6223 = vpop.f32.mrb[0].mxu0
      %v6224 = vadd.f32 %v5902, %v6223
      %v6225 = vpop.f32.mrb[0].mxu0
      %v6226 = vadd.f32 %v5906, %v6225
      %v6227 = vpop.f32.mrb[0].mxu0
      %v6228 = vadd.f32 %v5902, %v6227
      %v6229 = vpop.f32.mrb[0].mxu0
      %v6230 = vadd.f32 %v5906, %v6229
      %6231 = vmatprep.mubr.bf16.mxu0 %v5828
      %6232 = vmatmul.mubr.bf16.gmra.mrb[0].mxu0 %v5827
      %v6233 = vpop.f32.mrb[0].mxu0
      %v6234 = vadd.f32 %v5902, %v6233
      %v6235 = vpop.f32.mrb[0].mxu0
      %v6236 = vadd.f32 %v5906, %v6235
      %v6237 = vpop.f32.mrb[0].mxu0
      %v6238 = vadd.f32 %v5902, %v6237
      %v6239 = vpop.f32.mrb[0].mxu0
      %v6240 = vadd.f32 %v5906, %v6239
      %6241 = vmatprep.mubr.bf16.mxu0 %v5830
      %6242 = vmatmul.mubr.bf16.gmra.mrb[0].mxu0 %v5829
      %v6243 = vpop.f32.mrb[0].mxu0
      %v6244 = vadd.f32 %v5902, %v6243
      %v6245 = vpop.f32.mrb[0].mxu0
      %v6246 = vadd.f32 %v5906, %v6245
      %v6247 = vpop.f32.mrb[0].mxu0
      %v6248 = vadd.f32 %v5902, %v6247
      %v6249 = vpop.f32.mrb[0].mxu0
      %v6250 = vadd.f32 %v5906, %v6249
      %6251 = vmatprep.mubr.bf16.mxu0 %v5832
      %6252 = vmatmul.mubr.bf16.gmra.mrb[0].mxu0 %v5831
      %v6253 = vpop.f32.mrb[0].mxu0
      %v6254 = vadd.f32 %v5902, %v6253
      %v6255 = vpop.f32.mrb[0].mxu0
      %v6256 = vadd.f32 %v5906, %v6255
      %v6257 = vpop.f32.mrb[0].mxu0
      %v6258 = vadd.f32 %v5902, %v6257
      %v6259 = vpop.f32.mrb[0].mxu0
      %v6260 = vadd.f32 %v5906, %v6259
      %6261 = vmatprep.mubr.bf16.mxu0 %v5834
      %6262 = vmatmul.mubr.bf16.gmra.mrb[0].mxu0 %v5833
      %v6263 = vpop.f32.mrb[0].mxu0
      %v6264 = vadd.f32 %v5902, %v6263
      %v6265 = vpop.f32.mrb[0].mxu0
      %v6266 = vadd.f32 %v5906, %v6265
      %v6267 = vpop.f32.mrb[0].mxu0
      %v6268 = vadd.f32 %v5902, %v6267
      %v6269 = vpop.f32.mrb[0].mxu0
      %v6270 = vadd.f32 %v5906, %v6269
      %6271 = vmatprep.mubr.bf16.mxu0 %v5836
      %6272 = vmatmul.mubr.bf16.gmra.mrb[0].mxu0 %v5835
      %v6273 = vpop.f32.mrb[0].mxu0
      %v6274 = vadd.f32 %v5902, %v6273
      %v6275 = vpop.f32.mrb[0].mxu0
      %v6276 = vadd.f32 %v5906, %v6275
      %v6277 = vpop.f32.mrb[0].mxu0
      %v6278 = vadd.f32 %v5902, %v6277
      %v6279 = vpop.f32.mrb[0].mxu0
      %v6280 = vadd.f32 %v5906, %v6279
      %6281 = vmatprep.mubr.bf16.mxu0 %v5838
      %6282 = vmatmul.mubr.bf16.gmra.mrb[0].mxu0 %v5837
      %v6283 = vpop.f32.mrb[0].mxu0
      %v6284 = vadd.f32 %v5902, %v6283
      %v6285 = vpop.f32.mrb[0].mxu0
      %v6286 = vadd.f32 %v5906, %v6285
      %v6287 = vpop.f32.mrb[0].mxu0
      %v6288 = vadd.f32 %v5902, %v6287
      %v6289 = vpop.f32.mrb[0].mxu0
      %v6290 = vadd.f32 %v5906, %v6289
      %6291 = vmatprep.mubr.bf16.mxu0 %v5840
      %6292 = vmatmul.mubr.bf16.gmra.mrb[0].mxu0 %v5839
      %v6293 = vpop.f32.mrb[0].mxu0
      %v6294 = vadd.f32 %v5902, %v6293
      %v6295 = vpop.f32.mrb[0].mxu0
      %v6296 = vadd.f32 %v5906, %v6295
      %v6297 = vpop.f32.mrb[0].mxu0
      %v6298 = vadd.f32 %v5902, %v6297
      %v6299 = vpop.f32.mrb[0].mxu0
      %v6300 = vadd.f32 %v5906, %v6299
      %6301 = vmatprep.mubr.bf16.mxu0 %v5842
      %6302 = vmatmul.mubr.bf16.gmra.mrb[0].mxu0 %v5841
      %v6303 = vpop.f32.mrb[0].mxu0
      %v6304 = vadd.f32 %v5902, %v6303
      %v6305 = vpop.f32.mrb[0].mxu0
      %v6306 = vadd.f32 %v5906, %v6305
      %v6307 = vpop.f32.mrb[0].mxu0
      %v6308 = vadd.f32 %v5902, %v6307
      %v6309 = vpop.f32.mrb[0].mxu0
      %v6310 = vadd.f32 %v5906, %v6309
      %6311 = vmatprep.mubr.bf16.mxu0 %v5844
      %6312 = vmatmul.mubr.bf16.gmra.mrb[0].mxu0 %v5843
      %v6313 = vpop.f32.mrb[0].mxu0
      %v6314 = vadd.f32 %v5902, %v6313
      %v6315 = vpop.f32.mrb[0].mxu0
      %v6316 = vadd.f32 %v5906, %v6315
      %v6317 = vpop.f32.mrb[0].mxu0
      %v6318 = vadd.f32 %v5902, %v6317
      %v6319 = vpop.f32.mrb[0].mxu0
      %v6320 = vadd.f32 %v5906, %v6319
      %6321 = vmatprep.mubr.bf16.mxu0 %v5846
      %6322 = vmatmul.mubr.bf16.gmra.mrb[0].mxu0 %v5845
      %v6323 = vpop.f32.mrb[0].mxu0
      %v6324 = vadd.f32 %v5902, %v6323
      %v6325 = vpop.f32.mrb[0].mxu0
      %v6326 = vadd.f32 %v5906, %v6325
      %v6327 = vpop.f32.mrb[0].mxu0
      %v6328 = vadd.f32 %v5902, %v6327
      %v6329 = vpop.f32.mrb[0].mxu0
      %v6330 = vadd.f32 %v5906, %v6329
      %6331 = vmatprep.mubr.bf16.mxu0 %v5848
      %6332 = vmatmul.mubr.bf16.gmra.mrb[0].mxu0 %v5847
      %v6333 = vpop.f32.mrb[0].mxu0
      %v6334 = vadd.f32 %v5902, %v6333
      %v6335 = vpop.f32.mrb[0].mxu0
      %v6336 = vadd.f32 %v5906, %v6335
      %v6337 = vpop.f32.mrb[0].mxu0
      %v6338 = vadd.f32 %v5902, %v6337
      %v6339 = vpop.f32.mrb[0].mxu0
      %v6340 = vadd.f32 %v5906, %v6339
      %6341 = vmatprep.mubr.bf16.mxu0 %v5850
      %6342 = vmatmul.mubr.bf16.gmra.mrb[0].mxu0 %v5849
      %v6343 = vpop.f32.mrb[0].mxu0
      %v6344 = vadd.f32 %v5902, %v6343
      %v6345 = vpop.f32.mrb[0].mxu0
      %v6346 = vadd.f32 %v5906, %v6345
      %v6347 = vpop.f32.mrb[0].mxu0
      %v6348 = vadd.f32 %v5902, %v6347
      %v6349 = vpop.f32.mrb[0].mxu0
      %v6350 = vadd.f32 %v5906, %v6349
      %6351 = vmatprep.mubr.bf16.mxu0 %v5852
      %6352 = vmatmul.mubr.bf16.gmra.mrb[0].mxu0 %v5851
      %v6353 = vpop.f32.mrb[0].mxu0
      %v6354 = vadd.f32 %v5902, %v6353
      %v6355 = vpop.f32.mrb[0].mxu0
      %v6356 = vadd.f32 %v5906, %v6355
      %v6357 = vpop.f32.mrb[0].mxu0
      %v6358 = vadd.f32 %v5902, %v6357
      %v6359 = vpop.f32.mrb[0].mxu0
      %v6360 = vadd.f32 %v5906, %v6359
      %6361 = vmatprep.mubr.bf16.mxu0 %v5854
      %6362 = vmatmul.mubr.bf16.gmra.mrb[0].mxu0 %v5853
      %v6363 = vpop.f32.mrb[0].mxu0
      %v6364 = vadd.f32 %v5902, %v6363
      %v6365 = vpop.f32.mrb[0].mxu0
      %v6366 = vadd.f32 %v5906, %v6365
      %v6367 = vpop.f32.mrb[0].mxu0
      %v6368 = vadd.f32 %v5902, %v6367
      %v6369 = vpop.f32.mrb[0].mxu0
      %v6370 = vadd.f32 %v5906, %v6369
      %6371 = vmatprep.mubr.bf16.mxu0 %v5856
      %6372 = vmatmul.mubr.bf16.gmra.mrb[0].mxu0 %v5855
      %v6373 = vpop.f32.mrb[0].mxu0
      %v6374 = vadd.f32 %v5902, %v6373
      %v6375 = vpop.f32.mrb[0].mxu0
      %v6376 = vadd.f32 %v5906, %v6375
      %v6377 = vpop.f32.mrb[0].mxu0
      %v6378 = vadd.f32 %v5902, %v6377
      %v6379 = vpop.f32.mrb[0].mxu0
      %v6380 = vadd.f32 %v5906, %v6379
      %6381 = vmatprep.mubr.bf16.mxu0 %v5858
      %6382 = vmatmul.mubr.bf16.gmra.mrb[0].mxu0 %v5857
      %v6383 = vpop.f32.mrb[0].mxu0
      %v6384 = vadd.f32 %v5902, %v6383
      %v6385 = vpop.f32.mrb[0].mxu0
      %v6386 = vadd.f32 %v5906, %v6385
      %v6387 = vpop.f32.mrb[0].mxu0
      %v6388 = vadd.f32 %v5902, %v6387
      %v6389 = vpop.f32.mrb[0].mxu0
      %v6390 = vadd.f32 %v5906, %v6389
      %6391 = vmatprep.mubr.bf16.mxu0 %v5860
      %6392 = vmatmul.mubr.bf16.gmra.mrb[0].mxu0 %v5859
      %v6393 = vpop.f32.mrb[0].mxu0
      %v6394 = vadd.f32 %v5902, %v6393
      %v6395 = vpop.f32.mrb[0].mxu0
      %v6396 = vadd.f32 %v5906, %v6395
      %v6397 = vpop.f32.mrb[0].mxu0
      %v6398 = vadd.f32 %v5902, %v6397
      %v6399 = vpop.f32.mrb[0].mxu0
      %v6400 = vadd.f32 %v5906, %v6399
      %6401 = vmatprep.mubr.bf16.mxu0 %v5862
      %6402 = vmatmul.mubr.bf16.gmra.mrb[0].mxu0 %v5861
      %v6403 = vpop.f32.mrb[0].mxu0
      %v6404 = vadd.f32 %v5902, %v6403
      %v6405 = vpop.f32.mrb[0].mxu0
      %v6406 = vadd.f32 %v5906, %v6405
      %v6407 = vpop.f32.mrb[0].mxu0
      %v6408 = vadd.f32 %v5902, %v6407
      %v6409 = vpop.f32.mrb[0].mxu0
      %v6410 = vadd.f32 %v5906, %v6409
      %6411 = vmatprep.mubr.bf16.mxu0 %v5864
      %6412 = vmatmul.mubr.bf16.gmra.mrb[0].mxu0 %v5863
      %v6413 = vpop.f32.mrb[0].mxu0
      %v6414 = vadd.f32 %v5902, %v6413
      %v6415 = vpop.f32.mrb[0].mxu0
      %v6416 = vadd.f32 %v5906, %v6415
      %v6417 = vpop.f32.mrb[0].mxu0
      %v6418 = vadd.f32 %v5902, %v6417
      %v6419 = vpop.f32.mrb[0].mxu0
      %v6420 = vadd.f32 %v5906, %v6419
      %6421 = vdwg.mxu0
      %v6422 = vmax.f32 %v6104, 0.0
      %v6423 = vmax.f32 %v6106, 0.0
      %v6424 = vmax.f32 %v6108, 0.0
      %v6425 = vmax.f32 %v6110, 0.0
      %v6426 = vmax.f32 %v6114, 0.0
      %v6427 = vmax.f32 %v6116, 0.0
      %v6428 = vmax.f32 %v6118, 0.0
      %v6429 = vmax.f32 %v6120, 0.0
      %v6430 = vmax.f32 %v6124, 0.0
      %v6431 = vmax.f32 %v6126, 0.0
      %v6432 = vmax.f32 %v6128, 0.0
      %v6433 = vmax.f32 %v6130, 0.0
      %v6434 = vmax.f32 %v6134, 0.0
      %v6435 = vmax.f32 %v6136, 0.0
      %v6436 = vmax.f32 %v6138, 0.0
      %v6437 = vmax.f32 %v6140, 0.0
      %v6438 = vmax.f32 %v6144, 0.0
      %v6439 = vmax.f32 %v6146, 0.0
      %v6440 = vmax.f32 %v6148, 0.0
      %v6441 = vmax.f32 %v6150, 0.0
      %v6442 = vmax.f32 %v6154, 0.0
      %v6443 = vmax.f32 %v6156, 0.0
      %v6444 = vmax.f32 %v6158, 0.0
      %v6445 = vmax.f32 %v6160, 0.0
      %v6446 = vmax.f32 %v6164, 0.0
      %v6447 = vmax.f32 %v6166, 0.0
      %v6448 = vmax.f32 %v6168, 0.0
      %v6449 = vmax.f32 %v6170, 0.0
      %v6450 = vmax.f32 %v6174, 0.0
      %v6451 = vmax.f32 %v6176, 0.0
      %v6452 = vmax.f32 %v6178, 0.0
      %v6453 = vmax.f32 %v6180, 0.0
      %v6454 = vmax.f32 %v6184, 0.0
      %v6455 = vmax.f32 %v6186, 0.0
      %v6456 = vmax.f32 %v6188, 0.0
      %v6457 = vmax.f32 %v6190, 0.0
      %v6458 = vmax.f32 %v6194, 0.0
      %v6459 = vmax.f32 %v6196, 0.0
      %v6460 = vmax.f32 %v6198, 0.0
      %v6461 = vmax.f32 %v6200, 0.0
      %v6462 = vmax.f32 %v6204, 0.0
      %v6463 = vmax.f32 %v6206, 0.0
      %v6464 = vmax.f32 %v6208, 0.0
      %v6465 = vmax.f32 %v6210, 0.0
      %v6466 = vmax.f32 %v6214, 0.0
      %v6467 = vmax.f32 %v6216, 0.0
      %v6468 = vmax.f32 %v6218, 0.0
      %v6469 = vmax.f32 %v6220, 0.0
      %v6470 = vmax.f32 %v6224, 0.0
      %v6471 = vmax.f32 %v6226, 0.0
      %v6472 = vmax.f32 %v6228, 0.0
      %v6473 = vmax.f32 %v6230, 0.0
      %v6474 = vmax.f32 %v6234, 0.0
      %v6475 = vmax.f32 %v6236, 0.0
      %v6476 = vmax.f32 %v6238, 0.0
      %v6477 = vmax.f32 %v6240, 0.0
      %v6478 = vmax.f32 %v6244, 0.0
      %v6479 = vmax.f32 %v6246, 0.0
      %v6480 = vmax.f32 %v6248, 0.0
      %v6481 = vmax.f32 %v6250, 0.0
      %v6482 = vmax.f32 %v6254, 0.0
      %v6483 = vmax.f32 %v6256, 0.0
      %v6484 = vmax.f32 %v6258, 0.0
      %v6485 = vmax.f32 %v6260, 0.0
      %v6486 = vmax.f32 %v6264, 0.0
      %v6487 = vmax.f32 %v6266, 0.0
      %v6488 = vmax.f32 %v6268, 0.0
      %v6489 = vmax.f32 %v6270, 0.0
      %v6490 = vmax.f32 %v6274, 0.0
      %v6491 = vmax.f32 %v6276, 0.0
      %v6492 = vmax.f32 %v6278, 0.0
      %v6493 = vmax.f32 %v6280, 0.0
      %v6494 = vmax.f32 %v6284, 0.0
      %v6495 = vmax.f32 %v6286, 0.0
      %v6496 = vmax.f32 %v6288, 0.0
      %v6497 = vmax.f32 %v6290, 0.0
      %v6498 = vmax.f32 %v6294, 0.0
      %v6499 = vmax.f32 %v6296, 0.0
      %v6500 = vmax.f32 %v6298, 0.0
      %v6501 = vmax.f32 %v6300, 0.0
      %v6502 = vmax.f32 %v6304, 0.0
      %v6503 = vmax.f32 %v6306, 0.0
      %v6504 = vmax.f32 %v6308, 0.0
      %v6505 = vmax.f32 %v6310, 0.0
      %v6506 = vmax.f32 %v6314, 0.0
      %v6507 = vmax.f32 %v6316, 0.0
      %v6508 = vmax.f32 %v6318, 0.0
      %v6509 = vmax.f32 %v6320, 0.0
      %v6510 = vmax.f32 %v6324, 0.0
      %v6511 = vmax.f32 %v6326, 0.0
      %v6512 = vmax.f32 %v6328, 0.0
      %v6513 = vmax.f32 %v6330, 0.0
      %v6514 = vmax.f32 %v6334, 0.0
      %v6515 = vmax.f32 %v6336, 0.0
      %v6516 = vmax.f32 %v6338, 0.0
      %v6517 = vmax.f32 %v6340, 0.0
      %v6518 = vmax.f32 %v6344, 0.0
      %v6519 = vmax.f32 %v6346, 0.0
      %v6520 = vmax.f32 %v6348, 0.0
      %v6521 = vmax.f32 %v6350, 0.0
      %v6522 = vmax.f32 %v6354, 0.0
      %v6523 = vmax.f32 %v6356, 0.0
      %v6524 = vmax.f32 %v6358, 0.0
      %v6525 = vmax.f32 %v6360, 0.0
      %v6526 = vmax.f32 %v6364, 0.0
      %v6527 = vmax.f32 %v6366, 0.0
      %v6528 = vmax.f32 %v6368, 0.0
      %v6529 = vmax.f32 %v6370, 0.0
      %v6530 = vmax.f32 %v6374, 0.0
      %v6531 = vmax.f32 %v6376, 0.0
      %v6532 = vmax.f32 %v6378, 0.0
      %v6533 = vmax.f32 %v6380, 0.0
      %v6534 = vmax.f32 %v6384, 0.0
      %v6535 = vmax.f32 %v6386, 0.0
      %v6536 = vmax.f32 %v6388, 0.0
      %v6537 = vmax.f32 %v6390, 0.0
      %v6538 = vmax.f32 %v6394, 0.0
      %v6539 = vmax.f32 %v6396, 0.0
      %v6540 = vmax.f32 %v6398, 0.0
      %v6541 = vmax.f32 %v6400, 0.0
      %v6542 = vmax.f32 %v6404, 0.0
      %v6543 = vmax.f32 %v6406, 0.0
      %v6544 = vmax.f32 %v6408, 0.0
      %v6545 = vmax.f32 %v6410, 0.0
      %v6546 = vmax.f32 %v6414, 0.0
      %v6547 = vmax.f32 %v6416, 0.0
      %v6548 = vmax.f32 %v6418, 0.0
      %v6549 = vmax.f32 %v6420, 0.0
      %v6550 = vpack.c.bf16 %v6424, %v6422
      %v6551 = vpack.c.bf16 %v6425, %v6423
      %v6552 = vpack.c.bf16 %v6428, %v6426
      %v6553 = vpack.c.bf16 %v6429, %v6427
      %v6554 = vpack.c.bf16 %v6432, %v6430
      %v6555 = vpack.c.bf16 %v6433, %v6431
      %v6556 = vpack.c.bf16 %v6436, %v6434
      %v6557 = vpack.c.bf16 %v6437, %v6435
      %v6558 = vpack.c.bf16 %v6440, %v6438
      %v6559 = vpack.c.bf16 %v6441, %v6439
      %v6560 = vpack.c.bf16 %v6444, %v6442
      %v6561 = vpack.c.bf16 %v6445, %v6443
      %v6562 = vpack.c.bf16 %v6448, %v6446
      %v6563 = vpack.c.bf16 %v6449, %v6447
      %v6564 = vpack.c.bf16 %v6452, %v6450
      %v6565 = vpack.c.bf16 %v6453, %v6451
      %v6566 = vpack.c.bf16 %v6456, %v6454
      %v6567 = vpack.c.bf16 %v6457, %v6455
      %v6568 = vpack.c.bf16 %v6460, %v6458
      %v6569 = vpack.c.bf16 %v6461, %v6459
      %v6570 = vpack.c.bf16 %v6464, %v6462
      %v6571 = vpack.c.bf16 %v6465, %v6463
      %v6572 = vpack.c.bf16 %v6468, %v6466
      %v6573 = vpack.c.bf16 %v6469, %v6467
      %v6574 = vpack.c.bf16 %v6472, %v6470
      %v6575 = vpack.c.bf16 %v6473, %v6471
      %v6576 = vpack.c.bf16 %v6476, %v6474
      %v6577 = vpack.c.bf16 %v6477, %v6475
      %v6578 = vpack.c.bf16 %v6480, %v6478
      %v6579 = vpack.c.bf16 %v6481, %v6479
      %v6580 = vpack.c.bf16 %v6484, %v6482
      %v6581 = vpack.c.bf16 %v6485, %v6483
      %v6582 = vpack.c.bf16 %v6488, %v6486
      %v6583 = vpack.c.bf16 %v6489, %v6487
      %v6584 = vpack.c.bf16 %v6492, %v6490
      %v6585 = vpack.c.bf16 %v6493, %v6491
      %v6586 = vpack.c.bf16 %v6496, %v6494
      %v6587 = vpack.c.bf16 %v6497, %v6495
      %v6588 = vpack.c.bf16 %v6500, %v6498
      %v6589 = vpack.c.bf16 %v6501, %v6499
      %v6590 = vpack.c.bf16 %v6504, %v6502
      %v6591 = vpack.c.bf16 %v6505, %v6503
      %v6592 = vpack.c.bf16 %v6508, %v6506
      %v6593 = vpack.c.bf16 %v6509, %v6507
      %v6594 = vpack.c.bf16 %v6512, %v6510
      %v6595 = vpack.c.bf16 %v6513, %v6511
      %v6596 = vpack.c.bf16 %v6516, %v6514
      %v6597 = vpack.c.bf16 %v6517, %v6515
      %v6598 = vpack.c.bf16 %v6520, %v6518
      %v6599 = vpack.c.bf16 %v6521, %v6519
      %v6600 = vpack.c.bf16 %v6524, %v6522
      %v6601 = vpack.c.bf16 %v6525, %v6523
      %v6602 = vpack.c.bf16 %v6528, %v6526
      %v6603 = vpack.c.bf16 %v6529, %v6527
      %v6604 = vpack.c.bf16 %v6532, %v6530
      %v6605 = vpack.c.bf16 %v6533, %v6531
      %v6606 = vpack.c.bf16 %v6536, %v6534
      %v6607 = vpack.c.bf16 %v6537, %v6535
      %v6608 = vpack.c.bf16 %v6540, %v6538
      %v6609 = vpack.c.bf16 %v6541, %v6539
      %v6610 = vpack.c.bf16 %v6544, %v6542
      %v6611 = vpack.c.bf16 %v6545, %v6543
      %v6612 = vpack.c.bf16 %v6548, %v6546
      %v6613 = vpack.c.bf16 %v6549, %v6547
      %v6614 = vld [vmem:[%s16] sm:$0xff]
      %v6615 = vld [vmem:[%s16 + $0x8] sm:$0xff]
      %v6616 = vld [vmem:[%s16 + $0x10] sm:$0xff]
      %v6617 = vld [vmem:[%s16 + $0x18] sm:$0xff]
      %v6618 = vld [vmem:[%s16 + $0x20] sm:$0xff]
      %v6619 = vld [vmem:[%s16 + $0x28] sm:$0xff]
      %v6620 = vld [vmem:[%s16 + $0x30] sm:$0xff]
      %v6621 = vld [vmem:[%s16 + $0x38] sm:$0xff]
      %v6622 = vld [vmem:[%s16 + $0x40] sm:$0xff]
      %v6623 = vld [vmem:[%s16 + $0x48] sm:$0xff]
      %v6624 = vld [vmem:[%s16 + $0x50] sm:$0xff]
      %v6625 = vld [vmem:[%s16 + $0x58] sm:$0xff]
      %v6626 = vld [vmem:[%s16 + $0x60] sm:$0xff]
      %v6627 = vld [vmem:[%s16 + $0x68] sm:$0xff]
      %v6628 = vld [vmem:[%s16 + $0x70] sm:$0xff]
      %v6629 = vld [vmem:[%s16 + $0x78] sm:$0xff]
      %v6630 = vld [vmem:[%s16 + $0x80] sm:$0xff]
      %v6631 = vld [vmem:[%s16 + $0x88] sm:$0xff]
      %v6632 = vld [vmem:[%s16 + $0x90] sm:$0xff]
      %v6633 = vld [vmem:[%s16 + $0x98] sm:$0xff]
      %v6634 = vld [vmem:[%s16 + $0xa0] sm:$0xff]
      %v6635 = vld [vmem:[%s16 + $0xa8] sm:$0xff]
      %v6636 = vld [vmem:[%s16 + $0xb0] sm:$0xff]
      %v6637 = vld [vmem:[%s16 + $0xb8] sm:$0xff]
      %v6638 = vld [vmem:[%s16 + $0xc0] sm:$0xff]
      %v6639 = vld [vmem:[%s16 + $0xc8] sm:$0xff]
      %v6640 = vld [vmem:[%s16 + $0xd0] sm:$0xff]
      %v6641 = vld [vmem:[%s16 + $0xd8] sm:$0xff]
      %v6642 = vld [vmem:[%s16 + $0xe0] sm:$0xff]
      %v6643 = vld [vmem:[%s16 + $0xe8] sm:$0xff]
      %v6644 = vld [vmem:[%s16 + $0xf0] sm:$0xff]
      %v6645 = vld [vmem:[%s16 + $0xf8] sm:$0xff]
      %v6646 = vld [vmem:[%s17] sm:$0x3]
      %v6648 = vlaneseq
      %v6649 = vshrl.u32 %v6648, 7
      %v6650 = vsub.s32 0, %v6649
      %v6651 = vrot.slane %v6646, %v6650
      %v6652 = vlaneseq
      %v6653 = vshrl.u32 %v6652, 7
      %v6654 = vsub.s32 1, %v6653
      %v6655 = vrot.slane %v6646, %v6654
      %v6690 = vunpack.c.l.b16 %v6614
      %v6691 = vunpack.c.h.b16 %v6614
      %v6692 = vunpack.c.l.b16 %v6615
      %v6693 = vunpack.c.h.b16 %v6615
      %v6694 = vunpack.c.l.b16 %v6616
      %v6695 = vunpack.c.h.b16 %v6616
      %v6696 = vunpack.c.l.b16 %v6617
      %v6697 = vunpack.c.h.b16 %v6617
      %v6698 = vunpack.c.l.b16 %v6618
      %v6699 = vunpack.c.h.b16 %v6618
      %v6700 = vunpack.c.l.b16 %v6619
      %v6701 = vunpack.c.h.b16 %v6619
      %v6702 = vunpack.c.l.b16 %v6620
      %v6703 = vunpack.c.h.b16 %v6620
      %v6704 = vunpack.c.l.b16 %v6621
      %v6705 = vunpack.c.h.b16 %v6621
      %v6706 = vunpack.c.l.b16 %v6622
      %v6707 = vunpack.c.h.b16 %v6622
      %v6708 = vunpack.c.l.b16 %v6623
      %v6709 = vunpack.c.h.b16 %v6623
      %v6710 = vunpack.c.l.b16 %v6624
      %v6711 = vunpack.c.h.b16 %v6624
      %v6712 = vunpack.c.l.b16 %v6625
      %v6713 = vunpack.c.h.b16 %v6625
      %v6714 = vunpack.c.l.b16 %v6626
      %v6715 = vunpack.c.h.b16 %v6626
      %v6716 = vunpack.c.l.b16 %v6627
      %v6717 = vunpack.c.h.b16 %v6627
      %v6718 = vunpack.c.l.b16 %v6628
      %v6719 = vunpack.c.h.b16 %v6628
      %v6720 = vunpack.c.l.b16 %v6629
      %v6721 = vunpack.c.h.b16 %v6629
      %v6722 = vunpack.c.l.b16 %v6630
      %v6723 = vunpack.c.h.b16 %v6630
      %v6724 = vunpack.c.l.b16 %v6631
      %v6725 = vunpack.c.h.b16 %v6631
      %v6726 = vunpack.c.l.b16 %v6632
      %v6727 = vunpack.c.h.b16 %v6632
      %v6728 = vunpack.c.l.b16 %v6633
      %v6729 = vunpack.c.h.b16 %v6633
      %v6730 = vunpack.c.l.b16 %v6634
      %v6731 = vunpack.c.h.b16 %v6634
      %v6732 = vunpack.c.l.b16 %v6635
      %v6733 = vunpack.c.h.b16 %v6635
      %v6734 = vunpack.c.l.b16 %v6636
      %v6735 = vunpack.c.h.b16 %v6636
      %v6736 = vunpack.c.l.b16 %v6637
      %v6737 = vunpack.c.h.b16 %v6637
      %v6738 = vunpack.c.l.b16 %v6638
      %v6739 = vunpack.c.h.b16 %v6638
      %v6740 = vunpack.c.l.b16 %v6639
      %v6741 = vunpack.c.h.b16 %v6639
      %v6742 = vunpack.c.l.b16 %v6640
      %v6743 = vunpack.c.h.b16 %v6640
      %v6744 = vunpack.c.l.b16 %v6641
      %v6745 = vunpack.c.h.b16 %v6641
      %v6746 = vunpack.c.l.b16 %v6642
      %v6747 = vunpack.c.h.b16 %v6642
      %v6748 = vunpack.c.l.b16 %v6643
      %v6749 = vunpack.c.h.b16 %v6643
      %v6750 = vunpack.c.l.b16 %v6644
      %v6751 = vunpack.c.h.b16 %v6644
      %v6752 = vunpack.c.l.b16 %v6645
      %v6753 = vunpack.c.h.b16 %v6645
      %v6754 = vpack.c.b16 %v6692, %v6690
      %v6755 = vpack.c.b16 %v6693, %v6691
      %v6756 = vpack.c.b16 %v6696, %v6694
      %v6757 = vpack.c.b16 %v6697, %v6695
      %v6758 = vpack.c.b16 %v6700, %v6698
      %v6759 = vpack.c.b16 %v6701, %v6699
      %v6760 = vpack.c.b16 %v6704, %v6702
      %v6761 = vpack.c.b16 %v6705, %v6703
      %v6762 = vpack.c.b16 %v6708, %v6706
      %v6763 = vpack.c.b16 %v6709, %v6707
      %v6764 = vpack.c.b16 %v6712, %v6710
      %v6765 = vpack.c.b16 %v6713, %v6711
      %v6766 = vpack.c.b16 %v6716, %v6714
      %v6767 = vpack.c.b16 %v6717, %v6715
      %v6768 = vpack.c.b16 %v6720, %v6718
      %v6769 = vpack.c.b16 %v6721, %v6719
      %v6770 = vpack.c.b16 %v6724, %v6722
      %v6771 = vpack.c.b16 %v6725, %v6723
      %v6772 = vpack.c.b16 %v6728, %v6726
      %v6773 = vpack.c.b16 %v6729, %v6727
      %v6774 = vpack.c.b16 %v6732, %v6730
      %v6775 = vpack.c.b16 %v6733, %v6731
      %v6776 = vpack.c.b16 %v6736, %v6734
      %v6777 = vpack.c.b16 %v6737, %v6735
      %v6778 = vpack.c.b16 %v6740, %v6738
      %v6779 = vpack.c.b16 %v6741, %v6739
      %v6780 = vpack.c.b16 %v6744, %v6742
      %v6781 = vpack.c.b16 %v6745, %v6743
      %v6782 = vpack.c.b16 %v6748, %v6746
      %v6783 = vpack.c.b16 %v6749, %v6747
      %v6784 = vpack.c.b16 %v6752, %v6750
      %v6785 = vpack.c.b16 %v6753, %v6751
      %6818 = vmatprep.subr.bf16.mxu0 %v6755
      %6819 = vmatpush1.bf16.msra.mxu0 %v6754
      %6820 = vmatprep.subr.bf16.mxu0 %v6757
      %6821 = vmatpush1.bf16.msra.mxu0 %v6756
      %6822 = vmatprep.subr.bf16.mxu0 %v6759
      %6823 = vmatpush1.bf16.msra.mxu0 %v6758
      %6824 = vmatprep.subr.bf16.mxu0 %v6761
      %6825 = vmatpush1.bf16.msra.mxu0 %v6760
      %6826 = vmatprep.subr.bf16.mxu0 %v6763
      %6827 = vmatpush1.bf16.msra.mxu0 %v6762
      %6828 = vmatprep.subr.bf16.mxu0 %v6765
      %6829 = vmatpush1.bf16.msra.mxu0 %v6764
      %6830 = vmatprep.subr.bf16.mxu0 %v6767
      %6831 = vmatpush1.bf16.msra.mxu0 %v6766
      %6832 = vmatprep.subr.bf16.mxu0 %v6769
      %6833 = vmatpush1.bf16.msra.mxu0 %v6768
      %6834 = vmatprep.subr.bf16.mxu0 %v6771
      %6835 = vmatpush1.bf16.msra.mxu0 %v6770
      %6836 = vmatprep.subr.bf16.mxu0 %v6773
      %6837 = vmatpush1.bf16.msra.mxu0 %v6772
      %6838 = vmatprep.subr.bf16.mxu0 %v6775
      %6839 = vmatpush1.bf16.msra.mxu0 %v6774
      %6840 = vmatprep.subr.bf16.mxu0 %v6777
      %6841 = vmatpush1.bf16.msra.mxu0 %v6776
      %6842 = vmatprep.subr.bf16.mxu0 %v6779
      %6843 = vmatpush1.bf16.msra.mxu0 %v6778
      %6844 = vmatprep.subr.bf16.mxu0 %v6781
      %6845 = vmatpush1.bf16.msra.mxu0 %v6780
      %6846 = vmatprep.subr.bf16.mxu0 %v6783
      %6847 = vmatpush1.bf16.msra.mxu0 %v6782
      %6848 = vmatprep.subr.bf16.mxu0 %v6785
      %6849 = vmatpush1.bf16.msra.mxu0 %v6784
      %6850 = vmatprep.mubr.bf16.mxu0 %v6551
      %6851 = vmatmul.mubr.bf16.gmra.mrb[0].mxu0 %v6550
      %v6852 = vpop.f32.mrb[0].mxu0
      %v6853 = vadd.f32 %v6651, %v6852
      %v6854 = vpop.f32.mrb[0].mxu0
      %v6855 = vadd.f32 %v6655, %v6854
      %v6856 = vpop.f32.mrb[0].mxu0
      %v6857 = vadd.f32 %v6651, %v6856
      %v6858 = vpop.f32.mrb[0].mxu0
      %v6859 = vadd.f32 %v6655, %v6858
      %6860 = vmatprep.mubr.bf16.mxu0 %v6553
      %6861 = vmatmul.mubr.bf16.gmra.mrb[0].mxu0 %v6552
      %v6862 = vpop.f32.mrb[0].mxu0
      %v6863 = vadd.f32 %v6651, %v6862
      %v6864 = vpop.f32.mrb[0].mxu0
      %v6865 = vadd.f32 %v6655, %v6864
      %v6866 = vpop.f32.mrb[0].mxu0
      %v6867 = vadd.f32 %v6651, %v6866
      %v6868 = vpop.f32.mrb[0].mxu0
      %v6869 = vadd.f32 %v6655, %v6868
      %6870 = vmatprep.mubr.bf16.mxu0 %v6555
      %6871 = vmatmul.mubr.bf16.gmra.mrb[0].mxu0 %v6554
      %v6872 = vpop.f32.mrb[0].mxu0
      %v6873 = vadd.f32 %v6651, %v6872
      %v6874 = vpop.f32.mrb[0].mxu0
      %v6875 = vadd.f32 %v6655, %v6874
      %v6876 = vpop.f32.mrb[0].mxu0
      %v6877 = vadd.f32 %v6651, %v6876
      %v6878 = vpop.f32.mrb[0].mxu0
      %v6879 = vadd.f32 %v6655, %v6878
      %6880 = vmatprep.mubr.bf16.mxu0 %v6557
      %6881 = vmatmul.mubr.bf16.gmra.mrb[0].mxu0 %v6556
      %v6882 = vpop.f32.mrb[0].mxu0
      %v6883 = vadd.f32 %v6651, %v6882
      %v6884 = vpop.f32.mrb[0].mxu0
      %v6885 = vadd.f32 %v6655, %v6884
      %v6886 = vpop.f32.mrb[0].mxu0
      %v6887 = vadd.f32 %v6651, %v6886
      %v6888 = vpop.f32.mrb[0].mxu0
      %v6889 = vadd.f32 %v6655, %v6888
      %6890 = vmatprep.mubr.bf16.mxu0 %v6559
      %6891 = vmatmul.mubr.bf16.gmra.mrb[0].mxu0 %v6558
      %v6892 = vpop.f32.mrb[0].mxu0
      %v6893 = vadd.f32 %v6651, %v6892
      %v6894 = vpop.f32.mrb[0].mxu0
      %v6895 = vadd.f32 %v6655, %v6894
      %v6896 = vpop.f32.mrb[0].mxu0
      %v6897 = vadd.f32 %v6651, %v6896
      %v6898 = vpop.f32.mrb[0].mxu0
      %v6899 = vadd.f32 %v6655, %v6898
      %6900 = vmatprep.mubr.bf16.mxu0 %v6561
      %6901 = vmatmul.mubr.bf16.gmra.mrb[0].mxu0 %v6560
      %v6902 = vpop.f32.mrb[0].mxu0
      %v6903 = vadd.f32 %v6651, %v6902
      %v6904 = vpop.f32.mrb[0].mxu0
      %v6905 = vadd.f32 %v6655, %v6904
      %v6906 = vpop.f32.mrb[0].mxu0
      %v6907 = vadd.f32 %v6651, %v6906
      %v6908 = vpop.f32.mrb[0].mxu0
      %v6909 = vadd.f32 %v6655, %v6908
      %6910 = vmatprep.mubr.bf16.mxu0 %v6563
      %6911 = vmatmul.mubr.bf16.gmra.mrb[0].mxu0 %v6562
      %v6912 = vpop.f32.mrb[0].mxu0
      %v6913 = vadd.f32 %v6651, %v6912
      %v6914 = vpop.f32.mrb[0].mxu0
      %v6915 = vadd.f32 %v6655, %v6914
      %v6916 = vpop.f32.mrb[0].mxu0
      %v6917 = vadd.f32 %v6651, %v6916
      %v6918 = vpop.f32.mrb[0].mxu0
      %v6919 = vadd.f32 %v6655, %v6918
      %6920 = vmatprep.mubr.bf16.mxu0 %v6565
      %6921 = vmatmul.mubr.bf16.gmra.mrb[0].mxu0 %v6564
      %v6922 = vpop.f32.mrb[0].mxu0
      %v6923 = vadd.f32 %v6651, %v6922
      %v6924 = vpop.f32.mrb[0].mxu0
      %v6925 = vadd.f32 %v6655, %v6924
      %v6926 = vpop.f32.mrb[0].mxu0
      %v6927 = vadd.f32 %v6651, %v6926
      %v6928 = vpop.f32.mrb[0].mxu0
      %v6929 = vadd.f32 %v6655, %v6928
      %6930 = vmatprep.mubr.bf16.mxu0 %v6567
      %6931 = vmatmul.mubr.bf16.gmra.mrb[0].mxu0 %v6566
      %v6932 = vpop.f32.mrb[0].mxu0
      %v6933 = vadd.f32 %v6651, %v6932
      %v6934 = vpop.f32.mrb[0].mxu0
      %v6935 = vadd.f32 %v6655, %v6934
      %v6936 = vpop.f32.mrb[0].mxu0
      %v6937 = vadd.f32 %v6651, %v6936
      %v6938 = vpop.f32.mrb[0].mxu0
      %v6939 = vadd.f32 %v6655, %v6938
      %6940 = vmatprep.mubr.bf16.mxu0 %v6569
      %6941 = vmatmul.mubr.bf16.gmra.mrb[0].mxu0 %v6568
      %v6942 = vpop.f32.mrb[0].mxu0
      %v6943 = vadd.f32 %v6651, %v6942
      %v6944 = vpop.f32.mrb[0].mxu0
      %v6945 = vadd.f32 %v6655, %v6944
      %v6946 = vpop.f32.mrb[0].mxu0
      %v6947 = vadd.f32 %v6651, %v6946
      %v6948 = vpop.f32.mrb[0].mxu0
      %v6949 = vadd.f32 %v6655, %v6948
      %6950 = vmatprep.mubr.bf16.mxu0 %v6571
      %6951 = vmatmul.mubr.bf16.gmra.mrb[0].mxu0 %v6570
      %v6952 = vpop.f32.mrb[0].mxu0
      %v6953 = vadd.f32 %v6651, %v6952
      %v6954 = vpop.f32.mrb[0].mxu0
      %v6955 = vadd.f32 %v6655, %v6954
      %v6956 = vpop.f32.mrb[0].mxu0
      %v6957 = vadd.f32 %v6651, %v6956
      %v6958 = vpop.f32.mrb[0].mxu0
      %v6959 = vadd.f32 %v6655, %v6958
      %6960 = vmatprep.mubr.bf16.mxu0 %v6573
      %6961 = vmatmul.mubr.bf16.gmra.mrb[0].mxu0 %v6572
      %v6962 = vpop.f32.mrb[0].mxu0
      %v6963 = vadd.f32 %v6651, %v6962
      %v6964 = vpop.f32.mrb[0].mxu0
      %v6965 = vadd.f32 %v6655, %v6964
      %v6966 = vpop.f32.mrb[0].mxu0
      %v6967 = vadd.f32 %v6651, %v6966
      %v6968 = vpop.f32.mrb[0].mxu0
      %v6969 = vadd.f32 %v6655, %v6968
      %6970 = vmatprep.mubr.bf16.mxu0 %v6575
      %6971 = vmatmul.mubr.bf16.gmra.mrb[0].mxu0 %v6574
      %v6972 = vpop.f32.mrb[0].mxu0
      %v6973 = vadd.f32 %v6651, %v6972
      %v6974 = vpop.f32.mrb[0].mxu0
      %v6975 = vadd.f32 %v6655, %v6974
      %v6976 = vpop.f32.mrb[0].mxu0
      %v6977 = vadd.f32 %v6651, %v6976
      %v6978 = vpop.f32.mrb[0].mxu0
      %v6979 = vadd.f32 %v6655, %v6978
      %6980 = vmatprep.mubr.bf16.mxu0 %v6577
      %6981 = vmatmul.mubr.bf16.gmra.mrb[0].mxu0 %v6576
      %v6982 = vpop.f32.mrb[0].mxu0
      %v6983 = vadd.f32 %v6651, %v6982
      %v6984 = vpop.f32.mrb[0].mxu0
      %v6985 = vadd.f32 %v6655, %v6984
      %v6986 = vpop.f32.mrb[0].mxu0
      %v6987 = vadd.f32 %v6651, %v6986
      %v6988 = vpop.f32.mrb[0].mxu0
      %v6989 = vadd.f32 %v6655, %v6988
      %6990 = vmatprep.mubr.bf16.mxu0 %v6579
      %6991 = vmatmul.mubr.bf16.gmra.mrb[0].mxu0 %v6578
      %v6992 = vpop.f32.mrb[0].mxu0
      %v6993 = vadd.f32 %v6651, %v6992
      %v6994 = vpop.f32.mrb[0].mxu0
      %v6995 = vadd.f32 %v6655, %v6994
      %v6996 = vpop.f32.mrb[0].mxu0
      %v6997 = vadd.f32 %v6651, %v6996
      %v6998 = vpop.f32.mrb[0].mxu0
      %v6999 = vadd.f32 %v6655, %v6998
      %7000 = vmatprep.mubr.bf16.mxu0 %v6581
      %7001 = vmatmul.mubr.bf16.gmra.mrb[0].mxu0 %v6580
      %v7002 = vpop.f32.mrb[0].mxu0
      %v7003 = vadd.f32 %v6651, %v7002
      %v7004 = vpop.f32.mrb[0].mxu0
      %v7005 = vadd.f32 %v6655, %v7004
      %v7006 = vpop.f32.mrb[0].mxu0
      %v7007 = vadd.f32 %v6651, %v7006
      %v7008 = vpop.f32.mrb[0].mxu0
      %v7009 = vadd.f32 %v6655, %v7008
      %7010 = vmatprep.mubr.bf16.mxu0 %v6583
      %7011 = vmatmul.mubr.bf16.gmra.mrb[0].mxu0 %v6582
      %v7012 = vpop.f32.mrb[0].mxu0
      %v7013 = vadd.f32 %v6651, %v7012
      %v7014 = vpop.f32.mrb[0].mxu0
      %v7015 = vadd.f32 %v6655, %v7014
      %v7016 = vpop.f32.mrb[0].mxu0
      %v7017 = vadd.f32 %v6651, %v7016
      %v7018 = vpop.f32.mrb[0].mxu0
      %v7019 = vadd.f32 %v6655, %v7018
      %7020 = vmatprep.mubr.bf16.mxu0 %v6585
      %7021 = vmatmul.mubr.bf16.gmra.mrb[0].mxu0 %v6584
      %v7022 = vpop.f32.mrb[0].mxu0
      %v7023 = vadd.f32 %v6651, %v7022
      %v7024 = vpop.f32.mrb[0].mxu0
      %v7025 = vadd.f32 %v6655, %v7024
      %v7026 = vpop.f32.mrb[0].mxu0
      %v7027 = vadd.f32 %v6651, %v7026
      %v7028 = vpop.f32.mrb[0].mxu0
      %v7029 = vadd.f32 %v6655, %v7028
      %7030 = vmatprep.mubr.bf16.mxu0 %v6587
      %7031 = vmatmul.mubr.bf16.gmra.mrb[0].mxu0 %v6586
      %v7032 = vpop.f32.mrb[0].mxu0
      %v7033 = vadd.f32 %v6651, %v7032
      %v7034 = vpop.f32.mrb[0].mxu0
      %v7035 = vadd.f32 %v6655, %v7034
      %v7036 = vpop.f32.mrb[0].mxu0
      %v7037 = vadd.f32 %v6651, %v7036
      %v7038 = vpop.f32.mrb[0].mxu0
      %v7039 = vadd.f32 %v6655, %v7038
      %7040 = vmatprep.mubr.bf16.mxu0 %v6589
      %7041 = vmatmul.mubr.bf16.gmra.mrb[0].mxu0 %v6588
      %v7042 = vpop.f32.mrb[0].mxu0
      %v7043 = vadd.f32 %v6651, %v7042
      %v7044 = vpop.f32.mrb[0].mxu0
      %v7045 = vadd.f32 %v6655, %v7044
      %v7046 = vpop.f32.mrb[0].mxu0
      %v7047 = vadd.f32 %v6651, %v7046
      %v7048 = vpop.f32.mrb[0].mxu0
      %v7049 = vadd.f32 %v6655, %v7048
      %7050 = vmatprep.mubr.bf16.mxu0 %v6591
      %7051 = vmatmul.mubr.bf16.gmra.mrb[0].mxu0 %v6590
      %v7052 = vpop.f32.mrb[0].mxu0
      %v7053 = vadd.f32 %v6651, %v7052
      %v7054 = vpop.f32.mrb[0].mxu0
      %v7055 = vadd.f32 %v6655, %v7054
      %v7056 = vpop.f32.mrb[0].mxu0
      %v7057 = vadd.f32 %v6651, %v7056
      %v7058 = vpop.f32.mrb[0].mxu0
      %v7059 = vadd.f32 %v6655, %v7058
      %7060 = vmatprep.mubr.bf16.mxu0 %v6593
      %7061 = vmatmul.mubr.bf16.gmra.mrb[0].mxu0 %v6592
      %v7062 = vpop.f32.mrb[0].mxu0
      %v7063 = vadd.f32 %v6651, %v7062
      %v7064 = vpop.f32.mrb[0].mxu0
      %v7065 = vadd.f32 %v6655, %v7064
      %v7066 = vpop.f32.mrb[0].mxu0
      %v7067 = vadd.f32 %v6651, %v7066
      %v7068 = vpop.f32.mrb[0].mxu0
      %v7069 = vadd.f32 %v6655, %v7068
      %7070 = vmatprep.mubr.bf16.mxu0 %v6595
      %7071 = vmatmul.mubr.bf16.gmra.mrb[0].mxu0 %v6594
      %v7072 = vpop.f32.mrb[0].mxu0
      %v7073 = vadd.f32 %v6651, %v7072
      %v7074 = vpop.f32.mrb[0].mxu0
      %v7075 = vadd.f32 %v6655, %v7074
      %v7076 = vpop.f32.mrb[0].mxu0
      %v7077 = vadd.f32 %v6651, %v7076
      %v7078 = vpop.f32.mrb[0].mxu0
      %v7079 = vadd.f32 %v6655, %v7078
      %7080 = vmatprep.mubr.bf16.mxu0 %v6597
      %7081 = vmatmul.mubr.bf16.gmra.mrb[0].mxu0 %v6596
      %v7082 = vpop.f32.mrb[0].mxu0
      %v7083 = vadd.f32 %v6651, %v7082
      %v7084 = vpop.f32.mrb[0].mxu0
      %v7085 = vadd.f32 %v6655, %v7084
      %v7086 = vpop.f32.mrb[0].mxu0
      %v7087 = vadd.f32 %v6651, %v7086
      %v7088 = vpop.f32.mrb[0].mxu0
      %v7089 = vadd.f32 %v6655, %v7088
      %7090 = vmatprep.mubr.bf16.mxu0 %v6599
      %7091 = vmatmul.mubr.bf16.gmra.mrb[0].mxu0 %v6598
      %v7092 = vpop.f32.mrb[0].mxu0
      %v7093 = vadd.f32 %v6651, %v7092
      %v7094 = vpop.f32.mrb[0].mxu0
      %v7095 = vadd.f32 %v6655, %v7094
      %v7096 = vpop.f32.mrb[0].mxu0
      %v7097 = vadd.f32 %v6651, %v7096
      %v7098 = vpop.f32.mrb[0].mxu0
      %v7099 = vadd.f32 %v6655, %v7098
      %7100 = vmatprep.mubr.bf16.mxu0 %v6601
      %7101 = vmatmul.mubr.bf16.gmra.mrb[0].mxu0 %v6600
      %v7102 = vpop.f32.mrb[0].mxu0
      %v7103 = vadd.f32 %v6651, %v7102
      %v7104 = vpop.f32.mrb[0].mxu0
      %v7105 = vadd.f32 %v6655, %v7104
      %v7106 = vpop.f32.mrb[0].mxu0
      %v7107 = vadd.f32 %v6651, %v7106
      %v7108 = vpop.f32.mrb[0].mxu0
      %v7109 = vadd.f32 %v6655, %v7108
      %7110 = vmatprep.mubr.bf16.mxu0 %v6603
      %7111 = vmatmul.mubr.bf16.gmra.mrb[0].mxu0 %v6602
      %v7112 = vpop.f32.mrb[0].mxu0
      %v7113 = vadd.f32 %v6651, %v7112
      %v7114 = vpop.f32.mrb[0].mxu0
      %v7115 = vadd.f32 %v6655, %v7114
      %v7116 = vpop.f32.mrb[0].mxu0
      %v7117 = vadd.f32 %v6651, %v7116
      %v7118 = vpop.f32.mrb[0].mxu0
      %v7119 = vadd.f32 %v6655, %v7118
      %7120 = vmatprep.mubr.bf16.mxu0 %v6605
      %7121 = vmatmul.mubr.bf16.gmra.mrb[0].mxu0 %v6604
      %v7122 = vpop.f32.mrb[0].mxu0
      %v7123 = vadd.f32 %v6651, %v7122
      %v7124 = vpop.f32.mrb[0].mxu0
      %v7125 = vadd.f32 %v6655, %v7124
      %v7126 = vpop.f32.mrb[0].mxu0
      %v7127 = vadd.f32 %v6651, %v7126
      %v7128 = vpop.f32.mrb[0].mxu0
      %v7129 = vadd.f32 %v6655, %v7128
      %7130 = vmatprep.mubr.bf16.mxu0 %v6607
      %7131 = vmatmul.mubr.bf16.gmra.mrb[0].mxu0 %v6606
      %v7132 = vpop.f32.mrb[0].mxu0
      %v7133 = vadd.f32 %v6651, %v7132
      %v7134 = vpop.f32.mrb[0].mxu0
      %v7135 = vadd.f32 %v6655, %v7134
      %v7136 = vpop.f32.mrb[0].mxu0
      %v7137 = vadd.f32 %v6651, %v7136
      %v7138 = vpop.f32.mrb[0].mxu0
      %v7139 = vadd.f32 %v6655, %v7138
      %7140 = vmatprep.mubr.bf16.mxu0 %v6609
      %7141 = vmatmul.mubr.bf16.gmra.mrb[0].mxu0 %v6608
      %v7142 = vpop.f32.mrb[0].mxu0
      %v7143 = vadd.f32 %v6651, %v7142
      %v7144 = vpop.f32.mrb[0].mxu0
      %v7145 = vadd.f32 %v6655, %v7144
      %v7146 = vpop.f32.mrb[0].mxu0
      %v7147 = vadd.f32 %v6651, %v7146
      %v7148 = vpop.f32.mrb[0].mxu0
      %v7149 = vadd.f32 %v6655, %v7148
      %7150 = vmatprep.mubr.bf16.mxu0 %v6611
      %7151 = vmatmul.mubr.bf16.gmra.mrb[0].mxu0 %v6610
      %v7152 = vpop.f32.mrb[0].mxu0
      %v7153 = vadd.f32 %v6651, %v7152
      %v7154 = vpop.f32.mrb[0].mxu0
      %v7155 = vadd.f32 %v6655, %v7154
      %v7156 = vpop.f32.mrb[0].mxu0
      %v7157 = vadd.f32 %v6651, %v7156
      %v7158 = vpop.f32.mrb[0].mxu0
      %v7159 = vadd.f32 %v6655, %v7158
      %7160 = vmatprep.mubr.bf16.mxu0 %v6613
      %7161 = vmatmul.mubr.bf16.gmra.mrb[0].mxu0 %v6612
      %v7162 = vpop.f32.mrb[0].mxu0
      %v7163 = vadd.f32 %v6651, %v7162
      %v7164 = vpop.f32.mrb[0].mxu0
      %v7165 = vadd.f32 %v6655, %v7164
      %v7166 = vpop.f32.mrb[0].mxu0
      %v7167 = vadd.f32 %v6651, %v7166
      %v7168 = vpop.f32.mrb[0].mxu0
      %v7169 = vadd.f32 %v6655, %v7168
      %7170 = vdwg.mxu0
      %v7171 = vmax.f32 %v6853, 0.0
      %v7172 = vmax.f32 %v6855, 0.0
      %v7173 = vmax.f32 %v6857, 0.0
      %v7174 = vmax.f32 %v6859, 0.0
      %v7175 = vmax.f32 %v6863, 0.0
      %v7176 = vmax.f32 %v6865, 0.0
      %v7177 = vmax.f32 %v6867, 0.0
      %v7178 = vmax.f32 %v6869, 0.0
      %v7179 = vmax.f32 %v6873, 0.0
      %v7180 = vmax.f32 %v6875, 0.0
      %v7181 = vmax.f32 %v6877, 0.0
      %v7182 = vmax.f32 %v6879, 0.0
      %v7183 = vmax.f32 %v6883, 0.0
      %v7184 = vmax.f32 %v6885, 0.0
      %v7185 = vmax.f32 %v6887, 0.0
      %v7186 = vmax.f32 %v6889, 0.0
      %v7187 = vmax.f32 %v6893, 0.0
      %v7188 = vmax.f32 %v6895, 0.0
      %v7189 = vmax.f32 %v6897, 0.0
      %v7190 = vmax.f32 %v6899, 0.0
      %v7191 = vmax.f32 %v6903, 0.0
      %v7192 = vmax.f32 %v6905, 0.0
      %v7193 = vmax.f32 %v6907, 0.0
      %v7194 = vmax.f32 %v6909, 0.0
      %v7195 = vmax.f32 %v6913, 0.0
      %v7196 = vmax.f32 %v6915, 0.0
      %v7197 = vmax.f32 %v6917, 0.0
      %v7198 = vmax.f32 %v6919, 0.0
      %v7199 = vmax.f32 %v6923, 0.0
      %v7200 = vmax.f32 %v6925, 0.0
      %v7201 = vmax.f32 %v6927, 0.0
      %v7202 = vmax.f32 %v6929, 0.0
      %v7203 = vmax.f32 %v6933, 0.0
      %v7204 = vmax.f32 %v6935, 0.0
      %v7205 = vmax.f32 %v6937, 0.0
      %v7206 = vmax.f32 %v6939, 0.0
      %v7207 = vmax.f32 %v6943, 0.0
      %v7208 = vmax.f32 %v6945, 0.0
      %v7209 = vmax.f32 %v6947, 0.0
      %v7210 = vmax.f32 %v6949, 0.0
      %v7211 = vmax.f32 %v6953, 0.0
      %v7212 = vmax.f32 %v6955, 0.0
      %v7213 = vmax.f32 %v6957, 0.0
      %v7214 = vmax.f32 %v6959, 0.0
      %v7215 = vmax.f32 %v6963, 0.0
      %v7216 = vmax.f32 %v6965, 0.0
      %v7217 = vmax.f32 %v6967, 0.0
      %v7218 = vmax.f32 %v6969, 0.0
      %v7219 = vmax.f32 %v6973, 0.0
      %v7220 = vmax.f32 %v6975, 0.0
      %v7221 = vmax.f32 %v6977, 0.0
      %v7222 = vmax.f32 %v6979, 0.0
      %v7223 = vmax.f32 %v6983, 0.0
      %v7224 = vmax.f32 %v6985, 0.0
      %v7225 = vmax.f32 %v6987, 0.0
      %v7226 = vmax.f32 %v6989, 0.0
      %v7227 = vmax.f32 %v6993, 0.0
      %v7228 = vmax.f32 %v6995, 0.0
      %v7229 = vmax.f32 %v6997, 0.0
      %v7230 = vmax.f32 %v6999, 0.0
      %v7231 = vmax.f32 %v7003, 0.0
      %v7232 = vmax.f32 %v7005, 0.0
      %v7233 = vmax.f32 %v7007, 0.0
      %v7234 = vmax.f32 %v7009, 0.0
      %v7235 = vmax.f32 %v7013, 0.0
      %v7236 = vmax.f32 %v7015, 0.0
      %v7237 = vmax.f32 %v7017, 0.0
      %v7238 = vmax.f32 %v7019, 0.0
      %v7239 = vmax.f32 %v7023, 0.0
      %v7240 = vmax.f32 %v7025, 0.0
      %v7241 = vmax.f32 %v7027, 0.0
      %v7242 = vmax.f32 %v7029, 0.0
      %v7243 = vmax.f32 %v7033, 0.0
      %v7244 = vmax.f32 %v7035, 0.0
      %v7245 = vmax.f32 %v7037, 0.0
      %v7246 = vmax.f32 %v7039, 0.0
      %v7247 = vmax.f32 %v7043, 0.0
      %v7248 = vmax.f32 %v7045, 0.0
      %v7249 = vmax.f32 %v7047, 0.0
      %v7250 = vmax.f32 %v7049, 0.0
      %v7251 = vmax.f32 %v7053, 0.0
      %v7252 = vmax.f32 %v7055, 0.0
      %v7253 = vmax.f32 %v7057, 0.0
      %v7254 = vmax.f32 %v7059, 0.0
      %v7255 = vmax.f32 %v7063, 0.0
      %v7256 = vmax.f32 %v7065, 0.0
      %v7257 = vmax.f32 %v7067, 0.0
      %v7258 = vmax.f32 %v7069, 0.0
      %v7259 = vmax.f32 %v7073, 0.0
      %v7260 = vmax.f32 %v7075, 0.0
      %v7261 = vmax.f32 %v7077, 0.0
      %v7262 = vmax.f32 %v7079, 0.0
      %v7263 = vmax.f32 %v7083, 0.0
      %v7264 = vmax.f32 %v7085, 0.0
      %v7265 = vmax.f32 %v7087, 0.0
      %v7266 = vmax.f32 %v7089, 0.0
      %v7267 = vmax.f32 %v7093, 0.0
      %v7268 = vmax.f32 %v7095, 0.0
      %v7269 = vmax.f32 %v7097, 0.0
      %v7270 = vmax.f32 %v7099, 0.0
      %v7271 = vmax.f32 %v7103, 0.0
      %v7272 = vmax.f32 %v7105, 0.0
      %v7273 = vmax.f32 %v7107, 0.0
      %v7274 = vmax.f32 %v7109, 0.0
      %v7275 = vmax.f32 %v7113, 0.0
      %v7276 = vmax.f32 %v7115, 0.0
      %v7277 = vmax.f32 %v7117, 0.0
      %v7278 = vmax.f32 %v7119, 0.0
      %v7279 = vmax.f32 %v7123, 0.0
      %v7280 = vmax.f32 %v7125, 0.0
      %v7281 = vmax.f32 %v7127, 0.0
      %v7282 = vmax.f32 %v7129, 0.0
      %v7283 = vmax.f32 %v7133, 0.0
      %v7284 = vmax.f32 %v7135, 0.0
      %v7285 = vmax.f32 %v7137, 0.0
      %v7286 = vmax.f32 %v7139, 0.0
      %v7287 = vmax.f32 %v7143, 0.0
      %v7288 = vmax.f32 %v7145, 0.0
      %v7289 = vmax.f32 %v7147, 0.0
      %v7290 = vmax.f32 %v7149, 0.0
      %v7291 = vmax.f32 %v7153, 0.0
      %v7292 = vmax.f32 %v7155, 0.0
      %v7293 = vmax.f32 %v7157, 0.0
      %v7294 = vmax.f32 %v7159, 0.0
      %v7295 = vmax.f32 %v7163, 0.0
      %v7296 = vmax.f32 %v7165, 0.0
      %v7297 = vmax.f32 %v7167, 0.0
      %v7298 = vmax.f32 %v7169, 0.0
      %v7299 = vpack.c.bf16 %v7173, %v7171
      %v7300 = vpack.c.bf16 %v7174, %v7172
      %v7301 = vpack.c.bf16 %v7177, %v7175
      %v7302 = vpack.c.bf16 %v7178, %v7176
      %v7303 = vpack.c.bf16 %v7181, %v7179
      %v7304 = vpack.c.bf16 %v7182, %v7180
      %v7305 = vpack.c.bf16 %v7185, %v7183
      %v7306 = vpack.c.bf16 %v7186, %v7184
      %v7307 = vpack.c.bf16 %v7189, %v7187
      %v7308 = vpack.c.bf16 %v7190, %v7188
      %v7309 = vpack.c.bf16 %v7193, %v7191
      %v7310 = vpack.c.bf16 %v7194, %v7192
      %v7311 = vpack.c.bf16 %v7197, %v7195
      %v7312 = vpack.c.bf16 %v7198, %v7196
      %v7313 = vpack.c.bf16 %v7201, %v7199
      %v7314 = vpack.c.bf16 %v7202, %v7200
      %v7315 = vpack.c.bf16 %v7205, %v7203
      %v7316 = vpack.c.bf16 %v7206, %v7204
      %v7317 = vpack.c.bf16 %v7209, %v7207
      %v7318 = vpack.c.bf16 %v7210, %v7208
      %v7319 = vpack.c.bf16 %v7213, %v7211
      %v7320 = vpack.c.bf16 %v7214, %v7212
      %v7321 = vpack.c.bf16 %v7217, %v7215
      %v7322 = vpack.c.bf16 %v7218, %v7216
      %v7323 = vpack.c.bf16 %v7221, %v7219
      %v7324 = vpack.c.bf16 %v7222, %v7220
      %v7325 = vpack.c.bf16 %v7225, %v7223
      %v7326 = vpack.c.bf16 %v7226, %v7224
      %v7327 = vpack.c.bf16 %v7229, %v7227
      %v7328 = vpack.c.bf16 %v7230, %v7228
      %v7329 = vpack.c.bf16 %v7233, %v7231
      %v7330 = vpack.c.bf16 %v7234, %v7232
      %v7331 = vpack.c.bf16 %v7237, %v7235
      %v7332 = vpack.c.bf16 %v7238, %v7236
      %v7333 = vpack.c.bf16 %v7241, %v7239
      %v7334 = vpack.c.bf16 %v7242, %v7240
      %v7335 = vpack.c.bf16 %v7245, %v7243
      %v7336 = vpack.c.bf16 %v7246, %v7244
      %v7337 = vpack.c.bf16 %v7249, %v7247
      %v7338 = vpack.c.bf16 %v7250, %v7248
      %v7339 = vpack.c.bf16 %v7253, %v7251
      %v7340 = vpack.c.bf16 %v7254, %v7252
      %v7341 = vpack.c.bf16 %v7257, %v7255
      %v7342 = vpack.c.bf16 %v7258, %v7256
      %v7343 = vpack.c.bf16 %v7261, %v7259
      %v7344 = vpack.c.bf16 %v7262, %v7260
      %v7345 = vpack.c.bf16 %v7265, %v7263
      %v7346 = vpack.c.bf16 %v7266, %v7264
      %v7347 = vpack.c.bf16 %v7269, %v7267
      %v7348 = vpack.c.bf16 %v7270, %v7268
      %v7349 = vpack.c.bf16 %v7273, %v7271
      %v7350 = vpack.c.bf16 %v7274, %v7272
      %v7351 = vpack.c.bf16 %v7277, %v7275
      %v7352 = vpack.c.bf16 %v7278, %v7276
      %v7353 = vpack.c.bf16 %v7281, %v7279
      %v7354 = vpack.c.bf16 %v7282, %v7280
      %v7355 = vpack.c.bf16 %v7285, %v7283
      %v7356 = vpack.c.bf16 %v7286, %v7284
      %v7357 = vpack.c.bf16 %v7289, %v7287
      %v7358 = vpack.c.bf16 %v7290, %v7288
      %v7359 = vpack.c.bf16 %v7293, %v7291
      %v7360 = vpack.c.bf16 %v7294, %v7292
      %v7361 = vpack.c.bf16 %v7297, %v7295
      %v7362 = vpack.c.bf16 %v7298, %v7296
      %v7363 = vld [vmem:[%s18] sm:$0xf]
      %v7364 = vld [vmem:[%s18 + $0x4] sm:$0xf]
      %v7365 = vld [vmem:[%s18 + $0x8] sm:$0xf]
      %v7366 = vld [vmem:[%s18 + $0xc] sm:$0xf]
      %v7367 = vld [vmem:[%s18 + $0x10] sm:$0xf]
      %v7368 = vld [vmem:[%s18 + $0x14] sm:$0xf]
      %v7369 = vld [vmem:[%s18 + $0x18] sm:$0xf]
      %v7370 = vld [vmem:[%s18 + $0x1c] sm:$0xf]
      %v7371 = vld [vmem:[%s18 + $0x20] sm:$0xf]
      %v7372 = vld [vmem:[%s18 + $0x24] sm:$0xf]
      %v7373 = vld [vmem:[%s18 + $0x28] sm:$0xf]
      %v7374 = vld [vmem:[%s18 + $0x2c] sm:$0xf]
      %v7375 = vld [vmem:[%s18 + $0x30] sm:$0xf]
      %v7376 = vld [vmem:[%s18 + $0x34] sm:$0xf]
      %v7377 = vld [vmem:[%s18 + $0x38] sm:$0xf]
      %v7378 = vld [vmem:[%s18 + $0x3c] sm:$0xf]
      %v7379 = vld [vmem:[%s18 + $0x40] sm:$0xf]
      %v7380 = vld [vmem:[%s18 + $0x44] sm:$0xf]
      %v7381 = vld [vmem:[%s18 + $0x48] sm:$0xf]
      %v7382 = vld [vmem:[%s18 + $0x4c] sm:$0xf]
      %v7383 = vld [vmem:[%s18 + $0x50] sm:$0xf]
      %v7384 = vld [vmem:[%s18 + $0x54] sm:$0xf]
      %v7385 = vld [vmem:[%s18 + $0x58] sm:$0xf]
      %v7386 = vld [vmem:[%s18 + $0x5c] sm:$0xf]
      %v7387 = vld [vmem:[%s18 + $0x60] sm:$0xf]
      %v7388 = vld [vmem:[%s18 + $0x64] sm:$0xf]
      %v7389 = vld [vmem:[%s18 + $0x68] sm:$0xf]
      %v7390 = vld [vmem:[%s18 + $0x6c] sm:$0xf]
      %v7391 = vld [vmem:[%s18 + $0x70] sm:$0xf]
      %v7392 = vld [vmem:[%s18 + $0x74] sm:$0xf]
      %v7393 = vld [vmem:[%s18 + $0x78] sm:$0xf]
      %v7394 = vld [vmem:[%s18 + $0x7c] sm:$0xf]
      %v7395 = vld [vmem:[%s19] sm:$0x1]
      %v7397 = vlaneseq
      %v7398 = vshrl.u32 %v7397, 7
      %v7399 = vsub.s32 0, %v7398
      %v7400 = vrot.slane %v7395, %v7399
      %v7434 = vunpack.c.l.b16 %v7363
      %v7435 = vunpack.c.l.b16 %v7364
      %v7436 = vunpack.c.l.b16 %v7365
      %v7437 = vunpack.c.l.b16 %v7366
      %v7438 = vunpack.c.l.b16 %v7367
      %v7439 = vunpack.c.l.b16 %v7368
      %v7440 = vunpack.c.l.b16 %v7369
      %v7441 = vunpack.c.l.b16 %v7370
      %v7442 = vunpack.c.l.b16 %v7371
      %v7443 = vunpack.c.l.b16 %v7372
      %v7444 = vunpack.c.l.b16 %v7373
      %v7445 = vunpack.c.l.b16 %v7374
      %v7446 = vunpack.c.l.b16 %v7375
      %v7447 = vunpack.c.l.b16 %v7376
      %v7448 = vunpack.c.l.b16 %v7377
      %v7449 = vunpack.c.l.b16 %v7378
      %v7450 = vunpack.c.l.b16 %v7379
      %v7451 = vunpack.c.l.b16 %v7380
      %v7452 = vunpack.c.l.b16 %v7381
      %v7453 = vunpack.c.l.b16 %v7382
      %v7454 = vunpack.c.l.b16 %v7383
      %v7455 = vunpack.c.l.b16 %v7384
      %v7456 = vunpack.c.l.b16 %v7385
      %v7457 = vunpack.c.l.b16 %v7386
      %v7458 = vunpack.c.l.b16 %v7387
      %v7459 = vunpack.c.l.b16 %v7388
      %v7460 = vunpack.c.l.b16 %v7389
      %v7461 = vunpack.c.l.b16 %v7390
      %v7462 = vunpack.c.l.b16 %v7391
      %v7463 = vunpack.c.l.b16 %v7392
      %v7464 = vunpack.c.l.b16 %v7393
      %v7465 = vunpack.c.l.b16 %v7394
      %v7466 = vpack.c.b16 %v7435, %v7434
      %v7467 = vpack.c.b16 %v7437, %v7436
      %v7468 = vpack.c.b16 %v7439, %v7438
      %v7469 = vpack.c.b16 %v7441, %v7440
      %v7470 = vpack.c.b16 %v7443, %v7442
      %v7471 = vpack.c.b16 %v7445, %v7444
      %v7472 = vpack.c.b16 %v7447, %v7446
      %v7473 = vpack.c.b16 %v7449, %v7448
      %v7474 = vpack.c.b16 %v7451, %v7450
      %v7475 = vpack.c.b16 %v7453, %v7452
      %v7476 = vpack.c.b16 %v7455, %v7454
      %v7477 = vpack.c.b16 %v7457, %v7456
      %v7478 = vpack.c.b16 %v7459, %v7458
      %v7479 = vpack.c.b16 %v7461, %v7460
      %v7480 = vpack.c.b16 %v7463, %v7462
      %v7481 = vpack.c.b16 %v7465, %v7464
      %7498 = vmatprep.subr.bf16.mxu0 0
      %7499 = vmatpush1.bf16.msra.mxu0 %v7466
      %7500 = vmatprep.subr.bf16.mxu0 0
      %7501 = vmatpush1.bf16.msra.mxu0 %v7467
      %7502 = vmatprep.subr.bf16.mxu0 0
      %7503 = vmatpush1.bf16.msra.mxu0 %v7468
      %7504 = vmatprep.subr.bf16.mxu0 0
      %7505 = vmatpush1.bf16.msra.mxu0 %v7469
      %7506 = vmatprep.subr.bf16.mxu0 0
      %7507 = vmatpush1.bf16.msra.mxu0 %v7470
      %7508 = vmatprep.subr.bf16.mxu0 0
      %7509 = vmatpush1.bf16.msra.mxu0 %v7471
      %7510 = vmatprep.subr.bf16.mxu0 0
      %7511 = vmatpush1.bf16.msra.mxu0 %v7472
      %7512 = vmatprep.subr.bf16.mxu0 0
      %7513 = vmatpush1.bf16.msra.mxu0 %v7473
      %7514 = vmatprep.subr.bf16.mxu0 0
      %7515 = vmatpush1.bf16.msra.mxu0 %v7474
      %7516 = vmatprep.subr.bf16.mxu0 0
      %7517 = vmatpush1.bf16.msra.mxu0 %v7475
      %7518 = vmatprep.subr.bf16.mxu0 0
      %7519 = vmatpush1.bf16.msra.mxu0 %v7476
      %7520 = vmatprep.subr.bf16.mxu0 0
      %7521 = vmatpush1.bf16.msra.mxu0 %v7477
      %7522 = vmatprep.subr.bf16.mxu0 0
      %7523 = vmatpush1.bf16.msra.mxu0 %v7478
      %7524 = vmatprep.subr.bf16.mxu0 0
      %7525 = vmatpush1.bf16.msra.mxu0 %v7479
      %7526 = vmatprep.subr.bf16.mxu0 0
      %7527 = vmatpush1.bf16.msra.mxu0 %v7480
      %7528 = vmatprep.subr.bf16.mxu0 0
      %7529 = vmatpush1.bf16.msra.mxu0 %v7481
      %7530 = vmatprep.mubr.bf16.mxu0 %v7300
      %7531 = vmatmul.mubr.bf16.gmra.mrb[0].mxu0 %v7299
      %v7532 = vpop.f32.mrb[0].mxu0
      %v7533 = vadd.f32 %v7400, %v7532
      %v7534 = vpop.f32.mrb[0].mxu0
      %v7535 = vpop.f32.mrb[0].mxu0
      %v7536 = vadd.f32 %v7400, %v7535
      %v7537 = vpop.f32.mrb[0].mxu0
      %7538 = vmatprep.mubr.bf16.mxu0 %v7302
      %7539 = vmatmul.mubr.bf16.gmra.mrb[0].mxu0 %v7301
      %v7540 = vpop.f32.mrb[0].mxu0
      %v7541 = vadd.f32 %v7400, %v7540
      %v7542 = vpop.f32.mrb[0].mxu0
      %v7543 = vpop.f32.mrb[0].mxu0
      %v7544 = vadd.f32 %v7400, %v7543
      %v7545 = vpop.f32.mrb[0].mxu0
      %7546 = vmatprep.mubr.bf16.mxu0 %v7304
      %7547 = vmatmul.mubr.bf16.gmra.mrb[0].mxu0 %v7303
      %v7548 = vpop.f32.mrb[0].mxu0
      %v7549 = vadd.f32 %v7400, %v7548
      %v7550 = vpop.f32.mrb[0].mxu0
      %v7551 = vpop.f32.mrb[0].mxu0
      %v7552 = vadd.f32 %v7400, %v7551
      %v7553 = vpop.f32.mrb[0].mxu0
      %7554 = vmatprep.mubr.bf16.mxu0 %v7306
      %7555 = vmatmul.mubr.bf16.gmra.mrb[0].mxu0 %v7305
      %v7556 = vpop.f32.mrb[0].mxu0
      %v7557 = vadd.f32 %v7400, %v7556
      %v7558 = vpop.f32.mrb[0].mxu0
      %v7559 = vpop.f32.mrb[0].mxu0
      %v7560 = vadd.f32 %v7400, %v7559
      %v7561 = vpop.f32.mrb[0].mxu0
      %7562 = vmatprep.mubr.bf16.mxu0 %v7308
      %7563 = vmatmul.mubr.bf16.gmra.mrb[0].mxu0 %v7307
      %v7564 = vpop.f32.mrb[0].mxu0
      %v7565 = vadd.f32 %v7400, %v7564
      %v7566 = vpop.f32.mrb[0].mxu0
      %v7567 = vpop.f32.mrb[0].mxu0
      %v7568 = vadd.f32 %v7400, %v7567
      %v7569 = vpop.f32.mrb[0].mxu0
      %7570 = vmatprep.mubr.bf16.mxu0 %v7310
      %7571 = vmatmul.mubr.bf16.gmra.mrb[0].mxu0 %v7309
      %v7572 = vpop.f32.mrb[0].mxu0
      %v7573 = vadd.f32 %v7400, %v7572
      %v7574 = vpop.f32.mrb[0].mxu0
      %v7575 = vpop.f32.mrb[0].mxu0
      %v7576 = vadd.f32 %v7400, %v7575
      %v7577 = vpop.f32.mrb[0].mxu0
      %7578 = vmatprep.mubr.bf16.mxu0 %v7312
      %7579 = vmatmul.mubr.bf16.gmra.mrb[0].mxu0 %v7311
      %v7580 = vpop.f32.mrb[0].mxu0
      %v7581 = vadd.f32 %v7400, %v7580
      %v7582 = vpop.f32.mrb[0].mxu0
      %v7583 = vpop.f32.mrb[0].mxu0
      %v7584 = vadd.f32 %v7400, %v7583
      %v7585 = vpop.f32.mrb[0].mxu0
      %7586 = vmatprep.mubr.bf16.mxu0 %v7314
      %7587 = vmatmul.mubr.bf16.gmra.mrb[0].mxu0 %v7313
      %v7588 = vpop.f32.mrb[0].mxu0
      %v7589 = vadd.f32 %v7400, %v7588
      %v7590 = vpop.f32.mrb[0].mxu0
      %v7591 = vpop.f32.mrb[0].mxu0
      %v7592 = vadd.f32 %v7400, %v7591
      %v7593 = vpop.f32.mrb[0].mxu0
      %7594 = vmatprep.mubr.bf16.mxu0 %v7316
      %7595 = vmatmul.mubr.bf16.gmra.mrb[0].mxu0 %v7315
      %v7596 = vpop.f32.mrb[0].mxu0
      %v7597 = vadd.f32 %v7400, %v7596
      %v7598 = vpop.f32.mrb[0].mxu0
      %v7599 = vpop.f32.mrb[0].mxu0
      %v7600 = vadd.f32 %v7400, %v7599
      %v7601 = vpop.f32.mrb[0].mxu0
      %7602 = vmatprep.mubr.bf16.mxu0 %v7318
      %7603 = vmatmul.mubr.bf16.gmra.mrb[0].mxu0 %v7317
      %v7604 = vpop.f32.mrb[0].mxu0
      %v7605 = vadd.f32 %v7400, %v7604
      %v7606 = vpop.f32.mrb[0].mxu0
      %v7607 = vpop.f32.mrb[0].mxu0
      %v7608 = vadd.f32 %v7400, %v7607
      %v7609 = vpop.f32.mrb[0].mxu0
      %7610 = vmatprep.mubr.bf16.mxu0 %v7320
      %7611 = vmatmul.mubr.bf16.gmra.mrb[0].mxu0 %v7319
      %v7612 = vpop.f32.mrb[0].mxu0
      %v7613 = vadd.f32 %v7400, %v7612
      %v7614 = vpop.f32.mrb[0].mxu0
      %v7615 = vpop.f32.mrb[0].mxu0
      %v7616 = vadd.f32 %v7400, %v7615
      %v7617 = vpop.f32.mrb[0].mxu0
      %7618 = vmatprep.mubr.bf16.mxu0 %v7322
      %7619 = vmatmul.mubr.bf16.gmra.mrb[0].mxu0 %v7321
      %v7620 = vpop.f32.mrb[0].mxu0
      %v7621 = vadd.f32 %v7400, %v7620
      %v7622 = vpop.f32.mrb[0].mxu0
      %v7623 = vpop.f32.mrb[0].mxu0
      %v7624 = vadd.f32 %v7400, %v7623
      %v7625 = vpop.f32.mrb[0].mxu0
      %7626 = vmatprep.mubr.bf16.mxu0 %v7324
      %7627 = vmatmul.mubr.bf16.gmra.mrb[0].mxu0 %v7323
      %v7628 = vpop.f32.mrb[0].mxu0
      %v7629 = vadd.f32 %v7400, %v7628
      %v7630 = vpop.f32.mrb[0].mxu0
      %v7631 = vpop.f32.mrb[0].mxu0
      %v7632 = vadd.f32 %v7400, %v7631
      %v7633 = vpop.f32.mrb[0].mxu0
      %7634 = vmatprep.mubr.bf16.mxu0 %v7326
      %7635 = vmatmul.mubr.bf16.gmra.mrb[0].mxu0 %v7325
      %v7636 = vpop.f32.mrb[0].mxu0
      %v7637 = vadd.f32 %v7400, %v7636
      %v7638 = vpop.f32.mrb[0].mxu0
      %v7639 = vpop.f32.mrb[0].mxu0
      %v7640 = vadd.f32 %v7400, %v7639
      %v7641 = vpop.f32.mrb[0].mxu0
      %7642 = vmatprep.mubr.bf16.mxu0 %v7328
      %7643 = vmatmul.mubr.bf16.gmra.mrb[0].mxu0 %v7327
      %v7644 = vpop.f32.mrb[0].mxu0
      %v7645 = vadd.f32 %v7400, %v7644
      %v7646 = vpop.f32.mrb[0].mxu0
      %v7647 = vpop.f32.mrb[0].mxu0
      %v7648 = vadd.f32 %v7400, %v7647
      %v7649 = vpop.f32.mrb[0].mxu0
      %7650 = vmatprep.mubr.bf16.mxu0 %v7330
      %7651 = vmatmul.mubr.bf16.gmra.mrb[0].mxu0 %v7329
      %v7652 = vpop.f32.mrb[0].mxu0
      %v7653 = vadd.f32 %v7400, %v7652
      %v7654 = vpop.f32.mrb[0].mxu0
      %v7655 = vpop.f32.mrb[0].mxu0
      %v7656 = vadd.f32 %v7400, %v7655
      %v7657 = vpop.f32.mrb[0].mxu0
      %7658 = vmatprep.mubr.bf16.mxu0 %v7332
      %7659 = vmatmul.mubr.bf16.gmra.mrb[0].mxu0 %v7331
      %v7660 = vpop.f32.mrb[0].mxu0
      %v7661 = vadd.f32 %v7400, %v7660
      %v7662 = vpop.f32.mrb[0].mxu0
      %v7663 = vpop.f32.mrb[0].mxu0
      %v7664 = vadd.f32 %v7400, %v7663
      %v7665 = vpop.f32.mrb[0].mxu0
      %7666 = vmatprep.mubr.bf16.mxu0 %v7334
      %7667 = vmatmul.mubr.bf16.gmra.mrb[0].mxu0 %v7333
      %v7668 = vpop.f32.mrb[0].mxu0
      %v7669 = vadd.f32 %v7400, %v7668
      %v7670 = vpop.f32.mrb[0].mxu0
      %v7671 = vpop.f32.mrb[0].mxu0
      %v7672 = vadd.f32 %v7400, %v7671
      %v7673 = vpop.f32.mrb[0].mxu0
      %7674 = vmatprep.mubr.bf16.mxu0 %v7336
      %7675 = vmatmul.mubr.bf16.gmra.mrb[0].mxu0 %v7335
      %v7676 = vpop.f32.mrb[0].mxu0
      %v7677 = vadd.f32 %v7400, %v7676
      %v7678 = vpop.f32.mrb[0].mxu0
      %v7679 = vpop.f32.mrb[0].mxu0
      %v7680 = vadd.f32 %v7400, %v7679
      %v7681 = vpop.f32.mrb[0].mxu0
      %7682 = vmatprep.mubr.bf16.mxu0 %v7338
      %7683 = vmatmul.mubr.bf16.gmra.mrb[0].mxu0 %v7337
      %v7684 = vpop.f32.mrb[0].mxu0
      %v7685 = vadd.f32 %v7400, %v7684
      %v7686 = vpop.f32.mrb[0].mxu0
      %v7687 = vpop.f32.mrb[0].mxu0
      %v7688 = vadd.f32 %v7400, %v7687
      %v7689 = vpop.f32.mrb[0].mxu0
      %7690 = vmatprep.mubr.bf16.mxu0 %v7340
      %7691 = vmatmul.mubr.bf16.gmra.mrb[0].mxu0 %v7339
      %v7692 = vpop.f32.mrb[0].mxu0
      %v7693 = vadd.f32 %v7400, %v7692
      %v7694 = vpop.f32.mrb[0].mxu0
      %v7695 = vpop.f32.mrb[0].mxu0
      %v7696 = vadd.f32 %v7400, %v7695
      %v7697 = vpop.f32.mrb[0].mxu0
      %7698 = vmatprep.mubr.bf16.mxu0 %v7342
      %7699 = vmatmul.mubr.bf16.gmra.mrb[0].mxu0 %v7341
      %v7700 = vpop.f32.mrb[0].mxu0
      %v7701 = vadd.f32 %v7400, %v7700
      %v7702 = vpop.f32.mrb[0].mxu0
      %v7703 = vpop.f32.mrb[0].mxu0
      %v7704 = vadd.f32 %v7400, %v7703
      %v7705 = vpop.f32.mrb[0].mxu0
      %7706 = vmatprep.mubr.bf16.mxu0 %v7344
      %7707 = vmatmul.mubr.bf16.gmra.mrb[0].mxu0 %v7343
      %v7708 = vpop.f32.mrb[0].mxu0
      %v7709 = vadd.f32 %v7400, %v7708
      %v7710 = vpop.f32.mrb[0].mxu0
      %v7711 = vpop.f32.mrb[0].mxu0
      %v7712 = vadd.f32 %v7400, %v7711
      %v7713 = vpop.f32.mrb[0].mxu0
      %7714 = vmatprep.mubr.bf16.mxu0 %v7346
      %7715 = vmatmul.mubr.bf16.gmra.mrb[0].mxu0 %v7345
      %v7716 = vpop.f32.mrb[0].mxu0
      %v7717 = vadd.f32 %v7400, %v7716
      %v7718 = vpop.f32.mrb[0].mxu0
      %v7719 = vpop.f32.mrb[0].mxu0
      %v7720 = vadd.f32 %v7400, %v7719
      %v7721 = vpop.f32.mrb[0].mxu0
      %7722 = vmatprep.mubr.bf16.mxu0 %v7348
      %7723 = vmatmul.mubr.bf16.gmra.mrb[0].mxu0 %v7347
      %v7724 = vpop.f32.mrb[0].mxu0
      %v7725 = vadd.f32 %v7400, %v7724
      %v7726 = vpop.f32.mrb[0].mxu0
      %v7727 = vpop.f32.mrb[0].mxu0
      %v7728 = vadd.f32 %v7400, %v7727
      %v7729 = vpop.f32.mrb[0].mxu0
      %7730 = vmatprep.mubr.bf16.mxu0 %v7350
      %7731 = vmatmul.mubr.bf16.gmra.mrb[0].mxu0 %v7349
      %v7732 = vpop.f32.mrb[0].mxu0
      %v7733 = vadd.f32 %v7400, %v7732
      %v7734 = vpop.f32.mrb[0].mxu0
      %v7735 = vpop.f32.mrb[0].mxu0
      %v7736 = vadd.f32 %v7400, %v7735
      %v7737 = vpop.f32.mrb[0].mxu0
      %7738 = vmatprep.mubr.bf16.mxu0 %v7352
      %7739 = vmatmul.mubr.bf16.gmra.mrb[0].mxu0 %v7351
      %v7740 = vpop.f32.mrb[0].mxu0
      %v7741 = vadd.f32 %v7400, %v7740
      %v7742 = vpop.f32.mrb[0].mxu0
      %v7743 = vpop.f32.mrb[0].mxu0
      %v7744 = vadd.f32 %v7400, %v7743
      %v7745 = vpop.f32.mrb[0].mxu0
      %7746 = vmatprep.mubr.bf16.mxu0 %v7354
      %7747 = vmatmul.mubr.bf16.gmra.mrb[0].mxu0 %v7353
      %v7748 = vpop.f32.mrb[0].mxu0
      %v7749 = vadd.f32 %v7400, %v7748
      %v7750 = vpop.f32.mrb[0].mxu0
      %v7751 = vpop.f32.mrb[0].mxu0
      %v7752 = vadd.f32 %v7400, %v7751
      %v7753 = vpop.f32.mrb[0].mxu0
      %7754 = vmatprep.mubr.bf16.mxu0 %v7356
      %7755 = vmatmul.mubr.bf16.gmra.mrb[0].mxu0 %v7355
      %v7756 = vpop.f32.mrb[0].mxu0
      %v7757 = vadd.f32 %v7400, %v7756
      %v7758 = vpop.f32.mrb[0].mxu0
      %v7759 = vpop.f32.mrb[0].mxu0
      %v7760 = vadd.f32 %v7400, %v7759
      %v7761 = vpop.f32.mrb[0].mxu0
      %7762 = vmatprep.mubr.bf16.mxu0 %v7358
      %7763 = vmatmul.mubr.bf16.gmra.mrb[0].mxu0 %v7357
      %v7764 = vpop.f32.mrb[0].mxu0
      %v7765 = vadd.f32 %v7400, %v7764
      %v7766 = vpop.f32.mrb[0].mxu0
      %v7767 = vpop.f32.mrb[0].mxu0
      %v7768 = vadd.f32 %v7400, %v7767
      %v7769 = vpop.f32.mrb[0].mxu0
      %7770 = vmatprep.mubr.bf16.mxu0 %v7360
      %7771 = vmatmul.mubr.bf16.gmra.mrb[0].mxu0 %v7359
      %v7772 = vpop.f32.mrb[0].mxu0
      %v7773 = vadd.f32 %v7400, %v7772
      %v7774 = vpop.f32.mrb[0].mxu0
      %v7775 = vpop.f32.mrb[0].mxu0
      %v7776 = vadd.f32 %v7400, %v7775
      %v7777 = vpop.f32.mrb[0].mxu0
      %7778 = vmatprep.mubr.bf16.mxu0 %v7362
      %7779 = vmatmul.mubr.bf16.gmra.mrb[0].mxu0 %v7361
      %v7780 = vpop.f32.mrb[0].mxu0
      %v7781 = vadd.f32 %v7400, %v7780
      %v7782 = vpop.f32.mrb[0].mxu0
      %v7783 = vpop.f32.mrb[0].mxu0
      %v7784 = vadd.f32 %v7400, %v7783
      %v7785 = vpop.f32.mrb[0].mxu0
      %7786 = vdwg.mxu0
      %vm7787 = vcmask 130048
      %7788 = vst.msk [vmem:[%s631] sm:$0xff] %vm7787, %v7533
      %7789 = vst.msk [vmem:[%s631 + $0x8] sm:$0xff] %vm7787, %v7536
      %7790 = vst.msk [vmem:[%s631 + $0x10] sm:$0xff] %vm7787, %v7541
      %7791 = vst.msk [vmem:[%s631 + $0x18] sm:$0xff] %vm7787, %v7544
      %7792 = vst.msk [vmem:[%s631 + $0x20] sm:$0xff] %vm7787, %v7549
      %7793 = vst.msk [vmem:[%s631 + $0x28] sm:$0xff] %vm7787, %v7552
      %7794 = vst.msk [vmem:[%s631 + $0x30] sm:$0xff] %vm7787, %v7557
      %7795 = vst.msk [vmem:[%s631 + $0x38] sm:$0xff] %vm7787, %v7560
      %7796 = vst.msk [vmem:[%s631 + $0x40] sm:$0xff] %vm7787, %v7565
      %7797 = vst.msk [vmem:[%s631 + $0x48] sm:$0xff] %vm7787, %v7568
      %7798 = vst.msk [vmem:[%s631 + $0x50] sm:$0xff] %vm7787, %v7573
      %7799 = vst.msk [vmem:[%s631 + $0x58] sm:$0xff] %vm7787, %v7576
      %7800 = vst.msk [vmem:[%s631 + $0x60] sm:$0xff] %vm7787, %v7581
      %7801 = vst.msk [vmem:[%s631 + $0x68] sm:$0xff] %vm7787, %v7584
      %7802 = vst.msk [vmem:[%s631 + $0x70] sm:$0xff] %vm7787, %v7589
      %7803 = vst.msk [vmem:[%s631 + $0x78] sm:$0xff] %vm7787, %v7592
      %7804 = vst.msk [vmem:[%s631 + $0x80] sm:$0xff] %vm7787, %v7597
      %7805 = vst.msk [vmem:[%s631 + $0x88] sm:$0xff] %vm7787, %v7600
      %7806 = vst.msk [vmem:[%s631 + $0x90] sm:$0xff] %vm7787, %v7605
      %7807 = vst.msk [vmem:[%s631 + $0x98] sm:$0xff] %vm7787, %v7608
      %7808 = vst.msk [vmem:[%s631 + $0xa0] sm:$0xff] %vm7787, %v7613
      %7809 = vst.msk [vmem:[%s631 + $0xa8] sm:$0xff] %vm7787, %v7616
      %7810 = vst.msk [vmem:[%s631 + $0xb0] sm:$0xff] %vm7787, %v7621
      %7811 = vst.msk [vmem:[%s631 + $0xb8] sm:$0xff] %vm7787, %v7624
      %7812 = vst.msk [vmem:[%s631 + $0xc0] sm:$0xff] %vm7787, %v7629
      %7813 = vst.msk [vmem:[%s631 + $0xc8] sm:$0xff] %vm7787, %v7632
      %7814 = vst.msk [vmem:[%s631 + $0xd0] sm:$0xff] %vm7787, %v7637
      %7815 = vst.msk [vmem:[%s631 + $0xd8] sm:$0xff] %vm7787, %v7640
      %7816 = vst.msk [vmem:[%s631 + $0xe0] sm:$0xff] %vm7787, %v7645
      %7817 = vst.msk [vmem:[%s631 + $0xe8] sm:$0xff] %vm7787, %v7648
      %7818 = vst.msk [vmem:[%s631 + $0xf0] sm:$0xff] %vm7787, %v7653
      %7819 = vst.msk [vmem:[%s631 + $0xf8] sm:$0xff] %vm7787, %v7656
      %7820 = vst.msk [vmem:[%s631 + $0x100] sm:$0xff] %vm7787, %v7661
      %7821 = vst.msk [vmem:[%s631 + $0x108] sm:$0xff] %vm7787, %v7664
      %7822 = vst.msk [vmem:[%s631 + $0x110] sm:$0xff] %vm7787, %v7669
      %7823 = vst.msk [vmem:[%s631 + $0x118] sm:$0xff] %vm7787, %v7672
      %7824 = vst.msk [vmem:[%s631 + $0x120] sm:$0xff] %vm7787, %v7677
      %7825 = vst.msk [vmem:[%s631 + $0x128] sm:$0xff] %vm7787, %v7680
      %7826 = vst.msk [vmem:[%s631 + $0x130] sm:$0xff] %vm7787, %v7685
      %7827 = vst.msk [vmem:[%s631 + $0x138] sm:$0xff] %vm7787, %v7688
      %7828 = vst.msk [vmem:[%s631 + $0x140] sm:$0xff] %vm7787, %v7693
      %7829 = vst.msk [vmem:[%s631 + $0x148] sm:$0xff] %vm7787, %v7696
      %7830 = vst.msk [vmem:[%s631 + $0x150] sm:$0xff] %vm7787, %v7701
      %7831 = vst.msk [vmem:[%s631 + $0x158] sm:$0xff] %vm7787, %v7704
      %7832 = vst.msk [vmem:[%s631 + $0x160] sm:$0xff] %vm7787, %v7709
      %7833 = vst.msk [vmem:[%s631 + $0x168] sm:$0xff] %vm7787, %v7712
      %7834 = vst.msk [vmem:[%s631 + $0x170] sm:$0xff] %vm7787, %v7717
      %7835 = vst.msk [vmem:[%s631 + $0x178] sm:$0xff] %vm7787, %v7720
      %7836 = vst.msk [vmem:[%s631 + $0x180] sm:$0xff] %vm7787, %v7725
      %7837 = vst.msk [vmem:[%s631 + $0x188] sm:$0xff] %vm7787, %v7728
      %7838 = vst.msk [vmem:[%s631 + $0x190] sm:$0xff] %vm7787, %v7733
      %7839 = vst.msk [vmem:[%s631 + $0x198] sm:$0xff] %vm7787, %v7736
      %7840 = vst.msk [vmem:[%s631 + $0x1a0] sm:$0xff] %vm7787, %v7741
      %7841 = vst.msk [vmem:[%s631 + $0x1a8] sm:$0xff] %vm7787, %v7744
      %7842 = vst.msk [vmem:[%s631 + $0x1b0] sm:$0xff] %vm7787, %v7749
      %7843 = vst.msk [vmem:[%s631 + $0x1b8] sm:$0xff] %vm7787, %v7752
      %7844 = vst.msk [vmem:[%s631 + $0x1c0] sm:$0xff] %vm7787, %v7757
      %7845 = vst.msk [vmem:[%s631 + $0x1c8] sm:$0xff] %vm7787, %v7760
      %7846 = vst.msk [vmem:[%s631 + $0x1d0] sm:$0xff] %vm7787, %v7765
      %7847 = vst.msk [vmem:[%s631 + $0x1d8] sm:$0xff] %vm7787, %v7768
      %7848 = vst.msk [vmem:[%s631 + $0x1e0] sm:$0xff] %vm7787, %v7773
      %7849 = vst.msk [vmem:[%s631 + $0x1e8] sm:$0xff] %vm7787, %v7776
      %7850 = vst.msk [vmem:[%s631 + $0x1f0] sm:$0xff] %vm7787, %v7781
      %7851 = vst.msk [vmem:[%s631 + $0x1f8] sm:$0xff] %vm7787, %v7784
      %s7852 = smul.u32 64, %s31
      %p7853 = scmp.lt.s32.totalorder %s7852, 127
      %s7854 = scalar_select %p7853, %s7852, 127
      %s7855 = smul.addr %s7854, 8
      %s7856 = scalar_lea.vmem %s20, %s7855
      // Predicated region
      $region101: #{conditional_deform_forward.1} parent=99 // pred_check
        %p7857 = pneg %p474
      $region102: #{conditional_deform_forward.1} parent=99 // pred_check_branch
        %7859 = sbr.rel (%p7857) target = $region104
      $region103: #{conditional_deform_forward.1} parent=99 // pred_region
        %s7860 = smul.u32 64, %s31
      $region104: #{conditional_deform_forward.1} parent=99 // pred_fallthru
        _
    $region100: #{conditional_deform_forward.1} parent=5 // pred_fallthru
      _
    %p7861 = scmp.le.s32.totalorder 2, %s26
    // Predicated region
    $region105: #{conditional_deform_forward.1} parent=5 // pred_check
      %p7862 = pneg %p7861
    $region106: #{conditional_deform_forward.1} parent=5 // pred_check_branch
      %7864 = sbr.rel (%p7862) target = $region108
    $region107: #{conditional_deform_forward.1} parent=5 // pred_region
      %s7865 = ssub.s32 %s26, 2
      // Predicated region
      $region109: #{conditional_deform_forward.1} parent=107 // pred_check
        %p7866 = pneg %p480
      $region110: #{conditional_deform_forward.1} parent=107 // pred_check_branch
        %7868 = sbr.rel (%p7866) target = $region112
      $region111: #{conditional_deform_forward.1} parent=107 // pred_region
        %s7869 = smul.u32 64, %s32
        %p7870 = scmp.lt.s32.totalorder %s7869, 127
        %s7871 = scalar_select %p7870, %s7869, 127
        %s7872 = smul.addr %s7871, 8
        %s7873 = scalar_lea.vmem %s20, %s7872
      $region112: #{conditional_deform_forward.1} parent=107 // pred_fallthru
        _
    $region108: #{conditional_deform_forward.1} parent=5 // pred_fallthru
      _
  $region6: #{conditional_deform_forward.1} parent=0 // loop_footer
    %s30 = sadd.s32 1, %s26
  $region7: #{conditional_deform_forward.1} parent=0 // loop_footer_branch
    %25 = sbr.rel target = $region3
  $region8: #{conditional_deform_forward.1} parent=0 // loop_exit
    _

</llo_original>
